<compile_context>
chip_gen: v5e
topology: v5e:2x2
jax: 0.10.0
libtpu: 0.0.40
codegen_flags: <defaults>
</compile_context>

<pallas_src>
import functools

import jax
import jax.numpy as jnp
from jax.experimental import pallas as pl
from jax.experimental.pallas import tpu as pltpu

MATMUL_DTYPE = jnp.bfloat16   # MXU-native operand dtype; accumulation stays f32


def _round_up(x, m):
    return (x + m - 1) // m * m


def _nbytes(a):
    return int(a.size) * a.dtype.itemsize


def _compiler_params(semantics, *block_nbytes):
    """Mosaic params with a VMEM budget derived from the actual block sizes
    (double-buffered) plus headroom -- fits v7x's 64 MiB as well as v5e/v6e."""
    limit = 2 * int(sum(block_nbytes)) + (16 << 20)
    return pltpu.CompilerParams(dimension_semantics=semantics,
                                vmem_limit_bytes=limit)


# -----------------------------------------------------------------------------
# Kernels
# -----------------------------------------------------------------------------
def _conv_gemm_relu_kernel(w_ref, b_ref, x_ref, o_ref, *, img_w, k):
    """Implicit-GEMM 'valid' conv + bias + ReLU on one sample.

    w_ref: (k*k, O, C_pad) bf16  -- one (O, C) weight slab per tap
    b_ref: (O, 1) f32
    x_ref: (1, C_pad, S_pad) bf16 -- one sample, spatially flattened (h*W + w),
                                     zero-padded columns at the end (tap halo)
    o_ref: (1, O, M) bf16         -- conv output on the FULL img grid; column
                                     m = h*img_w + w is a valid conv output
                                     only for h <= H-k, w <= W-k (the rest is
                                     discarded by the caller before pooling).

    Because the output lives on the same flattened grid as the input, every
    tap (di, dj) is a constant lane offset di*img_w + dj: the 25 patch views
    are plain static slices of the in-VMEM activation (no im2col in HBM).
    """
    m = o_ref.shape[-1]
    o_chan = w_ref.shape[1]
    x = x_ref[0]                                            # (C_pad, S_pad)
    acc = jnp.zeros((o_chan, m), jnp.float32)
    for di in range(k):
        for dj in range(k):
            off = di * img_w + dj
            w_t = w_ref[di * k + dj]                        # (O, C_pad)
            acc = acc + jnp.dot(w_t, x[:, off:off + m],
                                preferred_element_type=jnp.float32)
    acc = jnp.maximum(acc + b_ref[...], 0.0)                # f32 epilogue
    o_ref[0] = acc.astype(o_ref.dtype)


def _mlp3_kernel(w1_ref, b1_ref, w2_ref, b2_ref, w3_ref, b3_ref, x_ref, o_ref):
    """Fused fc1->ReLU->fc2->ReLU->fc3 (lane-dense, transposed activations)."""
    h = jnp.dot(w1_ref[...], x_ref[...], preferred_element_type=jnp.float32)
    h = jnp.maximum(h + b1_ref[...], 0.0).astype(MATMUL_DTYPE)
    h = jnp.dot(w2_ref[...], h, preferred_element_type=jnp.float32)
    h = jnp.maximum(h + b2_ref[...], 0.0).astype(MATMUL_DTYPE)
    h = jnp.dot(w3_ref[...], h, preferred_element_type=jnp.float32)
    o_ref[...] = (h + b3_ref[...]).astype(o_ref.dtype)


# -----------------------------------------------------------------------------
# Layer wrappers
# -----------------------------------------------------------------------------
def conv_relu_pool(x, w_prep, b_col, *, k=5):
    """Valid conv (stride 1) + ReLU (in-kernel) + 2x2/stride-2 max-pool (glue).

    x: (N, C, H, W) float;  w_prep: (k*k, O, C_pad) bf16;  b_col: (O, 1) f32.
    Returns (N, O, (H-k+1)//2, (W-k+1)//2) in MATMUL_DTYPE, NCHW (no transposes).
    """
    N, C, H, W = x.shape
    taps, O, C_pad = w_prep.shape
    assert taps == k * k
    Ho, Wo = H - k + 1, W - k + 1
    m_out = _round_up(H * W, 128)                       # full-grid, lane-dense
    s_pad = _round_up(m_out + (k - 1) * W + (k - 1), 128)   # + tap halo

    # bf16 FIRST, keep channel-major NCHW, flatten spatial, pad channels (to a
    # sublane multiple) and columns (halo) in one fused pad -- no transposes.
    xf = x.astype(MATMUL_DTYPE).reshape(N, C, H * W)
    xf = jnp.pad(xf, ((0, 0), (0, C_pad - C), (0, s_pad - H * W)))

    kernel = functools.partial(_conv_gemm_relu_kernel, img_w=W, k=k)
    y = pl.pallas_call(
        kernel,
        out_shape=jax.ShapeDtypeStruct((N, O, m_out), MATMUL_DTYPE),
        grid=(N,),                                      # >=2 parallel steps
        in_specs=[
            pl.BlockSpec((taps, O, C_pad), lambda n: (0, 0, 0)),   # weights resident
            pl.BlockSpec((O, 1), lambda n: (0, 0)),                # bias resident
            pl.BlockSpec((1, C_pad, s_pad), lambda n: (n, 0, 0)),  # one sample/step
        ],
        out_specs=pl.BlockSpec((1, O, m_out), lambda n: (n, 0, 0)),
        compiler_params=_compiler_params(
            ("parallel",),
            _nbytes(w_prep), _nbytes(b_col),
            C_pad * s_pad * 2, O * m_out * 2, O * m_out * 4),
    )(w_prep, b_col, xf)

    # TODO(synk): the 2x2 max-pool stays in XLA glue (a single reshape+max
    # fusion, channel-major, no transposes); fusing it into the kernel epilogue
    # would require an in-register stride-2 lane compaction.
    y = y[:, :, :H * W].reshape(N, O, H, W)[:, :, :Ho, :Wo]   # drop invalid cols
    y = y.reshape(N, O, Ho // 2, 2, Wo // 2, 2).max(axis=(3, 5))
    return y                                            # (N, O, Ho//2, Wo//2)


def mlp3(x2d, kp):
    """Fused fc1/fc2/fc3 head.  x2d: (N, 400).  Returns (N, 10) float32."""
    N, K = x2d.shape
    m_pad = _round_up(N, 128)
    xt = jnp.pad(x2d.astype(MATMUL_DTYPE).T, ((0, 0), (0, m_pad - N)))  # (K, M)
    O = kp["fc3_w"].shape[0]

    y = pl.pallas_call(
        _mlp3_kernel,
        out_shape=jax.ShapeDtypeStruct((O, m_pad), jnp.float32),
        grid=(1,),
        in_specs=[
            pl.BlockSpec(kp["fc1_w"].shape, lambda i: (0, 0)),
            pl.BlockSpec(kp["fc1_b"].shape, lambda i: (0, 0)),
            pl.BlockSpec(kp["fc2_w"].shape, lambda i: (0, 0)),
            pl.BlockSpec(kp["fc2_b"].shape, lambda i: (0, 0)),
            pl.BlockSpec(kp["fc3_w"].shape, lambda i: (0, 0)),
            pl.BlockSpec(kp["fc3_b"].shape, lambda i: (0, 0)),
            pl.BlockSpec((K, m_pad), lambda i: (0, 0)),
        ],
        out_specs=pl.BlockSpec((O, m_pad), lambda i: (0, 0)),
        compiler_params=_compiler_params(
            ("arbitrary",),
            _nbytes(kp["fc1_w"]), _nbytes(kp["fc2_w"]), _nbytes(kp["fc3_w"]),
            K * m_pad * 2, O * m_pad * 4),
    )(kp["fc1_w"], kp["fc1_b"], kp["fc2_w"], kp["fc2_b"],
      kp["fc3_w"], kp["fc3_b"], xt)

    return y[:, :N].T                                   # (N, 10) f32


# -----------------------------------------------------------------------------
# Parameters
# -----------------------------------------------------------------------------
def init_params(key):
    """Deterministic PyTorch-style uniform(-1/sqrt(fan_in), 1/sqrt(fan_in))."""
    keys = jax.random.split(key, 32)
    ki = iter(keys)

    def u(shape, fan_in):
        bound = 1.0 / float(fan_in) ** 0.5
        return jax.random.uniform(next(ki), shape, jnp.float32, -bound, bound)

    p = {}
    p["conv1_w"], p["conv1_b"] = u((6, 3, 5, 5), 3 * 25), u((6,), 3 * 25)
    p["conv2_w"], p["conv2_b"] = u((16, 6, 5, 5), 6 * 25), u((16,), 6 * 25)
    # conv3 / linears / linears2 exist in __init__ but are unused in forward.
    p["conv3_w"], p["conv3_b"] = u((16, 6, 5, 5), 6 * 25), u((16,), 6 * 25)
    p["fc1_w"], p["fc1_b"] = u((120, 400), 400), u((120,), 400)
    p["fc2_w"], p["fc2_b"] = u((84, 120), 120), u((84,), 120)
    p["fc3_w"], p["fc3_b"] = u((10, 84), 84), u((10,), 84)
    return p


def prepare_params(p):
    """One-time conversion to kernel layout (no per-forward transposes):
    conv weights as (k*k, O, C_pad) bf16 tap-major slabs (C zero-padded to a
    sublane multiple); fc weights kept in PyTorch (O, K) layout, bf16; biases
    as f32 (O, 1) columns."""
    out = {}
    for name in ("conv1", "conv2"):
        w = p[f"{name}_w"]                             # (O, C, k, k)
        O, C, kh, kw = w.shape
        c_pad = _round_up(C, 8)
        wt = jnp.transpose(w, (2, 3, 0, 1)).reshape(kh * kw, O, C)
        wt = jnp.pad(wt, ((0, 0), (0, 0), (0, c_pad - C)))
        out[f"{name}_w"] = wt.astype(MATMUL_DTYPE)
        out[f"{name}_b"] = p[f"{name}_b"].reshape(O, 1).astype(jnp.float32)
    for name in ("fc1", "fc2", "fc3"):
        out[f"{name}_w"] = p[f"{name}_w"].astype(MATMUL_DTYPE)   # (O, K) as-is
        out[f"{name}_b"] = p[f"{name}_b"].reshape(-1, 1).astype(jnp.float32)
    return out


# -----------------------------------------------------------------------------
# Model forward
# -----------------------------------------------------------------------------
def forward(x, kp):
    """TheModelClass2.forward (runnable part).  x: (N, 3, 32, 32) float32."""
    x = conv_relu_pool(x, kp["conv1_w"], kp["conv1_b"], k=5)   # (N, 6, 14, 14)
    x = conv_relu_pool(x, kp["conv2_w"], kp["conv2_b"], k=5)   # (N, 16, 5, 5)
    # TODO(synk): the PyTorch forward repeats pool(relu(conv1))/pool(relu(conv2))
    # here, but conv1 expects 3 input channels while x now has 16 -> the
    # original module raises on any input; the repeated stage is omitted.
    x = x.reshape(x.shape[0], 16 * 5 * 5)                      # (N, 400) c-major
    return mlp3(x, kp)                                         # (N, 10) f32


if __name__ == "__main__":
    key = jax.random.PRNGKey(0)
    pkey, xkey = jax.random.split(key)
    params = init_params(pkey)
    kparams = prepare_params(params)

    # NCHW (batch=2, channels=3, 32x32) -- 32x32 is what x.view(-1, 16*5*5)
    # in the module implies.
    x = jax.random.normal(xkey, (2, 3, 32, 32), dtype=jnp.float32)

    fwd = jax.jit(forward)
    out = jax.block_until_ready(fwd(x, kparams))
    assert out.shape == (2, 10) and out.dtype == jnp.float32
    assert bool(jnp.all(jnp.isfinite(out)))
    print("KERNEL_OK")
</pallas_src>

<mosaic_0001>
module attributes {stable_mosaic.version = 11 : i64} {
  func.func @_conv_gemm_relu_kernel(%arg0: i32, %arg1: memref<25x6x8xbf16, #tpu.memory_space<vmem>>, %arg2: memref<6x1xf32, #tpu.memory_space<vmem>>, %arg3: memref<1x8x1280xbf16, #tpu.memory_space<vmem>>, %arg4: memref<1x6x1024xbf16, #tpu.memory_space<vmem>>) attributes {dimension_semantics = [#tpu.dimension_semantics<parallel>], iteration_bounds = array<i64: 2>, scalar_prefetch = 0 : i64, scratch_operands = 0 : i64, tpu.core_type = #tpu.core_type<tc>, window_params = [{pipeline_mode = #tpu.pipeline_mode<synchronous>, transform_indices = @transform_0, window_bounds = array<i64: 25, 6, 8>}, {pipeline_mode = #tpu.pipeline_mode<synchronous>, transform_indices = @transform_1, window_bounds = array<i64: 6, 1>}, {transform_indices = @transform_2, window_bounds = array<i64: 1, 8, 1280>}, {transform_indices = @transform_3, window_bounds = array<i64: 1, 6, 1024>}]} {
    %c0 = arith.constant 0 : index
    %c0_0 = arith.constant 0 : index
    %c0_1 = arith.constant 0 : index
    %0 = vector.load %arg3[%c0, %c0_0, %c0_1] : memref<1x8x1280xbf16, #tpu.memory_space<vmem>>, vector<1x8x1280xbf16>
    %1 = vector.shape_cast %0 : vector<1x8x1280xbf16> to vector<8x1280xbf16>
    %cst = arith.constant 0.000000e+00 : f32
    %2 = vector.broadcast %cst : f32 to vector<6x1024xf32>
    %c0_2 = arith.constant 0 : index
    %c0_3 = arith.constant 0 : index
    %c0_4 = arith.constant 0 : index
    %3 = vector.load %arg1[%c0_2, %c0_3, %c0_4] : memref<25x6x8xbf16, #tpu.memory_space<vmem>>, vector<1x6x8xbf16>
    %4 = vector.shape_cast %3 : vector<1x6x8xbf16> to vector<6x8xbf16>
    %5 = vector.extract_strided_slice %1 {offsets = [0, 0], sizes = [8, 1024], strides = [1, 1]} : vector<8x1280xbf16> to vector<8x1024xbf16>
    %cst_5 = arith.constant dense<0.000000e+00> : vector<6x1024xf32>
    %6 = tpu.matmul %4, %5, %cst_5 {dimension_numbers = #tpu.dot_dimension_numbers<[1], [0], [0], [1], [0, 0, 1, 1], [], []>} : vector<6x8xbf16>, vector<8x1024xbf16>, vector<6x1024xf32> -> vector<6x1024xf32>
    %7 = arith.addf %2, %6 : vector<6x1024xf32>
    %c1 = arith.constant 1 : index
    %c0_6 = arith.constant 0 : index
    %c0_7 = arith.constant 0 : index
    %8 = vector.load %arg1[%c1, %c0_6, %c0_7] : memref<25x6x8xbf16, #tpu.memory_space<vmem>>, vector<1x6x8xbf16>
    %9 = vector.shape_cast %8 : vector<1x6x8xbf16> to vector<6x8xbf16>
    %10 = vector.extract_strided_slice %1 {offsets = [0, 1], sizes = [8, 1024], strides = [1, 1]} : vector<8x1280xbf16> to vector<8x1024xbf16>
    %cst_8 = arith.constant dense<0.000000e+00> : vector<6x1024xf32>
    %11 = tpu.matmul %9, %10, %cst_8 {dimension_numbers = #tpu.dot_dimension_numbers<[1], [0], [0], [1], [0, 0, 1, 1], [], []>} : vector<6x8xbf16>, vector<8x1024xbf16>, vector<6x1024xf32> -> vector<6x1024xf32>
    %12 = arith.addf %7, %11 : vector<6x1024xf32>
    %c2 = arith.constant 2 : index
    %c0_9 = arith.constant 0 : index
    %c0_10 = arith.constant 0 : index
    %13 = vector.load %arg1[%c2, %c0_9, %c0_10] : memref<25x6x8xbf16, #tpu.memory_space<vmem>>, vector<1x6x8xbf16>
    %14 = vector.shape_cast %13 : vector<1x6x8xbf16> to vector<6x8xbf16>
    %15 = vector.extract_strided_slice %1 {offsets = [0, 2], sizes = [8, 1024], strides = [1, 1]} : vector<8x1280xbf16> to vector<8x1024xbf16>
    %cst_11 = arith.constant dense<0.000000e+00> : vector<6x1024xf32>
    %16 = tpu.matmul %14, %15, %cst_11 {dimension_numbers = #tpu.dot_dimension_numbers<[1], [0], [0], [1], [0, 0, 1, 1], [], []>} : vector<6x8xbf16>, vector<8x1024xbf16>, vector<6x1024xf32> -> vector<6x1024xf32>
    %17 = arith.addf %12, %16 : vector<6x1024xf32>
    %c3 = arith.constant 3 : index
    %c0_12 = arith.constant 0 : index
    %c0_13 = arith.constant 0 : index
    %18 = vector.load %arg1[%c3, %c0_12, %c0_13] : memref<25x6x8xbf16, #tpu.memory_space<vmem>>, vector<1x6x8xbf16>
    %19 = vector.shape_cast %18 : vector<1x6x8xbf16> to vector<6x8xbf16>
    %20 = vector.extract_strided_slice %1 {offsets = [0, 3], sizes = [8, 1024], strides = [1, 1]} : vector<8x1280xbf16> to vector<8x1024xbf16>
    %cst_14 = arith.constant dense<0.000000e+00> : vector<6x1024xf32>
    %21 = tpu.matmul %19, %20, %cst_14 {dimension_numbers = #tpu.dot_dimension_numbers<[1], [0], [0], [1], [0, 0, 1, 1], [], []>} : vector<6x8xbf16>, vector<8x1024xbf16>, vector<6x1024xf32> -> vector<6x1024xf32>
    %22 = arith.addf %17, %21 : vector<6x1024xf32>
    %c4 = arith.constant 4 : index
    %c0_15 = arith.constant 0 : index
    %c0_16 = arith.constant 0 : index
    %23 = vector.load %arg1[%c4, %c0_15, %c0_16] : memref<25x6x8xbf16, #tpu.memory_space<vmem>>, vector<1x6x8xbf16>
    %24 = vector.shape_cast %23 : vector<1x6x8xbf16> to vector<6x8xbf16>
    %25 = vector.extract_strided_slice %1 {offsets = [0, 4], sizes = [8, 1024], strides = [1, 1]} : vector<8x1280xbf16> to vector<8x1024xbf16>
    %cst_17 = arith.constant dense<0.000000e+00> : vector<6x1024xf32>
    %26 = tpu.matmul %24, %25, %cst_17 {dimension_numbers = #tpu.dot_dimension_numbers<[1], [0], [0], [1], [0, 0, 1, 1], [], []>} : vector<6x8xbf16>, vector<8x1024xbf16>, vector<6x1024xf32> -> vector<6x1024xf32>
    %27 = arith.addf %22, %26 : vector<6x1024xf32>
    %c5 = arith.constant 5 : index
    %c0_18 = arith.constant 0 : index
    %c0_19 = arith.constant 0 : index
    %28 = vector.load %arg1[%c5, %c0_18, %c0_19] : memref<25x6x8xbf16, #tpu.memory_space<vmem>>, vector<1x6x8xbf16>
    %29 = vector.shape_cast %28 : vector<1x6x8xbf16> to vector<6x8xbf16>
    %30 = vector.extract_strided_slice %1 {offsets = [0, 32], sizes = [8, 1024], strides = [1, 1]} : vector<8x1280xbf16> to vector<8x1024xbf16>
    %cst_20 = arith.constant dense<0.000000e+00> : vector<6x1024xf32>
    %31 = tpu.matmul %29, %30, %cst_20 {dimension_numbers = #tpu.dot_dimension_numbers<[1], [0], [0], [1], [0, 0, 1, 1], [], []>} : vector<6x8xbf16>, vector<8x1024xbf16>, vector<6x1024xf32> -> vector<6x1024xf32>
    %32 = arith.addf %27, %31 : vector<6x1024xf32>
    %c6 = arith.constant 6 : index
    %c0_21 = arith.constant 0 : index
    %c0_22 = arith.constant 0 : index
    %33 = vector.load %arg1[%c6, %c0_21, %c0_22] : memref<25x6x8xbf16, #tpu.memory_space<vmem>>, vector<1x6x8xbf16>
    %34 = vector.shape_cast %33 : vector<1x6x8xbf16> to vector<6x8xbf16>
    %35 = vector.extract_strided_slice %1 {offsets = [0, 33], sizes = [8, 1024], strides = [1, 1]} : vector<8x1280xbf16> to vector<8x1024xbf16>
    %cst_23 = arith.constant dense<0.000000e+00> : vector<6x1024xf32>
    %36 = tpu.matmul %34, %35, %cst_23 {dimension_numbers = #tpu.dot_dimension_numbers<[1], [0], [0], [1], [0, 0, 1, 1], [], []>} : vector<6x8xbf16>, vector<8x1024xbf16>, vector<6x1024xf32> -> vector<6x1024xf32>
    %37 = arith.addf %32, %36 : vector<6x1024xf32>
    %c7 = arith.constant 7 : index
    %c0_24 = arith.constant 0 : index
    %c0_25 = arith.constant 0 : index
    %38 = vector.load %arg1[%c7, %c0_24, %c0_25] : memref<25x6x8xbf16, #tpu.memory_space<vmem>>, vector<1x6x8xbf16>
    %39 = vector.shape_cast %38 : vector<1x6x8xbf16> to vector<6x8xbf16>
    %40 = vector.extract_strided_slice %1 {offsets = [0, 34], sizes = [8, 1024], strides = [1, 1]} : vector<8x1280xbf16> to vector<8x1024xbf16>
    %cst_26 = arith.constant dense<0.000000e+00> : vector<6x1024xf32>
    %41 = tpu.matmul %39, %40, %cst_26 {dimension_numbers = #tpu.dot_dimension_numbers<[1], [0], [0], [1], [0, 0, 1, 1], [], []>} : vector<6x8xbf16>, vector<8x1024xbf16>, vector<6x1024xf32> -> vector<6x1024xf32>
    %42 = arith.addf %37, %41 : vector<6x1024xf32>
    %c8 = arith.constant 8 : index
    %c0_27 = arith.constant 0 : index
    %c0_28 = arith.constant 0 : index
    %43 = vector.load %arg1[%c8, %c0_27, %c0_28] : memref<25x6x8xbf16, #tpu.memory_space<vmem>>, vector<1x6x8xbf16>
    %44 = vector.shape_cast %43 : vector<1x6x8xbf16> to vector<6x8xbf16>
    %45 = vector.extract_strided_slice %1 {offsets = [0, 35], sizes = [8, 1024], strides = [1, 1]} : vector<8x1280xbf16> to vector<8x1024xbf16>
    %cst_29 = arith.constant dense<0.000000e+00> : vector<6x1024xf32>
    %46 = tpu.matmul %44, %45, %cst_29 {dimension_numbers = #tpu.dot_dimension_numbers<[1], [0], [0], [1], [0, 0, 1, 1], [], []>} : vector<6x8xbf16>, vector<8x1024xbf16>, vector<6x1024xf32> -> vector<6x1024xf32>
    %47 = arith.addf %42, %46 : vector<6x1024xf32>
    %c9 = arith.constant 9 : index
    %c0_30 = arith.constant 0 : index
    %c0_31 = arith.constant 0 : index
    %48 = vector.load %arg1[%c9, %c0_30, %c0_31] : memref<25x6x8xbf16, #tpu.memory_space<vmem>>, vector<1x6x8xbf16>
    %49 = vector.shape_cast %48 : vector<1x6x8xbf16> to vector<6x8xbf16>
    %50 = vector.extract_strided_slice %1 {offsets = [0, 36], sizes = [8, 1024], strides = [1, 1]} : vector<8x1280xbf16> to vector<8x1024xbf16>
    %cst_32 = arith.constant dense<0.000000e+00> : vector<6x1024xf32>
    %51 = tpu.matmul %49, %50, %cst_32 {dimension_numbers = #tpu.dot_dimension_numbers<[1], [0], [0], [1], [0, 0, 1, 1], [], []>} : vector<6x8xbf16>, vector<8x1024xbf16>, vector<6x1024xf32> -> vector<6x1024xf32>
    %52 = arith.addf %47, %51 : vector<6x1024xf32>
    %c10 = arith.constant 10 : index
    %c0_33 = arith.constant 0 : index
    %c0_34 = arith.constant 0 : index
    %53 = vector.load %arg1[%c10, %c0_33, %c0_34] : memref<25x6x8xbf16, #tpu.memory_space<vmem>>, vector<1x6x8xbf16>
    %54 = vector.shape_cast %53 : vector<1x6x8xbf16> to vector<6x8xbf16>
    %55 = vector.extract_strided_slice %1 {offsets = [0, 64], sizes = [8, 1024], strides = [1, 1]} : vector<8x1280xbf16> to vector<8x1024xbf16>
    %cst_35 = arith.constant dense<0.000000e+00> : vector<6x1024xf32>
    %56 = tpu.matmul %54, %55, %cst_35 {dimension_numbers = #tpu.dot_dimension_numbers<[1], [0], [0], [1], [0, 0, 1, 1], [], []>} : vector<6x8xbf16>, vector<8x1024xbf16>, vector<6x1024xf32> -> vector<6x1024xf32>
    %57 = arith.addf %52, %56 : vector<6x1024xf32>
    %c11 = arith.constant 11 : index
    %c0_36 = arith.constant 0 : index
    %c0_37 = arith.constant 0 : index
    %58 = vector.load %arg1[%c11, %c0_36, %c0_37] : memref<25x6x8xbf16, #tpu.memory_space<vmem>>, vector<1x6x8xbf16>
    %59 = vector.shape_cast %58 : vector<1x6x8xbf16> to vector<6x8xbf16>
    %60 = vector.extract_strided_slice %1 {offsets = [0, 65], sizes = [8, 1024], strides = [1, 1]} : vector<8x1280xbf16> to vector<8x1024xbf16>
    %cst_38 = arith.constant dense<0.000000e+00> : vector<6x1024xf32>
    %61 = tpu.matmul %59, %60, %cst_38 {dimension_numbers = #tpu.dot_dimension_numbers<[1], [0], [0], [1], [0, 0, 1, 1], [], []>} : vector<6x8xbf16>, vector<8x1024xbf16>, vector<6x1024xf32> -> vector<6x1024xf32>
    %62 = arith.addf %57, %61 : vector<6x1024xf32>
    %c12 = arith.constant 12 : index
    %c0_39 = arith.constant 0 : index
    %c0_40 = arith.constant 0 : index
    %63 = vector.load %arg1[%c12, %c0_39, %c0_40] : memref<25x6x8xbf16, #tpu.memory_space<vmem>>, vector<1x6x8xbf16>
    %64 = vector.shape_cast %63 : vector<1x6x8xbf16> to vector<6x8xbf16>
    %65 = vector.extract_strided_slice %1 {offsets = [0, 66], sizes = [8, 1024], strides = [1, 1]} : vector<8x1280xbf16> to vector<8x1024xbf16>
    %cst_41 = arith.constant dense<0.000000e+00> : vector<6x1024xf32>
    %66 = tpu.matmul %64, %65, %cst_41 {dimension_numbers = #tpu.dot_dimension_numbers<[1], [0], [0], [1], [0, 0, 1, 1], [], []>} : vector<6x8xbf16>, vector<8x1024xbf16>, vector<6x1024xf32> -> vector<6x1024xf32>
    %67 = arith.addf %62, %66 : vector<6x1024xf32>
    %c13 = arith.constant 13 : index
    %c0_42 = arith.constant 0 : index
    %c0_43 = arith.constant 0 : index
    %68 = vector.load %arg1[%c13, %c0_42, %c0_43] : memref<25x6x8xbf16, #tpu.memory_space<vmem>>, vector<1x6x8xbf16>
    %69 = vector.shape_cast %68 : vector<1x6x8xbf16> to vector<6x8xbf16>
    %70 = vector.extract_strided_slice %1 {offsets = [0, 67], sizes = [8, 1024], strides = [1, 1]} : vector<8x1280xbf16> to vector<8x1024xbf16>
    %cst_44 = arith.constant dense<0.000000e+00> : vector<6x1024xf32>
    %71 = tpu.matmul %69, %70, %cst_44 {dimension_numbers = #tpu.dot_dimension_numbers<[1], [0], [0], [1], [0, 0, 1, 1], [], []>} : vector<6x8xbf16>, vector<8x1024xbf16>, vector<6x1024xf32> -> vector<6x1024xf32>
    %72 = arith.addf %67, %71 : vector<6x1024xf32>
    %c14 = arith.constant 14 : index
    %c0_45 = arith.constant 0 : index
    %c0_46 = arith.constant 0 : index
    %73 = vector.load %arg1[%c14, %c0_45, %c0_46] : memref<25x6x8xbf16, #tpu.memory_space<vmem>>, vector<1x6x8xbf16>
    %74 = vector.shape_cast %73 : vector<1x6x8xbf16> to vector<6x8xbf16>
    %75 = vector.extract_strided_slice %1 {offsets = [0, 68], sizes = [8, 1024], strides = [1, 1]} : vector<8x1280xbf16> to vector<8x1024xbf16>
    %cst_47 = arith.constant dense<0.000000e+00> : vector<6x1024xf32>
    %76 = tpu.matmul %74, %75, %cst_47 {dimension_numbers = #tpu.dot_dimension_numbers<[1], [0], [0], [1], [0, 0, 1, 1], [], []>} : vector<6x8xbf16>, vector<8x1024xbf16>, vector<6x1024xf32> -> vector<6x1024xf32>
    %77 = arith.addf %72, %76 : vector<6x1024xf32>
    %c15 = arith.constant 15 : index
    %c0_48 = arith.constant 0 : index
    %c0_49 = arith.constant 0 : index
    %78 = vector.load %arg1[%c15, %c0_48, %c0_49] : memref<25x6x8xbf16, #tpu.memory_space<vmem>>, vector<1x6x8xbf16>
    %79 = vector.shape_cast %78 : vector<1x6x8xbf16> to vector<6x8xbf16>
    %80 = vector.extract_strided_slice %1 {offsets = [0, 96], sizes = [8, 1024], strides = [1, 1]} : vector<8x1280xbf16> to vector<8x1024xbf16>
    %cst_50 = arith.constant dense<0.000000e+00> : vector<6x1024xf32>
    %81 = tpu.matmul %79, %80, %cst_50 {dimension_numbers = #tpu.dot_dimension_numbers<[1], [0], [0], [1], [0, 0, 1, 1], [], []>} : vector<6x8xbf16>, vector<8x1024xbf16>, vector<6x1024xf32> -> vector<6x1024xf32>
    %82 = arith.addf %77, %81 : vector<6x1024xf32>
    %c16 = arith.constant 16 : index
    %c0_51 = arith.constant 0 : index
    %c0_52 = arith.constant 0 : index
    %83 = vector.load %arg1[%c16, %c0_51, %c0_52] : memref<25x6x8xbf16, #tpu.memory_space<vmem>>, vector<1x6x8xbf16>
    %84 = vector.shape_cast %83 : vector<1x6x8xbf16> to vector<6x8xbf16>
    %85 = vector.extract_strided_slice %1 {offsets = [0, 97], sizes = [8, 1024], strides = [1, 1]} : vector<8x1280xbf16> to vector<8x1024xbf16>
    %cst_53 = arith.constant dense<0.000000e+00> : vector<6x1024xf32>
    %86 = tpu.matmul %84, %85, %cst_53 {dimension_numbers = #tpu.dot_dimension_numbers<[1], [0], [0], [1], [0, 0, 1, 1], [], []>} : vector<6x8xbf16>, vector<8x1024xbf16>, vector<6x1024xf32> -> vector<6x1024xf32>
    %87 = arith.addf %82, %86 : vector<6x1024xf32>
    %c17 = arith.constant 17 : index
    %c0_54 = arith.constant 0 : index
    %c0_55 = arith.constant 0 : index
    %88 = vector.load %arg1[%c17, %c0_54, %c0_55] : memref<25x6x8xbf16, #tpu.memory_space<vmem>>, vector<1x6x8xbf16>
    %89 = vector.shape_cast %88 : vector<1x6x8xbf16> to vector<6x8xbf16>
    %90 = vector.extract_strided_slice %1 {offsets = [0, 98], sizes = [8, 1024], strides = [1, 1]} : vector<8x1280xbf16> to vector<8x1024xbf16>
    %cst_56 = arith.constant dense<0.000000e+00> : vector<6x1024xf32>
    %91 = tpu.matmul %89, %90, %cst_56 {dimension_numbers = #tpu.dot_dimension_numbers<[1], [0], [0], [1], [0, 0, 1, 1], [], []>} : vector<6x8xbf16>, vector<8x1024xbf16>, vector<6x1024xf32> -> vector<6x1024xf32>
    %92 = arith.addf %87, %91 : vector<6x1024xf32>
    %c18 = arith.constant 18 : index
    %c0_57 = arith.constant 0 : index
    %c0_58 = arith.constant 0 : index
    %93 = vector.load %arg1[%c18, %c0_57, %c0_58] : memref<25x6x8xbf16, #tpu.memory_space<vmem>>, vector<1x6x8xbf16>
    %94 = vector.shape_cast %93 : vector<1x6x8xbf16> to vector<6x8xbf16>
    %95 = vector.extract_strided_slice %1 {offsets = [0, 99], sizes = [8, 1024], strides = [1, 1]} : vector<8x1280xbf16> to vector<8x1024xbf16>
    %cst_59 = arith.constant dense<0.000000e+00> : vector<6x1024xf32>
    %96 = tpu.matmul %94, %95, %cst_59 {dimension_numbers = #tpu.dot_dimension_numbers<[1], [0], [0], [1], [0, 0, 1, 1], [], []>} : vector<6x8xbf16>, vector<8x1024xbf16>, vector<6x1024xf32> -> vector<6x1024xf32>
    %97 = arith.addf %92, %96 : vector<6x1024xf32>
    %c19 = arith.constant 19 : index
    %c0_60 = arith.constant 0 : index
    %c0_61 = arith.constant 0 : index
    %98 = vector.load %arg1[%c19, %c0_60, %c0_61] : memref<25x6x8xbf16, #tpu.memory_space<vmem>>, vector<1x6x8xbf16>
    %99 = vector.shape_cast %98 : vector<1x6x8xbf16> to vector<6x8xbf16>
    %100 = vector.extract_strided_slice %1 {offsets = [0, 100], sizes = [8, 1024], strides = [1, 1]} : vector<8x1280xbf16> to vector<8x1024xbf16>
    %cst_62 = arith.constant dense<0.000000e+00> : vector<6x1024xf32>
    %101 = tpu.matmul %99, %100, %cst_62 {dimension_numbers = #tpu.dot_dimension_numbers<[1], [0], [0], [1], [0, 0, 1, 1], [], []>} : vector<6x8xbf16>, vector<8x1024xbf16>, vector<6x1024xf32> -> vector<6x1024xf32>
    %102 = arith.addf %97, %101 : vector<6x1024xf32>
    %c20 = arith.constant 20 : index
    %c0_63 = arith.constant 0 : index
    %c0_64 = arith.constant 0 : index
    %103 = vector.load %arg1[%c20, %c0_63, %c0_64] : memref<25x6x8xbf16, #tpu.memory_space<vmem>>, vector<1x6x8xbf16>
    %104 = vector.shape_cast %103 : vector<1x6x8xbf16> to vector<6x8xbf16>
    %105 = vector.extract_strided_slice %1 {offsets = [0, 128], sizes = [8, 1024], strides = [1, 1]} : vector<8x1280xbf16> to vector<8x1024xbf16>
    %cst_65 = arith.constant dense<0.000000e+00> : vector<6x1024xf32>
    %106 = tpu.matmul %104, %105, %cst_65 {dimension_numbers = #tpu.dot_dimension_numbers<[1], [0], [0], [1], [0, 0, 1, 1], [], []>} : vector<6x8xbf16>, vector<8x1024xbf16>, vector<6x1024xf32> -> vector<6x1024xf32>
    %107 = arith.addf %102, %106 : vector<6x1024xf32>
    %c21 = arith.constant 21 : index
    %c0_66 = arith.constant 0 : index
    %c0_67 = arith.constant 0 : index
    %108 = vector.load %arg1[%c21, %c0_66, %c0_67] : memref<25x6x8xbf16, #tpu.memory_space<vmem>>, vector<1x6x8xbf16>
    %109 = vector.shape_cast %108 : vector<1x6x8xbf16> to vector<6x8xbf16>
    %110 = vector.extract_strided_slice %1 {offsets = [0, 129], sizes = [8, 1024], strides = [1, 1]} : vector<8x1280xbf16> to vector<8x1024xbf16>
    %cst_68 = arith.constant dense<0.000000e+00> : vector<6x1024xf32>
    %111 = tpu.matmul %109, %110, %cst_68 {dimension_numbers = #tpu.dot_dimension_numbers<[1], [0], [0], [1], [0, 0, 1, 1], [], []>} : vector<6x8xbf16>, vector<8x1024xbf16>, vector<6x1024xf32> -> vector<6x1024xf32>
    %112 = arith.addf %107, %111 : vector<6x1024xf32>
    %c22 = arith.constant 22 : index
    %c0_69 = arith.constant 0 : index
    %c0_70 = arith.constant 0 : index
    %113 = vector.load %arg1[%c22, %c0_69, %c0_70] : memref<25x6x8xbf16, #tpu.memory_space<vmem>>, vector<1x6x8xbf16>
    %114 = vector.shape_cast %113 : vector<1x6x8xbf16> to vector<6x8xbf16>
    %115 = vector.extract_strided_slice %1 {offsets = [0, 130], sizes = [8, 1024], strides = [1, 1]} : vector<8x1280xbf16> to vector<8x1024xbf16>
    %cst_71 = arith.constant dense<0.000000e+00> : vector<6x1024xf32>
    %116 = tpu.matmul %114, %115, %cst_71 {dimension_numbers = #tpu.dot_dimension_numbers<[1], [0], [0], [1], [0, 0, 1, 1], [], []>} : vector<6x8xbf16>, vector<8x1024xbf16>, vector<6x1024xf32> -> vector<6x1024xf32>
    %117 = arith.addf %112, %116 : vector<6x1024xf32>
    %c23 = arith.constant 23 : index
    %c0_72 = arith.constant 0 : index
    %c0_73 = arith.constant 0 : index
    %118 = vector.load %arg1[%c23, %c0_72, %c0_73] : memref<25x6x8xbf16, #tpu.memory_space<vmem>>, vector<1x6x8xbf16>
    %119 = vector.shape_cast %118 : vector<1x6x8xbf16> to vector<6x8xbf16>
    %120 = vector.extract_strided_slice %1 {offsets = [0, 131], sizes = [8, 1024], strides = [1, 1]} : vector<8x1280xbf16> to vector<8x1024xbf16>
    %cst_74 = arith.constant dense<0.000000e+00> : vector<6x1024xf32>
    %121 = tpu.matmul %119, %120, %cst_74 {dimension_numbers = #tpu.dot_dimension_numbers<[1], [0], [0], [1], [0, 0, 1, 1], [], []>} : vector<6x8xbf16>, vector<8x1024xbf16>, vector<6x1024xf32> -> vector<6x1024xf32>
    %122 = arith.addf %117, %121 : vector<6x1024xf32>
    %c24 = arith.constant 24 : index
    %c0_75 = arith.constant 0 : index
    %c0_76 = arith.constant 0 : index
    %123 = vector.load %arg1[%c24, %c0_75, %c0_76] : memref<25x6x8xbf16, #tpu.memory_space<vmem>>, vector<1x6x8xbf16>
    %124 = vector.shape_cast %123 : vector<1x6x8xbf16> to vector<6x8xbf16>
    %125 = vector.extract_strided_slice %1 {offsets = [0, 132], sizes = [8, 1024], strides = [1, 1]} : vector<8x1280xbf16> to vector<8x1024xbf16>
    %cst_77 = arith.constant dense<0.000000e+00> : vector<6x1024xf32>
    %126 = tpu.matmul %124, %125, %cst_77 {dimension_numbers = #tpu.dot_dimension_numbers<[1], [0], [0], [1], [0, 0, 1, 1], [], []>} : vector<6x8xbf16>, vector<8x1024xbf16>, vector<6x1024xf32> -> vector<6x1024xf32>
    %127 = arith.addf %122, %126 : vector<6x1024xf32>
    %c0_78 = arith.constant 0 : index
    %c0_79 = arith.constant 0 : index
    %128 = vector.load %arg2[%c0_78, %c0_79] : memref<6x1xf32, #tpu.memory_space<vmem>>, vector<6x1xf32>
    %129 = vector.broadcast %128 : vector<6x1xf32> to vector<6x1024xf32>
    %130 = arith.addf %127, %129 : vector<6x1024xf32>
    %cst_80 = arith.constant 0.000000e+00 : f32
    %131 = vector.broadcast %cst_80 : f32 to vector<6x1024xf32>
    %132 = arith.maximumf %130, %131 : vector<6x1024xf32>
    %133 = arith.truncf %132 : vector<6x1024xf32> to vector<6x1024xbf16>
    %c0_81 = arith.constant 0 : index
    %c0_82 = arith.constant 0 : index
    %c0_83 = arith.constant 0 : index
    %134 = vector.load %arg4[%c0_81, %c0_82, %c0_83] : memref<1x6x1024xbf16, #tpu.memory_space<vmem>>, vector<1x6x1024xbf16>
    %135 = vector.shape_cast %134 : vector<1x6x1024xbf16> to vector<6x1024xbf16>
    %136 = vector.shape_cast %133 : vector<6x1024xbf16> to vector<1x6x1024xbf16>
    tpu.vector_store %arg4[%c0_81, %c0_82, %c0_83], %136 {strides = array<i32>} : memref<1x6x1024xbf16, #tpu.memory_space<vmem>>, vector<1x6x1024xbf16>,
    return
  }
  func.func @transform_0(%arg0: i32) -> (i32, i32, i32) {
    %c0_i32 = arith.constant 0 : i32
    %c0_i32_0 = arith.constant 0 : i32
    %c0_i32_1 = arith.constant 0 : i32
    %c0_i32_2 = arith.constant 0 : i32
    return %c0_i32, %c0_i32_0, %c0_i32_1 : i32, i32, i32
  }
  func.func @transform_1(%arg0: i32) -> (i32, i32) {
    %c0_i32 = arith.constant 0 : i32
    %c0_i32_0 = arith.constant 0 : i32
    %c0_i32_1 = arith.constant 0 : i32
    return %c0_i32, %c0_i32_0 : i32, i32
  }
  func.func @transform_2(%arg0: i32) -> (i32, i32, i32) {
    %c0_i32 = arith.constant 0 : i32
    %c0_i32_0 = arith.constant 0 : i32
    %c0_i32_1 = arith.constant 0 : i32
    return %arg0, %c0_i32, %c0_i32_0 : i32, i32, i32
  }
  func.func @transform_3(%arg0: i32) -> (i32, i32, i32) {
    %c0_i32 = arith.constant 0 : i32
    %c0_i32_0 = arith.constant 0 : i32
    %c0_i32_1 = arith.constant 0 : i32
    return %arg0, %c0_i32, %c0_i32_0 : i32, i32, i32
  }
}

module attributes {stable_mosaic.version = 11 : i64} {
  func.func @_conv_gemm_relu_kernel(%arg0: i32, %arg1: memref<25x16x8xbf16, #tpu.memory_space<vmem>>, %arg2: memref<16x1xf32, #tpu.memory_space<vmem>>, %arg3: memref<1x8x384xbf16, #tpu.memory_space<vmem>>, %arg4: memref<1x16x256xbf16, #tpu.memory_space<vmem>>) attributes {dimension_semantics = [#tpu.dimension_semantics<parallel>], iteration_bounds = array<i64: 2>, scalar_prefetch = 0 : i64, scratch_operands = 0 : i64, tpu.core_type = #tpu.core_type<tc>, window_params = [{pipeline_mode = #tpu.pipeline_mode<synchronous>, transform_indices = @transform_0, window_bounds = array<i64: 25, 16, 8>}, {pipeline_mode = #tpu.pipeline_mode<synchronous>, transform_indices = @transform_1, window_bounds = array<i64: 16, 1>}, {transform_indices = @transform_2, window_bounds = array<i64: 1, 8, 384>}, {transform_indices = @transform_3, window_bounds = array<i64: 1, 16, 256>}]} {
    %c0 = arith.constant 0 : index
    %c0_0 = arith.constant 0 : index
    %c0_1 = arith.constant 0 : index
    %0 = vector.load %arg3[%c0, %c0_0, %c0_1] : memref<1x8x384xbf16, #tpu.memory_space<vmem>>, vector<1x8x384xbf16>
    %1 = vector.shape_cast %0 : vector<1x8x384xbf16> to vector<8x384xbf16>
    %cst = arith.constant 0.000000e+00 : f32
    %2 = vector.broadcast %cst : f32 to vector<16x256xf32>
    %c0_2 = arith.constant 0 : index
    %c0_3 = arith.constant 0 : index
    %c0_4 = arith.constant 0 : index
    %3 = vector.load %arg1[%c0_2, %c0_3, %c0_4] : memref<25x16x8xbf16, #tpu.memory_space<vmem>>, vector<1x16x8xbf16>
    %4 = vector.shape_cast %3 : vector<1x16x8xbf16> to vector<16x8xbf16>
    %5 = vector.extract_strided_slice %1 {offsets = [0, 0], sizes = [8, 256], strides = [1, 1]} : vector<8x384xbf16> to vector<8x256xbf16>
    %cst_5 = arith.constant dense<0.000000e+00> : vector<16x256xf32>
    %6 = tpu.matmul %4, %5, %cst_5 {dimension_numbers = #tpu.dot_dimension_numbers<[1], [0], [0], [1], [0, 0, 1, 1], [], []>} : vector<16x8xbf16>, vector<8x256xbf16>, vector<16x256xf32> -> vector<16x256xf32>
    %7 = arith.addf %2, %6 : vector<16x256xf32>
    %c1 = arith.constant 1 : index
    %c0_6 = arith.constant 0 : index
    %c0_7 = arith.constant 0 : index
    %8 = vector.load %arg1[%c1, %c0_6, %c0_7] : memref<25x16x8xbf16, #tpu.memory_space<vmem>>, vector<1x16x8xbf16>
    %9 = vector.shape_cast %8 : vector<1x16x8xbf16> to vector<16x8xbf16>
    %10 = vector.extract_strided_slice %1 {offsets = [0, 1], sizes = [8, 256], strides = [1, 1]} : vector<8x384xbf16> to vector<8x256xbf16>
    %cst_8 = arith.constant dense<0.000000e+00> : vector<16x256xf32>
    %11 = tpu.matmul %9, %10, %cst_8 {dimension_numbers = #tpu.dot_dimension_numbers<[1], [0], [0], [1], [0, 0, 1, 1], [], []>} : vector<16x8xbf16>, vector<8x256xbf16>, vector<16x256xf32> -> vector<16x256xf32>
    %12 = arith.addf %7, %11 : vector<16x256xf32>
    %c2 = arith.constant 2 : index
    %c0_9 = arith.constant 0 : index
    %c0_10 = arith.constant 0 : index
    %13 = vector.load %arg1[%c2, %c0_9, %c0_10] : memref<25x16x8xbf16, #tpu.memory_space<vmem>>, vector<1x16x8xbf16>
    %14 = vector.shape_cast %13 : vector<1x16x8xbf16> to vector<16x8xbf16>
    %15 = vector.extract_strided_slice %1 {offsets = [0, 2], sizes = [8, 256], strides = [1, 1]} : vector<8x384xbf16> to vector<8x256xbf16>
    %cst_11 = arith.constant dense<0.000000e+00> : vector<16x256xf32>
    %16 = tpu.matmul %14, %15, %cst_11 {dimension_numbers = #tpu.dot_dimension_numbers<[1], [0], [0], [1], [0, 0, 1, 1], [], []>} : vector<16x8xbf16>, vector<8x256xbf16>, vector<16x256xf32> -> vector<16x256xf32>
    %17 = arith.addf %12, %16 : vector<16x256xf32>
    %c3 = arith.constant 3 : index
    %c0_12 = arith.constant 0 : index
    %c0_13 = arith.constant 0 : index
    %18 = vector.load %arg1[%c3, %c0_12, %c0_13] : memref<25x16x8xbf16, #tpu.memory_space<vmem>>, vector<1x16x8xbf16>
    %19 = vector.shape_cast %18 : vector<1x16x8xbf16> to vector<16x8xbf16>
    %20 = vector.extract_strided_slice %1 {offsets = [0, 3], sizes = [8, 256], strides = [1, 1]} : vector<8x384xbf16> to vector<8x256xbf16>
    %cst_14 = arith.constant dense<0.000000e+00> : vector<16x256xf32>
    %21 = tpu.matmul %19, %20, %cst_14 {dimension_numbers = #tpu.dot_dimension_numbers<[1], [0], [0], [1], [0, 0, 1, 1], [], []>} : vector<16x8xbf16>, vector<8x256xbf16>, vector<16x256xf32> -> vector<16x256xf32>
    %22 = arith.addf %17, %21 : vector<16x256xf32>
    %c4 = arith.constant 4 : index
    %c0_15 = arith.constant 0 : index
    %c0_16 = arith.constant 0 : index
    %23 = vector.load %arg1[%c4, %c0_15, %c0_16] : memref<25x16x8xbf16, #tpu.memory_space<vmem>>, vector<1x16x8xbf16>
    %24 = vector.shape_cast %23 : vector<1x16x8xbf16> to vector<16x8xbf16>
    %25 = vector.extract_strided_slice %1 {offsets = [0, 4], sizes = [8, 256], strides = [1, 1]} : vector<8x384xbf16> to vector<8x256xbf16>
    %cst_17 = arith.constant dense<0.000000e+00> : vector<16x256xf32>
    %26 = tpu.matmul %24, %25, %cst_17 {dimension_numbers = #tpu.dot_dimension_numbers<[1], [0], [0], [1], [0, 0, 1, 1], [], []>} : vector<16x8xbf16>, vector<8x256xbf16>, vector<16x256xf32> -> vector<16x256xf32>
    %27 = arith.addf %22, %26 : vector<16x256xf32>
    %c5 = arith.constant 5 : index
    %c0_18 = arith.constant 0 : index
    %c0_19 = arith.constant 0 : index
    %28 = vector.load %arg1[%c5, %c0_18, %c0_19] : memref<25x16x8xbf16, #tpu.memory_space<vmem>>, vector<1x16x8xbf16>
    %29 = vector.shape_cast %28 : vector<1x16x8xbf16> to vector<16x8xbf16>
    %30 = vector.extract_strided_slice %1 {offsets = [0, 14], sizes = [8, 256], strides = [1, 1]} : vector<8x384xbf16> to vector<8x256xbf16>
    %cst_20 = arith.constant dense<0.000000e+00> : vector<16x256xf32>
    %31 = tpu.matmul %29, %30, %cst_20 {dimension_numbers = #tpu.dot_dimension_numbers<[1], [0], [0], [1], [0, 0, 1, 1], [], []>} : vector<16x8xbf16>, vector<8x256xbf16>, vector<16x256xf32> -> vector<16x256xf32>
    %32 = arith.addf %27, %31 : vector<16x256xf32>
    %c6 = arith.constant 6 : index
    %c0_21 = arith.constant 0 : index
    %c0_22 = arith.constant 0 : index
    %33 = vector.load %arg1[%c6, %c0_21, %c0_22] : memref<25x16x8xbf16, #tpu.memory_space<vmem>>, vector<1x16x8xbf16>
    %34 = vector.shape_cast %33 : vector<1x16x8xbf16> to vector<16x8xbf16>
    %35 = vector.extract_strided_slice %1 {offsets = [0, 15], sizes = [8, 256], strides = [1, 1]} : vector<8x384xbf16> to vector<8x256xbf16>
    %cst_23 = arith.constant dense<0.000000e+00> : vector<16x256xf32>
    %36 = tpu.matmul %34, %35, %cst_23 {dimension_numbers = #tpu.dot_dimension_numbers<[1], [0], [0], [1], [0, 0, 1, 1], [], []>} : vector<16x8xbf16>, vector<8x256xbf16>, vector<16x256xf32> -> vector<16x256xf32>
    %37 = arith.addf %32, %36 : vector<16x256xf32>
    %c7 = arith.constant 7 : index
    %c0_24 = arith.constant 0 : index
    %c0_25 = arith.constant 0 : index
    %38 = vector.load %arg1[%c7, %c0_24, %c0_25] : memref<25x16x8xbf16, #tpu.memory_space<vmem>>, vector<1x16x8xbf16>
    %39 = vector.shape_cast %38 : vector<1x16x8xbf16> to vector<16x8xbf16>
    %40 = vector.extract_strided_slice %1 {offsets = [0, 16], sizes = [8, 256], strides = [1, 1]} : vector<8x384xbf16> to vector<8x256xbf16>
    %cst_26 = arith.constant dense<0.000000e+00> : vector<16x256xf32>
    %41 = tpu.matmul %39, %40, %cst_26 {dimension_numbers = #tpu.dot_dimension_numbers<[1], [0], [0], [1], [0, 0, 1, 1], [], []>} : vector<16x8xbf16>, vector<8x256xbf16>, vector<16x256xf32> -> vector<16x256xf32>
    %42 = arith.addf %37, %41 : vector<16x256xf32>
    %c8 = arith.constant 8 : index
    %c0_27 = arith.constant 0 : index
    %c0_28 = arith.constant 0 : index
    %43 = vector.load %arg1[%c8, %c0_27, %c0_28] : memref<25x16x8xbf16, #tpu.memory_space<vmem>>, vector<1x16x8xbf16>
    %44 = vector.shape_cast %43 : vector<1x16x8xbf16> to vector<16x8xbf16>
    %45 = vector.extract_strided_slice %1 {offsets = [0, 17], sizes = [8, 256], strides = [1, 1]} : vector<8x384xbf16> to vector<8x256xbf16>
    %cst_29 = arith.constant dense<0.000000e+00> : vector<16x256xf32>
    %46 = tpu.matmul %44, %45, %cst_29 {dimension_numbers = #tpu.dot_dimension_numbers<[1], [0], [0], [1], [0, 0, 1, 1], [], []>} : vector<16x8xbf16>, vector<8x256xbf16>, vector<16x256xf32> -> vector<16x256xf32>
    %47 = arith.addf %42, %46 : vector<16x256xf32>
    %c9 = arith.constant 9 : index
    %c0_30 = arith.constant 0 : index
    %c0_31 = arith.constant 0 : index
    %48 = vector.load %arg1[%c9, %c0_30, %c0_31] : memref<25x16x8xbf16, #tpu.memory_space<vmem>>, vector<1x16x8xbf16>
    %49 = vector.shape_cast %48 : vector<1x16x8xbf16> to vector<16x8xbf16>
    %50 = vector.extract_strided_slice %1 {offsets = [0, 18], sizes = [8, 256], strides = [1, 1]} : vector<8x384xbf16> to vector<8x256xbf16>
    %cst_32 = arith.constant dense<0.000000e+00> : vector<16x256xf32>
    %51 = tpu.matmul %49, %50, %cst_32 {dimension_numbers = #tpu.dot_dimension_numbers<[1], [0], [0], [1], [0, 0, 1, 1], [], []>} : vector<16x8xbf16>, vector<8x256xbf16>, vector<16x256xf32> -> vector<16x256xf32>
    %52 = arith.addf %47, %51 : vector<16x256xf32>
    %c10 = arith.constant 10 : index
    %c0_33 = arith.constant 0 : index
    %c0_34 = arith.constant 0 : index
    %53 = vector.load %arg1[%c10, %c0_33, %c0_34] : memref<25x16x8xbf16, #tpu.memory_space<vmem>>, vector<1x16x8xbf16>
    %54 = vector.shape_cast %53 : vector<1x16x8xbf16> to vector<16x8xbf16>
    %55 = vector.extract_strided_slice %1 {offsets = [0, 28], sizes = [8, 256], strides = [1, 1]} : vector<8x384xbf16> to vector<8x256xbf16>
    %cst_35 = arith.constant dense<0.000000e+00> : vector<16x256xf32>
    %56 = tpu.matmul %54, %55, %cst_35 {dimension_numbers = #tpu.dot_dimension_numbers<[1], [0], [0], [1], [0, 0, 1, 1], [], []>} : vector<16x8xbf16>, vector<8x256xbf16>, vector<16x256xf32> -> vector<16x256xf32>
    %57 = arith.addf %52, %56 : vector<16x256xf32>
    %c11 = arith.constant 11 : index
    %c0_36 = arith.constant 0 : index
    %c0_37 = arith.constant 0 : index
    %58 = vector.load %arg1[%c11, %c0_36, %c0_37] : memref<25x16x8xbf16, #tpu.memory_space<vmem>>, vector<1x16x8xbf16>
    %59 = vector.shape_cast %58 : vector<1x16x8xbf16> to vector<16x8xbf16>
    %60 = vector.extract_strided_slice %1 {offsets = [0, 29], sizes = [8, 256], strides = [1, 1]} : vector<8x384xbf16> to vector<8x256xbf16>
    %cst_38 = arith.constant dense<0.000000e+00> : vector<16x256xf32>
    %61 = tpu.matmul %59, %60, %cst_38 {dimension_numbers = #tpu.dot_dimension_numbers<[1], [0], [0], [1], [0, 0, 1, 1], [], []>} : vector<16x8xbf16>, vector<8x256xbf16>, vector<16x256xf32> -> vector<16x256xf32>
    %62 = arith.addf %57, %61 : vector<16x256xf32>
    %c12 = arith.constant 12 : index
    %c0_39 = arith.constant 0 : index
    %c0_40 = arith.constant 0 : index
    %63 = vector.load %arg1[%c12, %c0_39, %c0_40] : memref<25x16x8xbf16, #tpu.memory_space<vmem>>, vector<1x16x8xbf16>
    %64 = vector.shape_cast %63 : vector<1x16x8xbf16> to vector<16x8xbf16>
    %65 = vector.extract_strided_slice %1 {offsets = [0, 30], sizes = [8, 256], strides = [1, 1]} : vector<8x384xbf16> to vector<8x256xbf16>
    %cst_41 = arith.constant dense<0.000000e+00> : vector<16x256xf32>
    %66 = tpu.matmul %64, %65, %cst_41 {dimension_numbers = #tpu.dot_dimension_numbers<[1], [0], [0], [1], [0, 0, 1, 1], [], []>} : vector<16x8xbf16>, vector<8x256xbf16>, vector<16x256xf32> -> vector<16x256xf32>
    %67 = arith.addf %62, %66 : vector<16x256xf32>
    %c13 = arith.constant 13 : index
    %c0_42 = arith.constant 0 : index
    %c0_43 = arith.constant 0 : index
    %68 = vector.load %arg1[%c13, %c0_42, %c0_43] : memref<25x16x8xbf16, #tpu.memory_space<vmem>>, vector<1x16x8xbf16>
    %69 = vector.shape_cast %68 : vector<1x16x8xbf16> to vector<16x8xbf16>
    %70 = vector.extract_strided_slice %1 {offsets = [0, 31], sizes = [8, 256], strides = [1, 1]} : vector<8x384xbf16> to vector<8x256xbf16>
    %cst_44 = arith.constant dense<0.000000e+00> : vector<16x256xf32>
    %71 = tpu.matmul %69, %70, %cst_44 {dimension_numbers = #tpu.dot_dimension_numbers<[1], [0], [0], [1], [0, 0, 1, 1], [], []>} : vector<16x8xbf16>, vector<8x256xbf16>, vector<16x256xf32> -> vector<16x256xf32>
    %72 = arith.addf %67, %71 : vector<16x256xf32>
    %c14 = arith.constant 14 : index
    %c0_45 = arith.constant 0 : index
    %c0_46 = arith.constant 0 : index
    %73 = vector.load %arg1[%c14, %c0_45, %c0_46] : memref<25x16x8xbf16, #tpu.memory_space<vmem>>, vector<1x16x8xbf16>
    %74 = vector.shape_cast %73 : vector<1x16x8xbf16> to vector<16x8xbf16>
    %75 = vector.extract_strided_slice %1 {offsets = [0, 32], sizes = [8, 256], strides = [1, 1]} : vector<8x384xbf16> to vector<8x256xbf16>
    %cst_47 = arith.constant dense<0.000000e+00> : vector<16x256xf32>
    %76 = tpu.matmul %74, %75, %cst_47 {dimension_numbers = #tpu.dot_dimension_numbers<[1], [0], [0], [1], [0, 0, 1, 1], [], []>} : vector<16x8xbf16>, vector<8x256xbf16>, vector<16x256xf32> -> vector<16x256xf32>
    %77 = arith.addf %72, %76 : vector<16x256xf32>
    %c15 = arith.constant 15 : index
    %c0_48 = arith.constant 0 : index
    %c0_49 = arith.constant 0 : index
    %78 = vector.load %arg1[%c15, %c0_48, %c0_49] : memref<25x16x8xbf16, #tpu.memory_space<vmem>>, vector<1x16x8xbf16>
    %79 = vector.shape_cast %78 : vector<1x16x8xbf16> to vector<16x8xbf16>
    %80 = vector.extract_strided_slice %1 {offsets = [0, 42], sizes = [8, 256], strides = [1, 1]} : vector<8x384xbf16> to vector<8x256xbf16>
    %cst_50 = arith.constant dense<0.000000e+00> : vector<16x256xf32>
    %81 = tpu.matmul %79, %80, %cst_50 {dimension_numbers = #tpu.dot_dimension_numbers<[1], [0], [0], [1], [0, 0, 1, 1], [], []>} : vector<16x8xbf16>, vector<8x256xbf16>, vector<16x256xf32> -> vector<16x256xf32>
    %82 = arith.addf %77, %81 : vector<16x256xf32>
    %c16 = arith.constant 16 : index
    %c0_51 = arith.constant 0 : index
    %c0_52 = arith.constant 0 : index
    %83 = vector.load %arg1[%c16, %c0_51, %c0_52] : memref<25x16x8xbf16, #tpu.memory_space<vmem>>, vector<1x16x8xbf16>
    %84 = vector.shape_cast %83 : vector<1x16x8xbf16> to vector<16x8xbf16>
    %85 = vector.extract_strided_slice %1 {offsets = [0, 43], sizes = [8, 256], strides = [1, 1]} : vector<8x384xbf16> to vector<8x256xbf16>
    %cst_53 = arith.constant dense<0.000000e+00> : vector<16x256xf32>
    %86 = tpu.matmul %84, %85, %cst_53 {dimension_numbers = #tpu.dot_dimension_numbers<[1], [0], [0], [1], [0, 0, 1, 1], [], []>} : vector<16x8xbf16>, vector<8x256xbf16>, vector<16x256xf32> -> vector<16x256xf32>
    %87 = arith.addf %82, %86 : vector<16x256xf32>
    %c17 = arith.constant 17 : index
    %c0_54 = arith.constant 0 : index
    %c0_55 = arith.constant 0 : index
    %88 = vector.load %arg1[%c17, %c0_54, %c0_55] : memref<25x16x8xbf16, #tpu.memory_space<vmem>>, vector<1x16x8xbf16>
    %89 = vector.shape_cast %88 : vector<1x16x8xbf16> to vector<16x8xbf16>
    %90 = vector.extract_strided_slice %1 {offsets = [0, 44], sizes = [8, 256], strides = [1, 1]} : vector<8x384xbf16> to vector<8x256xbf16>
    %cst_56 = arith.constant dense<0.000000e+00> : vector<16x256xf32>
    %91 = tpu.matmul %89, %90, %cst_56 {dimension_numbers = #tpu.dot_dimension_numbers<[1], [0], [0], [1], [0, 0, 1, 1], [], []>} : vector<16x8xbf16>, vector<8x256xbf16>, vector<16x256xf32> -> vector<16x256xf32>
    %92 = arith.addf %87, %91 : vector<16x256xf32>
    %c18 = arith.constant 18 : index
    %c0_57 = arith.constant 0 : index
    %c0_58 = arith.constant 0 : index
    %93 = vector.load %arg1[%c18, %c0_57, %c0_58] : memref<25x16x8xbf16, #tpu.memory_space<vmem>>, vector<1x16x8xbf16>
    %94 = vector.shape_cast %93 : vector<1x16x8xbf16> to vector<16x8xbf16>
    %95 = vector.extract_strided_slice %1 {offsets = [0, 45], sizes = [8, 256], strides = [1, 1]} : vector<8x384xbf16> to vector<8x256xbf16>
    %cst_59 = arith.constant dense<0.000000e+00> : vector<16x256xf32>
    %96 = tpu.matmul %94, %95, %cst_59 {dimension_numbers = #tpu.dot_dimension_numbers<[1], [0], [0], [1], [0, 0, 1, 1], [], []>} : vector<16x8xbf16>, vector<8x256xbf16>, vector<16x256xf32> -> vector<16x256xf32>
    %97 = arith.addf %92, %96 : vector<16x256xf32>
    %c19 = arith.constant 19 : index
    %c0_60 = arith.constant 0 : index
    %c0_61 = arith.constant 0 : index
    %98 = vector.load %arg1[%c19, %c0_60, %c0_61] : memref<25x16x8xbf16, #tpu.memory_space<vmem>>, vector<1x16x8xbf16>
    %99 = vector.shape_cast %98 : vector<1x16x8xbf16> to vector<16x8xbf16>
    %100 = vector.extract_strided_slice %1 {offsets = [0, 46], sizes = [8, 256], strides = [1, 1]} : vector<8x384xbf16> to vector<8x256xbf16>
    %cst_62 = arith.constant dense<0.000000e+00> : vector<16x256xf32>
    %101 = tpu.matmul %99, %100, %cst_62 {dimension_numbers = #tpu.dot_dimension_numbers<[1], [0], [0], [1], [0, 0, 1, 1], [], []>} : vector<16x8xbf16>, vector<8x256xbf16>, vector<16x256xf32> -> vector<16x256xf32>
    %102 = arith.addf %97, %101 : vector<16x256xf32>
    %c20 = arith.constant 20 : index
    %c0_63 = arith.constant 0 : index
    %c0_64 = arith.constant 0 : index
    %103 = vector.load %arg1[%c20, %c0_63, %c0_64] : memref<25x16x8xbf16, #tpu.memory_space<vmem>>, vector<1x16x8xbf16>
    %104 = vector.shape_cast %103 : vector<1x16x8xbf16> to vector<16x8xbf16>
    %105 = vector.extract_strided_slice %1 {offsets = [0, 56], sizes = [8, 256], strides = [1, 1]} : vector<8x384xbf16> to vector<8x256xbf16>
    %cst_65 = arith.constant dense<0.000000e+00> : vector<16x256xf32>
    %106 = tpu.matmul %104, %105, %cst_65 {dimension_numbers = #tpu.dot_dimension_numbers<[1], [0], [0], [1], [0, 0, 1, 1], [], []>} : vector<16x8xbf16>, vector<8x256xbf16>, vector<16x256xf32> -> vector<16x256xf32>
    %107 = arith.addf %102, %106 : vector<16x256xf32>
    %c21 = arith.constant 21 : index
    %c0_66 = arith.constant 0 : index
    %c0_67 = arith.constant 0 : index
    %108 = vector.load %arg1[%c21, %c0_66, %c0_67] : memref<25x16x8xbf16, #tpu.memory_space<vmem>>, vector<1x16x8xbf16>
    %109 = vector.shape_cast %108 : vector<1x16x8xbf16> to vector<16x8xbf16>
    %110 = vector.extract_strided_slice %1 {offsets = [0, 57], sizes = [8, 256], strides = [1, 1]} : vector<8x384xbf16> to vector<8x256xbf16>
    %cst_68 = arith.constant dense<0.000000e+00> : vector<16x256xf32>
    %111 = tpu.matmul %109, %110, %cst_68 {dimension_numbers = #tpu.dot_dimension_numbers<[1], [0], [0], [1], [0, 0, 1, 1], [], []>} : vector<16x8xbf16>, vector<8x256xbf16>, vector<16x256xf32> -> vector<16x256xf32>
    %112 = arith.addf %107, %111 : vector<16x256xf32>
    %c22 = arith.constant 22 : index
    %c0_69 = arith.constant 0 : index
    %c0_70 = arith.constant 0 : index
    %113 = vector.load %arg1[%c22, %c0_69, %c0_70] : memref<25x16x8xbf16, #tpu.memory_space<vmem>>, vector<1x16x8xbf16>
    %114 = vector.shape_cast %113 : vector<1x16x8xbf16> to vector<16x8xbf16>
    %115 = vector.extract_strided_slice %1 {offsets = [0, 58], sizes = [8, 256], strides = [1, 1]} : vector<8x384xbf16> to vector<8x256xbf16>
    %cst_71 = arith.constant dense<0.000000e+00> : vector<16x256xf32>
    %116 = tpu.matmul %114, %115, %cst_71 {dimension_numbers = #tpu.dot_dimension_numbers<[1], [0], [0], [1], [0, 0, 1, 1], [], []>} : vector<16x8xbf16>, vector<8x256xbf16>, vector<16x256xf32> -> vector<16x256xf32>
    %117 = arith.addf %112, %116 : vector<16x256xf32>
    %c23 = arith.constant 23 : index
    %c0_72 = arith.constant 0 : index
    %c0_73 = arith.constant 0 : index
    %118 = vector.load %arg1[%c23, %c0_72, %c0_73] : memref<25x16x8xbf16, #tpu.memory_space<vmem>>, vector<1x16x8xbf16>
    %119 = vector.shape_cast %118 : vector<1x16x8xbf16> to vector<16x8xbf16>
    %120 = vector.extract_strided_slice %1 {offsets = [0, 59], sizes = [8, 256], strides = [1, 1]} : vector<8x384xbf16> to vector<8x256xbf16>
    %cst_74 = arith.constant dense<0.000000e+00> : vector<16x256xf32>
    %121 = tpu.matmul %119, %120, %cst_74 {dimension_numbers = #tpu.dot_dimension_numbers<[1], [0], [0], [1], [0, 0, 1, 1], [], []>} : vector<16x8xbf16>, vector<8x256xbf16>, vector<16x256xf32> -> vector<16x256xf32>
    %122 = arith.addf %117, %121 : vector<16x256xf32>
    %c24 = arith.constant 24 : index
    %c0_75 = arith.constant 0 : index
    %c0_76 = arith.constant 0 : index
    %123 = vector.load %arg1[%c24, %c0_75, %c0_76] : memref<25x16x8xbf16, #tpu.memory_space<vmem>>, vector<1x16x8xbf16>
    %124 = vector.shape_cast %123 : vector<1x16x8xbf16> to vector<16x8xbf16>
    %125 = vector.extract_strided_slice %1 {offsets = [0, 60], sizes = [8, 256], strides = [1, 1]} : vector<8x384xbf16> to vector<8x256xbf16>
    %cst_77 = arith.constant dense<0.000000e+00> : vector<16x256xf32>
    %126 = tpu.matmul %124, %125, %cst_77 {dimension_numbers = #tpu.dot_dimension_numbers<[1], [0], [0], [1], [0, 0, 1, 1], [], []>} : vector<16x8xbf16>, vector<8x256xbf16>, vector<16x256xf32> -> vector<16x256xf32>
    %127 = arith.addf %122, %126 : vector<16x256xf32>
    %c0_78 = arith.constant 0 : index
    %c0_79 = arith.constant 0 : index
    %128 = vector.load %arg2[%c0_78, %c0_79] : memref<16x1xf32, #tpu.memory_space<vmem>>, vector<16x1xf32>
    %129 = vector.broadcast %128 : vector<16x1xf32> to vector<16x256xf32>
    %130 = arith.addf %127, %129 : vector<16x256xf32>
    %cst_80 = arith.constant 0.000000e+00 : f32
    %131 = vector.broadcast %cst_80 : f32 to vector<16x256xf32>
    %132 = arith.maximumf %130, %131 : vector<16x256xf32>
    %133 = arith.truncf %132 : vector<16x256xf32> to vector<16x256xbf16>
    %c0_81 = arith.constant 0 : index
    %c0_82 = arith.constant 0 : index
    %c0_83 = arith.constant 0 : index
    %134 = vector.load %arg4[%c0_81, %c0_82, %c0_83] : memref<1x16x256xbf16, #tpu.memory_space<vmem>>, vector<1x16x256xbf16>
    %135 = vector.shape_cast %134 : vector<1x16x256xbf16> to vector<16x256xbf16>
    %136 = vector.shape_cast %133 : vector<16x256xbf16> to vector<1x16x256xbf16>
    tpu.vector_store %arg4[%c0_81, %c0_82, %c0_83], %136 {strides = array<i32>} : memref<1x16x256xbf16, #tpu.memory_space<vmem>>, vector<1x16x256xbf16>,
    return
  }
  func.func @transform_0(%arg0: i32) -> (i32, i32, i32) {
    %c0_i32 = arith.constant 0 : i32
    %c0_i32_0 = arith.constant 0 : i32
    %c0_i32_1 = arith.constant 0 : i32
    %c0_i32_2 = arith.constant 0 : i32
    return %c0_i32, %c0_i32_0, %c0_i32_1 : i32, i32, i32
  }
  func.func @transform_1(%arg0: i32) -> (i32, i32) {
    %c0_i32 = arith.constant 0 : i32
    %c0_i32_0 = arith.constant 0 : i32
    %c0_i32_1 = arith.constant 0 : i32
    return %c0_i32, %c0_i32_0 : i32, i32
  }
  func.func @transform_2(%arg0: i32) -> (i32, i32, i32) {
    %c0_i32 = arith.constant 0 : i32
    %c0_i32_0 = arith.constant 0 : i32
    %c0_i32_1 = arith.constant 0 : i32
    return %arg0, %c0_i32, %c0_i32_0 : i32, i32, i32
  }
  func.func @transform_3(%arg0: i32) -> (i32, i32, i32) {
    %c0_i32 = arith.constant 0 : i32
    %c0_i32_0 = arith.constant 0 : i32
    %c0_i32_1 = arith.constant 0 : i32
    return %arg0, %c0_i32, %c0_i32_0 : i32, i32, i32
  }
}

module attributes {stable_mosaic.version = 11 : i64} {
  func.func @_mlp3_kernel(%arg0: i32, %arg1: memref<120x400xbf16, #tpu.memory_space<vmem>>, %arg2: memref<120x1xf32, #tpu.memory_space<vmem>>, %arg3: memref<84x120xbf16, #tpu.memory_space<vmem>>, %arg4: memref<84x1xf32, #tpu.memory_space<vmem>>, %arg5: memref<10x84xbf16, #tpu.memory_space<vmem>>, %arg6: memref<10x1xf32, #tpu.memory_space<vmem>>, %arg7: memref<400x128xbf16, #tpu.memory_space<vmem>>, %arg8: memref<10x128xf32, #tpu.memory_space<vmem>>) attributes {dimension_semantics = [#tpu.dimension_semantics<arbitrary>], iteration_bounds = array<i64: 1>, scalar_prefetch = 0 : i64, scratch_operands = 0 : i64, tpu.core_type = #tpu.core_type<tc>, window_params = [{pipeline_mode = #tpu.pipeline_mode<synchronous>, transform_indices = @transform_0, window_bounds = array<i64: 120, 400>}, {pipeline_mode = #tpu.pipeline_mode<synchronous>, transform_indices = @transform_1, window_bounds = array<i64: 120, 1>}, {pipeline_mode = #tpu.pipeline_mode<synchronous>, transform_indices = @transform_2, window_bounds = array<i64: 84, 120>}, {pipeline_mode = #tpu.pipeline_mode<synchronous>, transform_indices = @transform_3, window_bounds = array<i64: 84, 1>}, {pipeline_mode = #tpu.pipeline_mode<synchronous>, transform_indices = @transform_4, window_bounds = array<i64: 10, 84>}, {pipeline_mode = #tpu.pipeline_mode<synchronous>, transform_indices = @transform_5, window_bounds = array<i64: 10, 1>}, {pipeline_mode = #tpu.pipeline_mode<synchronous>, transform_indices = @transform_6, window_bounds = array<i64: 400, 128>}, {pipeline_mode = #tpu.pipeline_mode<synchronous>, transform_indices = @transform_7, window_bounds = array<i64: 10, 128>}]} {
    %c0 = arith.constant 0 : index
    %c0_0 = arith.constant 0 : index
    %0 = vector.load %arg1[%c0, %c0_0] : memref<120x400xbf16, #tpu.memory_space<vmem>>, vector<120x400xbf16>
    %c0_1 = arith.constant 0 : index
    %c0_2 = arith.constant 0 : index
    %1 = vector.load %arg7[%c0_1, %c0_2] : memref<400x128xbf16, #tpu.memory_space<vmem>>, vector<400x128xbf16>
    %cst = arith.constant dense<0.000000e+00> : vector<120x128xf32>
    %2 = tpu.matmul %0, %1, %cst {dimension_numbers = #tpu.dot_dimension_numbers<[1], [0], [0], [1], [0, 0, 1, 1], [], []>} : vector<120x400xbf16>, vector<400x128xbf16>, vector<120x128xf32> -> vector<120x128xf32>
    %c0_3 = arith.constant 0 : index
    %c0_4 = arith.constant 0 : index
    %3 = vector.load %arg2[%c0_3, %c0_4] : memref<120x1xf32, #tpu.memory_space<vmem>>, vector<120x1xf32>
    %4 = vector.broadcast %3 : vector<120x1xf32> to vector<120x128xf32>
    %5 = arith.addf %2, %4 : vector<120x128xf32>
    %cst_5 = arith.constant 0.000000e+00 : f32
    %6 = vector.broadcast %cst_5 : f32 to vector<120x128xf32>
    %7 = arith.maximumf %5, %6 : vector<120x128xf32>
    %8 = arith.truncf %7 : vector<120x128xf32> to vector<120x128xbf16>
    %c0_6 = arith.constant 0 : index
    %c0_7 = arith.constant 0 : index
    %9 = vector.load %arg3[%c0_6, %c0_7] : memref<84x120xbf16, #tpu.memory_space<vmem>>, vector<84x120xbf16>
    %cst_8 = arith.constant dense<0.000000e+00> : vector<84x128xf32>
    %10 = tpu.matmul %9, %8, %cst_8 {dimension_numbers = #tpu.dot_dimension_numbers<[1], [0], [0], [1], [0, 0, 1, 1], [], []>} : vector<84x120xbf16>, vector<120x128xbf16>, vector<84x128xf32> -> vector<84x128xf32>
    %c0_9 = arith.constant 0 : index
    %c0_10 = arith.constant 0 : index
    %11 = vector.load %arg4[%c0_9, %c0_10] : memref<84x1xf32, #tpu.memory_space<vmem>>, vector<84x1xf32>
    %12 = vector.broadcast %11 : vector<84x1xf32> to vector<84x128xf32>
    %13 = arith.addf %10, %12 : vector<84x128xf32>
    %cst_11 = arith.constant 0.000000e+00 : f32
    %14 = vector.broadcast %cst_11 : f32 to vector<84x128xf32>
    %15 = arith.maximumf %13, %14 : vector<84x128xf32>
    %16 = arith.truncf %15 : vector<84x128xf32> to vector<84x128xbf16>
    %c0_12 = arith.constant 0 : index
    %c0_13 = arith.constant 0 : index
    %17 = vector.load %arg5[%c0_12, %c0_13] : memref<10x84xbf16, #tpu.memory_space<vmem>>, vector<10x84xbf16>
    %cst_14 = arith.constant dense<0.000000e+00> : vector<10x128xf32>
    %18 = tpu.matmul %17, %16, %cst_14 {dimension_numbers = #tpu.dot_dimension_numbers<[1], [0], [0], [1], [0, 0, 1, 1], [], []>} : vector<10x84xbf16>, vector<84x128xbf16>, vector<10x128xf32> -> vector<10x128xf32>
    %c0_15 = arith.constant 0 : index
    %c0_16 = arith.constant 0 : index
    %19 = vector.load %arg6[%c0_15, %c0_16] : memref<10x1xf32, #tpu.memory_space<vmem>>, vector<10x1xf32>
    %20 = vector.broadcast %19 : vector<10x1xf32> to vector<10x128xf32>
    %21 = arith.addf %18, %20 : vector<10x128xf32>
    %c0_17 = arith.constant 0 : index
    %c0_18 = arith.constant 0 : index
    %22 = vector.load %arg8[%c0_17, %c0_18] : memref<10x128xf32, #tpu.memory_space<vmem>>, vector<10x128xf32>
    tpu.vector_store %arg8[%c0_17, %c0_18], %21 {strides = array<i32>} : memref<10x128xf32, #tpu.memory_space<vmem>>, vector<10x128xf32>,
    return
  }
  func.func @transform_0(%arg0: i32) -> (i32, i32) {
    %c0_i32 = arith.constant 0 : i32
    %c0_i32_0 = arith.constant 0 : i32
    %c0_i32_1 = arith.constant 0 : i32
    return %c0_i32, %c0_i32_0 : i32, i32
  }
  func.func @transform_1(%arg0: i32) -> (i32, i32) {
    %c0_i32 = arith.constant 0 : i32
    %c0_i32_0 = arith.constant 0 : i32
    %c0_i32_1 = arith.constant 0 : i32
    return %c0_i32, %c0_i32_0 : i32, i32
  }
  func.func @transform_2(%arg0: i32) -> (i32, i32) {
    %c0_i32 = arith.constant 0 : i32
    %c0_i32_0 = arith.constant 0 : i32
    %c0_i32_1 = arith.constant 0 : i32
    return %c0_i32, %c0_i32_0 : i32, i32
  }
  func.func @transform_3(%arg0: i32) -> (i32, i32) {
    %c0_i32 = arith.constant 0 : i32
    %c0_i32_0 = arith.constant 0 : i32
    %c0_i32_1 = arith.constant 0 : i32
    return %c0_i32, %c0_i32_0 : i32, i32
  }
  func.func @transform_4(%arg0: i32) -> (i32, i32) {
    %c0_i32 = arith.constant 0 : i32
    %c0_i32_0 = arith.constant 0 : i32
    %c0_i32_1 = arith.constant 0 : i32
    return %c0_i32, %c0_i32_0 : i32, i32
  }
  func.func @transform_5(%arg0: i32) -> (i32, i32) {
    %c0_i32 = arith.constant 0 : i32
    %c0_i32_0 = arith.constant 0 : i32
    %c0_i32_1 = arith.constant 0 : i32
    return %c0_i32, %c0_i32_0 : i32, i32
  }
  func.func @transform_6(%arg0: i32) -> (i32, i32) {
    %c0_i32 = arith.constant 0 : i32
    %c0_i32_0 = arith.constant 0 : i32
    %c0_i32_1 = arith.constant 0 : i32
    return %c0_i32, %c0_i32_0 : i32, i32
  }
  func.func @transform_7(%arg0: i32) -> (i32, i32) {
    %c0_i32 = arith.constant 0 : i32
    %c0_i32_0 = arith.constant 0 : i32
    %c0_i32_1 = arith.constant 0 : i32
    return %c0_i32, %c0_i32_0 : i32, i32
  }
}

</mosaic_0001>

<llo_original>
// kernel: forward.4
$region0: #{forward.4}
  #allocation0 [shape = 'u32[]', space=smem, size = 0x4, offset = 0x4, fixed_abs, tag = 'smem constant byte address 0x4 - core index']
  #allocation1 [shape = 'u32[72,128]{1,0:T(1,128)}', space=vmem, size = 0x9000, scoped, tag = 'internal scratch']
  %s0 = inlined_call_operand.vmem [shape: bf16[25,16,8], index: 0, kind: input, shape index: {}]
  %s1 = inlined_call_operand.vmem [shape: f32[16,1], index: 1, kind: input, shape index: {}]
  %s2 = inlined_call_operand.vmem [shape: bf16[2,8,384], index: 2, kind: input, shape index: {}]
  %s3 = inlined_call_operand.vmem [shape: bf16[2,16,256], index: 3, kind: output, shape index: {}]
  %s4 = sld [smem:[#allocation0]]
  $region45: #{forward.4} parent=0
    _
  %s6 = ssub.s32 1, %s4
  %s7 = scalar_select 0, %s6, %s4
  loop: start=0, step=1, limit=4
  $region2: #{forward.4} parent=0 // loop_pre_header
    _
  $region3: #{forward.4} parent=0 // loop_header
    %s9 = sphi 0, %s13
    %p10 = scmp.ge.s32.totalorder %s9, 4
    %s17 = sphi 0, %s17
    %s19 = sphi 0, %s17
    %s20 = sphi 0, %s19
    %s34 = sphi 0, %s20
    %s38 = sphi 0, %s38
    %s40 = sphi 0, %s38
    %s41 = sphi 0, %s40
    %s55 = sphi 0, %s41
    %s61 = sphi 0, %s63
    %s64 = sphi 0, %s61
    %s65 = sphi 0, %s64
    %s81 = sphi 0, %s65
    %s87 = sphi 0, %s89
    %s90 = sphi 0, %s87
    %s91 = sphi 0, %s90
    %s107 = sphi 0, %s91
  $region4: #{forward.4} parent=0 // loop_header_branch
    %12 = sbr.rel (%p10) target = $region8
  $region5: #{forward.4} parent=0 // loop_body
    %s14 = ssub.s32 %s9, 1
    %s15 = ssub.s32 %s9, 2
    %s16 = sadd.s32 %s9, 1
    %s18 = sadd.s32 %s17, 1
    %p21 = scmp.eq.s32.totalorder %s9, 1
    %p22 = scmp.ne.s32.totalorder %s17, %s19
    %p23 = scmp.eq.s32.totalorder %s9, 0
    %p24 = por %p22, %p23
    %p25 = scmp.ne.s32.totalorder %s17, %s19
    %p26 = scmp.eq.s32.totalorder %s14, 1
    %p27 = por %p25, %p26
    %p28 = scmp.ne.s32.totalorder %s19, %s20
    %p29 = scmp.eq.s32.totalorder %s14, 0
    %p30 = por %p28, %p29
    %p31 = scmp.ne.s32.totalorder %s19, %s20
    %p32 = scmp.eq.s32.totalorder %s15, 1
    %p33 = por %p31, %p32
    %p35 = scmp.ne.s32.totalorder %s20, %s34
    %p36 = scmp.eq.s32.totalorder %s15, 0
    %p37 = por %p35, %p36
    %s39 = sadd.s32 %s38, 1
    %p42 = scmp.eq.s32.totalorder %s9, 1
    %p43 = scmp.ne.s32.totalorder %s38, %s40
    %p44 = scmp.eq.s32.totalorder %s9, 0
    %p45 = por %p43, %p44
    %p46 = scmp.ne.s32.totalorder %s38, %s40
    %p47 = scmp.eq.s32.totalorder %s14, 1
    %p48 = por %p46, %p47
    %p49 = scmp.ne.s32.totalorder %s40, %s41
    %p50 = scmp.eq.s32.totalorder %s14, 0
    %p51 = por %p49, %p50
    %p52 = scmp.ne.s32.totalorder %s40, %s41
    %p53 = scmp.eq.s32.totalorder %s15, 1
    %p54 = por %p52, %p53
    %p56 = scmp.ne.s32.totalorder %s41, %s55
    %p57 = scmp.eq.s32.totalorder %s15, 0
    %p58 = por %p56, %p57
    %s59 = ssub.s32 %s9, %s16
    %p60 = scmp.eq.s32.totalorder %s59, 0
    %s62 = sadd.s32 %s61, 1
    %s63 = scalar_select %p60, %s61, %s62
    %p66 = pneg %p60
    %p67 = scmp.eq.s32.totalorder %s9, 1
    %p68 = por %p66, %p67
    %p69 = scmp.ne.s32.totalorder %s61, %s64
    %p70 = scmp.eq.s32.totalorder %s9, 0
    %p71 = por %p69, %p70
    %p72 = scmp.ne.s32.totalorder %s61, %s64
    %p73 = scmp.eq.s32.totalorder %s14, 1
    %p74 = por %p72, %p73
    %p75 = scmp.ne.s32.totalorder %s64, %s65
    %p76 = scmp.eq.s32.totalorder %s14, 0
    %p77 = por %p75, %p76
    %p78 = scmp.ne.s32.totalorder %s64, %s65
    %p79 = scmp.eq.s32.totalorder %s15, 1
    %p80 = por %p78, %p79
    %p82 = scmp.ne.s32.totalorder %s65, %s81
    %p83 = scmp.eq.s32.totalorder %s15, 0
    %p84 = por %p82, %p83
    %s85 = ssub.s32 %s9, %s16
    %p86 = scmp.eq.s32.totalorder %s85, 0
    %s88 = sadd.s32 %s87, 1
    %s89 = scalar_select %p86, %s87, %s88
    %p92 = pneg %p86
    %p93 = scmp.eq.s32.totalorder %s9, 1
    %p94 = por %p92, %p93
    %p95 = scmp.ne.s32.totalorder %s87, %s90
    %p96 = scmp.eq.s32.totalorder %s9, 0
    %p97 = por %p95, %p96
    %p98 = scmp.ne.s32.totalorder %s87, %s90
    %p99 = scmp.eq.s32.totalorder %s14, 1
    %p100 = por %p98, %p99
    %p101 = scmp.ne.s32.totalorder %s90, %s91
    %p102 = scmp.eq.s32.totalorder %s14, 0
    %p103 = por %p101, %p102
    %p104 = scmp.ne.s32.totalorder %s90, %s91
    %p105 = scmp.eq.s32.totalorder %s15, 1
    %p106 = por %p104, %p105
    %p108 = scmp.ne.s32.totalorder %s91, %s107
    %p109 = scmp.eq.s32.totalorder %s15, 0
    %p110 = por %p108, %p109
    %p111 = scmp.le.s32.totalorder 1, %s9
    %p112 = scmp.lt.s32.totalorder %s9, 3
    %p113 = pnand %p111, %p112
    %p114 = pneg %p113
    // Predicated region
    $region9: #{forward.4} parent=5 // pred_check
      _
    $region10: #{forward.4} parent=5 // pred_check_branch
      %116 = sbr.rel (%p113) target = $region12
    $region11: #{forward.4} parent=5 // pred_region
      %s117 = ssub.s32 %s9, 1
      // Predicated region
      $region13: #{forward.4} parent=11 // pred_check
        %p118 = pneg %p30
      $region14: #{forward.4} parent=11 // pred_check_branch
        %120 = sbr.rel (%p118) target = $region16
      $region15: #{forward.4} parent=11 // pred_region
        _
      $region16: #{forward.4} parent=11 // pred_fallthru
        _
      // Predicated region
      $region17: #{forward.4} parent=11 // pred_check
        %p121 = pneg %p51
      $region18: #{forward.4} parent=11 // pred_check_branch
        %123 = sbr.rel (%p121) target = $region20
      $region19: #{forward.4} parent=11 // pred_region
        _
      $region20: #{forward.4} parent=11 // pred_fallthru
        _
    $region12: #{forward.4} parent=5 // pred_fallthru
      _
    %p124 = scmp.lt.s32.totalorder %s9, 2
    // Predicated region
    $region21: #{forward.4} parent=5 // pred_check
      %p125 = pneg %p124
    $region22: #{forward.4} parent=5 // pred_check_branch
      %127 = sbr.rel (%p125) target = $region24
    $region23: #{forward.4} parent=5 // pred_region
      // Predicated region
      $region25: #{forward.4} parent=23 // pred_check
        %p128 = pneg %p71
      $region26: #{forward.4} parent=23 // pred_check_branch
        %130 = sbr.rel (%p128) target = $region28
      $region27: #{forward.4} parent=23 // pred_region
        %p131 = scmp.lt.s32.totalorder %s9, 1
        %s132 = scalar_select %p131, %s9, 1
        %s133 = smul.addr %s132, 3
        %s134 = smul.addr %s133, 4
        %s135 = scalar_lea.vmem %s2, %s134
      $region28: #{forward.4} parent=23 // pred_fallthru
        _
    $region24: #{forward.4} parent=5 // pred_fallthru
      _
    %p136 = scmp.le.s32.totalorder 1, %s9
    %p137 = scmp.lt.s32.totalorder %s9, 3
    %p138 = pnand %p136, %p137
    %p139 = pneg %p138
    // Predicated region
    $region29: #{forward.4} parent=5 // pred_check
      _
    $region30: #{forward.4} parent=5 // pred_check_branch
      %141 = sbr.rel (%p138) target = $region32
    $region31: #{forward.4} parent=5 // pred_region
      %s142 = ssub.s32 %s9, 1
      %p143 = pneg %p30
      %p144 = pneg %p27
      %p145 = pneg %p51
      %p146 = pneg %p48
      %p147 = scmp.lt.s32.totalorder %s14, 1
      %s148 = scalar_select %p147, %s14, 1
      %s149 = smul.addr %s148, 3
      %s150 = smul.addr %s149, 4
      %s151 = scalar_lea.vmem %s2, %s150
      %p152 = pneg %p77
      %p153 = pneg %p74
      %p154 = pneg %p103
      %p155 = pneg %p100
      %p156 = scmp.lt.s32.totalorder %s14, 1
      %s157 = scalar_select %p156, %s14, 1
      %s158 = smul.addr %s157, 4
      %s159 = smul.addr %s158, 4
      %s160 = scalar_lea.vmem %s3, %s159
      %p161 = scmp.lt.s32.totalorder %s14, 1
      %s162 = scalar_select %p161, %s14, 1
      %s163 = smul.addr %s162, 3
      %s164 = smul.addr %s163, 4
      %s165 = scalar_lea.vmem %s2, %s164
      %p166 = scmp.lt.s32.totalorder %s14, 1
      %s167 = scalar_select %p166, %s14, 1
      %s168 = smul.addr %s167, 4
      %s169 = smul.addr %s168, 4
      %s170 = scalar_lea.vmem %s3, %s169
      %v172 = vld [vmem:[%s165] sm:$0xff]
      %v173 = vld [vmem:[%s165 + $0x8] sm:$0xf]
      %v174 = vld [vmem:[%s0] sm:$0xf]
      %v175 = vld [vmem:[%s0 + $0x4] sm:$0xf]
      %s176 = scalar_lea.vmem %s0, 8
      %v177 = vld [vmem:[%s176] sm:$0xf]
      %v178 = vld [vmem:[%s176 + $0x4] sm:$0xf]
      %v181 = vunpack.c.l.b16 %v177
      %v182 = vunpack.c.l.b16 %v178
      %v183 = vpack.c.b16 %v182, %v181
      %v186 = vunpack.c.l.b16 %v172
      %v187 = vunpack.c.h.b16 %v172
      %v188 = vunpack.c.l.b16 %v173
      %v189 = vpack.c.b16 %v186, %v186
      %v190 = vpack.c.b16 %v187, %v187
      %v191 = vpack.c.b16 %v188, %v188
      %192 = vrot.lane.b32.xlu0 %v189, 127
      %v193 = vpop.permute.xlu0 %192
      %194 = vrot.lane.b32.xlu0 %v190, 127
      %v195 = vpop.permute.xlu0 %194
      %196 = vrot.lane.b32.xlu0 %v191, 127
      %v197 = vpop.permute.xlu0 %196
      %vm198 = vcmask 1039360
      %v199 = vsel %vm198, %v193, %v195
      %v200 = vsel %vm198, %v195, %v197
      %vm201 = vcmask 64512
      %v203 = vsel %vm201, %v183, 0
      %vm205 = vcmask 1043456
      %v207 = vsel %vm205, %v199, 0
      %v210 = vsel %vm205, %v200, 0
      %212 = vmatpush.bf16.msra.mxu0 0
      %213 = vmatpush.bf16.msra.mxu0 0
      %214 = vmatpush.bf16.msra.mxu0 0
      %215 = vmatpush.bf16.msra.mxu0 0
      %216 = vmatpush.bf16.msra.mxu0 0
      %217 = vmatpush.bf16.msra.mxu0 0
      %218 = vmatpush.bf16.msra.mxu0 0
      %219 = vmatpush.bf16.msra.mxu0 %v207
      %220 = vmatmul.bf16.gmra.mxu0 %v203
      %v221 = vpop.f32.mrf.mxu0
      %v222 = vadd.f32 0.0, %v221
      %v223 = vpop.f32.mrf.mxu0
      %v224 = vadd.f32 0.0, %v223
      %225 = vdwg.mxu0
      %226 = vmatpush.bf16.msra.mxu0 0
      %227 = vmatpush.bf16.msra.mxu0 0
      %228 = vmatpush.bf16.msra.mxu0 0
      %229 = vmatpush.bf16.msra.mxu0 0
      %230 = vmatpush.bf16.msra.mxu0 0
      %231 = vmatpush.bf16.msra.mxu0 0
      %232 = vmatpush.bf16.msra.mxu0 0
      %233 = vmatpush.bf16.msra.mxu0 %v210
      %234 = vmatmul.bf16.gmra.mxu0 %v203
      %v235 = vpop.f32.mrf.mxu0
      %v236 = vadd.f32 0.0, %v235
      %v237 = vpop.f32.mrf.mxu0
      %v238 = vadd.f32 0.0, %v237
      %239 = vdwg.mxu0
      %v242 = vunpack.c.l.b16 %v174
      %v243 = vunpack.c.l.b16 %v175
      %v244 = vpack.c.b16 %v243, %v242
      %v246 = vsel %vm201, %v244, 0
      %v249 = vsel %vm205, %v189, 0
      %v252 = vsel %vm205, %v190, 0
      %254 = vmatpush.bf16.msra.mxu0 0
      %255 = vmatpush.bf16.msra.mxu0 0
      %256 = vmatpush.bf16.msra.mxu0 0
      %257 = vmatpush.bf16.msra.mxu0 0
      %258 = vmatpush.bf16.msra.mxu0 0
      %259 = vmatpush.bf16.msra.mxu0 0
      %260 = vmatpush.bf16.msra.mxu0 0
      %261 = vmatpush.bf16.msra.mxu0 %v249
      %262 = vmatmul.bf16.gmra.mxu0 %v246
      %v263 = vpop.f32.mrf.mxu0
      %v264 = vadd.f32 %v222, %v263
      %v265 = vpop.f32.mrf.mxu0
      %v266 = vadd.f32 %v224, %v265
      %267 = vdwg.mxu0
      %268 = vmatpush.bf16.msra.mxu0 0
      %269 = vmatpush.bf16.msra.mxu0 0
      %270 = vmatpush.bf16.msra.mxu0 0
      %271 = vmatpush.bf16.msra.mxu0 0
      %272 = vmatpush.bf16.msra.mxu0 0
      %273 = vmatpush.bf16.msra.mxu0 0
      %274 = vmatpush.bf16.msra.mxu0 0
      %275 = vmatpush.bf16.msra.mxu0 %v252
      %276 = vmatmul.bf16.gmra.mxu0 %v246
      %v277 = vpop.f32.mrf.mxu0
      %v278 = vadd.f32 %v236, %v277
      %v279 = vpop.f32.mrf.mxu0
      %v280 = vadd.f32 %v238, %v279
      %281 = vdwg.mxu0
      %s282 = scalar_lea.vmem %s0, 16
      %v283 = vld [vmem:[%s282] sm:$0xf]
      %v284 = vld [vmem:[%s282 + $0x4] sm:$0xf]
      %v287 = vunpack.c.l.b16 %v283
      %v288 = vunpack.c.l.b16 %v284
      %v289 = vpack.c.b16 %v288, %v287
      %290 = vrot.lane.b32.xlu0 %v189, 126
      %v291 = vpop.permute.xlu0 %290
      %292 = vrot.lane.b32.xlu0 %v190, 126
      %v293 = vpop.permute.xlu0 %292
      %294 = vrot.lane.b32.xlu0 %v191, 126
      %v295 = vpop.permute.xlu0 %294
      %vm296 = vcmask 1031168
      %v297 = vsel %vm296, %v291, %v293
      %v298 = vsel %vm296, %v293, %v295
      %v300 = vsel %vm201, %v289, 0
      %v303 = vsel %vm205, %v297, 0
      %v306 = vsel %vm205, %v298, 0
      %308 = vmatpush.bf16.msra.mxu0 0
      %309 = vmatpush.bf16.msra.mxu0 0
      %310 = vmatpush.bf16.msra.mxu0 0
      %311 = vmatpush.bf16.msra.mxu0 0
      %312 = vmatpush.bf16.msra.mxu0 0
      %313 = vmatpush.bf16.msra.mxu0 0
      %314 = vmatpush.bf16.msra.mxu0 0
      %315 = vmatpush.bf16.msra.mxu0 %v303
      %316 = vmatmul.bf16.gmra.mxu0 %v300
      %v317 = vpop.f32.mrf.mxu0
      %v318 = vadd.f32 0.0, %v317
      %v319 = vpop.f32.mrf.mxu0
      %v320 = vadd.f32 0.0, %v319
      %321 = vdwg.mxu0
      %322 = vmatpush.bf16.msra.mxu0 0
      %323 = vmatpush.bf16.msra.mxu0 0
      %324 = vmatpush.bf16.msra.mxu0 0
      %325 = vmatpush.bf16.msra.mxu0 0
      %326 = vmatpush.bf16.msra.mxu0 0
      %327 = vmatpush.bf16.msra.mxu0 0
      %328 = vmatpush.bf16.msra.mxu0 0
      %329 = vmatpush.bf16.msra.mxu0 %v306
      %330 = vmatmul.bf16.gmra.mxu0 %v300
      %v331 = vpop.f32.mrf.mxu0
      %v332 = vadd.f32 0.0, %v331
      %v333 = vpop.f32.mrf.mxu0
      %v334 = vadd.f32 0.0, %v333
      %335 = vdwg.mxu0
      %v336 = vadd.f32 %v264, %v318
      %v337 = vadd.f32 %v278, %v332
      %v338 = vadd.f32 %v266, %v320
      %v339 = vadd.f32 %v280, %v334
      %s340 = scalar_lea.vmem %s0, 24
      %v341 = vld [vmem:[%s340] sm:$0xf]
      %v342 = vld [vmem:[%s340 + $0x4] sm:$0xf]
      %v345 = vunpack.c.l.b16 %v341
      %v346 = vunpack.c.l.b16 %v342
      %v347 = vpack.c.b16 %v346, %v345
      %348 = vrot.lane.b32.xlu0 %v189, 125
      %v349 = vpop.permute.xlu0 %348
      %350 = vrot.lane.b32.xlu0 %v190, 125
      %v351 = vpop.permute.xlu0 %350
      %352 = vrot.lane.b32.xlu0 %v191, 125
      %v353 = vpop.permute.xlu0 %352
      %vm354 = vcmask 1022976
      %v355 = vsel %vm354, %v349, %v351
      %v356 = vsel %vm354, %v351, %v353
      %v358 = vsel %vm201, %v347, 0
      %v361 = vsel %vm205, %v355, 0
      %v364 = vsel %vm205, %v356, 0
      %366 = vmatpush.bf16.msra.mxu0 0
      %367 = vmatpush.bf16.msra.mxu0 0
      %368 = vmatpush.bf16.msra.mxu0 0
      %369 = vmatpush.bf16.msra.mxu0 0
      %370 = vmatpush.bf16.msra.mxu0 0
      %371 = vmatpush.bf16.msra.mxu0 0
      %372 = vmatpush.bf16.msra.mxu0 0
      %373 = vmatpush.bf16.msra.mxu0 %v361
      %374 = vmatmul.bf16.gmra.mxu0 %v358
      %v375 = vpop.f32.mrf.mxu0
      %v376 = vadd.f32 0.0, %v375
      %v377 = vpop.f32.mrf.mxu0
      %v378 = vadd.f32 0.0, %v377
      %379 = vdwg.mxu0
      %380 = vmatpush.bf16.msra.mxu0 0
      %381 = vmatpush.bf16.msra.mxu0 0
      %382 = vmatpush.bf16.msra.mxu0 0
      %383 = vmatpush.bf16.msra.mxu0 0
      %384 = vmatpush.bf16.msra.mxu0 0
      %385 = vmatpush.bf16.msra.mxu0 0
      %386 = vmatpush.bf16.msra.mxu0 0
      %387 = vmatpush.bf16.msra.mxu0 %v364
      %388 = vmatmul.bf16.gmra.mxu0 %v358
      %v389 = vpop.f32.mrf.mxu0
      %v390 = vadd.f32 0.0, %v389
      %v391 = vpop.f32.mrf.mxu0
      %v392 = vadd.f32 0.0, %v391
      %393 = vdwg.mxu0
      %v394 = vadd.f32 %v336, %v376
      %v395 = vadd.f32 %v337, %v390
      %v396 = vadd.f32 %v338, %v378
      %v397 = vadd.f32 %v339, %v392
      %s398 = scalar_lea.vmem %s0, 32
      %v399 = vld [vmem:[%s398] sm:$0xf]
      %v400 = vld [vmem:[%s398 + $0x4] sm:$0xf]
      %v403 = vunpack.c.l.b16 %v399
      %v404 = vunpack.c.l.b16 %v400
      %v405 = vpack.c.b16 %v404, %v403
      %406 = vrot.lane.b32.xlu0 %v189, 124
      %v407 = vpop.permute.xlu0 %406
      %408 = vrot.lane.b32.xlu0 %v190, 124
      %v409 = vpop.permute.xlu0 %408
      %410 = vrot.lane.b32.xlu0 %v191, 124
      %v411 = vpop.permute.xlu0 %410
      %vm412 = vcmask 1014784
      %v413 = vsel %vm412, %v407, %v409
      %v414 = vsel %vm412, %v409, %v411
      %v416 = vsel %vm201, %v405, 0
      %v419 = vsel %vm205, %v413, 0
      %v422 = vsel %vm205, %v414, 0
      %424 = vmatpush.bf16.msra.mxu0 0
      %425 = vmatpush.bf16.msra.mxu0 0
      %426 = vmatpush.bf16.msra.mxu0 0
      %427 = vmatpush.bf16.msra.mxu0 0
      %428 = vmatpush.bf16.msra.mxu0 0
      %429 = vmatpush.bf16.msra.mxu0 0
      %430 = vmatpush.bf16.msra.mxu0 0
      %431 = vmatpush.bf16.msra.mxu0 %v419
      %432 = vmatmul.bf16.gmra.mxu0 %v416
      %v433 = vpop.f32.mrf.mxu0
      %v434 = vadd.f32 0.0, %v433
      %v435 = vpop.f32.mrf.mxu0
      %v436 = vadd.f32 0.0, %v435
      %437 = vdwg.mxu0
      %438 = vmatpush.bf16.msra.mxu0 0
      %439 = vmatpush.bf16.msra.mxu0 0
      %440 = vmatpush.bf16.msra.mxu0 0
      %441 = vmatpush.bf16.msra.mxu0 0
      %442 = vmatpush.bf16.msra.mxu0 0
      %443 = vmatpush.bf16.msra.mxu0 0
      %444 = vmatpush.bf16.msra.mxu0 0
      %445 = vmatpush.bf16.msra.mxu0 %v422
      %446 = vmatmul.bf16.gmra.mxu0 %v416
      %v447 = vpop.f32.mrf.mxu0
      %v448 = vadd.f32 0.0, %v447
      %v449 = vpop.f32.mrf.mxu0
      %v450 = vadd.f32 0.0, %v449
      %451 = vdwg.mxu0
      %v452 = vadd.f32 %v394, %v434
      %v453 = vadd.f32 %v395, %v448
      %v454 = vadd.f32 %v396, %v436
      %v455 = vadd.f32 %v397, %v450
      %s456 = scalar_lea.vmem %s0, 40
      %v457 = vld [vmem:[%s456] sm:$0xf]
      %v458 = vld [vmem:[%s456 + $0x4] sm:$0xf]
      %v461 = vunpack.c.l.b16 %v457
      %v462 = vunpack.c.l.b16 %v458
      %v463 = vpack.c.b16 %v462, %v461
      %464 = vrot.lane.b32.xlu0 %v189, 114
      %v465 = vpop.permute.xlu0 %464
      %466 = vrot.lane.b32.xlu0 %v190, 114
      %v467 = vpop.permute.xlu0 %466
      %468 = vrot.lane.b32.xlu0 %v191, 114
      %v469 = vpop.permute.xlu0 %468
      %vm470 = vcmask 932864
      %v471 = vsel %vm470, %v465, %v467
      %v472 = vsel %vm470, %v467, %v469
      %v474 = vsel %vm201, %v463, 0
      %v477 = vsel %vm205, %v471, 0
      %v480 = vsel %vm205, %v472, 0
      %482 = vmatpush.bf16.msra.mxu0 0
      %483 = vmatpush.bf16.msra.mxu0 0
      %484 = vmatpush.bf16.msra.mxu0 0
      %485 = vmatpush.bf16.msra.mxu0 0
      %486 = vmatpush.bf16.msra.mxu0 0
      %487 = vmatpush.bf16.msra.mxu0 0
      %488 = vmatpush.bf16.msra.mxu0 0
      %489 = vmatpush.bf16.msra.mxu0 %v477
      %490 = vmatmul.bf16.gmra.mxu0 %v474
      %v491 = vpop.f32.mrf.mxu0
      %v492 = vadd.f32 0.0, %v491
      %v493 = vpop.f32.mrf.mxu0
      %v494 = vadd.f32 0.0, %v493
      %495 = vdwg.mxu0
      %496 = vmatpush.bf16.msra.mxu0 0
      %497 = vmatpush.bf16.msra.mxu0 0
      %498 = vmatpush.bf16.msra.mxu0 0
      %499 = vmatpush.bf16.msra.mxu0 0
      %500 = vmatpush.bf16.msra.mxu0 0
      %501 = vmatpush.bf16.msra.mxu0 0
      %502 = vmatpush.bf16.msra.mxu0 0
      %503 = vmatpush.bf16.msra.mxu0 %v480
      %504 = vmatmul.bf16.gmra.mxu0 %v474
      %v505 = vpop.f32.mrf.mxu0
      %v506 = vadd.f32 0.0, %v505
      %v507 = vpop.f32.mrf.mxu0
      %v508 = vadd.f32 0.0, %v507
      %509 = vdwg.mxu0
      %v510 = vadd.f32 %v452, %v492
      %v511 = vadd.f32 %v453, %v506
      %v512 = vadd.f32 %v454, %v494
      %v513 = vadd.f32 %v455, %v508
      %s514 = scalar_lea.vmem %s0, 48
      %v515 = vld [vmem:[%s514] sm:$0xf]
      %v516 = vld [vmem:[%s514 + $0x4] sm:$0xf]
      %v519 = vunpack.c.l.b16 %v515
      %v520 = vunpack.c.l.b16 %v516
      %v521 = vpack.c.b16 %v520, %v519
      %522 = vrot.lane.b32.xlu0 %v189, 113
      %v523 = vpop.permute.xlu0 %522
      %524 = vrot.lane.b32.xlu0 %v190, 113
      %v525 = vpop.permute.xlu0 %524
      %526 = vrot.lane.b32.xlu0 %v191, 113
      %v527 = vpop.permute.xlu0 %526
      %vm528 = vcmask 924672
      %v529 = vsel %vm528, %v523, %v525
      %v530 = vsel %vm528, %v525, %v527
      %v532 = vsel %vm201, %v521, 0
      %v535 = vsel %vm205, %v529, 0
      %v538 = vsel %vm205, %v530, 0
      %540 = vmatpush.bf16.msra.mxu0 0
      %541 = vmatpush.bf16.msra.mxu0 0
      %542 = vmatpush.bf16.msra.mxu0 0
      %543 = vmatpush.bf16.msra.mxu0 0
      %544 = vmatpush.bf16.msra.mxu0 0
      %545 = vmatpush.bf16.msra.mxu0 0
      %546 = vmatpush.bf16.msra.mxu0 0
      %547 = vmatpush.bf16.msra.mxu0 %v535
      %548 = vmatmul.bf16.gmra.mxu0 %v532
      %v549 = vpop.f32.mrf.mxu0
      %v550 = vadd.f32 0.0, %v549
      %v551 = vpop.f32.mrf.mxu0
      %v552 = vadd.f32 0.0, %v551
      %553 = vdwg.mxu0
      %554 = vmatpush.bf16.msra.mxu0 0
      %555 = vmatpush.bf16.msra.mxu0 0
      %556 = vmatpush.bf16.msra.mxu0 0
      %557 = vmatpush.bf16.msra.mxu0 0
      %558 = vmatpush.bf16.msra.mxu0 0
      %559 = vmatpush.bf16.msra.mxu0 0
      %560 = vmatpush.bf16.msra.mxu0 0
      %561 = vmatpush.bf16.msra.mxu0 %v538
      %562 = vmatmul.bf16.gmra.mxu0 %v532
      %v563 = vpop.f32.mrf.mxu0
      %v564 = vadd.f32 0.0, %v563
      %v565 = vpop.f32.mrf.mxu0
      %v566 = vadd.f32 0.0, %v565
      %567 = vdwg.mxu0
      %v568 = vadd.f32 %v510, %v550
      %v569 = vadd.f32 %v511, %v564
      %v570 = vadd.f32 %v512, %v552
      %v571 = vadd.f32 %v513, %v566
      %s572 = scalar_lea.vmem %s0, 56
      %v573 = vld [vmem:[%s572] sm:$0xf]
      %v574 = vld [vmem:[%s572 + $0x4] sm:$0xf]
      %v577 = vunpack.c.l.b16 %v573
      %v578 = vunpack.c.l.b16 %v574
      %v579 = vpack.c.b16 %v578, %v577
      %580 = vrot.lane.b32.xlu0 %v189, 112
      %v581 = vpop.permute.xlu0 %580
      %582 = vrot.lane.b32.xlu0 %v190, 112
      %v583 = vpop.permute.xlu0 %582
      %584 = vrot.lane.b32.xlu0 %v191, 112
      %v585 = vpop.permute.xlu0 %584
      %vm586 = vcmask 916480
      %v587 = vsel %vm586, %v581, %v583
      %v588 = vsel %vm586, %v583, %v585
      %v590 = vsel %vm201, %v579, 0
      %v593 = vsel %vm205, %v587, 0
      %v596 = vsel %vm205, %v588, 0
      %598 = vmatpush.bf16.msra.mxu0 0
      %599 = vmatpush.bf16.msra.mxu0 0
      %600 = vmatpush.bf16.msra.mxu0 0
      %601 = vmatpush.bf16.msra.mxu0 0
      %602 = vmatpush.bf16.msra.mxu0 0
      %603 = vmatpush.bf16.msra.mxu0 0
      %604 = vmatpush.bf16.msra.mxu0 0
      %605 = vmatpush.bf16.msra.mxu0 %v593
      %606 = vmatmul.bf16.gmra.mxu0 %v590
      %v607 = vpop.f32.mrf.mxu0
      %v608 = vadd.f32 0.0, %v607
      %v609 = vpop.f32.mrf.mxu0
      %v610 = vadd.f32 0.0, %v609
      %611 = vdwg.mxu0
      %612 = vmatpush.bf16.msra.mxu0 0
      %613 = vmatpush.bf16.msra.mxu0 0
      %614 = vmatpush.bf16.msra.mxu0 0
      %615 = vmatpush.bf16.msra.mxu0 0
      %616 = vmatpush.bf16.msra.mxu0 0
      %617 = vmatpush.bf16.msra.mxu0 0
      %618 = vmatpush.bf16.msra.mxu0 0
      %619 = vmatpush.bf16.msra.mxu0 %v596
      %620 = vmatmul.bf16.gmra.mxu0 %v590
      %v621 = vpop.f32.mrf.mxu0
      %v622 = vadd.f32 0.0, %v621
      %v623 = vpop.f32.mrf.mxu0
      %v624 = vadd.f32 0.0, %v623
      %625 = vdwg.mxu0
      %v626 = vadd.f32 %v568, %v608
      %v627 = vadd.f32 %v569, %v622
      %v628 = vadd.f32 %v570, %v610
      %v629 = vadd.f32 %v571, %v624
      %s630 = scalar_lea.vmem %s0, 64
      %v631 = vld [vmem:[%s630] sm:$0xf]
      %v632 = vld [vmem:[%s630 + $0x4] sm:$0xf]
      %v635 = vunpack.c.l.b16 %v631
      %v636 = vunpack.c.l.b16 %v632
      %v637 = vpack.c.b16 %v636, %v635
      %638 = vrot.lane.b32.xlu0 %v189, 111
      %v639 = vpop.permute.xlu0 %638
      %640 = vrot.lane.b32.xlu0 %v190, 111
      %v641 = vpop.permute.xlu0 %640
      %642 = vrot.lane.b32.xlu0 %v191, 111
      %v643 = vpop.permute.xlu0 %642
      %vm644 = vcmask 908288
      %v645 = vsel %vm644, %v639, %v641
      %v646 = vsel %vm644, %v641, %v643
      %v648 = vsel %vm201, %v637, 0
      %v651 = vsel %vm205, %v645, 0
      %v654 = vsel %vm205, %v646, 0
      %656 = vmatpush.bf16.msra.mxu0 0
      %657 = vmatpush.bf16.msra.mxu0 0
      %658 = vmatpush.bf16.msra.mxu0 0
      %659 = vmatpush.bf16.msra.mxu0 0
      %660 = vmatpush.bf16.msra.mxu0 0
      %661 = vmatpush.bf16.msra.mxu0 0
      %662 = vmatpush.bf16.msra.mxu0 0
      %663 = vmatpush.bf16.msra.mxu0 %v651
      %664 = vmatmul.bf16.gmra.mxu0 %v648
      %v665 = vpop.f32.mrf.mxu0
      %v666 = vadd.f32 0.0, %v665
      %v667 = vpop.f32.mrf.mxu0
      %v668 = vadd.f32 0.0, %v667
      %669 = vdwg.mxu0
      %670 = vmatpush.bf16.msra.mxu0 0
      %671 = vmatpush.bf16.msra.mxu0 0
      %672 = vmatpush.bf16.msra.mxu0 0
      %673 = vmatpush.bf16.msra.mxu0 0
      %674 = vmatpush.bf16.msra.mxu0 0
      %675 = vmatpush.bf16.msra.mxu0 0
      %676 = vmatpush.bf16.msra.mxu0 0
      %677 = vmatpush.bf16.msra.mxu0 %v654
      %678 = vmatmul.bf16.gmra.mxu0 %v648
      %v679 = vpop.f32.mrf.mxu0
      %v680 = vadd.f32 0.0, %v679
      %v681 = vpop.f32.mrf.mxu0
      %v682 = vadd.f32 0.0, %v681
      %683 = vdwg.mxu0
      %v684 = vadd.f32 %v626, %v666
      %v685 = vadd.f32 %v627, %v680
      %v686 = vadd.f32 %v628, %v668
      %v687 = vadd.f32 %v629, %v682
      %s688 = scalar_lea.vmem %s0, 72
      %v689 = vld [vmem:[%s688] sm:$0xf]
      %v690 = vld [vmem:[%s688 + $0x4] sm:$0xf]
      %v693 = vunpack.c.l.b16 %v689
      %v694 = vunpack.c.l.b16 %v690
      %v695 = vpack.c.b16 %v694, %v693
      %696 = vrot.lane.b32.xlu0 %v189, 110
      %v697 = vpop.permute.xlu0 %696
      %698 = vrot.lane.b32.xlu0 %v190, 110
      %v699 = vpop.permute.xlu0 %698
      %700 = vrot.lane.b32.xlu0 %v191, 110
      %v701 = vpop.permute.xlu0 %700
      %vm702 = vcmask 900096
      %v703 = vsel %vm702, %v697, %v699
      %v704 = vsel %vm702, %v699, %v701
      %v706 = vsel %vm201, %v695, 0
      %v709 = vsel %vm205, %v703, 0
      %v712 = vsel %vm205, %v704, 0
      %714 = vmatpush.bf16.msra.mxu0 0
      %715 = vmatpush.bf16.msra.mxu0 0
      %716 = vmatpush.bf16.msra.mxu0 0
      %717 = vmatpush.bf16.msra.mxu0 0
      %718 = vmatpush.bf16.msra.mxu0 0
      %719 = vmatpush.bf16.msra.mxu0 0
      %720 = vmatpush.bf16.msra.mxu0 0
      %721 = vmatpush.bf16.msra.mxu0 %v709
      %722 = vmatmul.bf16.gmra.mxu0 %v706
      %v723 = vpop.f32.mrf.mxu0
      %v724 = vadd.f32 0.0, %v723
      %v725 = vpop.f32.mrf.mxu0
      %v726 = vadd.f32 0.0, %v725
      %727 = vdwg.mxu0
      %728 = vmatpush.bf16.msra.mxu0 0
      %729 = vmatpush.bf16.msra.mxu0 0
      %730 = vmatpush.bf16.msra.mxu0 0
      %731 = vmatpush.bf16.msra.mxu0 0
      %732 = vmatpush.bf16.msra.mxu0 0
      %733 = vmatpush.bf16.msra.mxu0 0
      %734 = vmatpush.bf16.msra.mxu0 0
      %735 = vmatpush.bf16.msra.mxu0 %v712
      %736 = vmatmul.bf16.gmra.mxu0 %v706
      %v737 = vpop.f32.mrf.mxu0
      %v738 = vadd.f32 0.0, %v737
      %v739 = vpop.f32.mrf.mxu0
      %v740 = vadd.f32 0.0, %v739
      %741 = vdwg.mxu0
      %v742 = vadd.f32 %v684, %v724
      %v743 = vadd.f32 %v685, %v738
      %v744 = vadd.f32 %v686, %v726
      %v745 = vadd.f32 %v687, %v740
      %s746 = scalar_lea.vmem %s0, 80
      %v747 = vld [vmem:[%s746] sm:$0xf]
      %v748 = vld [vmem:[%s746 + $0x4] sm:$0xf]
      %v751 = vunpack.c.l.b16 %v747
      %v752 = vunpack.c.l.b16 %v748
      %v753 = vpack.c.b16 %v752, %v751
      %754 = vrot.lane.b32.xlu0 %v189, 100
      %v755 = vpop.permute.xlu0 %754
      %756 = vrot.lane.b32.xlu0 %v190, 100
      %v757 = vpop.permute.xlu0 %756
      %758 = vrot.lane.b32.xlu0 %v191, 100
      %v759 = vpop.permute.xlu0 %758
      %vm760 = vcmask 818176
      %v761 = vsel %vm760, %v755, %v757
      %v762 = vsel %vm760, %v757, %v759
      %v764 = vsel %vm201, %v753, 0
      %v767 = vsel %vm205, %v761, 0
      %v770 = vsel %vm205, %v762, 0
      %772 = vmatpush.bf16.msra.mxu0 0
      %773 = vmatpush.bf16.msra.mxu0 0
      %774 = vmatpush.bf16.msra.mxu0 0
      %775 = vmatpush.bf16.msra.mxu0 0
      %776 = vmatpush.bf16.msra.mxu0 0
      %777 = vmatpush.bf16.msra.mxu0 0
      %778 = vmatpush.bf16.msra.mxu0 0
      %779 = vmatpush.bf16.msra.mxu0 %v767
      %780 = vmatmul.bf16.gmra.mxu0 %v764
      %v781 = vpop.f32.mrf.mxu0
      %v782 = vadd.f32 0.0, %v781
      %v783 = vpop.f32.mrf.mxu0
      %v784 = vadd.f32 0.0, %v783
      %785 = vdwg.mxu0
      %786 = vmatpush.bf16.msra.mxu0 0
      %787 = vmatpush.bf16.msra.mxu0 0
      %788 = vmatpush.bf16.msra.mxu0 0
      %789 = vmatpush.bf16.msra.mxu0 0
      %790 = vmatpush.bf16.msra.mxu0 0
      %791 = vmatpush.bf16.msra.mxu0 0
      %792 = vmatpush.bf16.msra.mxu0 0
      %793 = vmatpush.bf16.msra.mxu0 %v770
      %794 = vmatmul.bf16.gmra.mxu0 %v764
      %v795 = vpop.f32.mrf.mxu0
      %v796 = vadd.f32 0.0, %v795
      %v797 = vpop.f32.mrf.mxu0
      %v798 = vadd.f32 0.0, %v797
      %799 = vdwg.mxu0
      %v800 = vadd.f32 %v742, %v782
      %v801 = vadd.f32 %v743, %v796
      %v802 = vadd.f32 %v744, %v784
      %v803 = vadd.f32 %v745, %v798
      %s804 = scalar_lea.vmem %s0, 88
      %v805 = vld [vmem:[%s804] sm:$0xf]
      %v806 = vld [vmem:[%s804 + $0x4] sm:$0xf]
      %v809 = vunpack.c.l.b16 %v805
      %v810 = vunpack.c.l.b16 %v806
      %v811 = vpack.c.b16 %v810, %v809
      %812 = vrot.lane.b32.xlu0 %v189, 99
      %v813 = vpop.permute.xlu0 %812
      %814 = vrot.lane.b32.xlu0 %v190, 99
      %v815 = vpop.permute.xlu0 %814
      %816 = vrot.lane.b32.xlu0 %v191, 99
      %v817 = vpop.permute.xlu0 %816
      %vm818 = vcmask 809984
      %v819 = vsel %vm818, %v813, %v815
      %v820 = vsel %vm818, %v815, %v817
      %v822 = vsel %vm201, %v811, 0
      %v825 = vsel %vm205, %v819, 0
      %v828 = vsel %vm205, %v820, 0
      %830 = vmatpush.bf16.msra.mxu0 0
      %831 = vmatpush.bf16.msra.mxu0 0
      %832 = vmatpush.bf16.msra.mxu0 0
      %833 = vmatpush.bf16.msra.mxu0 0
      %834 = vmatpush.bf16.msra.mxu0 0
      %835 = vmatpush.bf16.msra.mxu0 0
      %836 = vmatpush.bf16.msra.mxu0 0
      %837 = vmatpush.bf16.msra.mxu0 %v825
      %838 = vmatmul.bf16.gmra.mxu0 %v822
      %v839 = vpop.f32.mrf.mxu0
      %v840 = vadd.f32 0.0, %v839
      %v841 = vpop.f32.mrf.mxu0
      %v842 = vadd.f32 0.0, %v841
      %843 = vdwg.mxu0
      %844 = vmatpush.bf16.msra.mxu0 0
      %845 = vmatpush.bf16.msra.mxu0 0
      %846 = vmatpush.bf16.msra.mxu0 0
      %847 = vmatpush.bf16.msra.mxu0 0
      %848 = vmatpush.bf16.msra.mxu0 0
      %849 = vmatpush.bf16.msra.mxu0 0
      %850 = vmatpush.bf16.msra.mxu0 0
      %851 = vmatpush.bf16.msra.mxu0 %v828
      %852 = vmatmul.bf16.gmra.mxu0 %v822
      %v853 = vpop.f32.mrf.mxu0
      %v854 = vadd.f32 0.0, %v853
      %v855 = vpop.f32.mrf.mxu0
      %v856 = vadd.f32 0.0, %v855
      %857 = vdwg.mxu0
      %v858 = vadd.f32 %v800, %v840
      %v859 = vadd.f32 %v801, %v854
      %v860 = vadd.f32 %v802, %v842
      %v861 = vadd.f32 %v803, %v856
      %s862 = scalar_lea.vmem %s0, 96
      %v863 = vld [vmem:[%s862] sm:$0xf]
      %v864 = vld [vmem:[%s862 + $0x4] sm:$0xf]
      %v867 = vunpack.c.l.b16 %v863
      %v868 = vunpack.c.l.b16 %v864
      %v869 = vpack.c.b16 %v868, %v867
      %870 = vrot.lane.b32.xlu0 %v189, 98
      %v871 = vpop.permute.xlu0 %870
      %872 = vrot.lane.b32.xlu0 %v190, 98
      %v873 = vpop.permute.xlu0 %872
      %874 = vrot.lane.b32.xlu0 %v191, 98
      %v875 = vpop.permute.xlu0 %874
      %vm876 = vcmask 801792
      %v877 = vsel %vm876, %v871, %v873
      %v878 = vsel %vm876, %v873, %v875
      %v880 = vsel %vm201, %v869, 0
      %v883 = vsel %vm205, %v877, 0
      %v886 = vsel %vm205, %v878, 0
      %888 = vmatpush.bf16.msra.mxu0 0
      %889 = vmatpush.bf16.msra.mxu0 0
      %890 = vmatpush.bf16.msra.mxu0 0
      %891 = vmatpush.bf16.msra.mxu0 0
      %892 = vmatpush.bf16.msra.mxu0 0
      %893 = vmatpush.bf16.msra.mxu0 0
      %894 = vmatpush.bf16.msra.mxu0 0
      %895 = vmatpush.bf16.msra.mxu0 %v883
      %896 = vmatmul.bf16.gmra.mxu0 %v880
      %v897 = vpop.f32.mrf.mxu0
      %v898 = vadd.f32 0.0, %v897
      %v899 = vpop.f32.mrf.mxu0
      %v900 = vadd.f32 0.0, %v899
      %901 = vdwg.mxu0
      %902 = vmatpush.bf16.msra.mxu0 0
      %903 = vmatpush.bf16.msra.mxu0 0
      %904 = vmatpush.bf16.msra.mxu0 0
      %905 = vmatpush.bf16.msra.mxu0 0
      %906 = vmatpush.bf16.msra.mxu0 0
      %907 = vmatpush.bf16.msra.mxu0 0
      %908 = vmatpush.bf16.msra.mxu0 0
      %909 = vmatpush.bf16.msra.mxu0 %v886
      %910 = vmatmul.bf16.gmra.mxu0 %v880
      %v911 = vpop.f32.mrf.mxu0
      %v912 = vadd.f32 0.0, %v911
      %v913 = vpop.f32.mrf.mxu0
      %v914 = vadd.f32 0.0, %v913
      %915 = vdwg.mxu0
      %v916 = vadd.f32 %v858, %v898
      %v917 = vadd.f32 %v859, %v912
      %v918 = vadd.f32 %v860, %v900
      %v919 = vadd.f32 %v861, %v914
      %s920 = scalar_lea.vmem %s0, 104
      %v921 = vld [vmem:[%s920] sm:$0xf]
      %v922 = vld [vmem:[%s920 + $0x4] sm:$0xf]
      %v925 = vunpack.c.l.b16 %v921
      %v926 = vunpack.c.l.b16 %v922
      %v927 = vpack.c.b16 %v926, %v925
      %928 = vrot.lane.b32.xlu0 %v189, 97
      %v929 = vpop.permute.xlu0 %928
      %930 = vrot.lane.b32.xlu0 %v190, 97
      %v931 = vpop.permute.xlu0 %930
      %932 = vrot.lane.b32.xlu0 %v191, 97
      %v933 = vpop.permute.xlu0 %932
      %vm934 = vcmask 793600
      %v935 = vsel %vm934, %v929, %v931
      %v936 = vsel %vm934, %v931, %v933
      %v938 = vsel %vm201, %v927, 0
      %v941 = vsel %vm205, %v935, 0
      %v944 = vsel %vm205, %v936, 0
      %946 = vmatpush.bf16.msra.mxu0 0
      %947 = vmatpush.bf16.msra.mxu0 0
      %948 = vmatpush.bf16.msra.mxu0 0
      %949 = vmatpush.bf16.msra.mxu0 0
      %950 = vmatpush.bf16.msra.mxu0 0
      %951 = vmatpush.bf16.msra.mxu0 0
      %952 = vmatpush.bf16.msra.mxu0 0
      %953 = vmatpush.bf16.msra.mxu0 %v941
      %954 = vmatmul.bf16.gmra.mxu0 %v938
      %v955 = vpop.f32.mrf.mxu0
      %v956 = vadd.f32 0.0, %v955
      %v957 = vpop.f32.mrf.mxu0
      %v958 = vadd.f32 0.0, %v957
      %959 = vdwg.mxu0
      %960 = vmatpush.bf16.msra.mxu0 0
      %961 = vmatpush.bf16.msra.mxu0 0
      %962 = vmatpush.bf16.msra.mxu0 0
      %963 = vmatpush.bf16.msra.mxu0 0
      %964 = vmatpush.bf16.msra.mxu0 0
      %965 = vmatpush.bf16.msra.mxu0 0
      %966 = vmatpush.bf16.msra.mxu0 0
      %967 = vmatpush.bf16.msra.mxu0 %v944
      %968 = vmatmul.bf16.gmra.mxu0 %v938
      %v969 = vpop.f32.mrf.mxu0
      %v970 = vadd.f32 0.0, %v969
      %v971 = vpop.f32.mrf.mxu0
      %v972 = vadd.f32 0.0, %v971
      %973 = vdwg.mxu0
      %v974 = vadd.f32 %v916, %v956
      %v975 = vadd.f32 %v917, %v970
      %v976 = vadd.f32 %v918, %v958
      %v977 = vadd.f32 %v919, %v972
      %s978 = scalar_lea.vmem %s0, 112
      %v979 = vld [vmem:[%s978] sm:$0xf]
      %v980 = vld [vmem:[%s978 + $0x4] sm:$0xf]
      %v983 = vunpack.c.l.b16 %v979
      %v984 = vunpack.c.l.b16 %v980
      %v985 = vpack.c.b16 %v984, %v983
      %986 = vrot.lane.b32.xlu0 %v189, 96
      %v987 = vpop.permute.xlu0 %986
      %988 = vrot.lane.b32.xlu0 %v190, 96
      %v989 = vpop.permute.xlu0 %988
      %990 = vrot.lane.b32.xlu0 %v191, 96
      %v991 = vpop.permute.xlu0 %990
      %vm992 = vcmask 785408
      %v993 = vsel %vm992, %v987, %v989
      %v994 = vsel %vm992, %v989, %v991
      %v996 = vsel %vm201, %v985, 0
      %v999 = vsel %vm205, %v993, 0
      %v1002 = vsel %vm205, %v994, 0
      %1004 = vmatpush.bf16.msra.mxu0 0
      %1005 = vmatpush.bf16.msra.mxu0 0
      %1006 = vmatpush.bf16.msra.mxu0 0
      %1007 = vmatpush.bf16.msra.mxu0 0
      %1008 = vmatpush.bf16.msra.mxu0 0
      %1009 = vmatpush.bf16.msra.mxu0 0
      %1010 = vmatpush.bf16.msra.mxu0 0
      %1011 = vmatpush.bf16.msra.mxu0 %v999
      %1012 = vmatmul.bf16.gmra.mxu0 %v996
      %v1013 = vpop.f32.mrf.mxu0
      %v1014 = vadd.f32 0.0, %v1013
      %v1015 = vpop.f32.mrf.mxu0
      %v1016 = vadd.f32 0.0, %v1015
      %1017 = vdwg.mxu0
      %1018 = vmatpush.bf16.msra.mxu0 0
      %1019 = vmatpush.bf16.msra.mxu0 0
      %1020 = vmatpush.bf16.msra.mxu0 0
      %1021 = vmatpush.bf16.msra.mxu0 0
      %1022 = vmatpush.bf16.msra.mxu0 0
      %1023 = vmatpush.bf16.msra.mxu0 0
      %1024 = vmatpush.bf16.msra.mxu0 0
      %1025 = vmatpush.bf16.msra.mxu0 %v1002
      %1026 = vmatmul.bf16.gmra.mxu0 %v996
      %v1027 = vpop.f32.mrf.mxu0
      %v1028 = vadd.f32 0.0, %v1027
      %v1029 = vpop.f32.mrf.mxu0
      %v1030 = vadd.f32 0.0, %v1029
      %1031 = vdwg.mxu0
      %v1032 = vadd.f32 %v974, %v1014
      %v1033 = vadd.f32 %v975, %v1028
      %v1034 = vadd.f32 %v976, %v1016
      %v1035 = vadd.f32 %v977, %v1030
      %s1036 = scalar_lea.vmem %s0, 120
      %v1037 = vld [vmem:[%s1036] sm:$0xf]
      %v1038 = vld [vmem:[%s1036 + $0x4] sm:$0xf]
      %v1041 = vunpack.c.l.b16 %v1037
      %v1042 = vunpack.c.l.b16 %v1038
      %v1043 = vpack.c.b16 %v1042, %v1041
      %1044 = vrot.lane.b32.xlu0 %v189, 86
      %v1045 = vpop.permute.xlu0 %1044
      %1046 = vrot.lane.b32.xlu0 %v190, 86
      %v1047 = vpop.permute.xlu0 %1046
      %1048 = vrot.lane.b32.xlu0 %v191, 86
      %v1049 = vpop.permute.xlu0 %1048
      %vm1050 = vcmask 703488
      %v1051 = vsel %vm1050, %v1045, %v1047
      %v1052 = vsel %vm1050, %v1047, %v1049
      %v1054 = vsel %vm201, %v1043, 0
      %v1057 = vsel %vm205, %v1051, 0
      %v1060 = vsel %vm205, %v1052, 0
      %1062 = vmatpush.bf16.msra.mxu0 0
      %1063 = vmatpush.bf16.msra.mxu0 0
      %1064 = vmatpush.bf16.msra.mxu0 0
      %1065 = vmatpush.bf16.msra.mxu0 0
      %1066 = vmatpush.bf16.msra.mxu0 0
      %1067 = vmatpush.bf16.msra.mxu0 0
      %1068 = vmatpush.bf16.msra.mxu0 0
      %1069 = vmatpush.bf16.msra.mxu0 %v1057
      %1070 = vmatmul.bf16.gmra.mxu0 %v1054
      %v1071 = vpop.f32.mrf.mxu0
      %v1072 = vadd.f32 0.0, %v1071
      %v1073 = vpop.f32.mrf.mxu0
      %v1074 = vadd.f32 0.0, %v1073
      %1075 = vdwg.mxu0
      %1076 = vmatpush.bf16.msra.mxu0 0
      %1077 = vmatpush.bf16.msra.mxu0 0
      %1078 = vmatpush.bf16.msra.mxu0 0
      %1079 = vmatpush.bf16.msra.mxu0 0
      %1080 = vmatpush.bf16.msra.mxu0 0
      %1081 = vmatpush.bf16.msra.mxu0 0
      %1082 = vmatpush.bf16.msra.mxu0 0
      %1083 = vmatpush.bf16.msra.mxu0 %v1060
      %1084 = vmatmul.bf16.gmra.mxu0 %v1054
      %v1085 = vpop.f32.mrf.mxu0
      %v1086 = vadd.f32 0.0, %v1085
      %v1087 = vpop.f32.mrf.mxu0
      %v1088 = vadd.f32 0.0, %v1087
      %1089 = vdwg.mxu0
      %v1090 = vadd.f32 %v1032, %v1072
      %v1091 = vadd.f32 %v1033, %v1086
      %v1092 = vadd.f32 %v1034, %v1074
      %v1093 = vadd.f32 %v1035, %v1088
      %s1094 = scalar_lea.vmem %s0, 128
      %v1095 = vld [vmem:[%s1094] sm:$0xf]
      %v1096 = vld [vmem:[%s1094 + $0x4] sm:$0xf]
      %v1099 = vunpack.c.l.b16 %v1095
      %v1100 = vunpack.c.l.b16 %v1096
      %v1101 = vpack.c.b16 %v1100, %v1099
      %1102 = vrot.lane.b32.xlu0 %v189, 85
      %v1103 = vpop.permute.xlu0 %1102
      %1104 = vrot.lane.b32.xlu0 %v190, 85
      %v1105 = vpop.permute.xlu0 %1104
      %1106 = vrot.lane.b32.xlu0 %v191, 85
      %v1107 = vpop.permute.xlu0 %1106
      %vm1108 = vcmask 695296
      %v1109 = vsel %vm1108, %v1103, %v1105
      %v1110 = vsel %vm1108, %v1105, %v1107
      %v1112 = vsel %vm201, %v1101, 0
      %v1115 = vsel %vm205, %v1109, 0
      %v1118 = vsel %vm205, %v1110, 0
      %1120 = vmatpush.bf16.msra.mxu0 0
      %1121 = vmatpush.bf16.msra.mxu0 0
      %1122 = vmatpush.bf16.msra.mxu0 0
      %1123 = vmatpush.bf16.msra.mxu0 0
      %1124 = vmatpush.bf16.msra.mxu0 0
      %1125 = vmatpush.bf16.msra.mxu0 0
      %1126 = vmatpush.bf16.msra.mxu0 0
      %1127 = vmatpush.bf16.msra.mxu0 %v1115
      %1128 = vmatmul.bf16.gmra.mxu0 %v1112
      %v1129 = vpop.f32.mrf.mxu0
      %v1130 = vadd.f32 0.0, %v1129
      %v1131 = vpop.f32.mrf.mxu0
      %v1132 = vadd.f32 0.0, %v1131
      %1133 = vdwg.mxu0
      %1134 = vmatpush.bf16.msra.mxu0 0
      %1135 = vmatpush.bf16.msra.mxu0 0
      %1136 = vmatpush.bf16.msra.mxu0 0
      %1137 = vmatpush.bf16.msra.mxu0 0
      %1138 = vmatpush.bf16.msra.mxu0 0
      %1139 = vmatpush.bf16.msra.mxu0 0
      %1140 = vmatpush.bf16.msra.mxu0 0
      %1141 = vmatpush.bf16.msra.mxu0 %v1118
      %1142 = vmatmul.bf16.gmra.mxu0 %v1112
      %v1143 = vpop.f32.mrf.mxu0
      %v1144 = vadd.f32 0.0, %v1143
      %v1145 = vpop.f32.mrf.mxu0
      %v1146 = vadd.f32 0.0, %v1145
      %1147 = vdwg.mxu0
      %v1148 = vadd.f32 %v1090, %v1130
      %v1149 = vadd.f32 %v1091, %v1144
      %v1150 = vadd.f32 %v1092, %v1132
      %v1151 = vadd.f32 %v1093, %v1146
      %s1152 = scalar_lea.vmem %s0, 136
      %v1153 = vld [vmem:[%s1152] sm:$0xf]
      %v1154 = vld [vmem:[%s1152 + $0x4] sm:$0xf]
      %v1157 = vunpack.c.l.b16 %v1153
      %v1158 = vunpack.c.l.b16 %v1154
      %v1159 = vpack.c.b16 %v1158, %v1157
      %1160 = vrot.lane.b32.xlu0 %v189, 84
      %v1161 = vpop.permute.xlu0 %1160
      %1162 = vrot.lane.b32.xlu0 %v190, 84
      %v1163 = vpop.permute.xlu0 %1162
      %1164 = vrot.lane.b32.xlu0 %v191, 84
      %v1165 = vpop.permute.xlu0 %1164
      %vm1166 = vcmask 687104
      %v1167 = vsel %vm1166, %v1161, %v1163
      %v1168 = vsel %vm1166, %v1163, %v1165
      %v1170 = vsel %vm201, %v1159, 0
      %v1173 = vsel %vm205, %v1167, 0
      %v1176 = vsel %vm205, %v1168, 0
      %1178 = vmatpush.bf16.msra.mxu0 0
      %1179 = vmatpush.bf16.msra.mxu0 0
      %1180 = vmatpush.bf16.msra.mxu0 0
      %1181 = vmatpush.bf16.msra.mxu0 0
      %1182 = vmatpush.bf16.msra.mxu0 0
      %1183 = vmatpush.bf16.msra.mxu0 0
      %1184 = vmatpush.bf16.msra.mxu0 0
      %1185 = vmatpush.bf16.msra.mxu0 %v1173
      %1186 = vmatmul.bf16.gmra.mxu0 %v1170
      %v1187 = vpop.f32.mrf.mxu0
      %v1188 = vadd.f32 0.0, %v1187
      %v1189 = vpop.f32.mrf.mxu0
      %v1190 = vadd.f32 0.0, %v1189
      %1191 = vdwg.mxu0
      %1192 = vmatpush.bf16.msra.mxu0 0
      %1193 = vmatpush.bf16.msra.mxu0 0
      %1194 = vmatpush.bf16.msra.mxu0 0
      %1195 = vmatpush.bf16.msra.mxu0 0
      %1196 = vmatpush.bf16.msra.mxu0 0
      %1197 = vmatpush.bf16.msra.mxu0 0
      %1198 = vmatpush.bf16.msra.mxu0 0
      %1199 = vmatpush.bf16.msra.mxu0 %v1176
      %1200 = vmatmul.bf16.gmra.mxu0 %v1170
      %v1201 = vpop.f32.mrf.mxu0
      %v1202 = vadd.f32 0.0, %v1201
      %v1203 = vpop.f32.mrf.mxu0
      %v1204 = vadd.f32 0.0, %v1203
      %1205 = vdwg.mxu0
      %v1206 = vadd.f32 %v1148, %v1188
      %v1207 = vadd.f32 %v1149, %v1202
      %v1208 = vadd.f32 %v1150, %v1190
      %v1209 = vadd.f32 %v1151, %v1204
      %s1210 = scalar_lea.vmem %s0, 144
      %v1211 = vld [vmem:[%s1210] sm:$0xf]
      %v1212 = vld [vmem:[%s1210 + $0x4] sm:$0xf]
      %v1215 = vunpack.c.l.b16 %v1211
      %v1216 = vunpack.c.l.b16 %v1212
      %v1217 = vpack.c.b16 %v1216, %v1215
      %1218 = vrot.lane.b32.xlu0 %v189, 83
      %v1219 = vpop.permute.xlu0 %1218
      %1220 = vrot.lane.b32.xlu0 %v190, 83
      %v1221 = vpop.permute.xlu0 %1220
      %1222 = vrot.lane.b32.xlu0 %v191, 83
      %v1223 = vpop.permute.xlu0 %1222
      %vm1224 = vcmask 678912
      %v1225 = vsel %vm1224, %v1219, %v1221
      %v1226 = vsel %vm1224, %v1221, %v1223
      %v1228 = vsel %vm201, %v1217, 0
      %v1231 = vsel %vm205, %v1225, 0
      %v1234 = vsel %vm205, %v1226, 0
      %1236 = vmatpush.bf16.msra.mxu0 0
      %1237 = vmatpush.bf16.msra.mxu0 0
      %1238 = vmatpush.bf16.msra.mxu0 0
      %1239 = vmatpush.bf16.msra.mxu0 0
      %1240 = vmatpush.bf16.msra.mxu0 0
      %1241 = vmatpush.bf16.msra.mxu0 0
      %1242 = vmatpush.bf16.msra.mxu0 0
      %1243 = vmatpush.bf16.msra.mxu0 %v1231
      %1244 = vmatmul.bf16.gmra.mxu0 %v1228
      %v1245 = vpop.f32.mrf.mxu0
      %v1246 = vadd.f32 0.0, %v1245
      %v1247 = vpop.f32.mrf.mxu0
      %v1248 = vadd.f32 0.0, %v1247
      %1249 = vdwg.mxu0
      %1250 = vmatpush.bf16.msra.mxu0 0
      %1251 = vmatpush.bf16.msra.mxu0 0
      %1252 = vmatpush.bf16.msra.mxu0 0
      %1253 = vmatpush.bf16.msra.mxu0 0
      %1254 = vmatpush.bf16.msra.mxu0 0
      %1255 = vmatpush.bf16.msra.mxu0 0
      %1256 = vmatpush.bf16.msra.mxu0 0
      %1257 = vmatpush.bf16.msra.mxu0 %v1234
      %1258 = vmatmul.bf16.gmra.mxu0 %v1228
      %v1259 = vpop.f32.mrf.mxu0
      %v1260 = vadd.f32 0.0, %v1259
      %v1261 = vpop.f32.mrf.mxu0
      %v1262 = vadd.f32 0.0, %v1261
      %1263 = vdwg.mxu0
      %v1264 = vadd.f32 %v1206, %v1246
      %v1265 = vadd.f32 %v1207, %v1260
      %v1266 = vadd.f32 %v1208, %v1248
      %v1267 = vadd.f32 %v1209, %v1262
      %s1268 = scalar_lea.vmem %s0, 152
      %v1269 = vld [vmem:[%s1268] sm:$0xf]
      %v1270 = vld [vmem:[%s1268 + $0x4] sm:$0xf]
      %v1273 = vunpack.c.l.b16 %v1269
      %v1274 = vunpack.c.l.b16 %v1270
      %v1275 = vpack.c.b16 %v1274, %v1273
      %1276 = vrot.lane.b32.xlu0 %v189, 82
      %v1277 = vpop.permute.xlu0 %1276
      %1278 = vrot.lane.b32.xlu0 %v190, 82
      %v1279 = vpop.permute.xlu0 %1278
      %1280 = vrot.lane.b32.xlu0 %v191, 82
      %v1281 = vpop.permute.xlu0 %1280
      %vm1282 = vcmask 670720
      %v1283 = vsel %vm1282, %v1277, %v1279
      %v1284 = vsel %vm1282, %v1279, %v1281
      %v1286 = vsel %vm201, %v1275, 0
      %v1289 = vsel %vm205, %v1283, 0
      %v1292 = vsel %vm205, %v1284, 0
      %1294 = vmatpush.bf16.msra.mxu0 0
      %1295 = vmatpush.bf16.msra.mxu0 0
      %1296 = vmatpush.bf16.msra.mxu0 0
      %1297 = vmatpush.bf16.msra.mxu0 0
      %1298 = vmatpush.bf16.msra.mxu0 0
      %1299 = vmatpush.bf16.msra.mxu0 0
      %1300 = vmatpush.bf16.msra.mxu0 0
      %1301 = vmatpush.bf16.msra.mxu0 %v1289
      %1302 = vmatmul.bf16.gmra.mxu0 %v1286
      %v1303 = vpop.f32.mrf.mxu0
      %v1304 = vadd.f32 0.0, %v1303
      %v1305 = vpop.f32.mrf.mxu0
      %v1306 = vadd.f32 0.0, %v1305
      %1307 = vdwg.mxu0
      %1308 = vmatpush.bf16.msra.mxu0 0
      %1309 = vmatpush.bf16.msra.mxu0 0
      %1310 = vmatpush.bf16.msra.mxu0 0
      %1311 = vmatpush.bf16.msra.mxu0 0
      %1312 = vmatpush.bf16.msra.mxu0 0
      %1313 = vmatpush.bf16.msra.mxu0 0
      %1314 = vmatpush.bf16.msra.mxu0 0
      %1315 = vmatpush.bf16.msra.mxu0 %v1292
      %1316 = vmatmul.bf16.gmra.mxu0 %v1286
      %v1317 = vpop.f32.mrf.mxu0
      %v1318 = vadd.f32 0.0, %v1317
      %v1319 = vpop.f32.mrf.mxu0
      %v1320 = vadd.f32 0.0, %v1319
      %1321 = vdwg.mxu0
      %v1322 = vadd.f32 %v1264, %v1304
      %v1323 = vadd.f32 %v1265, %v1318
      %v1324 = vadd.f32 %v1266, %v1306
      %v1325 = vadd.f32 %v1267, %v1320
      %s1326 = scalar_lea.vmem %s0, 160
      %v1327 = vld [vmem:[%s1326] sm:$0xf]
      %v1328 = vld [vmem:[%s1326 + $0x4] sm:$0xf]
      %v1331 = vunpack.c.l.b16 %v1327
      %v1332 = vunpack.c.l.b16 %v1328
      %v1333 = vpack.c.b16 %v1332, %v1331
      %1334 = vrot.lane.b32.xlu0 %v189, 72
      %v1335 = vpop.permute.xlu0 %1334
      %1336 = vrot.lane.b32.xlu0 %v190, 72
      %v1337 = vpop.permute.xlu0 %1336
      %1338 = vrot.lane.b32.xlu0 %v191, 72
      %v1339 = vpop.permute.xlu0 %1338
      %vm1340 = vcmask 588800
      %v1341 = vsel %vm1340, %v1335, %v1337
      %v1342 = vsel %vm1340, %v1337, %v1339
      %v1344 = vsel %vm201, %v1333, 0
      %v1347 = vsel %vm205, %v1341, 0
      %v1350 = vsel %vm205, %v1342, 0
      %1352 = vmatpush.bf16.msra.mxu0 0
      %1353 = vmatpush.bf16.msra.mxu0 0
      %1354 = vmatpush.bf16.msra.mxu0 0
      %1355 = vmatpush.bf16.msra.mxu0 0
      %1356 = vmatpush.bf16.msra.mxu0 0
      %1357 = vmatpush.bf16.msra.mxu0 0
      %1358 = vmatpush.bf16.msra.mxu0 0
      %1359 = vmatpush.bf16.msra.mxu0 %v1347
      %1360 = vmatmul.bf16.gmra.mxu0 %v1344
      %v1361 = vpop.f32.mrf.mxu0
      %v1362 = vadd.f32 0.0, %v1361
      %v1363 = vpop.f32.mrf.mxu0
      %v1364 = vadd.f32 0.0, %v1363
      %1365 = vdwg.mxu0
      %1366 = vmatpush.bf16.msra.mxu0 0
      %1367 = vmatpush.bf16.msra.mxu0 0
      %1368 = vmatpush.bf16.msra.mxu0 0
      %1369 = vmatpush.bf16.msra.mxu0 0
      %1370 = vmatpush.bf16.msra.mxu0 0
      %1371 = vmatpush.bf16.msra.mxu0 0
      %1372 = vmatpush.bf16.msra.mxu0 0
      %1373 = vmatpush.bf16.msra.mxu0 %v1350
      %1374 = vmatmul.bf16.gmra.mxu0 %v1344
      %v1375 = vpop.f32.mrf.mxu0
      %v1376 = vadd.f32 0.0, %v1375
      %v1377 = vpop.f32.mrf.mxu0
      %v1378 = vadd.f32 0.0, %v1377
      %1379 = vdwg.mxu0
      %v1380 = vadd.f32 %v1322, %v1362
      %v1381 = vadd.f32 %v1323, %v1376
      %v1382 = vadd.f32 %v1324, %v1364
      %v1383 = vadd.f32 %v1325, %v1378
      %s1384 = scalar_lea.vmem %s0, 168
      %v1385 = vld [vmem:[%s1384] sm:$0xf]
      %v1386 = vld [vmem:[%s1384 + $0x4] sm:$0xf]
      %v1389 = vunpack.c.l.b16 %v1385
      %v1390 = vunpack.c.l.b16 %v1386
      %v1391 = vpack.c.b16 %v1390, %v1389
      %1392 = vrot.lane.b32.xlu0 %v189, 71
      %v1393 = vpop.permute.xlu0 %1392
      %1394 = vrot.lane.b32.xlu0 %v190, 71
      %v1395 = vpop.permute.xlu0 %1394
      %1396 = vrot.lane.b32.xlu0 %v191, 71
      %v1397 = vpop.permute.xlu0 %1396
      %vm1398 = vcmask 580608
      %v1399 = vsel %vm1398, %v1393, %v1395
      %v1400 = vsel %vm1398, %v1395, %v1397
      %v1402 = vsel %vm201, %v1391, 0
      %v1405 = vsel %vm205, %v1399, 0
      %v1408 = vsel %vm205, %v1400, 0
      %1410 = vmatpush.bf16.msra.mxu0 0
      %1411 = vmatpush.bf16.msra.mxu0 0
      %1412 = vmatpush.bf16.msra.mxu0 0
      %1413 = vmatpush.bf16.msra.mxu0 0
      %1414 = vmatpush.bf16.msra.mxu0 0
      %1415 = vmatpush.bf16.msra.mxu0 0
      %1416 = vmatpush.bf16.msra.mxu0 0
      %1417 = vmatpush.bf16.msra.mxu0 %v1405
      %1418 = vmatmul.bf16.gmra.mxu0 %v1402
      %v1419 = vpop.f32.mrf.mxu0
      %v1420 = vadd.f32 0.0, %v1419
      %v1421 = vpop.f32.mrf.mxu0
      %v1422 = vadd.f32 0.0, %v1421
      %1423 = vdwg.mxu0
      %1424 = vmatpush.bf16.msra.mxu0 0
      %1425 = vmatpush.bf16.msra.mxu0 0
      %1426 = vmatpush.bf16.msra.mxu0 0
      %1427 = vmatpush.bf16.msra.mxu0 0
      %1428 = vmatpush.bf16.msra.mxu0 0
      %1429 = vmatpush.bf16.msra.mxu0 0
      %1430 = vmatpush.bf16.msra.mxu0 0
      %1431 = vmatpush.bf16.msra.mxu0 %v1408
      %1432 = vmatmul.bf16.gmra.mxu0 %v1402
      %v1433 = vpop.f32.mrf.mxu0
      %v1434 = vadd.f32 0.0, %v1433
      %v1435 = vpop.f32.mrf.mxu0
      %v1436 = vadd.f32 0.0, %v1435
      %1437 = vdwg.mxu0
      %v1438 = vadd.f32 %v1380, %v1420
      %v1439 = vadd.f32 %v1381, %v1434
      %v1440 = vadd.f32 %v1382, %v1422
      %v1441 = vadd.f32 %v1383, %v1436
      %s1442 = scalar_lea.vmem %s0, 176
      %v1443 = vld [vmem:[%s1442] sm:$0xf]
      %v1444 = vld [vmem:[%s1442 + $0x4] sm:$0xf]
      %v1447 = vunpack.c.l.b16 %v1443
      %v1448 = vunpack.c.l.b16 %v1444
      %v1449 = vpack.c.b16 %v1448, %v1447
      %1450 = vrot.lane.b32.xlu0 %v189, 70
      %v1451 = vpop.permute.xlu0 %1450
      %1452 = vrot.lane.b32.xlu0 %v190, 70
      %v1453 = vpop.permute.xlu0 %1452
      %1454 = vrot.lane.b32.xlu0 %v191, 70
      %v1455 = vpop.permute.xlu0 %1454
      %vm1456 = vcmask 572416
      %v1457 = vsel %vm1456, %v1451, %v1453
      %v1458 = vsel %vm1456, %v1453, %v1455
      %v1460 = vsel %vm201, %v1449, 0
      %v1463 = vsel %vm205, %v1457, 0
      %v1466 = vsel %vm205, %v1458, 0
      %1468 = vmatpush.bf16.msra.mxu0 0
      %1469 = vmatpush.bf16.msra.mxu0 0
      %1470 = vmatpush.bf16.msra.mxu0 0
      %1471 = vmatpush.bf16.msra.mxu0 0
      %1472 = vmatpush.bf16.msra.mxu0 0
      %1473 = vmatpush.bf16.msra.mxu0 0
      %1474 = vmatpush.bf16.msra.mxu0 0
      %1475 = vmatpush.bf16.msra.mxu0 %v1463
      %1476 = vmatmul.bf16.gmra.mxu0 %v1460
      %v1477 = vpop.f32.mrf.mxu0
      %v1478 = vadd.f32 0.0, %v1477
      %v1479 = vpop.f32.mrf.mxu0
      %v1480 = vadd.f32 0.0, %v1479
      %1481 = vdwg.mxu0
      %1482 = vmatpush.bf16.msra.mxu0 0
      %1483 = vmatpush.bf16.msra.mxu0 0
      %1484 = vmatpush.bf16.msra.mxu0 0
      %1485 = vmatpush.bf16.msra.mxu0 0
      %1486 = vmatpush.bf16.msra.mxu0 0
      %1487 = vmatpush.bf16.msra.mxu0 0
      %1488 = vmatpush.bf16.msra.mxu0 0
      %1489 = vmatpush.bf16.msra.mxu0 %v1466
      %1490 = vmatmul.bf16.gmra.mxu0 %v1460
      %v1491 = vpop.f32.mrf.mxu0
      %v1492 = vadd.f32 0.0, %v1491
      %v1493 = vpop.f32.mrf.mxu0
      %v1494 = vadd.f32 0.0, %v1493
      %1495 = vdwg.mxu0
      %v1496 = vadd.f32 %v1438, %v1478
      %v1497 = vadd.f32 %v1439, %v1492
      %v1498 = vadd.f32 %v1440, %v1480
      %v1499 = vadd.f32 %v1441, %v1494
      %s1500 = scalar_lea.vmem %s0, 184
      %v1501 = vld [vmem:[%s1500] sm:$0xf]
      %v1502 = vld [vmem:[%s1500 + $0x4] sm:$0xf]
      %v1505 = vunpack.c.l.b16 %v1501
      %v1506 = vunpack.c.l.b16 %v1502
      %v1507 = vpack.c.b16 %v1506, %v1505
      %1508 = vrot.lane.b32.xlu0 %v189, 69
      %v1509 = vpop.permute.xlu0 %1508
      %1510 = vrot.lane.b32.xlu0 %v190, 69
      %v1511 = vpop.permute.xlu0 %1510
      %1512 = vrot.lane.b32.xlu0 %v191, 69
      %v1513 = vpop.permute.xlu0 %1512
      %vm1514 = vcmask 564224
      %v1515 = vsel %vm1514, %v1509, %v1511
      %v1516 = vsel %vm1514, %v1511, %v1513
      %v1518 = vsel %vm201, %v1507, 0
      %v1521 = vsel %vm205, %v1515, 0
      %v1524 = vsel %vm205, %v1516, 0
      %1526 = vmatpush.bf16.msra.mxu0 0
      %1527 = vmatpush.bf16.msra.mxu0 0
      %1528 = vmatpush.bf16.msra.mxu0 0
      %1529 = vmatpush.bf16.msra.mxu0 0
      %1530 = vmatpush.bf16.msra.mxu0 0
      %1531 = vmatpush.bf16.msra.mxu0 0
      %1532 = vmatpush.bf16.msra.mxu0 0
      %1533 = vmatpush.bf16.msra.mxu0 %v1521
      %1534 = vmatmul.bf16.gmra.mxu0 %v1518
      %v1535 = vpop.f32.mrf.mxu0
      %v1536 = vadd.f32 0.0, %v1535
      %v1537 = vpop.f32.mrf.mxu0
      %v1538 = vadd.f32 0.0, %v1537
      %1539 = vdwg.mxu0
      %1540 = vmatpush.bf16.msra.mxu0 0
      %1541 = vmatpush.bf16.msra.mxu0 0
      %1542 = vmatpush.bf16.msra.mxu0 0
      %1543 = vmatpush.bf16.msra.mxu0 0
      %1544 = vmatpush.bf16.msra.mxu0 0
      %1545 = vmatpush.bf16.msra.mxu0 0
      %1546 = vmatpush.bf16.msra.mxu0 0
      %1547 = vmatpush.bf16.msra.mxu0 %v1524
      %1548 = vmatmul.bf16.gmra.mxu0 %v1518
      %v1549 = vpop.f32.mrf.mxu0
      %v1550 = vadd.f32 0.0, %v1549
      %v1551 = vpop.f32.mrf.mxu0
      %v1552 = vadd.f32 0.0, %v1551
      %1553 = vdwg.mxu0
      %v1554 = vadd.f32 %v1496, %v1536
      %v1555 = vadd.f32 %v1497, %v1550
      %v1556 = vadd.f32 %v1498, %v1538
      %v1557 = vadd.f32 %v1499, %v1552
      %s1558 = scalar_lea.vmem %s0, 192
      %v1559 = vld [vmem:[%s1558] sm:$0xf]
      %v1560 = vld [vmem:[%s1558 + $0x4] sm:$0xf]
      %v1563 = vunpack.c.l.b16 %v1559
      %v1564 = vunpack.c.l.b16 %v1560
      %v1565 = vpack.c.b16 %v1564, %v1563
      %1566 = vrot.lane.b32.xlu0 %v189, 68
      %v1567 = vpop.permute.xlu0 %1566
      %1568 = vrot.lane.b32.xlu0 %v190, 68
      %v1569 = vpop.permute.xlu0 %1568
      %1570 = vrot.lane.b32.xlu0 %v191, 68
      %v1571 = vpop.permute.xlu0 %1570
      %vm1572 = vcmask 556032
      %v1573 = vsel %vm1572, %v1567, %v1569
      %v1574 = vsel %vm1572, %v1569, %v1571
      %v1576 = vsel %vm201, %v1565, 0
      %v1579 = vsel %vm205, %v1573, 0
      %v1582 = vsel %vm205, %v1574, 0
      %1584 = vmatpush.bf16.msra.mxu0 0
      %1585 = vmatpush.bf16.msra.mxu0 0
      %1586 = vmatpush.bf16.msra.mxu0 0
      %1587 = vmatpush.bf16.msra.mxu0 0
      %1588 = vmatpush.bf16.msra.mxu0 0
      %1589 = vmatpush.bf16.msra.mxu0 0
      %1590 = vmatpush.bf16.msra.mxu0 0
      %1591 = vmatpush.bf16.msra.mxu0 %v1579
      %1592 = vmatmul.bf16.gmra.mxu0 %v1576
      %v1593 = vpop.f32.mrf.mxu0
      %v1594 = vadd.f32 0.0, %v1593
      %v1595 = vpop.f32.mrf.mxu0
      %v1596 = vadd.f32 0.0, %v1595
      %1597 = vdwg.mxu0
      %1598 = vmatpush.bf16.msra.mxu0 0
      %1599 = vmatpush.bf16.msra.mxu0 0
      %1600 = vmatpush.bf16.msra.mxu0 0
      %1601 = vmatpush.bf16.msra.mxu0 0
      %1602 = vmatpush.bf16.msra.mxu0 0
      %1603 = vmatpush.bf16.msra.mxu0 0
      %1604 = vmatpush.bf16.msra.mxu0 0
      %1605 = vmatpush.bf16.msra.mxu0 %v1582
      %1606 = vmatmul.bf16.gmra.mxu0 %v1576
      %v1607 = vpop.f32.mrf.mxu0
      %v1608 = vadd.f32 0.0, %v1607
      %v1609 = vpop.f32.mrf.mxu0
      %v1610 = vadd.f32 0.0, %v1609
      %1611 = vdwg.mxu0
      %v1612 = vadd.f32 %v1554, %v1594
      %v1613 = vadd.f32 %v1555, %v1608
      %v1614 = vadd.f32 %v1556, %v1596
      %v1615 = vadd.f32 %v1557, %v1610
      %v1616 = vld [vmem:[%s1] sm:$0xff]
      %v1617 = vld [vmem:[%s1 + $0x8] sm:$0xff]
      %1619 = vset.pattern.permute.xlu0 0
      %1620 = vperm.xlu0 %1619, %v1616
      %v1621 = vpop.permute.xlu0 %1620
      %1624 = vset.pattern.permute.xlu0 0
      %1625 = vperm.xlu0 %1624, %v1617
      %v1626 = vpop.permute.xlu0 %1625
      %v1628 = vadd.f32 %v1612, %v1621
      %v1629 = vadd.f32 %v1613, %v1621
      %v1630 = vadd.f32 %v1614, %v1626
      %v1631 = vadd.f32 %v1615, %v1626
      %v1632 = vmax.f32 %v1628, 0.0
      %v1633 = vmax.f32 %v1629, 0.0
      %v1634 = vmax.f32 %v1630, 0.0
      %v1635 = vmax.f32 %v1631, 0.0
      %v1636 = vpack.c.bf16 %v1633, %v1632
      %v1637 = vpack.c.bf16 %v1635, %v1634
      %1638 = vst [vmem:[%s170] sm:$0xff] %v1636
      %1639 = vst [vmem:[%s170 + $0x8] sm:$0xff] %v1637
      %p1640 = scmp.lt.s32.totalorder %s14, 1
      %s1641 = scalar_select %p1640, %s14, 1
      %s1642 = smul.addr %s1641, 4
      %s1643 = smul.addr %s1642, 4
      %s1644 = scalar_lea.vmem %s3, %s1643
      // Predicated region
      $region33: #{forward.4} parent=31 // pred_check
        %p1645 = pneg %p100
      $region34: #{forward.4} parent=31 // pred_check_branch
        %1647 = sbr.rel (%p1645) target = $region36
      $region35: #{forward.4} parent=31 // pred_region
        _
      $region36: #{forward.4} parent=31 // pred_fallthru
        _
    $region32: #{forward.4} parent=5 // pred_fallthru
      _
    %p1648 = scmp.le.s32.totalorder 2, %s9
    // Predicated region
    $region37: #{forward.4} parent=5 // pred_check
      %p1649 = pneg %p1648
    $region38: #{forward.4} parent=5 // pred_check_branch
      %1651 = sbr.rel (%p1649) target = $region40
    $region39: #{forward.4} parent=5 // pred_region
      %s1652 = ssub.s32 %s9, 2
      // Predicated region
      $region41: #{forward.4} parent=39 // pred_check
        %p1653 = pneg %p106
      $region42: #{forward.4} parent=39 // pred_check_branch
        %1655 = sbr.rel (%p1653) target = $region44
      $region43: #{forward.4} parent=39 // pred_region
        %p1656 = scmp.lt.s32.totalorder %s15, 1
        %s1657 = scalar_select %p1656, %s15, 1
        %s1658 = smul.addr %s1657, 4
        %s1659 = smul.addr %s1658, 4
        %s1660 = scalar_lea.vmem %s3, %s1659
      $region44: #{forward.4} parent=39 // pred_fallthru
        _
    $region40: #{forward.4} parent=5 // pred_fallthru
      _
  $region6: #{forward.4} parent=0 // loop_footer
    %s13 = sadd.s32 1, %s9
  $region7: #{forward.4} parent=0 // loop_footer_branch
    %8 = sbr.rel target = $region3
  $region8: #{forward.4} parent=0 // loop_exit
    _

// kernel: forward.3
$region0: #{forward.3}
  #allocation0 [shape = 'u32[]', space=smem, size = 0x4, offset = 0x4, fixed_abs, tag = 'smem constant byte address 0x4 - core index']
  #allocation1 [shape = 'u32[72,128]{1,0:T(1,128)}', space=vmem, size = 0x9000, scoped, tag = 'internal scratch']
  %s0 = inlined_call_operand.vmem [shape: bf16[25,6,8], index: 0, kind: input, shape index: {}]
  %s1 = inlined_call_operand.vmem [shape: f32[6,1], index: 1, kind: input, shape index: {}]
  %s2 = inlined_call_operand.vmem [shape: bf16[2,8,1280], index: 2, kind: input, shape index: {}]
  %s3 = inlined_call_operand.vmem [shape: bf16[2,6,1024], index: 3, kind: output, shape index: {}]
  %s4 = sld [smem:[#allocation0]]
  $region45: #{forward.3} parent=0
    _
  %s6 = ssub.s32 1, %s4
  %s7 = scalar_select 0, %s6, %s4
  loop: start=0, step=1, limit=4
  $region2: #{forward.3} parent=0 // loop_pre_header
    _
  $region3: #{forward.3} parent=0 // loop_header
    %s9 = sphi 0, %s13
    %p10 = scmp.ge.s32.totalorder %s9, 4
    %s17 = sphi 0, %s17
    %s19 = sphi 0, %s17
    %s20 = sphi 0, %s19
    %s34 = sphi 0, %s20
    %s38 = sphi 0, %s38
    %s40 = sphi 0, %s38
    %s41 = sphi 0, %s40
    %s55 = sphi 0, %s41
    %s61 = sphi 0, %s63
    %s64 = sphi 0, %s61
    %s65 = sphi 0, %s64
    %s81 = sphi 0, %s65
    %s87 = sphi 0, %s89
    %s90 = sphi 0, %s87
    %s91 = sphi 0, %s90
    %s107 = sphi 0, %s91
  $region4: #{forward.3} parent=0 // loop_header_branch
    %12 = sbr.rel (%p10) target = $region8
  $region5: #{forward.3} parent=0 // loop_body
    %s14 = ssub.s32 %s9, 1
    %s15 = ssub.s32 %s9, 2
    %s16 = sadd.s32 %s9, 1
    %s18 = sadd.s32 %s17, 1
    %p21 = scmp.eq.s32.totalorder %s9, 1
    %p22 = scmp.ne.s32.totalorder %s17, %s19
    %p23 = scmp.eq.s32.totalorder %s9, 0
    %p24 = por %p22, %p23
    %p25 = scmp.ne.s32.totalorder %s17, %s19
    %p26 = scmp.eq.s32.totalorder %s14, 1
    %p27 = por %p25, %p26
    %p28 = scmp.ne.s32.totalorder %s19, %s20
    %p29 = scmp.eq.s32.totalorder %s14, 0
    %p30 = por %p28, %p29
    %p31 = scmp.ne.s32.totalorder %s19, %s20
    %p32 = scmp.eq.s32.totalorder %s15, 1
    %p33 = por %p31, %p32
    %p35 = scmp.ne.s32.totalorder %s20, %s34
    %p36 = scmp.eq.s32.totalorder %s15, 0
    %p37 = por %p35, %p36
    %s39 = sadd.s32 %s38, 1
    %p42 = scmp.eq.s32.totalorder %s9, 1
    %p43 = scmp.ne.s32.totalorder %s38, %s40
    %p44 = scmp.eq.s32.totalorder %s9, 0
    %p45 = por %p43, %p44
    %p46 = scmp.ne.s32.totalorder %s38, %s40
    %p47 = scmp.eq.s32.totalorder %s14, 1
    %p48 = por %p46, %p47
    %p49 = scmp.ne.s32.totalorder %s40, %s41
    %p50 = scmp.eq.s32.totalorder %s14, 0
    %p51 = por %p49, %p50
    %p52 = scmp.ne.s32.totalorder %s40, %s41
    %p53 = scmp.eq.s32.totalorder %s15, 1
    %p54 = por %p52, %p53
    %p56 = scmp.ne.s32.totalorder %s41, %s55
    %p57 = scmp.eq.s32.totalorder %s15, 0
    %p58 = por %p56, %p57
    %s59 = ssub.s32 %s9, %s16
    %p60 = scmp.eq.s32.totalorder %s59, 0
    %s62 = sadd.s32 %s61, 1
    %s63 = scalar_select %p60, %s61, %s62
    %p66 = pneg %p60
    %p67 = scmp.eq.s32.totalorder %s9, 1
    %p68 = por %p66, %p67
    %p69 = scmp.ne.s32.totalorder %s61, %s64
    %p70 = scmp.eq.s32.totalorder %s9, 0
    %p71 = por %p69, %p70
    %p72 = scmp.ne.s32.totalorder %s61, %s64
    %p73 = scmp.eq.s32.totalorder %s14, 1
    %p74 = por %p72, %p73
    %p75 = scmp.ne.s32.totalorder %s64, %s65
    %p76 = scmp.eq.s32.totalorder %s14, 0
    %p77 = por %p75, %p76
    %p78 = scmp.ne.s32.totalorder %s64, %s65
    %p79 = scmp.eq.s32.totalorder %s15, 1
    %p80 = por %p78, %p79
    %p82 = scmp.ne.s32.totalorder %s65, %s81
    %p83 = scmp.eq.s32.totalorder %s15, 0
    %p84 = por %p82, %p83
    %s85 = ssub.s32 %s9, %s16
    %p86 = scmp.eq.s32.totalorder %s85, 0
    %s88 = sadd.s32 %s87, 1
    %s89 = scalar_select %p86, %s87, %s88
    %p92 = pneg %p86
    %p93 = scmp.eq.s32.totalorder %s9, 1
    %p94 = por %p92, %p93
    %p95 = scmp.ne.s32.totalorder %s87, %s90
    %p96 = scmp.eq.s32.totalorder %s9, 0
    %p97 = por %p95, %p96
    %p98 = scmp.ne.s32.totalorder %s87, %s90
    %p99 = scmp.eq.s32.totalorder %s14, 1
    %p100 = por %p98, %p99
    %p101 = scmp.ne.s32.totalorder %s90, %s91
    %p102 = scmp.eq.s32.totalorder %s14, 0
    %p103 = por %p101, %p102
    %p104 = scmp.ne.s32.totalorder %s90, %s91
    %p105 = scmp.eq.s32.totalorder %s15, 1
    %p106 = por %p104, %p105
    %p108 = scmp.ne.s32.totalorder %s91, %s107
    %p109 = scmp.eq.s32.totalorder %s15, 0
    %p110 = por %p108, %p109
    %p111 = scmp.le.s32.totalorder 1, %s9
    %p112 = scmp.lt.s32.totalorder %s9, 3
    %p113 = pnand %p111, %p112
    %p114 = pneg %p113
    // Predicated region
    $region9: #{forward.3} parent=5 // pred_check
      _
    $region10: #{forward.3} parent=5 // pred_check_branch
      %116 = sbr.rel (%p113) target = $region12
    $region11: #{forward.3} parent=5 // pred_region
      %s117 = ssub.s32 %s9, 1
      // Predicated region
      $region13: #{forward.3} parent=11 // pred_check
        %p118 = pneg %p30
      $region14: #{forward.3} parent=11 // pred_check_branch
        %120 = sbr.rel (%p118) target = $region16
      $region15: #{forward.3} parent=11 // pred_region
        _
      $region16: #{forward.3} parent=11 // pred_fallthru
        _
      // Predicated region
      $region17: #{forward.3} parent=11 // pred_check
        %p121 = pneg %p51
      $region18: #{forward.3} parent=11 // pred_check_branch
        %123 = sbr.rel (%p121) target = $region20
      $region19: #{forward.3} parent=11 // pred_region
        _
      $region20: #{forward.3} parent=11 // pred_fallthru
        _
    $region12: #{forward.3} parent=5 // pred_fallthru
      _
    %p124 = scmp.lt.s32.totalorder %s9, 2
    // Predicated region
    $region21: #{forward.3} parent=5 // pred_check
      %p125 = pneg %p124
    $region22: #{forward.3} parent=5 // pred_check_branch
      %127 = sbr.rel (%p125) target = $region24
    $region23: #{forward.3} parent=5 // pred_region
      // Predicated region
      $region25: #{forward.3} parent=23 // pred_check
        %p128 = pneg %p71
      $region26: #{forward.3} parent=23 // pred_check_branch
        %130 = sbr.rel (%p128) target = $region28
      $region27: #{forward.3} parent=23 // pred_region
        %p131 = scmp.lt.s32.totalorder %s9, 1
        %s132 = scalar_select %p131, %s9, 1
        %s133 = smul.addr %s132, 10
        %s134 = smul.addr %s133, 4
        %s135 = scalar_lea.vmem %s2, %s134
      $region28: #{forward.3} parent=23 // pred_fallthru
        _
    $region24: #{forward.3} parent=5 // pred_fallthru
      _
    %p136 = scmp.le.s32.totalorder 1, %s9
    %p137 = scmp.lt.s32.totalorder %s9, 3
    %p138 = pnand %p136, %p137
    %p139 = pneg %p138
    // Predicated region
    $region29: #{forward.3} parent=5 // pred_check
      _
    $region30: #{forward.3} parent=5 // pred_check_branch
      %141 = sbr.rel (%p138) target = $region32
    $region31: #{forward.3} parent=5 // pred_region
      %s142 = ssub.s32 %s9, 1
      %p143 = pneg %p30
      %p144 = pneg %p27
      %p145 = pneg %p51
      %p146 = pneg %p48
      %p147 = scmp.lt.s32.totalorder %s14, 1
      %s148 = scalar_select %p147, %s14, 1
      %s149 = smul.addr %s148, 10
      %s150 = smul.addr %s149, 4
      %s151 = scalar_lea.vmem %s2, %s150
      %p152 = pneg %p77
      %p153 = pneg %p74
      %p154 = pneg %p103
      %p155 = pneg %p100
      %p156 = scmp.lt.s32.totalorder %s14, 1
      %s157 = scalar_select %p156, %s14, 1
      %s158 = smul.addr %s157, 8
      %s159 = smul.addr %s158, 4
      %s160 = scalar_lea.vmem %s3, %s159
      %p161 = scmp.lt.s32.totalorder %s14, 1
      %s162 = scalar_select %p161, %s14, 1
      %s163 = smul.addr %s162, 10
      %s164 = smul.addr %s163, 4
      %s165 = scalar_lea.vmem %s2, %s164
      %p166 = scmp.lt.s32.totalorder %s14, 1
      %s167 = scalar_select %p166, %s14, 1
      %s168 = smul.addr %s167, 8
      %s169 = smul.addr %s168, 4
      %s170 = scalar_lea.vmem %s3, %s169
      %v172 = vld [vmem:[%s165] sm:$0xff]
      %v173 = vld [vmem:[%s165 + $0x8] sm:$0xff]
      %v174 = vld [vmem:[%s165 + $0x10] sm:$0xff]
      %v175 = vld [vmem:[%s165 + $0x18] sm:$0xff]
      %v176 = vld [vmem:[%s165 + $0x20] sm:$0xff]
      %v177 = vld [vmem:[%s0] sm:$0x7]
      %s178 = scalar_lea.vmem %s0, 4
      %v179 = vld [vmem:[%s178] sm:$0x7]
      %v185 = vunpack.c.l.b16 %v172
      %v186 = vunpack.c.h.b16 %v172
      %v187 = vunpack.c.l.b16 %v173
      %v188 = vunpack.c.h.b16 %v173
      %v189 = vunpack.c.l.b16 %v174
      %v190 = vunpack.c.h.b16 %v174
      %v191 = vunpack.c.l.b16 %v175
      %v192 = vunpack.c.h.b16 %v175
      %v193 = vunpack.c.l.b16 %v176
      %v194 = vpack.c.b16 %v185, %v185
      %v195 = vpack.c.b16 %v186, %v186
      %v196 = vpack.c.b16 %v187, %v187
      %v197 = vpack.c.b16 %v188, %v188
      %v198 = vpack.c.b16 %v189, %v189
      %v199 = vpack.c.b16 %v190, %v190
      %v200 = vpack.c.b16 %v191, %v191
      %v201 = vpack.c.b16 %v192, %v192
      %v202 = vpack.c.b16 %v193, %v193
      %203 = vrot.lane.b32.xlu0 %v194, 127
      %v204 = vpop.permute.xlu0 %203
      %205 = vrot.lane.b32.xlu0 %v195, 127
      %v206 = vpop.permute.xlu0 %205
      %207 = vrot.lane.b32.xlu0 %v196, 127
      %v208 = vpop.permute.xlu0 %207
      %209 = vrot.lane.b32.xlu0 %v197, 127
      %v210 = vpop.permute.xlu0 %209
      %211 = vrot.lane.b32.xlu0 %v198, 127
      %v212 = vpop.permute.xlu0 %211
      %213 = vrot.lane.b32.xlu0 %v199, 127
      %v214 = vpop.permute.xlu0 %213
      %215 = vrot.lane.b32.xlu0 %v200, 127
      %v216 = vpop.permute.xlu0 %215
      %217 = vrot.lane.b32.xlu0 %v201, 127
      %v218 = vpop.permute.xlu0 %217
      %219 = vrot.lane.b32.xlu0 %v202, 127
      %v220 = vpop.permute.xlu0 %219
      %vm221 = vcmask 1039360
      %v222 = vsel %vm221, %v204, %v206
      %v223 = vsel %vm221, %v206, %v208
      %v224 = vsel %vm221, %v208, %v210
      %v225 = vsel %vm221, %v210, %v212
      %v226 = vsel %vm221, %v212, %v214
      %v227 = vsel %vm221, %v214, %v216
      %v228 = vsel %vm221, %v216, %v218
      %v229 = vsel %vm221, %v218, %v220
      %vm230 = vcmask 64512
      %v232 = vsel %vm230, %v179, 0
      %vm234 = vcmask 1043456
      %v236 = vsel %vm234, %v222, 0
      %v239 = vsel %vm234, %v223, 0
      %v242 = vsel %vm234, %v224, 0
      %v245 = vsel %vm234, %v225, 0
      %v248 = vsel %vm234, %v226, 0
      %v251 = vsel %vm234, %v227, 0
      %v254 = vsel %vm234, %v228, 0
      %v257 = vsel %vm234, %v229, 0
      %259 = vmatpush.bf16.msra.mxu0 0
      %260 = vmatpush.bf16.msra.mxu0 0
      %261 = vmatpush.bf16.msra.mxu0 0
      %262 = vmatpush.bf16.msra.mxu0 0
      %263 = vmatpush.bf16.msra.mxu0 0
      %264 = vmatpush.bf16.msra.mxu0 0
      %265 = vmatpush.bf16.msra.mxu0 0
      %266 = vmatpush.bf16.msra.mxu0 %v236
      %267 = vmatmul.bf16.gmra.mxu0 %v232
      %v268 = vpop.f32.mrf.mxu0
      %v269 = vadd.f32 0.0, %v268
      %v270 = vpop.f32.mrf.mxu0
      %271 = vdwg.mxu0
      %272 = vmatpush.bf16.msra.mxu0 0
      %273 = vmatpush.bf16.msra.mxu0 0
      %274 = vmatpush.bf16.msra.mxu0 0
      %275 = vmatpush.bf16.msra.mxu0 0
      %276 = vmatpush.bf16.msra.mxu0 0
      %277 = vmatpush.bf16.msra.mxu0 0
      %278 = vmatpush.bf16.msra.mxu0 0
      %279 = vmatpush.bf16.msra.mxu0 %v239
      %280 = vmatmul.bf16.gmra.mxu0 %v232
      %v281 = vpop.f32.mrf.mxu0
      %v282 = vadd.f32 0.0, %v281
      %v283 = vpop.f32.mrf.mxu0
      %284 = vdwg.mxu0
      %285 = vmatpush.bf16.msra.mxu0 0
      %286 = vmatpush.bf16.msra.mxu0 0
      %287 = vmatpush.bf16.msra.mxu0 0
      %288 = vmatpush.bf16.msra.mxu0 0
      %289 = vmatpush.bf16.msra.mxu0 0
      %290 = vmatpush.bf16.msra.mxu0 0
      %291 = vmatpush.bf16.msra.mxu0 0
      %292 = vmatpush.bf16.msra.mxu0 %v242
      %293 = vmatmul.bf16.gmra.mxu0 %v232
      %v294 = vpop.f32.mrf.mxu0
      %v295 = vadd.f32 0.0, %v294
      %v296 = vpop.f32.mrf.mxu0
      %297 = vdwg.mxu0
      %298 = vmatpush.bf16.msra.mxu0 0
      %299 = vmatpush.bf16.msra.mxu0 0
      %300 = vmatpush.bf16.msra.mxu0 0
      %301 = vmatpush.bf16.msra.mxu0 0
      %302 = vmatpush.bf16.msra.mxu0 0
      %303 = vmatpush.bf16.msra.mxu0 0
      %304 = vmatpush.bf16.msra.mxu0 0
      %305 = vmatpush.bf16.msra.mxu0 %v245
      %306 = vmatmul.bf16.gmra.mxu0 %v232
      %v307 = vpop.f32.mrf.mxu0
      %v308 = vadd.f32 0.0, %v307
      %v309 = vpop.f32.mrf.mxu0
      %310 = vdwg.mxu0
      %311 = vmatpush.bf16.msra.mxu0 0
      %312 = vmatpush.bf16.msra.mxu0 0
      %313 = vmatpush.bf16.msra.mxu0 0
      %314 = vmatpush.bf16.msra.mxu0 0
      %315 = vmatpush.bf16.msra.mxu0 0
      %316 = vmatpush.bf16.msra.mxu0 0
      %317 = vmatpush.bf16.msra.mxu0 0
      %318 = vmatpush.bf16.msra.mxu0 %v248
      %319 = vmatmul.bf16.gmra.mxu0 %v232
      %v320 = vpop.f32.mrf.mxu0
      %v321 = vadd.f32 0.0, %v320
      %v322 = vpop.f32.mrf.mxu0
      %323 = vdwg.mxu0
      %324 = vmatpush.bf16.msra.mxu0 0
      %325 = vmatpush.bf16.msra.mxu0 0
      %326 = vmatpush.bf16.msra.mxu0 0
      %327 = vmatpush.bf16.msra.mxu0 0
      %328 = vmatpush.bf16.msra.mxu0 0
      %329 = vmatpush.bf16.msra.mxu0 0
      %330 = vmatpush.bf16.msra.mxu0 0
      %331 = vmatpush.bf16.msra.mxu0 %v251
      %332 = vmatmul.bf16.gmra.mxu0 %v232
      %v333 = vpop.f32.mrf.mxu0
      %v334 = vadd.f32 0.0, %v333
      %v335 = vpop.f32.mrf.mxu0
      %336 = vdwg.mxu0
      %337 = vmatpush.bf16.msra.mxu0 0
      %338 = vmatpush.bf16.msra.mxu0 0
      %339 = vmatpush.bf16.msra.mxu0 0
      %340 = vmatpush.bf16.msra.mxu0 0
      %341 = vmatpush.bf16.msra.mxu0 0
      %342 = vmatpush.bf16.msra.mxu0 0
      %343 = vmatpush.bf16.msra.mxu0 0
      %344 = vmatpush.bf16.msra.mxu0 %v254
      %345 = vmatmul.bf16.gmra.mxu0 %v232
      %v346 = vpop.f32.mrf.mxu0
      %v347 = vadd.f32 0.0, %v346
      %v348 = vpop.f32.mrf.mxu0
      %349 = vdwg.mxu0
      %350 = vmatpush.bf16.msra.mxu0 0
      %351 = vmatpush.bf16.msra.mxu0 0
      %352 = vmatpush.bf16.msra.mxu0 0
      %353 = vmatpush.bf16.msra.mxu0 0
      %354 = vmatpush.bf16.msra.mxu0 0
      %355 = vmatpush.bf16.msra.mxu0 0
      %356 = vmatpush.bf16.msra.mxu0 0
      %357 = vmatpush.bf16.msra.mxu0 %v257
      %358 = vmatmul.bf16.gmra.mxu0 %v232
      %v359 = vpop.f32.mrf.mxu0
      %v360 = vadd.f32 0.0, %v359
      %v361 = vpop.f32.mrf.mxu0
      %362 = vdwg.mxu0
      %v364 = vsel %vm230, %v177, 0
      %v367 = vsel %vm234, %v194, 0
      %v370 = vsel %vm234, %v195, 0
      %v373 = vsel %vm234, %v196, 0
      %v376 = vsel %vm234, %v197, 0
      %v379 = vsel %vm234, %v198, 0
      %v382 = vsel %vm234, %v199, 0
      %v385 = vsel %vm234, %v200, 0
      %v388 = vsel %vm234, %v201, 0
      %390 = vmatpush.bf16.msra.mxu0 0
      %391 = vmatpush.bf16.msra.mxu0 0
      %392 = vmatpush.bf16.msra.mxu0 0
      %393 = vmatpush.bf16.msra.mxu0 0
      %394 = vmatpush.bf16.msra.mxu0 0
      %395 = vmatpush.bf16.msra.mxu0 0
      %396 = vmatpush.bf16.msra.mxu0 0
      %397 = vmatpush.bf16.msra.mxu0 %v367
      %398 = vmatmul.bf16.gmra.mxu0 %v364
      %v399 = vpop.f32.mrf.mxu0
      %v400 = vadd.f32 %v269, %v399
      %v401 = vpop.f32.mrf.mxu0
      %402 = vdwg.mxu0
      %403 = vmatpush.bf16.msra.mxu0 0
      %404 = vmatpush.bf16.msra.mxu0 0
      %405 = vmatpush.bf16.msra.mxu0 0
      %406 = vmatpush.bf16.msra.mxu0 0
      %407 = vmatpush.bf16.msra.mxu0 0
      %408 = vmatpush.bf16.msra.mxu0 0
      %409 = vmatpush.bf16.msra.mxu0 0
      %410 = vmatpush.bf16.msra.mxu0 %v370
      %411 = vmatmul.bf16.gmra.mxu0 %v364
      %v412 = vpop.f32.mrf.mxu0
      %v413 = vadd.f32 %v282, %v412
      %v414 = vpop.f32.mrf.mxu0
      %415 = vdwg.mxu0
      %416 = vmatpush.bf16.msra.mxu0 0
      %417 = vmatpush.bf16.msra.mxu0 0
      %418 = vmatpush.bf16.msra.mxu0 0
      %419 = vmatpush.bf16.msra.mxu0 0
      %420 = vmatpush.bf16.msra.mxu0 0
      %421 = vmatpush.bf16.msra.mxu0 0
      %422 = vmatpush.bf16.msra.mxu0 0
      %423 = vmatpush.bf16.msra.mxu0 %v373
      %424 = vmatmul.bf16.gmra.mxu0 %v364
      %v425 = vpop.f32.mrf.mxu0
      %v426 = vadd.f32 %v295, %v425
      %v427 = vpop.f32.mrf.mxu0
      %428 = vdwg.mxu0
      %429 = vmatpush.bf16.msra.mxu0 0
      %430 = vmatpush.bf16.msra.mxu0 0
      %431 = vmatpush.bf16.msra.mxu0 0
      %432 = vmatpush.bf16.msra.mxu0 0
      %433 = vmatpush.bf16.msra.mxu0 0
      %434 = vmatpush.bf16.msra.mxu0 0
      %435 = vmatpush.bf16.msra.mxu0 0
      %436 = vmatpush.bf16.msra.mxu0 %v376
      %437 = vmatmul.bf16.gmra.mxu0 %v364
      %v438 = vpop.f32.mrf.mxu0
      %v439 = vadd.f32 %v308, %v438
      %v440 = vpop.f32.mrf.mxu0
      %441 = vdwg.mxu0
      %442 = vmatpush.bf16.msra.mxu0 0
      %443 = vmatpush.bf16.msra.mxu0 0
      %444 = vmatpush.bf16.msra.mxu0 0
      %445 = vmatpush.bf16.msra.mxu0 0
      %446 = vmatpush.bf16.msra.mxu0 0
      %447 = vmatpush.bf16.msra.mxu0 0
      %448 = vmatpush.bf16.msra.mxu0 0
      %449 = vmatpush.bf16.msra.mxu0 %v379
      %450 = vmatmul.bf16.gmra.mxu0 %v364
      %v451 = vpop.f32.mrf.mxu0
      %v452 = vadd.f32 %v321, %v451
      %v453 = vpop.f32.mrf.mxu0
      %454 = vdwg.mxu0
      %455 = vmatpush.bf16.msra.mxu0 0
      %456 = vmatpush.bf16.msra.mxu0 0
      %457 = vmatpush.bf16.msra.mxu0 0
      %458 = vmatpush.bf16.msra.mxu0 0
      %459 = vmatpush.bf16.msra.mxu0 0
      %460 = vmatpush.bf16.msra.mxu0 0
      %461 = vmatpush.bf16.msra.mxu0 0
      %462 = vmatpush.bf16.msra.mxu0 %v382
      %463 = vmatmul.bf16.gmra.mxu0 %v364
      %v464 = vpop.f32.mrf.mxu0
      %v465 = vadd.f32 %v334, %v464
      %v466 = vpop.f32.mrf.mxu0
      %467 = vdwg.mxu0
      %468 = vmatpush.bf16.msra.mxu0 0
      %469 = vmatpush.bf16.msra.mxu0 0
      %470 = vmatpush.bf16.msra.mxu0 0
      %471 = vmatpush.bf16.msra.mxu0 0
      %472 = vmatpush.bf16.msra.mxu0 0
      %473 = vmatpush.bf16.msra.mxu0 0
      %474 = vmatpush.bf16.msra.mxu0 0
      %475 = vmatpush.bf16.msra.mxu0 %v385
      %476 = vmatmul.bf16.gmra.mxu0 %v364
      %v477 = vpop.f32.mrf.mxu0
      %v478 = vadd.f32 %v347, %v477
      %v479 = vpop.f32.mrf.mxu0
      %480 = vdwg.mxu0
      %481 = vmatpush.bf16.msra.mxu0 0
      %482 = vmatpush.bf16.msra.mxu0 0
      %483 = vmatpush.bf16.msra.mxu0 0
      %484 = vmatpush.bf16.msra.mxu0 0
      %485 = vmatpush.bf16.msra.mxu0 0
      %486 = vmatpush.bf16.msra.mxu0 0
      %487 = vmatpush.bf16.msra.mxu0 0
      %488 = vmatpush.bf16.msra.mxu0 %v388
      %489 = vmatmul.bf16.gmra.mxu0 %v364
      %v490 = vpop.f32.mrf.mxu0
      %v491 = vadd.f32 %v360, %v490
      %v492 = vpop.f32.mrf.mxu0
      %493 = vdwg.mxu0
      %s494 = scalar_lea.vmem %s0, 8
      %v495 = vld [vmem:[%s494] sm:$0x7]
      %496 = vrot.lane.b32.xlu0 %v194, 126
      %v497 = vpop.permute.xlu0 %496
      %498 = vrot.lane.b32.xlu0 %v195, 126
      %v499 = vpop.permute.xlu0 %498
      %500 = vrot.lane.b32.xlu0 %v196, 126
      %v501 = vpop.permute.xlu0 %500
      %502 = vrot.lane.b32.xlu0 %v197, 126
      %v503 = vpop.permute.xlu0 %502
      %504 = vrot.lane.b32.xlu0 %v198, 126
      %v505 = vpop.permute.xlu0 %504
      %506 = vrot.lane.b32.xlu0 %v199, 126
      %v507 = vpop.permute.xlu0 %506
      %508 = vrot.lane.b32.xlu0 %v200, 126
      %v509 = vpop.permute.xlu0 %508
      %510 = vrot.lane.b32.xlu0 %v201, 126
      %v511 = vpop.permute.xlu0 %510
      %512 = vrot.lane.b32.xlu0 %v202, 126
      %v513 = vpop.permute.xlu0 %512
      %vm514 = vcmask 1031168
      %v515 = vsel %vm514, %v497, %v499
      %v516 = vsel %vm514, %v499, %v501
      %v517 = vsel %vm514, %v501, %v503
      %v518 = vsel %vm514, %v503, %v505
      %v519 = vsel %vm514, %v505, %v507
      %v520 = vsel %vm514, %v507, %v509
      %v521 = vsel %vm514, %v509, %v511
      %v522 = vsel %vm514, %v511, %v513
      %v524 = vsel %vm230, %v495, 0
      %v527 = vsel %vm234, %v515, 0
      %v530 = vsel %vm234, %v516, 0
      %v533 = vsel %vm234, %v517, 0
      %v536 = vsel %vm234, %v518, 0
      %v539 = vsel %vm234, %v519, 0
      %v542 = vsel %vm234, %v520, 0
      %v545 = vsel %vm234, %v521, 0
      %v548 = vsel %vm234, %v522, 0
      %550 = vmatpush.bf16.msra.mxu0 0
      %551 = vmatpush.bf16.msra.mxu0 0
      %552 = vmatpush.bf16.msra.mxu0 0
      %553 = vmatpush.bf16.msra.mxu0 0
      %554 = vmatpush.bf16.msra.mxu0 0
      %555 = vmatpush.bf16.msra.mxu0 0
      %556 = vmatpush.bf16.msra.mxu0 0
      %557 = vmatpush.bf16.msra.mxu0 %v527
      %558 = vmatmul.bf16.gmra.mxu0 %v524
      %v559 = vpop.f32.mrf.mxu0
      %v560 = vadd.f32 0.0, %v559
      %v561 = vpop.f32.mrf.mxu0
      %562 = vdwg.mxu0
      %563 = vmatpush.bf16.msra.mxu0 0
      %564 = vmatpush.bf16.msra.mxu0 0
      %565 = vmatpush.bf16.msra.mxu0 0
      %566 = vmatpush.bf16.msra.mxu0 0
      %567 = vmatpush.bf16.msra.mxu0 0
      %568 = vmatpush.bf16.msra.mxu0 0
      %569 = vmatpush.bf16.msra.mxu0 0
      %570 = vmatpush.bf16.msra.mxu0 %v530
      %571 = vmatmul.bf16.gmra.mxu0 %v524
      %v572 = vpop.f32.mrf.mxu0
      %v573 = vadd.f32 0.0, %v572
      %v574 = vpop.f32.mrf.mxu0
      %575 = vdwg.mxu0
      %576 = vmatpush.bf16.msra.mxu0 0
      %577 = vmatpush.bf16.msra.mxu0 0
      %578 = vmatpush.bf16.msra.mxu0 0
      %579 = vmatpush.bf16.msra.mxu0 0
      %580 = vmatpush.bf16.msra.mxu0 0
      %581 = vmatpush.bf16.msra.mxu0 0
      %582 = vmatpush.bf16.msra.mxu0 0
      %583 = vmatpush.bf16.msra.mxu0 %v533
      %584 = vmatmul.bf16.gmra.mxu0 %v524
      %v585 = vpop.f32.mrf.mxu0
      %v586 = vadd.f32 0.0, %v585
      %v587 = vpop.f32.mrf.mxu0
      %588 = vdwg.mxu0
      %589 = vmatpush.bf16.msra.mxu0 0
      %590 = vmatpush.bf16.msra.mxu0 0
      %591 = vmatpush.bf16.msra.mxu0 0
      %592 = vmatpush.bf16.msra.mxu0 0
      %593 = vmatpush.bf16.msra.mxu0 0
      %594 = vmatpush.bf16.msra.mxu0 0
      %595 = vmatpush.bf16.msra.mxu0 0
      %596 = vmatpush.bf16.msra.mxu0 %v536
      %597 = vmatmul.bf16.gmra.mxu0 %v524
      %v598 = vpop.f32.mrf.mxu0
      %v599 = vadd.f32 0.0, %v598
      %v600 = vpop.f32.mrf.mxu0
      %601 = vdwg.mxu0
      %602 = vmatpush.bf16.msra.mxu0 0
      %603 = vmatpush.bf16.msra.mxu0 0
      %604 = vmatpush.bf16.msra.mxu0 0
      %605 = vmatpush.bf16.msra.mxu0 0
      %606 = vmatpush.bf16.msra.mxu0 0
      %607 = vmatpush.bf16.msra.mxu0 0
      %608 = vmatpush.bf16.msra.mxu0 0
      %609 = vmatpush.bf16.msra.mxu0 %v539
      %610 = vmatmul.bf16.gmra.mxu0 %v524
      %v611 = vpop.f32.mrf.mxu0
      %v612 = vadd.f32 0.0, %v611
      %v613 = vpop.f32.mrf.mxu0
      %614 = vdwg.mxu0
      %615 = vmatpush.bf16.msra.mxu0 0
      %616 = vmatpush.bf16.msra.mxu0 0
      %617 = vmatpush.bf16.msra.mxu0 0
      %618 = vmatpush.bf16.msra.mxu0 0
      %619 = vmatpush.bf16.msra.mxu0 0
      %620 = vmatpush.bf16.msra.mxu0 0
      %621 = vmatpush.bf16.msra.mxu0 0
      %622 = vmatpush.bf16.msra.mxu0 %v542
      %623 = vmatmul.bf16.gmra.mxu0 %v524
      %v624 = vpop.f32.mrf.mxu0
      %v625 = vadd.f32 0.0, %v624
      %v626 = vpop.f32.mrf.mxu0
      %627 = vdwg.mxu0
      %628 = vmatpush.bf16.msra.mxu0 0
      %629 = vmatpush.bf16.msra.mxu0 0
      %630 = vmatpush.bf16.msra.mxu0 0
      %631 = vmatpush.bf16.msra.mxu0 0
      %632 = vmatpush.bf16.msra.mxu0 0
      %633 = vmatpush.bf16.msra.mxu0 0
      %634 = vmatpush.bf16.msra.mxu0 0
      %635 = vmatpush.bf16.msra.mxu0 %v545
      %636 = vmatmul.bf16.gmra.mxu0 %v524
      %v637 = vpop.f32.mrf.mxu0
      %v638 = vadd.f32 0.0, %v637
      %v639 = vpop.f32.mrf.mxu0
      %640 = vdwg.mxu0
      %641 = vmatpush.bf16.msra.mxu0 0
      %642 = vmatpush.bf16.msra.mxu0 0
      %643 = vmatpush.bf16.msra.mxu0 0
      %644 = vmatpush.bf16.msra.mxu0 0
      %645 = vmatpush.bf16.msra.mxu0 0
      %646 = vmatpush.bf16.msra.mxu0 0
      %647 = vmatpush.bf16.msra.mxu0 0
      %648 = vmatpush.bf16.msra.mxu0 %v548
      %649 = vmatmul.bf16.gmra.mxu0 %v524
      %v650 = vpop.f32.mrf.mxu0
      %v651 = vadd.f32 0.0, %v650
      %v652 = vpop.f32.mrf.mxu0
      %653 = vdwg.mxu0
      %v654 = vadd.f32 %v400, %v560
      %v655 = vadd.f32 %v413, %v573
      %v656 = vadd.f32 %v426, %v586
      %v657 = vadd.f32 %v439, %v599
      %v658 = vadd.f32 %v452, %v612
      %v659 = vadd.f32 %v465, %v625
      %v660 = vadd.f32 %v478, %v638
      %v661 = vadd.f32 %v491, %v651
      %s662 = scalar_lea.vmem %s0, 12
      %v663 = vld [vmem:[%s662] sm:$0x7]
      %664 = vrot.lane.b32.xlu0 %v194, 125
      %v665 = vpop.permute.xlu0 %664
      %666 = vrot.lane.b32.xlu0 %v195, 125
      %v667 = vpop.permute.xlu0 %666
      %668 = vrot.lane.b32.xlu0 %v196, 125
      %v669 = vpop.permute.xlu0 %668
      %670 = vrot.lane.b32.xlu0 %v197, 125
      %v671 = vpop.permute.xlu0 %670
      %672 = vrot.lane.b32.xlu0 %v198, 125
      %v673 = vpop.permute.xlu0 %672
      %674 = vrot.lane.b32.xlu0 %v199, 125
      %v675 = vpop.permute.xlu0 %674
      %676 = vrot.lane.b32.xlu0 %v200, 125
      %v677 = vpop.permute.xlu0 %676
      %678 = vrot.lane.b32.xlu0 %v201, 125
      %v679 = vpop.permute.xlu0 %678
      %680 = vrot.lane.b32.xlu0 %v202, 125
      %v681 = vpop.permute.xlu0 %680
      %vm682 = vcmask 1022976
      %v683 = vsel %vm682, %v665, %v667
      %v684 = vsel %vm682, %v667, %v669
      %v685 = vsel %vm682, %v669, %v671
      %v686 = vsel %vm682, %v671, %v673
      %v687 = vsel %vm682, %v673, %v675
      %v688 = vsel %vm682, %v675, %v677
      %v689 = vsel %vm682, %v677, %v679
      %v690 = vsel %vm682, %v679, %v681
      %v692 = vsel %vm230, %v663, 0
      %v695 = vsel %vm234, %v683, 0
      %v698 = vsel %vm234, %v684, 0
      %v701 = vsel %vm234, %v685, 0
      %v704 = vsel %vm234, %v686, 0
      %v707 = vsel %vm234, %v687, 0
      %v710 = vsel %vm234, %v688, 0
      %v713 = vsel %vm234, %v689, 0
      %v716 = vsel %vm234, %v690, 0
      %718 = vmatpush.bf16.msra.mxu0 0
      %719 = vmatpush.bf16.msra.mxu0 0
      %720 = vmatpush.bf16.msra.mxu0 0
      %721 = vmatpush.bf16.msra.mxu0 0
      %722 = vmatpush.bf16.msra.mxu0 0
      %723 = vmatpush.bf16.msra.mxu0 0
      %724 = vmatpush.bf16.msra.mxu0 0
      %725 = vmatpush.bf16.msra.mxu0 %v695
      %726 = vmatmul.bf16.gmra.mxu0 %v692
      %v727 = vpop.f32.mrf.mxu0
      %v728 = vadd.f32 0.0, %v727
      %v729 = vpop.f32.mrf.mxu0
      %730 = vdwg.mxu0
      %731 = vmatpush.bf16.msra.mxu0 0
      %732 = vmatpush.bf16.msra.mxu0 0
      %733 = vmatpush.bf16.msra.mxu0 0
      %734 = vmatpush.bf16.msra.mxu0 0
      %735 = vmatpush.bf16.msra.mxu0 0
      %736 = vmatpush.bf16.msra.mxu0 0
      %737 = vmatpush.bf16.msra.mxu0 0
      %738 = vmatpush.bf16.msra.mxu0 %v698
      %739 = vmatmul.bf16.gmra.mxu0 %v692
      %v740 = vpop.f32.mrf.mxu0
      %v741 = vadd.f32 0.0, %v740
      %v742 = vpop.f32.mrf.mxu0
      %743 = vdwg.mxu0
      %744 = vmatpush.bf16.msra.mxu0 0
      %745 = vmatpush.bf16.msra.mxu0 0
      %746 = vmatpush.bf16.msra.mxu0 0
      %747 = vmatpush.bf16.msra.mxu0 0
      %748 = vmatpush.bf16.msra.mxu0 0
      %749 = vmatpush.bf16.msra.mxu0 0
      %750 = vmatpush.bf16.msra.mxu0 0
      %751 = vmatpush.bf16.msra.mxu0 %v701
      %752 = vmatmul.bf16.gmra.mxu0 %v692
      %v753 = vpop.f32.mrf.mxu0
      %v754 = vadd.f32 0.0, %v753
      %v755 = vpop.f32.mrf.mxu0
      %756 = vdwg.mxu0
      %757 = vmatpush.bf16.msra.mxu0 0
      %758 = vmatpush.bf16.msra.mxu0 0
      %759 = vmatpush.bf16.msra.mxu0 0
      %760 = vmatpush.bf16.msra.mxu0 0
      %761 = vmatpush.bf16.msra.mxu0 0
      %762 = vmatpush.bf16.msra.mxu0 0
      %763 = vmatpush.bf16.msra.mxu0 0
      %764 = vmatpush.bf16.msra.mxu0 %v704
      %765 = vmatmul.bf16.gmra.mxu0 %v692
      %v766 = vpop.f32.mrf.mxu0
      %v767 = vadd.f32 0.0, %v766
      %v768 = vpop.f32.mrf.mxu0
      %769 = vdwg.mxu0
      %770 = vmatpush.bf16.msra.mxu0 0
      %771 = vmatpush.bf16.msra.mxu0 0
      %772 = vmatpush.bf16.msra.mxu0 0
      %773 = vmatpush.bf16.msra.mxu0 0
      %774 = vmatpush.bf16.msra.mxu0 0
      %775 = vmatpush.bf16.msra.mxu0 0
      %776 = vmatpush.bf16.msra.mxu0 0
      %777 = vmatpush.bf16.msra.mxu0 %v707
      %778 = vmatmul.bf16.gmra.mxu0 %v692
      %v779 = vpop.f32.mrf.mxu0
      %v780 = vadd.f32 0.0, %v779
      %v781 = vpop.f32.mrf.mxu0
      %782 = vdwg.mxu0
      %783 = vmatpush.bf16.msra.mxu0 0
      %784 = vmatpush.bf16.msra.mxu0 0
      %785 = vmatpush.bf16.msra.mxu0 0
      %786 = vmatpush.bf16.msra.mxu0 0
      %787 = vmatpush.bf16.msra.mxu0 0
      %788 = vmatpush.bf16.msra.mxu0 0
      %789 = vmatpush.bf16.msra.mxu0 0
      %790 = vmatpush.bf16.msra.mxu0 %v710
      %791 = vmatmul.bf16.gmra.mxu0 %v692
      %v792 = vpop.f32.mrf.mxu0
      %v793 = vadd.f32 0.0, %v792
      %v794 = vpop.f32.mrf.mxu0
      %795 = vdwg.mxu0
      %796 = vmatpush.bf16.msra.mxu0 0
      %797 = vmatpush.bf16.msra.mxu0 0
      %798 = vmatpush.bf16.msra.mxu0 0
      %799 = vmatpush.bf16.msra.mxu0 0
      %800 = vmatpush.bf16.msra.mxu0 0
      %801 = vmatpush.bf16.msra.mxu0 0
      %802 = vmatpush.bf16.msra.mxu0 0
      %803 = vmatpush.bf16.msra.mxu0 %v713
      %804 = vmatmul.bf16.gmra.mxu0 %v692
      %v805 = vpop.f32.mrf.mxu0
      %v806 = vadd.f32 0.0, %v805
      %v807 = vpop.f32.mrf.mxu0
      %808 = vdwg.mxu0
      %809 = vmatpush.bf16.msra.mxu0 0
      %810 = vmatpush.bf16.msra.mxu0 0
      %811 = vmatpush.bf16.msra.mxu0 0
      %812 = vmatpush.bf16.msra.mxu0 0
      %813 = vmatpush.bf16.msra.mxu0 0
      %814 = vmatpush.bf16.msra.mxu0 0
      %815 = vmatpush.bf16.msra.mxu0 0
      %816 = vmatpush.bf16.msra.mxu0 %v716
      %817 = vmatmul.bf16.gmra.mxu0 %v692
      %v818 = vpop.f32.mrf.mxu0
      %v819 = vadd.f32 0.0, %v818
      %v820 = vpop.f32.mrf.mxu0
      %821 = vdwg.mxu0
      %v822 = vadd.f32 %v654, %v728
      %v823 = vadd.f32 %v655, %v741
      %v824 = vadd.f32 %v656, %v754
      %v825 = vadd.f32 %v657, %v767
      %v826 = vadd.f32 %v658, %v780
      %v827 = vadd.f32 %v659, %v793
      %v828 = vadd.f32 %v660, %v806
      %v829 = vadd.f32 %v661, %v819
      %s830 = scalar_lea.vmem %s0, 16
      %v831 = vld [vmem:[%s830] sm:$0x7]
      %832 = vrot.lane.b32.xlu0 %v194, 124
      %v833 = vpop.permute.xlu0 %832
      %834 = vrot.lane.b32.xlu0 %v195, 124
      %v835 = vpop.permute.xlu0 %834
      %836 = vrot.lane.b32.xlu0 %v196, 124
      %v837 = vpop.permute.xlu0 %836
      %838 = vrot.lane.b32.xlu0 %v197, 124
      %v839 = vpop.permute.xlu0 %838
      %840 = vrot.lane.b32.xlu0 %v198, 124
      %v841 = vpop.permute.xlu0 %840
      %842 = vrot.lane.b32.xlu0 %v199, 124
      %v843 = vpop.permute.xlu0 %842
      %844 = vrot.lane.b32.xlu0 %v200, 124
      %v845 = vpop.permute.xlu0 %844
      %846 = vrot.lane.b32.xlu0 %v201, 124
      %v847 = vpop.permute.xlu0 %846
      %848 = vrot.lane.b32.xlu0 %v202, 124
      %v849 = vpop.permute.xlu0 %848
      %vm850 = vcmask 1014784
      %v851 = vsel %vm850, %v833, %v835
      %v852 = vsel %vm850, %v835, %v837
      %v853 = vsel %vm850, %v837, %v839
      %v854 = vsel %vm850, %v839, %v841
      %v855 = vsel %vm850, %v841, %v843
      %v856 = vsel %vm850, %v843, %v845
      %v857 = vsel %vm850, %v845, %v847
      %v858 = vsel %vm850, %v847, %v849
      %v860 = vsel %vm230, %v831, 0
      %v863 = vsel %vm234, %v851, 0
      %v866 = vsel %vm234, %v852, 0
      %v869 = vsel %vm234, %v853, 0
      %v872 = vsel %vm234, %v854, 0
      %v875 = vsel %vm234, %v855, 0
      %v878 = vsel %vm234, %v856, 0
      %v881 = vsel %vm234, %v857, 0
      %v884 = vsel %vm234, %v858, 0
      %886 = vmatpush.bf16.msra.mxu0 0
      %887 = vmatpush.bf16.msra.mxu0 0
      %888 = vmatpush.bf16.msra.mxu0 0
      %889 = vmatpush.bf16.msra.mxu0 0
      %890 = vmatpush.bf16.msra.mxu0 0
      %891 = vmatpush.bf16.msra.mxu0 0
      %892 = vmatpush.bf16.msra.mxu0 0
      %893 = vmatpush.bf16.msra.mxu0 %v863
      %894 = vmatmul.bf16.gmra.mxu0 %v860
      %v895 = vpop.f32.mrf.mxu0
      %v896 = vadd.f32 0.0, %v895
      %v897 = vpop.f32.mrf.mxu0
      %898 = vdwg.mxu0
      %899 = vmatpush.bf16.msra.mxu0 0
      %900 = vmatpush.bf16.msra.mxu0 0
      %901 = vmatpush.bf16.msra.mxu0 0
      %902 = vmatpush.bf16.msra.mxu0 0
      %903 = vmatpush.bf16.msra.mxu0 0
      %904 = vmatpush.bf16.msra.mxu0 0
      %905 = vmatpush.bf16.msra.mxu0 0
      %906 = vmatpush.bf16.msra.mxu0 %v866
      %907 = vmatmul.bf16.gmra.mxu0 %v860
      %v908 = vpop.f32.mrf.mxu0
      %v909 = vadd.f32 0.0, %v908
      %v910 = vpop.f32.mrf.mxu0
      %911 = vdwg.mxu0
      %912 = vmatpush.bf16.msra.mxu0 0
      %913 = vmatpush.bf16.msra.mxu0 0
      %914 = vmatpush.bf16.msra.mxu0 0
      %915 = vmatpush.bf16.msra.mxu0 0
      %916 = vmatpush.bf16.msra.mxu0 0
      %917 = vmatpush.bf16.msra.mxu0 0
      %918 = vmatpush.bf16.msra.mxu0 0
      %919 = vmatpush.bf16.msra.mxu0 %v869
      %920 = vmatmul.bf16.gmra.mxu0 %v860
      %v921 = vpop.f32.mrf.mxu0
      %v922 = vadd.f32 0.0, %v921
      %v923 = vpop.f32.mrf.mxu0
      %924 = vdwg.mxu0
      %925 = vmatpush.bf16.msra.mxu0 0
      %926 = vmatpush.bf16.msra.mxu0 0
      %927 = vmatpush.bf16.msra.mxu0 0
      %928 = vmatpush.bf16.msra.mxu0 0
      %929 = vmatpush.bf16.msra.mxu0 0
      %930 = vmatpush.bf16.msra.mxu0 0
      %931 = vmatpush.bf16.msra.mxu0 0
      %932 = vmatpush.bf16.msra.mxu0 %v872
      %933 = vmatmul.bf16.gmra.mxu0 %v860
      %v934 = vpop.f32.mrf.mxu0
      %v935 = vadd.f32 0.0, %v934
      %v936 = vpop.f32.mrf.mxu0
      %937 = vdwg.mxu0
      %938 = vmatpush.bf16.msra.mxu0 0
      %939 = vmatpush.bf16.msra.mxu0 0
      %940 = vmatpush.bf16.msra.mxu0 0
      %941 = vmatpush.bf16.msra.mxu0 0
      %942 = vmatpush.bf16.msra.mxu0 0
      %943 = vmatpush.bf16.msra.mxu0 0
      %944 = vmatpush.bf16.msra.mxu0 0
      %945 = vmatpush.bf16.msra.mxu0 %v875
      %946 = vmatmul.bf16.gmra.mxu0 %v860
      %v947 = vpop.f32.mrf.mxu0
      %v948 = vadd.f32 0.0, %v947
      %v949 = vpop.f32.mrf.mxu0
      %950 = vdwg.mxu0
      %951 = vmatpush.bf16.msra.mxu0 0
      %952 = vmatpush.bf16.msra.mxu0 0
      %953 = vmatpush.bf16.msra.mxu0 0
      %954 = vmatpush.bf16.msra.mxu0 0
      %955 = vmatpush.bf16.msra.mxu0 0
      %956 = vmatpush.bf16.msra.mxu0 0
      %957 = vmatpush.bf16.msra.mxu0 0
      %958 = vmatpush.bf16.msra.mxu0 %v878
      %959 = vmatmul.bf16.gmra.mxu0 %v860
      %v960 = vpop.f32.mrf.mxu0
      %v961 = vadd.f32 0.0, %v960
      %v962 = vpop.f32.mrf.mxu0
      %963 = vdwg.mxu0
      %964 = vmatpush.bf16.msra.mxu0 0
      %965 = vmatpush.bf16.msra.mxu0 0
      %966 = vmatpush.bf16.msra.mxu0 0
      %967 = vmatpush.bf16.msra.mxu0 0
      %968 = vmatpush.bf16.msra.mxu0 0
      %969 = vmatpush.bf16.msra.mxu0 0
      %970 = vmatpush.bf16.msra.mxu0 0
      %971 = vmatpush.bf16.msra.mxu0 %v881
      %972 = vmatmul.bf16.gmra.mxu0 %v860
      %v973 = vpop.f32.mrf.mxu0
      %v974 = vadd.f32 0.0, %v973
      %v975 = vpop.f32.mrf.mxu0
      %976 = vdwg.mxu0
      %977 = vmatpush.bf16.msra.mxu0 0
      %978 = vmatpush.bf16.msra.mxu0 0
      %979 = vmatpush.bf16.msra.mxu0 0
      %980 = vmatpush.bf16.msra.mxu0 0
      %981 = vmatpush.bf16.msra.mxu0 0
      %982 = vmatpush.bf16.msra.mxu0 0
      %983 = vmatpush.bf16.msra.mxu0 0
      %984 = vmatpush.bf16.msra.mxu0 %v884
      %985 = vmatmul.bf16.gmra.mxu0 %v860
      %v986 = vpop.f32.mrf.mxu0
      %v987 = vadd.f32 0.0, %v986
      %v988 = vpop.f32.mrf.mxu0
      %989 = vdwg.mxu0
      %v990 = vadd.f32 %v822, %v896
      %v991 = vadd.f32 %v823, %v909
      %v992 = vadd.f32 %v824, %v922
      %v993 = vadd.f32 %v825, %v935
      %v994 = vadd.f32 %v826, %v948
      %v995 = vadd.f32 %v827, %v961
      %v996 = vadd.f32 %v828, %v974
      %v997 = vadd.f32 %v829, %v987
      %s998 = scalar_lea.vmem %s0, 20
      %v999 = vld [vmem:[%s998] sm:$0x7]
      %1000 = vrot.lane.b32.xlu0 %v194, 96
      %v1001 = vpop.permute.xlu0 %1000
      %1002 = vrot.lane.b32.xlu0 %v195, 96
      %v1003 = vpop.permute.xlu0 %1002
      %1004 = vrot.lane.b32.xlu0 %v196, 96
      %v1005 = vpop.permute.xlu0 %1004
      %1006 = vrot.lane.b32.xlu0 %v197, 96
      %v1007 = vpop.permute.xlu0 %1006
      %1008 = vrot.lane.b32.xlu0 %v198, 96
      %v1009 = vpop.permute.xlu0 %1008
      %1010 = vrot.lane.b32.xlu0 %v199, 96
      %v1011 = vpop.permute.xlu0 %1010
      %1012 = vrot.lane.b32.xlu0 %v200, 96
      %v1013 = vpop.permute.xlu0 %1012
      %1014 = vrot.lane.b32.xlu0 %v201, 96
      %v1015 = vpop.permute.xlu0 %1014
      %1016 = vrot.lane.b32.xlu0 %v202, 96
      %v1017 = vpop.permute.xlu0 %1016
      %vm1018 = vcmask 785408
      %v1019 = vsel %vm1018, %v1001, %v1003
      %v1020 = vsel %vm1018, %v1003, %v1005
      %v1021 = vsel %vm1018, %v1005, %v1007
      %v1022 = vsel %vm1018, %v1007, %v1009
      %v1023 = vsel %vm1018, %v1009, %v1011
      %v1024 = vsel %vm1018, %v1011, %v1013
      %v1025 = vsel %vm1018, %v1013, %v1015
      %v1026 = vsel %vm1018, %v1015, %v1017
      %v1028 = vsel %vm230, %v999, 0
      %v1031 = vsel %vm234, %v1019, 0
      %v1034 = vsel %vm234, %v1020, 0
      %v1037 = vsel %vm234, %v1021, 0
      %v1040 = vsel %vm234, %v1022, 0
      %v1043 = vsel %vm234, %v1023, 0
      %v1046 = vsel %vm234, %v1024, 0
      %v1049 = vsel %vm234, %v1025, 0
      %v1052 = vsel %vm234, %v1026, 0
      %1054 = vmatpush.bf16.msra.mxu0 0
      %1055 = vmatpush.bf16.msra.mxu0 0
      %1056 = vmatpush.bf16.msra.mxu0 0
      %1057 = vmatpush.bf16.msra.mxu0 0
      %1058 = vmatpush.bf16.msra.mxu0 0
      %1059 = vmatpush.bf16.msra.mxu0 0
      %1060 = vmatpush.bf16.msra.mxu0 0
      %1061 = vmatpush.bf16.msra.mxu0 %v1031
      %1062 = vmatmul.bf16.gmra.mxu0 %v1028
      %v1063 = vpop.f32.mrf.mxu0
      %v1064 = vadd.f32 0.0, %v1063
      %v1065 = vpop.f32.mrf.mxu0
      %1066 = vdwg.mxu0
      %1067 = vmatpush.bf16.msra.mxu0 0
      %1068 = vmatpush.bf16.msra.mxu0 0
      %1069 = vmatpush.bf16.msra.mxu0 0
      %1070 = vmatpush.bf16.msra.mxu0 0
      %1071 = vmatpush.bf16.msra.mxu0 0
      %1072 = vmatpush.bf16.msra.mxu0 0
      %1073 = vmatpush.bf16.msra.mxu0 0
      %1074 = vmatpush.bf16.msra.mxu0 %v1034
      %1075 = vmatmul.bf16.gmra.mxu0 %v1028
      %v1076 = vpop.f32.mrf.mxu0
      %v1077 = vadd.f32 0.0, %v1076
      %v1078 = vpop.f32.mrf.mxu0
      %1079 = vdwg.mxu0
      %1080 = vmatpush.bf16.msra.mxu0 0
      %1081 = vmatpush.bf16.msra.mxu0 0
      %1082 = vmatpush.bf16.msra.mxu0 0
      %1083 = vmatpush.bf16.msra.mxu0 0
      %1084 = vmatpush.bf16.msra.mxu0 0
      %1085 = vmatpush.bf16.msra.mxu0 0
      %1086 = vmatpush.bf16.msra.mxu0 0
      %1087 = vmatpush.bf16.msra.mxu0 %v1037
      %1088 = vmatmul.bf16.gmra.mxu0 %v1028
      %v1089 = vpop.f32.mrf.mxu0
      %v1090 = vadd.f32 0.0, %v1089
      %v1091 = vpop.f32.mrf.mxu0
      %1092 = vdwg.mxu0
      %1093 = vmatpush.bf16.msra.mxu0 0
      %1094 = vmatpush.bf16.msra.mxu0 0
      %1095 = vmatpush.bf16.msra.mxu0 0
      %1096 = vmatpush.bf16.msra.mxu0 0
      %1097 = vmatpush.bf16.msra.mxu0 0
      %1098 = vmatpush.bf16.msra.mxu0 0
      %1099 = vmatpush.bf16.msra.mxu0 0
      %1100 = vmatpush.bf16.msra.mxu0 %v1040
      %1101 = vmatmul.bf16.gmra.mxu0 %v1028
      %v1102 = vpop.f32.mrf.mxu0
      %v1103 = vadd.f32 0.0, %v1102
      %v1104 = vpop.f32.mrf.mxu0
      %1105 = vdwg.mxu0
      %1106 = vmatpush.bf16.msra.mxu0 0
      %1107 = vmatpush.bf16.msra.mxu0 0
      %1108 = vmatpush.bf16.msra.mxu0 0
      %1109 = vmatpush.bf16.msra.mxu0 0
      %1110 = vmatpush.bf16.msra.mxu0 0
      %1111 = vmatpush.bf16.msra.mxu0 0
      %1112 = vmatpush.bf16.msra.mxu0 0
      %1113 = vmatpush.bf16.msra.mxu0 %v1043
      %1114 = vmatmul.bf16.gmra.mxu0 %v1028
      %v1115 = vpop.f32.mrf.mxu0
      %v1116 = vadd.f32 0.0, %v1115
      %v1117 = vpop.f32.mrf.mxu0
      %1118 = vdwg.mxu0
      %1119 = vmatpush.bf16.msra.mxu0 0
      %1120 = vmatpush.bf16.msra.mxu0 0
      %1121 = vmatpush.bf16.msra.mxu0 0
      %1122 = vmatpush.bf16.msra.mxu0 0
      %1123 = vmatpush.bf16.msra.mxu0 0
      %1124 = vmatpush.bf16.msra.mxu0 0
      %1125 = vmatpush.bf16.msra.mxu0 0
      %1126 = vmatpush.bf16.msra.mxu0 %v1046
      %1127 = vmatmul.bf16.gmra.mxu0 %v1028
      %v1128 = vpop.f32.mrf.mxu0
      %v1129 = vadd.f32 0.0, %v1128
      %v1130 = vpop.f32.mrf.mxu0
      %1131 = vdwg.mxu0
      %1132 = vmatpush.bf16.msra.mxu0 0
      %1133 = vmatpush.bf16.msra.mxu0 0
      %1134 = vmatpush.bf16.msra.mxu0 0
      %1135 = vmatpush.bf16.msra.mxu0 0
      %1136 = vmatpush.bf16.msra.mxu0 0
      %1137 = vmatpush.bf16.msra.mxu0 0
      %1138 = vmatpush.bf16.msra.mxu0 0
      %1139 = vmatpush.bf16.msra.mxu0 %v1049
      %1140 = vmatmul.bf16.gmra.mxu0 %v1028
      %v1141 = vpop.f32.mrf.mxu0
      %v1142 = vadd.f32 0.0, %v1141
      %v1143 = vpop.f32.mrf.mxu0
      %1144 = vdwg.mxu0
      %1145 = vmatpush.bf16.msra.mxu0 0
      %1146 = vmatpush.bf16.msra.mxu0 0
      %1147 = vmatpush.bf16.msra.mxu0 0
      %1148 = vmatpush.bf16.msra.mxu0 0
      %1149 = vmatpush.bf16.msra.mxu0 0
      %1150 = vmatpush.bf16.msra.mxu0 0
      %1151 = vmatpush.bf16.msra.mxu0 0
      %1152 = vmatpush.bf16.msra.mxu0 %v1052
      %1153 = vmatmul.bf16.gmra.mxu0 %v1028
      %v1154 = vpop.f32.mrf.mxu0
      %v1155 = vadd.f32 0.0, %v1154
      %v1156 = vpop.f32.mrf.mxu0
      %1157 = vdwg.mxu0
      %v1158 = vadd.f32 %v990, %v1064
      %v1159 = vadd.f32 %v991, %v1077
      %v1160 = vadd.f32 %v992, %v1090
      %v1161 = vadd.f32 %v993, %v1103
      %v1162 = vadd.f32 %v994, %v1116
      %v1163 = vadd.f32 %v995, %v1129
      %v1164 = vadd.f32 %v996, %v1142
      %v1165 = vadd.f32 %v997, %v1155
      %s1166 = scalar_lea.vmem %s0, 24
      %v1167 = vld [vmem:[%s1166] sm:$0x7]
      %1168 = vrot.lane.b32.xlu0 %v194, 95
      %v1169 = vpop.permute.xlu0 %1168
      %1170 = vrot.lane.b32.xlu0 %v195, 95
      %v1171 = vpop.permute.xlu0 %1170
      %1172 = vrot.lane.b32.xlu0 %v196, 95
      %v1173 = vpop.permute.xlu0 %1172
      %1174 = vrot.lane.b32.xlu0 %v197, 95
      %v1175 = vpop.permute.xlu0 %1174
      %1176 = vrot.lane.b32.xlu0 %v198, 95
      %v1177 = vpop.permute.xlu0 %1176
      %1178 = vrot.lane.b32.xlu0 %v199, 95
      %v1179 = vpop.permute.xlu0 %1178
      %1180 = vrot.lane.b32.xlu0 %v200, 95
      %v1181 = vpop.permute.xlu0 %1180
      %1182 = vrot.lane.b32.xlu0 %v201, 95
      %v1183 = vpop.permute.xlu0 %1182
      %1184 = vrot.lane.b32.xlu0 %v202, 95
      %v1185 = vpop.permute.xlu0 %1184
      %vm1186 = vcmask 777216
      %v1187 = vsel %vm1186, %v1169, %v1171
      %v1188 = vsel %vm1186, %v1171, %v1173
      %v1189 = vsel %vm1186, %v1173, %v1175
      %v1190 = vsel %vm1186, %v1175, %v1177
      %v1191 = vsel %vm1186, %v1177, %v1179
      %v1192 = vsel %vm1186, %v1179, %v1181
      %v1193 = vsel %vm1186, %v1181, %v1183
      %v1194 = vsel %vm1186, %v1183, %v1185
      %v1196 = vsel %vm230, %v1167, 0
      %v1199 = vsel %vm234, %v1187, 0
      %v1202 = vsel %vm234, %v1188, 0
      %v1205 = vsel %vm234, %v1189, 0
      %v1208 = vsel %vm234, %v1190, 0
      %v1211 = vsel %vm234, %v1191, 0
      %v1214 = vsel %vm234, %v1192, 0
      %v1217 = vsel %vm234, %v1193, 0
      %v1220 = vsel %vm234, %v1194, 0
      %1222 = vmatpush.bf16.msra.mxu0 0
      %1223 = vmatpush.bf16.msra.mxu0 0
      %1224 = vmatpush.bf16.msra.mxu0 0
      %1225 = vmatpush.bf16.msra.mxu0 0
      %1226 = vmatpush.bf16.msra.mxu0 0
      %1227 = vmatpush.bf16.msra.mxu0 0
      %1228 = vmatpush.bf16.msra.mxu0 0
      %1229 = vmatpush.bf16.msra.mxu0 %v1199
      %1230 = vmatmul.bf16.gmra.mxu0 %v1196
      %v1231 = vpop.f32.mrf.mxu0
      %v1232 = vadd.f32 0.0, %v1231
      %v1233 = vpop.f32.mrf.mxu0
      %1234 = vdwg.mxu0
      %1235 = vmatpush.bf16.msra.mxu0 0
      %1236 = vmatpush.bf16.msra.mxu0 0
      %1237 = vmatpush.bf16.msra.mxu0 0
      %1238 = vmatpush.bf16.msra.mxu0 0
      %1239 = vmatpush.bf16.msra.mxu0 0
      %1240 = vmatpush.bf16.msra.mxu0 0
      %1241 = vmatpush.bf16.msra.mxu0 0
      %1242 = vmatpush.bf16.msra.mxu0 %v1202
      %1243 = vmatmul.bf16.gmra.mxu0 %v1196
      %v1244 = vpop.f32.mrf.mxu0
      %v1245 = vadd.f32 0.0, %v1244
      %v1246 = vpop.f32.mrf.mxu0
      %1247 = vdwg.mxu0
      %1248 = vmatpush.bf16.msra.mxu0 0
      %1249 = vmatpush.bf16.msra.mxu0 0
      %1250 = vmatpush.bf16.msra.mxu0 0
      %1251 = vmatpush.bf16.msra.mxu0 0
      %1252 = vmatpush.bf16.msra.mxu0 0
      %1253 = vmatpush.bf16.msra.mxu0 0
      %1254 = vmatpush.bf16.msra.mxu0 0
      %1255 = vmatpush.bf16.msra.mxu0 %v1205
      %1256 = vmatmul.bf16.gmra.mxu0 %v1196
      %v1257 = vpop.f32.mrf.mxu0
      %v1258 = vadd.f32 0.0, %v1257
      %v1259 = vpop.f32.mrf.mxu0
      %1260 = vdwg.mxu0
      %1261 = vmatpush.bf16.msra.mxu0 0
      %1262 = vmatpush.bf16.msra.mxu0 0
      %1263 = vmatpush.bf16.msra.mxu0 0
      %1264 = vmatpush.bf16.msra.mxu0 0
      %1265 = vmatpush.bf16.msra.mxu0 0
      %1266 = vmatpush.bf16.msra.mxu0 0
      %1267 = vmatpush.bf16.msra.mxu0 0
      %1268 = vmatpush.bf16.msra.mxu0 %v1208
      %1269 = vmatmul.bf16.gmra.mxu0 %v1196
      %v1270 = vpop.f32.mrf.mxu0
      %v1271 = vadd.f32 0.0, %v1270
      %v1272 = vpop.f32.mrf.mxu0
      %1273 = vdwg.mxu0
      %1274 = vmatpush.bf16.msra.mxu0 0
      %1275 = vmatpush.bf16.msra.mxu0 0
      %1276 = vmatpush.bf16.msra.mxu0 0
      %1277 = vmatpush.bf16.msra.mxu0 0
      %1278 = vmatpush.bf16.msra.mxu0 0
      %1279 = vmatpush.bf16.msra.mxu0 0
      %1280 = vmatpush.bf16.msra.mxu0 0
      %1281 = vmatpush.bf16.msra.mxu0 %v1211
      %1282 = vmatmul.bf16.gmra.mxu0 %v1196
      %v1283 = vpop.f32.mrf.mxu0
      %v1284 = vadd.f32 0.0, %v1283
      %v1285 = vpop.f32.mrf.mxu0
      %1286 = vdwg.mxu0
      %1287 = vmatpush.bf16.msra.mxu0 0
      %1288 = vmatpush.bf16.msra.mxu0 0
      %1289 = vmatpush.bf16.msra.mxu0 0
      %1290 = vmatpush.bf16.msra.mxu0 0
      %1291 = vmatpush.bf16.msra.mxu0 0
      %1292 = vmatpush.bf16.msra.mxu0 0
      %1293 = vmatpush.bf16.msra.mxu0 0
      %1294 = vmatpush.bf16.msra.mxu0 %v1214
      %1295 = vmatmul.bf16.gmra.mxu0 %v1196
      %v1296 = vpop.f32.mrf.mxu0
      %v1297 = vadd.f32 0.0, %v1296
      %v1298 = vpop.f32.mrf.mxu0
      %1299 = vdwg.mxu0
      %1300 = vmatpush.bf16.msra.mxu0 0
      %1301 = vmatpush.bf16.msra.mxu0 0
      %1302 = vmatpush.bf16.msra.mxu0 0
      %1303 = vmatpush.bf16.msra.mxu0 0
      %1304 = vmatpush.bf16.msra.mxu0 0
      %1305 = vmatpush.bf16.msra.mxu0 0
      %1306 = vmatpush.bf16.msra.mxu0 0
      %1307 = vmatpush.bf16.msra.mxu0 %v1217
      %1308 = vmatmul.bf16.gmra.mxu0 %v1196
      %v1309 = vpop.f32.mrf.mxu0
      %v1310 = vadd.f32 0.0, %v1309
      %v1311 = vpop.f32.mrf.mxu0
      %1312 = vdwg.mxu0
      %1313 = vmatpush.bf16.msra.mxu0 0
      %1314 = vmatpush.bf16.msra.mxu0 0
      %1315 = vmatpush.bf16.msra.mxu0 0
      %1316 = vmatpush.bf16.msra.mxu0 0
      %1317 = vmatpush.bf16.msra.mxu0 0
      %1318 = vmatpush.bf16.msra.mxu0 0
      %1319 = vmatpush.bf16.msra.mxu0 0
      %1320 = vmatpush.bf16.msra.mxu0 %v1220
      %1321 = vmatmul.bf16.gmra.mxu0 %v1196
      %v1322 = vpop.f32.mrf.mxu0
      %v1323 = vadd.f32 0.0, %v1322
      %v1324 = vpop.f32.mrf.mxu0
      %1325 = vdwg.mxu0
      %v1326 = vadd.f32 %v1158, %v1232
      %v1327 = vadd.f32 %v1159, %v1245
      %v1328 = vadd.f32 %v1160, %v1258
      %v1329 = vadd.f32 %v1161, %v1271
      %v1330 = vadd.f32 %v1162, %v1284
      %v1331 = vadd.f32 %v1163, %v1297
      %v1332 = vadd.f32 %v1164, %v1310
      %v1333 = vadd.f32 %v1165, %v1323
      %s1334 = scalar_lea.vmem %s0, 28
      %v1335 = vld [vmem:[%s1334] sm:$0x7]
      %1336 = vrot.lane.b32.xlu0 %v194, 94
      %v1337 = vpop.permute.xlu0 %1336
      %1338 = vrot.lane.b32.xlu0 %v195, 94
      %v1339 = vpop.permute.xlu0 %1338
      %1340 = vrot.lane.b32.xlu0 %v196, 94
      %v1341 = vpop.permute.xlu0 %1340
      %1342 = vrot.lane.b32.xlu0 %v197, 94
      %v1343 = vpop.permute.xlu0 %1342
      %1344 = vrot.lane.b32.xlu0 %v198, 94
      %v1345 = vpop.permute.xlu0 %1344
      %1346 = vrot.lane.b32.xlu0 %v199, 94
      %v1347 = vpop.permute.xlu0 %1346
      %1348 = vrot.lane.b32.xlu0 %v200, 94
      %v1349 = vpop.permute.xlu0 %1348
      %1350 = vrot.lane.b32.xlu0 %v201, 94
      %v1351 = vpop.permute.xlu0 %1350
      %1352 = vrot.lane.b32.xlu0 %v202, 94
      %v1353 = vpop.permute.xlu0 %1352
      %vm1354 = vcmask 769024
      %v1355 = vsel %vm1354, %v1337, %v1339
      %v1356 = vsel %vm1354, %v1339, %v1341
      %v1357 = vsel %vm1354, %v1341, %v1343
      %v1358 = vsel %vm1354, %v1343, %v1345
      %v1359 = vsel %vm1354, %v1345, %v1347
      %v1360 = vsel %vm1354, %v1347, %v1349
      %v1361 = vsel %vm1354, %v1349, %v1351
      %v1362 = vsel %vm1354, %v1351, %v1353
      %v1364 = vsel %vm230, %v1335, 0
      %v1367 = vsel %vm234, %v1355, 0
      %v1370 = vsel %vm234, %v1356, 0
      %v1373 = vsel %vm234, %v1357, 0
      %v1376 = vsel %vm234, %v1358, 0
      %v1379 = vsel %vm234, %v1359, 0
      %v1382 = vsel %vm234, %v1360, 0
      %v1385 = vsel %vm234, %v1361, 0
      %v1388 = vsel %vm234, %v1362, 0
      %1390 = vmatpush.bf16.msra.mxu0 0
      %1391 = vmatpush.bf16.msra.mxu0 0
      %1392 = vmatpush.bf16.msra.mxu0 0
      %1393 = vmatpush.bf16.msra.mxu0 0
      %1394 = vmatpush.bf16.msra.mxu0 0
      %1395 = vmatpush.bf16.msra.mxu0 0
      %1396 = vmatpush.bf16.msra.mxu0 0
      %1397 = vmatpush.bf16.msra.mxu0 %v1367
      %1398 = vmatmul.bf16.gmra.mxu0 %v1364
      %v1399 = vpop.f32.mrf.mxu0
      %v1400 = vadd.f32 0.0, %v1399
      %v1401 = vpop.f32.mrf.mxu0
      %1402 = vdwg.mxu0
      %1403 = vmatpush.bf16.msra.mxu0 0
      %1404 = vmatpush.bf16.msra.mxu0 0
      %1405 = vmatpush.bf16.msra.mxu0 0
      %1406 = vmatpush.bf16.msra.mxu0 0
      %1407 = vmatpush.bf16.msra.mxu0 0
      %1408 = vmatpush.bf16.msra.mxu0 0
      %1409 = vmatpush.bf16.msra.mxu0 0
      %1410 = vmatpush.bf16.msra.mxu0 %v1370
      %1411 = vmatmul.bf16.gmra.mxu0 %v1364
      %v1412 = vpop.f32.mrf.mxu0
      %v1413 = vadd.f32 0.0, %v1412
      %v1414 = vpop.f32.mrf.mxu0
      %1415 = vdwg.mxu0
      %1416 = vmatpush.bf16.msra.mxu0 0
      %1417 = vmatpush.bf16.msra.mxu0 0
      %1418 = vmatpush.bf16.msra.mxu0 0
      %1419 = vmatpush.bf16.msra.mxu0 0
      %1420 = vmatpush.bf16.msra.mxu0 0
      %1421 = vmatpush.bf16.msra.mxu0 0
      %1422 = vmatpush.bf16.msra.mxu0 0
      %1423 = vmatpush.bf16.msra.mxu0 %v1373
      %1424 = vmatmul.bf16.gmra.mxu0 %v1364
      %v1425 = vpop.f32.mrf.mxu0
      %v1426 = vadd.f32 0.0, %v1425
      %v1427 = vpop.f32.mrf.mxu0
      %1428 = vdwg.mxu0
      %1429 = vmatpush.bf16.msra.mxu0 0
      %1430 = vmatpush.bf16.msra.mxu0 0
      %1431 = vmatpush.bf16.msra.mxu0 0
      %1432 = vmatpush.bf16.msra.mxu0 0
      %1433 = vmatpush.bf16.msra.mxu0 0
      %1434 = vmatpush.bf16.msra.mxu0 0
      %1435 = vmatpush.bf16.msra.mxu0 0
      %1436 = vmatpush.bf16.msra.mxu0 %v1376
      %1437 = vmatmul.bf16.gmra.mxu0 %v1364
      %v1438 = vpop.f32.mrf.mxu0
      %v1439 = vadd.f32 0.0, %v1438
      %v1440 = vpop.f32.mrf.mxu0
      %1441 = vdwg.mxu0
      %1442 = vmatpush.bf16.msra.mxu0 0
      %1443 = vmatpush.bf16.msra.mxu0 0
      %1444 = vmatpush.bf16.msra.mxu0 0
      %1445 = vmatpush.bf16.msra.mxu0 0
      %1446 = vmatpush.bf16.msra.mxu0 0
      %1447 = vmatpush.bf16.msra.mxu0 0
      %1448 = vmatpush.bf16.msra.mxu0 0
      %1449 = vmatpush.bf16.msra.mxu0 %v1379
      %1450 = vmatmul.bf16.gmra.mxu0 %v1364
      %v1451 = vpop.f32.mrf.mxu0
      %v1452 = vadd.f32 0.0, %v1451
      %v1453 = vpop.f32.mrf.mxu0
      %1454 = vdwg.mxu0
      %1455 = vmatpush.bf16.msra.mxu0 0
      %1456 = vmatpush.bf16.msra.mxu0 0
      %1457 = vmatpush.bf16.msra.mxu0 0
      %1458 = vmatpush.bf16.msra.mxu0 0
      %1459 = vmatpush.bf16.msra.mxu0 0
      %1460 = vmatpush.bf16.msra.mxu0 0
      %1461 = vmatpush.bf16.msra.mxu0 0
      %1462 = vmatpush.bf16.msra.mxu0 %v1382
      %1463 = vmatmul.bf16.gmra.mxu0 %v1364
      %v1464 = vpop.f32.mrf.mxu0
      %v1465 = vadd.f32 0.0, %v1464
      %v1466 = vpop.f32.mrf.mxu0
      %1467 = vdwg.mxu0
      %1468 = vmatpush.bf16.msra.mxu0 0
      %1469 = vmatpush.bf16.msra.mxu0 0
      %1470 = vmatpush.bf16.msra.mxu0 0
      %1471 = vmatpush.bf16.msra.mxu0 0
      %1472 = vmatpush.bf16.msra.mxu0 0
      %1473 = vmatpush.bf16.msra.mxu0 0
      %1474 = vmatpush.bf16.msra.mxu0 0
      %1475 = vmatpush.bf16.msra.mxu0 %v1385
      %1476 = vmatmul.bf16.gmra.mxu0 %v1364
      %v1477 = vpop.f32.mrf.mxu0
      %v1478 = vadd.f32 0.0, %v1477
      %v1479 = vpop.f32.mrf.mxu0
      %1480 = vdwg.mxu0
      %1481 = vmatpush.bf16.msra.mxu0 0
      %1482 = vmatpush.bf16.msra.mxu0 0
      %1483 = vmatpush.bf16.msra.mxu0 0
      %1484 = vmatpush.bf16.msra.mxu0 0
      %1485 = vmatpush.bf16.msra.mxu0 0
      %1486 = vmatpush.bf16.msra.mxu0 0
      %1487 = vmatpush.bf16.msra.mxu0 0
      %1488 = vmatpush.bf16.msra.mxu0 %v1388
      %1489 = vmatmul.bf16.gmra.mxu0 %v1364
      %v1490 = vpop.f32.mrf.mxu0
      %v1491 = vadd.f32 0.0, %v1490
      %v1492 = vpop.f32.mrf.mxu0
      %1493 = vdwg.mxu0
      %v1494 = vadd.f32 %v1326, %v1400
      %v1495 = vadd.f32 %v1327, %v1413
      %v1496 = vadd.f32 %v1328, %v1426
      %v1497 = vadd.f32 %v1329, %v1439
      %v1498 = vadd.f32 %v1330, %v1452
      %v1499 = vadd.f32 %v1331, %v1465
      %v1500 = vadd.f32 %v1332, %v1478
      %v1501 = vadd.f32 %v1333, %v1491
      %s1502 = scalar_lea.vmem %s0, 32
      %v1503 = vld [vmem:[%s1502] sm:$0x7]
      %1504 = vrot.lane.b32.xlu0 %v194, 93
      %v1505 = vpop.permute.xlu0 %1504
      %1506 = vrot.lane.b32.xlu0 %v195, 93
      %v1507 = vpop.permute.xlu0 %1506
      %1508 = vrot.lane.b32.xlu0 %v196, 93
      %v1509 = vpop.permute.xlu0 %1508
      %1510 = vrot.lane.b32.xlu0 %v197, 93
      %v1511 = vpop.permute.xlu0 %1510
      %1512 = vrot.lane.b32.xlu0 %v198, 93
      %v1513 = vpop.permute.xlu0 %1512
      %1514 = vrot.lane.b32.xlu0 %v199, 93
      %v1515 = vpop.permute.xlu0 %1514
      %1516 = vrot.lane.b32.xlu0 %v200, 93
      %v1517 = vpop.permute.xlu0 %1516
      %1518 = vrot.lane.b32.xlu0 %v201, 93
      %v1519 = vpop.permute.xlu0 %1518
      %1520 = vrot.lane.b32.xlu0 %v202, 93
      %v1521 = vpop.permute.xlu0 %1520
      %vm1522 = vcmask 760832
      %v1523 = vsel %vm1522, %v1505, %v1507
      %v1524 = vsel %vm1522, %v1507, %v1509
      %v1525 = vsel %vm1522, %v1509, %v1511
      %v1526 = vsel %vm1522, %v1511, %v1513
      %v1527 = vsel %vm1522, %v1513, %v1515
      %v1528 = vsel %vm1522, %v1515, %v1517
      %v1529 = vsel %vm1522, %v1517, %v1519
      %v1530 = vsel %vm1522, %v1519, %v1521
      %v1532 = vsel %vm230, %v1503, 0
      %v1535 = vsel %vm234, %v1523, 0
      %v1538 = vsel %vm234, %v1524, 0
      %v1541 = vsel %vm234, %v1525, 0
      %v1544 = vsel %vm234, %v1526, 0
      %v1547 = vsel %vm234, %v1527, 0
      %v1550 = vsel %vm234, %v1528, 0
      %v1553 = vsel %vm234, %v1529, 0
      %v1556 = vsel %vm234, %v1530, 0
      %1558 = vmatpush.bf16.msra.mxu0 0
      %1559 = vmatpush.bf16.msra.mxu0 0
      %1560 = vmatpush.bf16.msra.mxu0 0
      %1561 = vmatpush.bf16.msra.mxu0 0
      %1562 = vmatpush.bf16.msra.mxu0 0
      %1563 = vmatpush.bf16.msra.mxu0 0
      %1564 = vmatpush.bf16.msra.mxu0 0
      %1565 = vmatpush.bf16.msra.mxu0 %v1535
      %1566 = vmatmul.bf16.gmra.mxu0 %v1532
      %v1567 = vpop.f32.mrf.mxu0
      %v1568 = vadd.f32 0.0, %v1567
      %v1569 = vpop.f32.mrf.mxu0
      %1570 = vdwg.mxu0
      %1571 = vmatpush.bf16.msra.mxu0 0
      %1572 = vmatpush.bf16.msra.mxu0 0
      %1573 = vmatpush.bf16.msra.mxu0 0
      %1574 = vmatpush.bf16.msra.mxu0 0
      %1575 = vmatpush.bf16.msra.mxu0 0
      %1576 = vmatpush.bf16.msra.mxu0 0
      %1577 = vmatpush.bf16.msra.mxu0 0
      %1578 = vmatpush.bf16.msra.mxu0 %v1538
      %1579 = vmatmul.bf16.gmra.mxu0 %v1532
      %v1580 = vpop.f32.mrf.mxu0
      %v1581 = vadd.f32 0.0, %v1580
      %v1582 = vpop.f32.mrf.mxu0
      %1583 = vdwg.mxu0
      %1584 = vmatpush.bf16.msra.mxu0 0
      %1585 = vmatpush.bf16.msra.mxu0 0
      %1586 = vmatpush.bf16.msra.mxu0 0
      %1587 = vmatpush.bf16.msra.mxu0 0
      %1588 = vmatpush.bf16.msra.mxu0 0
      %1589 = vmatpush.bf16.msra.mxu0 0
      %1590 = vmatpush.bf16.msra.mxu0 0
      %1591 = vmatpush.bf16.msra.mxu0 %v1541
      %1592 = vmatmul.bf16.gmra.mxu0 %v1532
      %v1593 = vpop.f32.mrf.mxu0
      %v1594 = vadd.f32 0.0, %v1593
      %v1595 = vpop.f32.mrf.mxu0
      %1596 = vdwg.mxu0
      %1597 = vmatpush.bf16.msra.mxu0 0
      %1598 = vmatpush.bf16.msra.mxu0 0
      %1599 = vmatpush.bf16.msra.mxu0 0
      %1600 = vmatpush.bf16.msra.mxu0 0
      %1601 = vmatpush.bf16.msra.mxu0 0
      %1602 = vmatpush.bf16.msra.mxu0 0
      %1603 = vmatpush.bf16.msra.mxu0 0
      %1604 = vmatpush.bf16.msra.mxu0 %v1544
      %1605 = vmatmul.bf16.gmra.mxu0 %v1532
      %v1606 = vpop.f32.mrf.mxu0
      %v1607 = vadd.f32 0.0, %v1606
      %v1608 = vpop.f32.mrf.mxu0
      %1609 = vdwg.mxu0
      %1610 = vmatpush.bf16.msra.mxu0 0
      %1611 = vmatpush.bf16.msra.mxu0 0
      %1612 = vmatpush.bf16.msra.mxu0 0
      %1613 = vmatpush.bf16.msra.mxu0 0
      %1614 = vmatpush.bf16.msra.mxu0 0
      %1615 = vmatpush.bf16.msra.mxu0 0
      %1616 = vmatpush.bf16.msra.mxu0 0
      %1617 = vmatpush.bf16.msra.mxu0 %v1547
      %1618 = vmatmul.bf16.gmra.mxu0 %v1532
      %v1619 = vpop.f32.mrf.mxu0
      %v1620 = vadd.f32 0.0, %v1619
      %v1621 = vpop.f32.mrf.mxu0
      %1622 = vdwg.mxu0
      %1623 = vmatpush.bf16.msra.mxu0 0
      %1624 = vmatpush.bf16.msra.mxu0 0
      %1625 = vmatpush.bf16.msra.mxu0 0
      %1626 = vmatpush.bf16.msra.mxu0 0
      %1627 = vmatpush.bf16.msra.mxu0 0
      %1628 = vmatpush.bf16.msra.mxu0 0
      %1629 = vmatpush.bf16.msra.mxu0 0
      %1630 = vmatpush.bf16.msra.mxu0 %v1550
      %1631 = vmatmul.bf16.gmra.mxu0 %v1532
      %v1632 = vpop.f32.mrf.mxu0
      %v1633 = vadd.f32 0.0, %v1632
      %v1634 = vpop.f32.mrf.mxu0
      %1635 = vdwg.mxu0
      %1636 = vmatpush.bf16.msra.mxu0 0
      %1637 = vmatpush.bf16.msra.mxu0 0
      %1638 = vmatpush.bf16.msra.mxu0 0
      %1639 = vmatpush.bf16.msra.mxu0 0
      %1640 = vmatpush.bf16.msra.mxu0 0
      %1641 = vmatpush.bf16.msra.mxu0 0
      %1642 = vmatpush.bf16.msra.mxu0 0
      %1643 = vmatpush.bf16.msra.mxu0 %v1553
      %1644 = vmatmul.bf16.gmra.mxu0 %v1532
      %v1645 = vpop.f32.mrf.mxu0
      %v1646 = vadd.f32 0.0, %v1645
      %v1647 = vpop.f32.mrf.mxu0
      %1648 = vdwg.mxu0
      %1649 = vmatpush.bf16.msra.mxu0 0
      %1650 = vmatpush.bf16.msra.mxu0 0
      %1651 = vmatpush.bf16.msra.mxu0 0
      %1652 = vmatpush.bf16.msra.mxu0 0
      %1653 = vmatpush.bf16.msra.mxu0 0
      %1654 = vmatpush.bf16.msra.mxu0 0
      %1655 = vmatpush.bf16.msra.mxu0 0
      %1656 = vmatpush.bf16.msra.mxu0 %v1556
      %1657 = vmatmul.bf16.gmra.mxu0 %v1532
      %v1658 = vpop.f32.mrf.mxu0
      %v1659 = vadd.f32 0.0, %v1658
      %v1660 = vpop.f32.mrf.mxu0
      %1661 = vdwg.mxu0
      %v1662 = vadd.f32 %v1494, %v1568
      %v1663 = vadd.f32 %v1495, %v1581
      %v1664 = vadd.f32 %v1496, %v1594
      %v1665 = vadd.f32 %v1497, %v1607
      %v1666 = vadd.f32 %v1498, %v1620
      %v1667 = vadd.f32 %v1499, %v1633
      %v1668 = vadd.f32 %v1500, %v1646
      %v1669 = vadd.f32 %v1501, %v1659
      %s1670 = scalar_lea.vmem %s0, 36
      %v1671 = vld [vmem:[%s1670] sm:$0x7]
      %1672 = vrot.lane.b32.xlu0 %v194, 92
      %v1673 = vpop.permute.xlu0 %1672
      %1674 = vrot.lane.b32.xlu0 %v195, 92
      %v1675 = vpop.permute.xlu0 %1674
      %1676 = vrot.lane.b32.xlu0 %v196, 92
      %v1677 = vpop.permute.xlu0 %1676
      %1678 = vrot.lane.b32.xlu0 %v197, 92
      %v1679 = vpop.permute.xlu0 %1678
      %1680 = vrot.lane.b32.xlu0 %v198, 92
      %v1681 = vpop.permute.xlu0 %1680
      %1682 = vrot.lane.b32.xlu0 %v199, 92
      %v1683 = vpop.permute.xlu0 %1682
      %1684 = vrot.lane.b32.xlu0 %v200, 92
      %v1685 = vpop.permute.xlu0 %1684
      %1686 = vrot.lane.b32.xlu0 %v201, 92
      %v1687 = vpop.permute.xlu0 %1686
      %1688 = vrot.lane.b32.xlu0 %v202, 92
      %v1689 = vpop.permute.xlu0 %1688
      %vm1690 = vcmask 752640
      %v1691 = vsel %vm1690, %v1673, %v1675
      %v1692 = vsel %vm1690, %v1675, %v1677
      %v1693 = vsel %vm1690, %v1677, %v1679
      %v1694 = vsel %vm1690, %v1679, %v1681
      %v1695 = vsel %vm1690, %v1681, %v1683
      %v1696 = vsel %vm1690, %v1683, %v1685
      %v1697 = vsel %vm1690, %v1685, %v1687
      %v1698 = vsel %vm1690, %v1687, %v1689
      %v1700 = vsel %vm230, %v1671, 0
      %v1703 = vsel %vm234, %v1691, 0
      %v1706 = vsel %vm234, %v1692, 0
      %v1709 = vsel %vm234, %v1693, 0
      %v1712 = vsel %vm234, %v1694, 0
      %v1715 = vsel %vm234, %v1695, 0
      %v1718 = vsel %vm234, %v1696, 0
      %v1721 = vsel %vm234, %v1697, 0
      %v1724 = vsel %vm234, %v1698, 0
      %1726 = vmatpush.bf16.msra.mxu0 0
      %1727 = vmatpush.bf16.msra.mxu0 0
      %1728 = vmatpush.bf16.msra.mxu0 0
      %1729 = vmatpush.bf16.msra.mxu0 0
      %1730 = vmatpush.bf16.msra.mxu0 0
      %1731 = vmatpush.bf16.msra.mxu0 0
      %1732 = vmatpush.bf16.msra.mxu0 0
      %1733 = vmatpush.bf16.msra.mxu0 %v1703
      %1734 = vmatmul.bf16.gmra.mxu0 %v1700
      %v1735 = vpop.f32.mrf.mxu0
      %v1736 = vadd.f32 0.0, %v1735
      %v1737 = vpop.f32.mrf.mxu0
      %1738 = vdwg.mxu0
      %1739 = vmatpush.bf16.msra.mxu0 0
      %1740 = vmatpush.bf16.msra.mxu0 0
      %1741 = vmatpush.bf16.msra.mxu0 0
      %1742 = vmatpush.bf16.msra.mxu0 0
      %1743 = vmatpush.bf16.msra.mxu0 0
      %1744 = vmatpush.bf16.msra.mxu0 0
      %1745 = vmatpush.bf16.msra.mxu0 0
      %1746 = vmatpush.bf16.msra.mxu0 %v1706
      %1747 = vmatmul.bf16.gmra.mxu0 %v1700
      %v1748 = vpop.f32.mrf.mxu0
      %v1749 = vadd.f32 0.0, %v1748
      %v1750 = vpop.f32.mrf.mxu0
      %1751 = vdwg.mxu0
      %1752 = vmatpush.bf16.msra.mxu0 0
      %1753 = vmatpush.bf16.msra.mxu0 0
      %1754 = vmatpush.bf16.msra.mxu0 0
      %1755 = vmatpush.bf16.msra.mxu0 0
      %1756 = vmatpush.bf16.msra.mxu0 0
      %1757 = vmatpush.bf16.msra.mxu0 0
      %1758 = vmatpush.bf16.msra.mxu0 0
      %1759 = vmatpush.bf16.msra.mxu0 %v1709
      %1760 = vmatmul.bf16.gmra.mxu0 %v1700
      %v1761 = vpop.f32.mrf.mxu0
      %v1762 = vadd.f32 0.0, %v1761
      %v1763 = vpop.f32.mrf.mxu0
      %1764 = vdwg.mxu0
      %1765 = vmatpush.bf16.msra.mxu0 0
      %1766 = vmatpush.bf16.msra.mxu0 0
      %1767 = vmatpush.bf16.msra.mxu0 0
      %1768 = vmatpush.bf16.msra.mxu0 0
      %1769 = vmatpush.bf16.msra.mxu0 0
      %1770 = vmatpush.bf16.msra.mxu0 0
      %1771 = vmatpush.bf16.msra.mxu0 0
      %1772 = vmatpush.bf16.msra.mxu0 %v1712
      %1773 = vmatmul.bf16.gmra.mxu0 %v1700
      %v1774 = vpop.f32.mrf.mxu0
      %v1775 = vadd.f32 0.0, %v1774
      %v1776 = vpop.f32.mrf.mxu0
      %1777 = vdwg.mxu0
      %1778 = vmatpush.bf16.msra.mxu0 0
      %1779 = vmatpush.bf16.msra.mxu0 0
      %1780 = vmatpush.bf16.msra.mxu0 0
      %1781 = vmatpush.bf16.msra.mxu0 0
      %1782 = vmatpush.bf16.msra.mxu0 0
      %1783 = vmatpush.bf16.msra.mxu0 0
      %1784 = vmatpush.bf16.msra.mxu0 0
      %1785 = vmatpush.bf16.msra.mxu0 %v1715
      %1786 = vmatmul.bf16.gmra.mxu0 %v1700
      %v1787 = vpop.f32.mrf.mxu0
      %v1788 = vadd.f32 0.0, %v1787
      %v1789 = vpop.f32.mrf.mxu0
      %1790 = vdwg.mxu0
      %1791 = vmatpush.bf16.msra.mxu0 0
      %1792 = vmatpush.bf16.msra.mxu0 0
      %1793 = vmatpush.bf16.msra.mxu0 0
      %1794 = vmatpush.bf16.msra.mxu0 0
      %1795 = vmatpush.bf16.msra.mxu0 0
      %1796 = vmatpush.bf16.msra.mxu0 0
      %1797 = vmatpush.bf16.msra.mxu0 0
      %1798 = vmatpush.bf16.msra.mxu0 %v1718
      %1799 = vmatmul.bf16.gmra.mxu0 %v1700
      %v1800 = vpop.f32.mrf.mxu0
      %v1801 = vadd.f32 0.0, %v1800
      %v1802 = vpop.f32.mrf.mxu0
      %1803 = vdwg.mxu0
      %1804 = vmatpush.bf16.msra.mxu0 0
      %1805 = vmatpush.bf16.msra.mxu0 0
      %1806 = vmatpush.bf16.msra.mxu0 0
      %1807 = vmatpush.bf16.msra.mxu0 0
      %1808 = vmatpush.bf16.msra.mxu0 0
      %1809 = vmatpush.bf16.msra.mxu0 0
      %1810 = vmatpush.bf16.msra.mxu0 0
      %1811 = vmatpush.bf16.msra.mxu0 %v1721
      %1812 = vmatmul.bf16.gmra.mxu0 %v1700
      %v1813 = vpop.f32.mrf.mxu0
      %v1814 = vadd.f32 0.0, %v1813
      %v1815 = vpop.f32.mrf.mxu0
      %1816 = vdwg.mxu0
      %1817 = vmatpush.bf16.msra.mxu0 0
      %1818 = vmatpush.bf16.msra.mxu0 0
      %1819 = vmatpush.bf16.msra.mxu0 0
      %1820 = vmatpush.bf16.msra.mxu0 0
      %1821 = vmatpush.bf16.msra.mxu0 0
      %1822 = vmatpush.bf16.msra.mxu0 0
      %1823 = vmatpush.bf16.msra.mxu0 0
      %1824 = vmatpush.bf16.msra.mxu0 %v1724
      %1825 = vmatmul.bf16.gmra.mxu0 %v1700
      %v1826 = vpop.f32.mrf.mxu0
      %v1827 = vadd.f32 0.0, %v1826
      %v1828 = vpop.f32.mrf.mxu0
      %1829 = vdwg.mxu0
      %v1830 = vadd.f32 %v1662, %v1736
      %v1831 = vadd.f32 %v1663, %v1749
      %v1832 = vadd.f32 %v1664, %v1762
      %v1833 = vadd.f32 %v1665, %v1775
      %v1834 = vadd.f32 %v1666, %v1788
      %v1835 = vadd.f32 %v1667, %v1801
      %v1836 = vadd.f32 %v1668, %v1814
      %v1837 = vadd.f32 %v1669, %v1827
      %s1838 = scalar_lea.vmem %s0, 40
      %v1839 = vld [vmem:[%s1838] sm:$0x7]
      %1840 = vrot.lane.b32.xlu0 %v194, 64
      %v1841 = vpop.permute.xlu0 %1840
      %1842 = vrot.lane.b32.xlu0 %v195, 64
      %v1843 = vpop.permute.xlu0 %1842
      %1844 = vrot.lane.b32.xlu0 %v196, 64
      %v1845 = vpop.permute.xlu0 %1844
      %1846 = vrot.lane.b32.xlu0 %v197, 64
      %v1847 = vpop.permute.xlu0 %1846
      %1848 = vrot.lane.b32.xlu0 %v198, 64
      %v1849 = vpop.permute.xlu0 %1848
      %1850 = vrot.lane.b32.xlu0 %v199, 64
      %v1851 = vpop.permute.xlu0 %1850
      %1852 = vrot.lane.b32.xlu0 %v200, 64
      %v1853 = vpop.permute.xlu0 %1852
      %1854 = vrot.lane.b32.xlu0 %v201, 64
      %v1855 = vpop.permute.xlu0 %1854
      %1856 = vrot.lane.b32.xlu0 %v202, 64
      %v1857 = vpop.permute.xlu0 %1856
      %vm1858 = vcmask 523264
      %v1859 = vsel %vm1858, %v1841, %v1843
      %v1860 = vsel %vm1858, %v1843, %v1845
      %v1861 = vsel %vm1858, %v1845, %v1847
      %v1862 = vsel %vm1858, %v1847, %v1849
      %v1863 = vsel %vm1858, %v1849, %v1851
      %v1864 = vsel %vm1858, %v1851, %v1853
      %v1865 = vsel %vm1858, %v1853, %v1855
      %v1866 = vsel %vm1858, %v1855, %v1857
      %v1868 = vsel %vm230, %v1839, 0
      %v1871 = vsel %vm234, %v1859, 0
      %v1874 = vsel %vm234, %v1860, 0
      %v1877 = vsel %vm234, %v1861, 0
      %v1880 = vsel %vm234, %v1862, 0
      %v1883 = vsel %vm234, %v1863, 0
      %v1886 = vsel %vm234, %v1864, 0
      %v1889 = vsel %vm234, %v1865, 0
      %v1892 = vsel %vm234, %v1866, 0
      %1894 = vmatpush.bf16.msra.mxu0 0
      %1895 = vmatpush.bf16.msra.mxu0 0
      %1896 = vmatpush.bf16.msra.mxu0 0
      %1897 = vmatpush.bf16.msra.mxu0 0
      %1898 = vmatpush.bf16.msra.mxu0 0
      %1899 = vmatpush.bf16.msra.mxu0 0
      %1900 = vmatpush.bf16.msra.mxu0 0
      %1901 = vmatpush.bf16.msra.mxu0 %v1871
      %1902 = vmatmul.bf16.gmra.mxu0 %v1868
      %v1903 = vpop.f32.mrf.mxu0
      %v1904 = vadd.f32 0.0, %v1903
      %v1905 = vpop.f32.mrf.mxu0
      %1906 = vdwg.mxu0
      %1907 = vmatpush.bf16.msra.mxu0 0
      %1908 = vmatpush.bf16.msra.mxu0 0
      %1909 = vmatpush.bf16.msra.mxu0 0
      %1910 = vmatpush.bf16.msra.mxu0 0
      %1911 = vmatpush.bf16.msra.mxu0 0
      %1912 = vmatpush.bf16.msra.mxu0 0
      %1913 = vmatpush.bf16.msra.mxu0 0
      %1914 = vmatpush.bf16.msra.mxu0 %v1874
      %1915 = vmatmul.bf16.gmra.mxu0 %v1868
      %v1916 = vpop.f32.mrf.mxu0
      %v1917 = vadd.f32 0.0, %v1916
      %v1918 = vpop.f32.mrf.mxu0
      %1919 = vdwg.mxu0
      %1920 = vmatpush.bf16.msra.mxu0 0
      %1921 = vmatpush.bf16.msra.mxu0 0
      %1922 = vmatpush.bf16.msra.mxu0 0
      %1923 = vmatpush.bf16.msra.mxu0 0
      %1924 = vmatpush.bf16.msra.mxu0 0
      %1925 = vmatpush.bf16.msra.mxu0 0
      %1926 = vmatpush.bf16.msra.mxu0 0
      %1927 = vmatpush.bf16.msra.mxu0 %v1877
      %1928 = vmatmul.bf16.gmra.mxu0 %v1868
      %v1929 = vpop.f32.mrf.mxu0
      %v1930 = vadd.f32 0.0, %v1929
      %v1931 = vpop.f32.mrf.mxu0
      %1932 = vdwg.mxu0
      %1933 = vmatpush.bf16.msra.mxu0 0
      %1934 = vmatpush.bf16.msra.mxu0 0
      %1935 = vmatpush.bf16.msra.mxu0 0
      %1936 = vmatpush.bf16.msra.mxu0 0
      %1937 = vmatpush.bf16.msra.mxu0 0
      %1938 = vmatpush.bf16.msra.mxu0 0
      %1939 = vmatpush.bf16.msra.mxu0 0
      %1940 = vmatpush.bf16.msra.mxu0 %v1880
      %1941 = vmatmul.bf16.gmra.mxu0 %v1868
      %v1942 = vpop.f32.mrf.mxu0
      %v1943 = vadd.f32 0.0, %v1942
      %v1944 = vpop.f32.mrf.mxu0
      %1945 = vdwg.mxu0
      %1946 = vmatpush.bf16.msra.mxu0 0
      %1947 = vmatpush.bf16.msra.mxu0 0
      %1948 = vmatpush.bf16.msra.mxu0 0
      %1949 = vmatpush.bf16.msra.mxu0 0
      %1950 = vmatpush.bf16.msra.mxu0 0
      %1951 = vmatpush.bf16.msra.mxu0 0
      %1952 = vmatpush.bf16.msra.mxu0 0
      %1953 = vmatpush.bf16.msra.mxu0 %v1883
      %1954 = vmatmul.bf16.gmra.mxu0 %v1868
      %v1955 = vpop.f32.mrf.mxu0
      %v1956 = vadd.f32 0.0, %v1955
      %v1957 = vpop.f32.mrf.mxu0
      %1958 = vdwg.mxu0
      %1959 = vmatpush.bf16.msra.mxu0 0
      %1960 = vmatpush.bf16.msra.mxu0 0
      %1961 = vmatpush.bf16.msra.mxu0 0
      %1962 = vmatpush.bf16.msra.mxu0 0
      %1963 = vmatpush.bf16.msra.mxu0 0
      %1964 = vmatpush.bf16.msra.mxu0 0
      %1965 = vmatpush.bf16.msra.mxu0 0
      %1966 = vmatpush.bf16.msra.mxu0 %v1886
      %1967 = vmatmul.bf16.gmra.mxu0 %v1868
      %v1968 = vpop.f32.mrf.mxu0
      %v1969 = vadd.f32 0.0, %v1968
      %v1970 = vpop.f32.mrf.mxu0
      %1971 = vdwg.mxu0
      %1972 = vmatpush.bf16.msra.mxu0 0
      %1973 = vmatpush.bf16.msra.mxu0 0
      %1974 = vmatpush.bf16.msra.mxu0 0
      %1975 = vmatpush.bf16.msra.mxu0 0
      %1976 = vmatpush.bf16.msra.mxu0 0
      %1977 = vmatpush.bf16.msra.mxu0 0
      %1978 = vmatpush.bf16.msra.mxu0 0
      %1979 = vmatpush.bf16.msra.mxu0 %v1889
      %1980 = vmatmul.bf16.gmra.mxu0 %v1868
      %v1981 = vpop.f32.mrf.mxu0
      %v1982 = vadd.f32 0.0, %v1981
      %v1983 = vpop.f32.mrf.mxu0
      %1984 = vdwg.mxu0
      %1985 = vmatpush.bf16.msra.mxu0 0
      %1986 = vmatpush.bf16.msra.mxu0 0
      %1987 = vmatpush.bf16.msra.mxu0 0
      %1988 = vmatpush.bf16.msra.mxu0 0
      %1989 = vmatpush.bf16.msra.mxu0 0
      %1990 = vmatpush.bf16.msra.mxu0 0
      %1991 = vmatpush.bf16.msra.mxu0 0
      %1992 = vmatpush.bf16.msra.mxu0 %v1892
      %1993 = vmatmul.bf16.gmra.mxu0 %v1868
      %v1994 = vpop.f32.mrf.mxu0
      %v1995 = vadd.f32 0.0, %v1994
      %v1996 = vpop.f32.mrf.mxu0
      %1997 = vdwg.mxu0
      %v1998 = vadd.f32 %v1830, %v1904
      %v1999 = vadd.f32 %v1831, %v1917
      %v2000 = vadd.f32 %v1832, %v1930
      %v2001 = vadd.f32 %v1833, %v1943
      %v2002 = vadd.f32 %v1834, %v1956
      %v2003 = vadd.f32 %v1835, %v1969
      %v2004 = vadd.f32 %v1836, %v1982
      %v2005 = vadd.f32 %v1837, %v1995
      %s2006 = scalar_lea.vmem %s0, 44
      %v2007 = vld [vmem:[%s2006] sm:$0x7]
      %2008 = vrot.lane.b32.xlu0 %v194, 63
      %v2009 = vpop.permute.xlu0 %2008
      %2010 = vrot.lane.b32.xlu0 %v195, 63
      %v2011 = vpop.permute.xlu0 %2010
      %2012 = vrot.lane.b32.xlu0 %v196, 63
      %v2013 = vpop.permute.xlu0 %2012
      %2014 = vrot.lane.b32.xlu0 %v197, 63
      %v2015 = vpop.permute.xlu0 %2014
      %2016 = vrot.lane.b32.xlu0 %v198, 63
      %v2017 = vpop.permute.xlu0 %2016
      %2018 = vrot.lane.b32.xlu0 %v199, 63
      %v2019 = vpop.permute.xlu0 %2018
      %2020 = vrot.lane.b32.xlu0 %v200, 63
      %v2021 = vpop.permute.xlu0 %2020
      %2022 = vrot.lane.b32.xlu0 %v201, 63
      %v2023 = vpop.permute.xlu0 %2022
      %2024 = vrot.lane.b32.xlu0 %v202, 63
      %v2025 = vpop.permute.xlu0 %2024
      %vm2026 = vcmask 515072
      %v2027 = vsel %vm2026, %v2009, %v2011
      %v2028 = vsel %vm2026, %v2011, %v2013
      %v2029 = vsel %vm2026, %v2013, %v2015
      %v2030 = vsel %vm2026, %v2015, %v2017
      %v2031 = vsel %vm2026, %v2017, %v2019
      %v2032 = vsel %vm2026, %v2019, %v2021
      %v2033 = vsel %vm2026, %v2021, %v2023
      %v2034 = vsel %vm2026, %v2023, %v2025
      %v2036 = vsel %vm230, %v2007, 0
      %v2039 = vsel %vm234, %v2027, 0
      %v2042 = vsel %vm234, %v2028, 0
      %v2045 = vsel %vm234, %v2029, 0
      %v2048 = vsel %vm234, %v2030, 0
      %v2051 = vsel %vm234, %v2031, 0
      %v2054 = vsel %vm234, %v2032, 0
      %v2057 = vsel %vm234, %v2033, 0
      %v2060 = vsel %vm234, %v2034, 0
      %2062 = vmatpush.bf16.msra.mxu0 0
      %2063 = vmatpush.bf16.msra.mxu0 0
      %2064 = vmatpush.bf16.msra.mxu0 0
      %2065 = vmatpush.bf16.msra.mxu0 0
      %2066 = vmatpush.bf16.msra.mxu0 0
      %2067 = vmatpush.bf16.msra.mxu0 0
      %2068 = vmatpush.bf16.msra.mxu0 0
      %2069 = vmatpush.bf16.msra.mxu0 %v2039
      %2070 = vmatmul.bf16.gmra.mxu0 %v2036
      %v2071 = vpop.f32.mrf.mxu0
      %v2072 = vadd.f32 0.0, %v2071
      %v2073 = vpop.f32.mrf.mxu0
      %2074 = vdwg.mxu0
      %2075 = vmatpush.bf16.msra.mxu0 0
      %2076 = vmatpush.bf16.msra.mxu0 0
      %2077 = vmatpush.bf16.msra.mxu0 0
      %2078 = vmatpush.bf16.msra.mxu0 0
      %2079 = vmatpush.bf16.msra.mxu0 0
      %2080 = vmatpush.bf16.msra.mxu0 0
      %2081 = vmatpush.bf16.msra.mxu0 0
      %2082 = vmatpush.bf16.msra.mxu0 %v2042
      %2083 = vmatmul.bf16.gmra.mxu0 %v2036
      %v2084 = vpop.f32.mrf.mxu0
      %v2085 = vadd.f32 0.0, %v2084
      %v2086 = vpop.f32.mrf.mxu0
      %2087 = vdwg.mxu0
      %2088 = vmatpush.bf16.msra.mxu0 0
      %2089 = vmatpush.bf16.msra.mxu0 0
      %2090 = vmatpush.bf16.msra.mxu0 0
      %2091 = vmatpush.bf16.msra.mxu0 0
      %2092 = vmatpush.bf16.msra.mxu0 0
      %2093 = vmatpush.bf16.msra.mxu0 0
      %2094 = vmatpush.bf16.msra.mxu0 0
      %2095 = vmatpush.bf16.msra.mxu0 %v2045
      %2096 = vmatmul.bf16.gmra.mxu0 %v2036
      %v2097 = vpop.f32.mrf.mxu0
      %v2098 = vadd.f32 0.0, %v2097
      %v2099 = vpop.f32.mrf.mxu0
      %2100 = vdwg.mxu0
      %2101 = vmatpush.bf16.msra.mxu0 0
      %2102 = vmatpush.bf16.msra.mxu0 0
      %2103 = vmatpush.bf16.msra.mxu0 0
      %2104 = vmatpush.bf16.msra.mxu0 0
      %2105 = vmatpush.bf16.msra.mxu0 0
      %2106 = vmatpush.bf16.msra.mxu0 0
      %2107 = vmatpush.bf16.msra.mxu0 0
      %2108 = vmatpush.bf16.msra.mxu0 %v2048
      %2109 = vmatmul.bf16.gmra.mxu0 %v2036
      %v2110 = vpop.f32.mrf.mxu0
      %v2111 = vadd.f32 0.0, %v2110
      %v2112 = vpop.f32.mrf.mxu0
      %2113 = vdwg.mxu0
      %2114 = vmatpush.bf16.msra.mxu0 0
      %2115 = vmatpush.bf16.msra.mxu0 0
      %2116 = vmatpush.bf16.msra.mxu0 0
      %2117 = vmatpush.bf16.msra.mxu0 0
      %2118 = vmatpush.bf16.msra.mxu0 0
      %2119 = vmatpush.bf16.msra.mxu0 0
      %2120 = vmatpush.bf16.msra.mxu0 0
      %2121 = vmatpush.bf16.msra.mxu0 %v2051
      %2122 = vmatmul.bf16.gmra.mxu0 %v2036
      %v2123 = vpop.f32.mrf.mxu0
      %v2124 = vadd.f32 0.0, %v2123
      %v2125 = vpop.f32.mrf.mxu0
      %2126 = vdwg.mxu0
      %2127 = vmatpush.bf16.msra.mxu0 0
      %2128 = vmatpush.bf16.msra.mxu0 0
      %2129 = vmatpush.bf16.msra.mxu0 0
      %2130 = vmatpush.bf16.msra.mxu0 0
      %2131 = vmatpush.bf16.msra.mxu0 0
      %2132 = vmatpush.bf16.msra.mxu0 0
      %2133 = vmatpush.bf16.msra.mxu0 0
      %2134 = vmatpush.bf16.msra.mxu0 %v2054
      %2135 = vmatmul.bf16.gmra.mxu0 %v2036
      %v2136 = vpop.f32.mrf.mxu0
      %v2137 = vadd.f32 0.0, %v2136
      %v2138 = vpop.f32.mrf.mxu0
      %2139 = vdwg.mxu0
      %2140 = vmatpush.bf16.msra.mxu0 0
      %2141 = vmatpush.bf16.msra.mxu0 0
      %2142 = vmatpush.bf16.msra.mxu0 0
      %2143 = vmatpush.bf16.msra.mxu0 0
      %2144 = vmatpush.bf16.msra.mxu0 0
      %2145 = vmatpush.bf16.msra.mxu0 0
      %2146 = vmatpush.bf16.msra.mxu0 0
      %2147 = vmatpush.bf16.msra.mxu0 %v2057
      %2148 = vmatmul.bf16.gmra.mxu0 %v2036
      %v2149 = vpop.f32.mrf.mxu0
      %v2150 = vadd.f32 0.0, %v2149
      %v2151 = vpop.f32.mrf.mxu0
      %2152 = vdwg.mxu0
      %2153 = vmatpush.bf16.msra.mxu0 0
      %2154 = vmatpush.bf16.msra.mxu0 0
      %2155 = vmatpush.bf16.msra.mxu0 0
      %2156 = vmatpush.bf16.msra.mxu0 0
      %2157 = vmatpush.bf16.msra.mxu0 0
      %2158 = vmatpush.bf16.msra.mxu0 0
      %2159 = vmatpush.bf16.msra.mxu0 0
      %2160 = vmatpush.bf16.msra.mxu0 %v2060
      %2161 = vmatmul.bf16.gmra.mxu0 %v2036
      %v2162 = vpop.f32.mrf.mxu0
      %v2163 = vadd.f32 0.0, %v2162
      %v2164 = vpop.f32.mrf.mxu0
      %2165 = vdwg.mxu0
      %v2166 = vadd.f32 %v1998, %v2072
      %v2167 = vadd.f32 %v1999, %v2085
      %v2168 = vadd.f32 %v2000, %v2098
      %v2169 = vadd.f32 %v2001, %v2111
      %v2170 = vadd.f32 %v2002, %v2124
      %v2171 = vadd.f32 %v2003, %v2137
      %v2172 = vadd.f32 %v2004, %v2150
      %v2173 = vadd.f32 %v2005, %v2163
      %s2174 = scalar_lea.vmem %s0, 48
      %v2175 = vld [vmem:[%s2174] sm:$0x7]
      %2176 = vrot.lane.b32.xlu0 %v194, 62
      %v2177 = vpop.permute.xlu0 %2176
      %2178 = vrot.lane.b32.xlu0 %v195, 62
      %v2179 = vpop.permute.xlu0 %2178
      %2180 = vrot.lane.b32.xlu0 %v196, 62
      %v2181 = vpop.permute.xlu0 %2180
      %2182 = vrot.lane.b32.xlu0 %v197, 62
      %v2183 = vpop.permute.xlu0 %2182
      %2184 = vrot.lane.b32.xlu0 %v198, 62
      %v2185 = vpop.permute.xlu0 %2184
      %2186 = vrot.lane.b32.xlu0 %v199, 62
      %v2187 = vpop.permute.xlu0 %2186
      %2188 = vrot.lane.b32.xlu0 %v200, 62
      %v2189 = vpop.permute.xlu0 %2188
      %2190 = vrot.lane.b32.xlu0 %v201, 62
      %v2191 = vpop.permute.xlu0 %2190
      %2192 = vrot.lane.b32.xlu0 %v202, 62
      %v2193 = vpop.permute.xlu0 %2192
      %vm2194 = vcmask 506880
      %v2195 = vsel %vm2194, %v2177, %v2179
      %v2196 = vsel %vm2194, %v2179, %v2181
      %v2197 = vsel %vm2194, %v2181, %v2183
      %v2198 = vsel %vm2194, %v2183, %v2185
      %v2199 = vsel %vm2194, %v2185, %v2187
      %v2200 = vsel %vm2194, %v2187, %v2189
      %v2201 = vsel %vm2194, %v2189, %v2191
      %v2202 = vsel %vm2194, %v2191, %v2193
      %v2204 = vsel %vm230, %v2175, 0
      %v2207 = vsel %vm234, %v2195, 0
      %v2210 = vsel %vm234, %v2196, 0
      %v2213 = vsel %vm234, %v2197, 0
      %v2216 = vsel %vm234, %v2198, 0
      %v2219 = vsel %vm234, %v2199, 0
      %v2222 = vsel %vm234, %v2200, 0
      %v2225 = vsel %vm234, %v2201, 0
      %v2228 = vsel %vm234, %v2202, 0
      %2230 = vmatpush.bf16.msra.mxu0 0
      %2231 = vmatpush.bf16.msra.mxu0 0
      %2232 = vmatpush.bf16.msra.mxu0 0
      %2233 = vmatpush.bf16.msra.mxu0 0
      %2234 = vmatpush.bf16.msra.mxu0 0
      %2235 = vmatpush.bf16.msra.mxu0 0
      %2236 = vmatpush.bf16.msra.mxu0 0
      %2237 = vmatpush.bf16.msra.mxu0 %v2207
      %2238 = vmatmul.bf16.gmra.mxu0 %v2204
      %v2239 = vpop.f32.mrf.mxu0
      %v2240 = vadd.f32 0.0, %v2239
      %v2241 = vpop.f32.mrf.mxu0
      %2242 = vdwg.mxu0
      %2243 = vmatpush.bf16.msra.mxu0 0
      %2244 = vmatpush.bf16.msra.mxu0 0
      %2245 = vmatpush.bf16.msra.mxu0 0
      %2246 = vmatpush.bf16.msra.mxu0 0
      %2247 = vmatpush.bf16.msra.mxu0 0
      %2248 = vmatpush.bf16.msra.mxu0 0
      %2249 = vmatpush.bf16.msra.mxu0 0
      %2250 = vmatpush.bf16.msra.mxu0 %v2210
      %2251 = vmatmul.bf16.gmra.mxu0 %v2204
      %v2252 = vpop.f32.mrf.mxu0
      %v2253 = vadd.f32 0.0, %v2252
      %v2254 = vpop.f32.mrf.mxu0
      %2255 = vdwg.mxu0
      %2256 = vmatpush.bf16.msra.mxu0 0
      %2257 = vmatpush.bf16.msra.mxu0 0
      %2258 = vmatpush.bf16.msra.mxu0 0
      %2259 = vmatpush.bf16.msra.mxu0 0
      %2260 = vmatpush.bf16.msra.mxu0 0
      %2261 = vmatpush.bf16.msra.mxu0 0
      %2262 = vmatpush.bf16.msra.mxu0 0
      %2263 = vmatpush.bf16.msra.mxu0 %v2213
      %2264 = vmatmul.bf16.gmra.mxu0 %v2204
      %v2265 = vpop.f32.mrf.mxu0
      %v2266 = vadd.f32 0.0, %v2265
      %v2267 = vpop.f32.mrf.mxu0
      %2268 = vdwg.mxu0
      %2269 = vmatpush.bf16.msra.mxu0 0
      %2270 = vmatpush.bf16.msra.mxu0 0
      %2271 = vmatpush.bf16.msra.mxu0 0
      %2272 = vmatpush.bf16.msra.mxu0 0
      %2273 = vmatpush.bf16.msra.mxu0 0
      %2274 = vmatpush.bf16.msra.mxu0 0
      %2275 = vmatpush.bf16.msra.mxu0 0
      %2276 = vmatpush.bf16.msra.mxu0 %v2216
      %2277 = vmatmul.bf16.gmra.mxu0 %v2204
      %v2278 = vpop.f32.mrf.mxu0
      %v2279 = vadd.f32 0.0, %v2278
      %v2280 = vpop.f32.mrf.mxu0
      %2281 = vdwg.mxu0
      %2282 = vmatpush.bf16.msra.mxu0 0
      %2283 = vmatpush.bf16.msra.mxu0 0
      %2284 = vmatpush.bf16.msra.mxu0 0
      %2285 = vmatpush.bf16.msra.mxu0 0
      %2286 = vmatpush.bf16.msra.mxu0 0
      %2287 = vmatpush.bf16.msra.mxu0 0
      %2288 = vmatpush.bf16.msra.mxu0 0
      %2289 = vmatpush.bf16.msra.mxu0 %v2219
      %2290 = vmatmul.bf16.gmra.mxu0 %v2204
      %v2291 = vpop.f32.mrf.mxu0
      %v2292 = vadd.f32 0.0, %v2291
      %v2293 = vpop.f32.mrf.mxu0
      %2294 = vdwg.mxu0
      %2295 = vmatpush.bf16.msra.mxu0 0
      %2296 = vmatpush.bf16.msra.mxu0 0
      %2297 = vmatpush.bf16.msra.mxu0 0
      %2298 = vmatpush.bf16.msra.mxu0 0
      %2299 = vmatpush.bf16.msra.mxu0 0
      %2300 = vmatpush.bf16.msra.mxu0 0
      %2301 = vmatpush.bf16.msra.mxu0 0
      %2302 = vmatpush.bf16.msra.mxu0 %v2222
      %2303 = vmatmul.bf16.gmra.mxu0 %v2204
      %v2304 = vpop.f32.mrf.mxu0
      %v2305 = vadd.f32 0.0, %v2304
      %v2306 = vpop.f32.mrf.mxu0
      %2307 = vdwg.mxu0
      %2308 = vmatpush.bf16.msra.mxu0 0
      %2309 = vmatpush.bf16.msra.mxu0 0
      %2310 = vmatpush.bf16.msra.mxu0 0
      %2311 = vmatpush.bf16.msra.mxu0 0
      %2312 = vmatpush.bf16.msra.mxu0 0
      %2313 = vmatpush.bf16.msra.mxu0 0
      %2314 = vmatpush.bf16.msra.mxu0 0
      %2315 = vmatpush.bf16.msra.mxu0 %v2225
      %2316 = vmatmul.bf16.gmra.mxu0 %v2204
      %v2317 = vpop.f32.mrf.mxu0
      %v2318 = vadd.f32 0.0, %v2317
      %v2319 = vpop.f32.mrf.mxu0
      %2320 = vdwg.mxu0
      %2321 = vmatpush.bf16.msra.mxu0 0
      %2322 = vmatpush.bf16.msra.mxu0 0
      %2323 = vmatpush.bf16.msra.mxu0 0
      %2324 = vmatpush.bf16.msra.mxu0 0
      %2325 = vmatpush.bf16.msra.mxu0 0
      %2326 = vmatpush.bf16.msra.mxu0 0
      %2327 = vmatpush.bf16.msra.mxu0 0
      %2328 = vmatpush.bf16.msra.mxu0 %v2228
      %2329 = vmatmul.bf16.gmra.mxu0 %v2204
      %v2330 = vpop.f32.mrf.mxu0
      %v2331 = vadd.f32 0.0, %v2330
      %v2332 = vpop.f32.mrf.mxu0
      %2333 = vdwg.mxu0
      %v2334 = vadd.f32 %v2166, %v2240
      %v2335 = vadd.f32 %v2167, %v2253
      %v2336 = vadd.f32 %v2168, %v2266
      %v2337 = vadd.f32 %v2169, %v2279
      %v2338 = vadd.f32 %v2170, %v2292
      %v2339 = vadd.f32 %v2171, %v2305
      %v2340 = vadd.f32 %v2172, %v2318
      %v2341 = vadd.f32 %v2173, %v2331
      %s2342 = scalar_lea.vmem %s0, 52
      %v2343 = vld [vmem:[%s2342] sm:$0x7]
      %2344 = vrot.lane.b32.xlu0 %v194, 61
      %v2345 = vpop.permute.xlu0 %2344
      %2346 = vrot.lane.b32.xlu0 %v195, 61
      %v2347 = vpop.permute.xlu0 %2346
      %2348 = vrot.lane.b32.xlu0 %v196, 61
      %v2349 = vpop.permute.xlu0 %2348
      %2350 = vrot.lane.b32.xlu0 %v197, 61
      %v2351 = vpop.permute.xlu0 %2350
      %2352 = vrot.lane.b32.xlu0 %v198, 61
      %v2353 = vpop.permute.xlu0 %2352
      %2354 = vrot.lane.b32.xlu0 %v199, 61
      %v2355 = vpop.permute.xlu0 %2354
      %2356 = vrot.lane.b32.xlu0 %v200, 61
      %v2357 = vpop.permute.xlu0 %2356
      %2358 = vrot.lane.b32.xlu0 %v201, 61
      %v2359 = vpop.permute.xlu0 %2358
      %2360 = vrot.lane.b32.xlu0 %v202, 61
      %v2361 = vpop.permute.xlu0 %2360
      %vm2362 = vcmask 498688
      %v2363 = vsel %vm2362, %v2345, %v2347
      %v2364 = vsel %vm2362, %v2347, %v2349
      %v2365 = vsel %vm2362, %v2349, %v2351
      %v2366 = vsel %vm2362, %v2351, %v2353
      %v2367 = vsel %vm2362, %v2353, %v2355
      %v2368 = vsel %vm2362, %v2355, %v2357
      %v2369 = vsel %vm2362, %v2357, %v2359
      %v2370 = vsel %vm2362, %v2359, %v2361
      %v2372 = vsel %vm230, %v2343, 0
      %v2375 = vsel %vm234, %v2363, 0
      %v2378 = vsel %vm234, %v2364, 0
      %v2381 = vsel %vm234, %v2365, 0
      %v2384 = vsel %vm234, %v2366, 0
      %v2387 = vsel %vm234, %v2367, 0
      %v2390 = vsel %vm234, %v2368, 0
      %v2393 = vsel %vm234, %v2369, 0
      %v2396 = vsel %vm234, %v2370, 0
      %2398 = vmatpush.bf16.msra.mxu0 0
      %2399 = vmatpush.bf16.msra.mxu0 0
      %2400 = vmatpush.bf16.msra.mxu0 0
      %2401 = vmatpush.bf16.msra.mxu0 0
      %2402 = vmatpush.bf16.msra.mxu0 0
      %2403 = vmatpush.bf16.msra.mxu0 0
      %2404 = vmatpush.bf16.msra.mxu0 0
      %2405 = vmatpush.bf16.msra.mxu0 %v2375
      %2406 = vmatmul.bf16.gmra.mxu0 %v2372
      %v2407 = vpop.f32.mrf.mxu0
      %v2408 = vadd.f32 0.0, %v2407
      %v2409 = vpop.f32.mrf.mxu0
      %2410 = vdwg.mxu0
      %2411 = vmatpush.bf16.msra.mxu0 0
      %2412 = vmatpush.bf16.msra.mxu0 0
      %2413 = vmatpush.bf16.msra.mxu0 0
      %2414 = vmatpush.bf16.msra.mxu0 0
      %2415 = vmatpush.bf16.msra.mxu0 0
      %2416 = vmatpush.bf16.msra.mxu0 0
      %2417 = vmatpush.bf16.msra.mxu0 0
      %2418 = vmatpush.bf16.msra.mxu0 %v2378
      %2419 = vmatmul.bf16.gmra.mxu0 %v2372
      %v2420 = vpop.f32.mrf.mxu0
      %v2421 = vadd.f32 0.0, %v2420
      %v2422 = vpop.f32.mrf.mxu0
      %2423 = vdwg.mxu0
      %2424 = vmatpush.bf16.msra.mxu0 0
      %2425 = vmatpush.bf16.msra.mxu0 0
      %2426 = vmatpush.bf16.msra.mxu0 0
      %2427 = vmatpush.bf16.msra.mxu0 0
      %2428 = vmatpush.bf16.msra.mxu0 0
      %2429 = vmatpush.bf16.msra.mxu0 0
      %2430 = vmatpush.bf16.msra.mxu0 0
      %2431 = vmatpush.bf16.msra.mxu0 %v2381
      %2432 = vmatmul.bf16.gmra.mxu0 %v2372
      %v2433 = vpop.f32.mrf.mxu0
      %v2434 = vadd.f32 0.0, %v2433
      %v2435 = vpop.f32.mrf.mxu0
      %2436 = vdwg.mxu0
      %2437 = vmatpush.bf16.msra.mxu0 0
      %2438 = vmatpush.bf16.msra.mxu0 0
      %2439 = vmatpush.bf16.msra.mxu0 0
      %2440 = vmatpush.bf16.msra.mxu0 0
      %2441 = vmatpush.bf16.msra.mxu0 0
      %2442 = vmatpush.bf16.msra.mxu0 0
      %2443 = vmatpush.bf16.msra.mxu0 0
      %2444 = vmatpush.bf16.msra.mxu0 %v2384
      %2445 = vmatmul.bf16.gmra.mxu0 %v2372
      %v2446 = vpop.f32.mrf.mxu0
      %v2447 = vadd.f32 0.0, %v2446
      %v2448 = vpop.f32.mrf.mxu0
      %2449 = vdwg.mxu0
      %2450 = vmatpush.bf16.msra.mxu0 0
      %2451 = vmatpush.bf16.msra.mxu0 0
      %2452 = vmatpush.bf16.msra.mxu0 0
      %2453 = vmatpush.bf16.msra.mxu0 0
      %2454 = vmatpush.bf16.msra.mxu0 0
      %2455 = vmatpush.bf16.msra.mxu0 0
      %2456 = vmatpush.bf16.msra.mxu0 0
      %2457 = vmatpush.bf16.msra.mxu0 %v2387
      %2458 = vmatmul.bf16.gmra.mxu0 %v2372
      %v2459 = vpop.f32.mrf.mxu0
      %v2460 = vadd.f32 0.0, %v2459
      %v2461 = vpop.f32.mrf.mxu0
      %2462 = vdwg.mxu0
      %2463 = vmatpush.bf16.msra.mxu0 0
      %2464 = vmatpush.bf16.msra.mxu0 0
      %2465 = vmatpush.bf16.msra.mxu0 0
      %2466 = vmatpush.bf16.msra.mxu0 0
      %2467 = vmatpush.bf16.msra.mxu0 0
      %2468 = vmatpush.bf16.msra.mxu0 0
      %2469 = vmatpush.bf16.msra.mxu0 0
      %2470 = vmatpush.bf16.msra.mxu0 %v2390
      %2471 = vmatmul.bf16.gmra.mxu0 %v2372
      %v2472 = vpop.f32.mrf.mxu0
      %v2473 = vadd.f32 0.0, %v2472
      %v2474 = vpop.f32.mrf.mxu0
      %2475 = vdwg.mxu0
      %2476 = vmatpush.bf16.msra.mxu0 0
      %2477 = vmatpush.bf16.msra.mxu0 0
      %2478 = vmatpush.bf16.msra.mxu0 0
      %2479 = vmatpush.bf16.msra.mxu0 0
      %2480 = vmatpush.bf16.msra.mxu0 0
      %2481 = vmatpush.bf16.msra.mxu0 0
      %2482 = vmatpush.bf16.msra.mxu0 0
      %2483 = vmatpush.bf16.msra.mxu0 %v2393
      %2484 = vmatmul.bf16.gmra.mxu0 %v2372
      %v2485 = vpop.f32.mrf.mxu0
      %v2486 = vadd.f32 0.0, %v2485
      %v2487 = vpop.f32.mrf.mxu0
      %2488 = vdwg.mxu0
      %2489 = vmatpush.bf16.msra.mxu0 0
      %2490 = vmatpush.bf16.msra.mxu0 0
      %2491 = vmatpush.bf16.msra.mxu0 0
      %2492 = vmatpush.bf16.msra.mxu0 0
      %2493 = vmatpush.bf16.msra.mxu0 0
      %2494 = vmatpush.bf16.msra.mxu0 0
      %2495 = vmatpush.bf16.msra.mxu0 0
      %2496 = vmatpush.bf16.msra.mxu0 %v2396
      %2497 = vmatmul.bf16.gmra.mxu0 %v2372
      %v2498 = vpop.f32.mrf.mxu0
      %v2499 = vadd.f32 0.0, %v2498
      %v2500 = vpop.f32.mrf.mxu0
      %2501 = vdwg.mxu0
      %v2502 = vadd.f32 %v2334, %v2408
      %v2503 = vadd.f32 %v2335, %v2421
      %v2504 = vadd.f32 %v2336, %v2434
      %v2505 = vadd.f32 %v2337, %v2447
      %v2506 = vadd.f32 %v2338, %v2460
      %v2507 = vadd.f32 %v2339, %v2473
      %v2508 = vadd.f32 %v2340, %v2486
      %v2509 = vadd.f32 %v2341, %v2499
      %s2510 = scalar_lea.vmem %s0, 56
      %v2511 = vld [vmem:[%s2510] sm:$0x7]
      %2512 = vrot.lane.b32.xlu0 %v194, 60
      %v2513 = vpop.permute.xlu0 %2512
      %2514 = vrot.lane.b32.xlu0 %v195, 60
      %v2515 = vpop.permute.xlu0 %2514
      %2516 = vrot.lane.b32.xlu0 %v196, 60
      %v2517 = vpop.permute.xlu0 %2516
      %2518 = vrot.lane.b32.xlu0 %v197, 60
      %v2519 = vpop.permute.xlu0 %2518
      %2520 = vrot.lane.b32.xlu0 %v198, 60
      %v2521 = vpop.permute.xlu0 %2520
      %2522 = vrot.lane.b32.xlu0 %v199, 60
      %v2523 = vpop.permute.xlu0 %2522
      %2524 = vrot.lane.b32.xlu0 %v200, 60
      %v2525 = vpop.permute.xlu0 %2524
      %2526 = vrot.lane.b32.xlu0 %v201, 60
      %v2527 = vpop.permute.xlu0 %2526
      %2528 = vrot.lane.b32.xlu0 %v202, 60
      %v2529 = vpop.permute.xlu0 %2528
      %vm2530 = vcmask 490496
      %v2531 = vsel %vm2530, %v2513, %v2515
      %v2532 = vsel %vm2530, %v2515, %v2517
      %v2533 = vsel %vm2530, %v2517, %v2519
      %v2534 = vsel %vm2530, %v2519, %v2521
      %v2535 = vsel %vm2530, %v2521, %v2523
      %v2536 = vsel %vm2530, %v2523, %v2525
      %v2537 = vsel %vm2530, %v2525, %v2527
      %v2538 = vsel %vm2530, %v2527, %v2529
      %v2540 = vsel %vm230, %v2511, 0
      %v2543 = vsel %vm234, %v2531, 0
      %v2546 = vsel %vm234, %v2532, 0
      %v2549 = vsel %vm234, %v2533, 0
      %v2552 = vsel %vm234, %v2534, 0
      %v2555 = vsel %vm234, %v2535, 0
      %v2558 = vsel %vm234, %v2536, 0
      %v2561 = vsel %vm234, %v2537, 0
      %v2564 = vsel %vm234, %v2538, 0
      %2566 = vmatpush.bf16.msra.mxu0 0
      %2567 = vmatpush.bf16.msra.mxu0 0
      %2568 = vmatpush.bf16.msra.mxu0 0
      %2569 = vmatpush.bf16.msra.mxu0 0
      %2570 = vmatpush.bf16.msra.mxu0 0
      %2571 = vmatpush.bf16.msra.mxu0 0
      %2572 = vmatpush.bf16.msra.mxu0 0
      %2573 = vmatpush.bf16.msra.mxu0 %v2543
      %2574 = vmatmul.bf16.gmra.mxu0 %v2540
      %v2575 = vpop.f32.mrf.mxu0
      %v2576 = vadd.f32 0.0, %v2575
      %v2577 = vpop.f32.mrf.mxu0
      %2578 = vdwg.mxu0
      %2579 = vmatpush.bf16.msra.mxu0 0
      %2580 = vmatpush.bf16.msra.mxu0 0
      %2581 = vmatpush.bf16.msra.mxu0 0
      %2582 = vmatpush.bf16.msra.mxu0 0
      %2583 = vmatpush.bf16.msra.mxu0 0
      %2584 = vmatpush.bf16.msra.mxu0 0
      %2585 = vmatpush.bf16.msra.mxu0 0
      %2586 = vmatpush.bf16.msra.mxu0 %v2546
      %2587 = vmatmul.bf16.gmra.mxu0 %v2540
      %v2588 = vpop.f32.mrf.mxu0
      %v2589 = vadd.f32 0.0, %v2588
      %v2590 = vpop.f32.mrf.mxu0
      %2591 = vdwg.mxu0
      %2592 = vmatpush.bf16.msra.mxu0 0
      %2593 = vmatpush.bf16.msra.mxu0 0
      %2594 = vmatpush.bf16.msra.mxu0 0
      %2595 = vmatpush.bf16.msra.mxu0 0
      %2596 = vmatpush.bf16.msra.mxu0 0
      %2597 = vmatpush.bf16.msra.mxu0 0
      %2598 = vmatpush.bf16.msra.mxu0 0
      %2599 = vmatpush.bf16.msra.mxu0 %v2549
      %2600 = vmatmul.bf16.gmra.mxu0 %v2540
      %v2601 = vpop.f32.mrf.mxu0
      %v2602 = vadd.f32 0.0, %v2601
      %v2603 = vpop.f32.mrf.mxu0
      %2604 = vdwg.mxu0
      %2605 = vmatpush.bf16.msra.mxu0 0
      %2606 = vmatpush.bf16.msra.mxu0 0
      %2607 = vmatpush.bf16.msra.mxu0 0
      %2608 = vmatpush.bf16.msra.mxu0 0
      %2609 = vmatpush.bf16.msra.mxu0 0
      %2610 = vmatpush.bf16.msra.mxu0 0
      %2611 = vmatpush.bf16.msra.mxu0 0
      %2612 = vmatpush.bf16.msra.mxu0 %v2552
      %2613 = vmatmul.bf16.gmra.mxu0 %v2540
      %v2614 = vpop.f32.mrf.mxu0
      %v2615 = vadd.f32 0.0, %v2614
      %v2616 = vpop.f32.mrf.mxu0
      %2617 = vdwg.mxu0
      %2618 = vmatpush.bf16.msra.mxu0 0
      %2619 = vmatpush.bf16.msra.mxu0 0
      %2620 = vmatpush.bf16.msra.mxu0 0
      %2621 = vmatpush.bf16.msra.mxu0 0
      %2622 = vmatpush.bf16.msra.mxu0 0
      %2623 = vmatpush.bf16.msra.mxu0 0
      %2624 = vmatpush.bf16.msra.mxu0 0
      %2625 = vmatpush.bf16.msra.mxu0 %v2555
      %2626 = vmatmul.bf16.gmra.mxu0 %v2540
      %v2627 = vpop.f32.mrf.mxu0
      %v2628 = vadd.f32 0.0, %v2627
      %v2629 = vpop.f32.mrf.mxu0
      %2630 = vdwg.mxu0
      %2631 = vmatpush.bf16.msra.mxu0 0
      %2632 = vmatpush.bf16.msra.mxu0 0
      %2633 = vmatpush.bf16.msra.mxu0 0
      %2634 = vmatpush.bf16.msra.mxu0 0
      %2635 = vmatpush.bf16.msra.mxu0 0
      %2636 = vmatpush.bf16.msra.mxu0 0
      %2637 = vmatpush.bf16.msra.mxu0 0
      %2638 = vmatpush.bf16.msra.mxu0 %v2558
      %2639 = vmatmul.bf16.gmra.mxu0 %v2540
      %v2640 = vpop.f32.mrf.mxu0
      %v2641 = vadd.f32 0.0, %v2640
      %v2642 = vpop.f32.mrf.mxu0
      %2643 = vdwg.mxu0
      %2644 = vmatpush.bf16.msra.mxu0 0
      %2645 = vmatpush.bf16.msra.mxu0 0
      %2646 = vmatpush.bf16.msra.mxu0 0
      %2647 = vmatpush.bf16.msra.mxu0 0
      %2648 = vmatpush.bf16.msra.mxu0 0
      %2649 = vmatpush.bf16.msra.mxu0 0
      %2650 = vmatpush.bf16.msra.mxu0 0
      %2651 = vmatpush.bf16.msra.mxu0 %v2561
      %2652 = vmatmul.bf16.gmra.mxu0 %v2540
      %v2653 = vpop.f32.mrf.mxu0
      %v2654 = vadd.f32 0.0, %v2653
      %v2655 = vpop.f32.mrf.mxu0
      %2656 = vdwg.mxu0
      %2657 = vmatpush.bf16.msra.mxu0 0
      %2658 = vmatpush.bf16.msra.mxu0 0
      %2659 = vmatpush.bf16.msra.mxu0 0
      %2660 = vmatpush.bf16.msra.mxu0 0
      %2661 = vmatpush.bf16.msra.mxu0 0
      %2662 = vmatpush.bf16.msra.mxu0 0
      %2663 = vmatpush.bf16.msra.mxu0 0
      %2664 = vmatpush.bf16.msra.mxu0 %v2564
      %2665 = vmatmul.bf16.gmra.mxu0 %v2540
      %v2666 = vpop.f32.mrf.mxu0
      %v2667 = vadd.f32 0.0, %v2666
      %v2668 = vpop.f32.mrf.mxu0
      %2669 = vdwg.mxu0
      %v2670 = vadd.f32 %v2502, %v2576
      %v2671 = vadd.f32 %v2503, %v2589
      %v2672 = vadd.f32 %v2504, %v2602
      %v2673 = vadd.f32 %v2505, %v2615
      %v2674 = vadd.f32 %v2506, %v2628
      %v2675 = vadd.f32 %v2507, %v2641
      %v2676 = vadd.f32 %v2508, %v2654
      %v2677 = vadd.f32 %v2509, %v2667
      %s2678 = scalar_lea.vmem %s0, 60
      %v2679 = vld [vmem:[%s2678] sm:$0x7]
      %2680 = vrot.lane.b32.xlu0 %v194, 32
      %v2681 = vpop.permute.xlu0 %2680
      %2682 = vrot.lane.b32.xlu0 %v195, 32
      %v2683 = vpop.permute.xlu0 %2682
      %2684 = vrot.lane.b32.xlu0 %v196, 32
      %v2685 = vpop.permute.xlu0 %2684
      %2686 = vrot.lane.b32.xlu0 %v197, 32
      %v2687 = vpop.permute.xlu0 %2686
      %2688 = vrot.lane.b32.xlu0 %v198, 32
      %v2689 = vpop.permute.xlu0 %2688
      %2690 = vrot.lane.b32.xlu0 %v199, 32
      %v2691 = vpop.permute.xlu0 %2690
      %2692 = vrot.lane.b32.xlu0 %v200, 32
      %v2693 = vpop.permute.xlu0 %2692
      %2694 = vrot.lane.b32.xlu0 %v201, 32
      %v2695 = vpop.permute.xlu0 %2694
      %2696 = vrot.lane.b32.xlu0 %v202, 32
      %v2697 = vpop.permute.xlu0 %2696
      %vm2698 = vcmask 261120
      %v2699 = vsel %vm2698, %v2681, %v2683
      %v2700 = vsel %vm2698, %v2683, %v2685
      %v2701 = vsel %vm2698, %v2685, %v2687
      %v2702 = vsel %vm2698, %v2687, %v2689
      %v2703 = vsel %vm2698, %v2689, %v2691
      %v2704 = vsel %vm2698, %v2691, %v2693
      %v2705 = vsel %vm2698, %v2693, %v2695
      %v2706 = vsel %vm2698, %v2695, %v2697
      %v2708 = vsel %vm230, %v2679, 0
      %v2711 = vsel %vm234, %v2699, 0
      %v2714 = vsel %vm234, %v2700, 0
      %v2717 = vsel %vm234, %v2701, 0
      %v2720 = vsel %vm234, %v2702, 0
      %v2723 = vsel %vm234, %v2703, 0
      %v2726 = vsel %vm234, %v2704, 0
      %v2729 = vsel %vm234, %v2705, 0
      %v2732 = vsel %vm234, %v2706, 0
      %2734 = vmatpush.bf16.msra.mxu0 0
      %2735 = vmatpush.bf16.msra.mxu0 0
      %2736 = vmatpush.bf16.msra.mxu0 0
      %2737 = vmatpush.bf16.msra.mxu0 0
      %2738 = vmatpush.bf16.msra.mxu0 0
      %2739 = vmatpush.bf16.msra.mxu0 0
      %2740 = vmatpush.bf16.msra.mxu0 0
      %2741 = vmatpush.bf16.msra.mxu0 %v2711
      %2742 = vmatmul.bf16.gmra.mxu0 %v2708
      %v2743 = vpop.f32.mrf.mxu0
      %v2744 = vadd.f32 0.0, %v2743
      %v2745 = vpop.f32.mrf.mxu0
      %2746 = vdwg.mxu0
      %2747 = vmatpush.bf16.msra.mxu0 0
      %2748 = vmatpush.bf16.msra.mxu0 0
      %2749 = vmatpush.bf16.msra.mxu0 0
      %2750 = vmatpush.bf16.msra.mxu0 0
      %2751 = vmatpush.bf16.msra.mxu0 0
      %2752 = vmatpush.bf16.msra.mxu0 0
      %2753 = vmatpush.bf16.msra.mxu0 0
      %2754 = vmatpush.bf16.msra.mxu0 %v2714
      %2755 = vmatmul.bf16.gmra.mxu0 %v2708
      %v2756 = vpop.f32.mrf.mxu0
      %v2757 = vadd.f32 0.0, %v2756
      %v2758 = vpop.f32.mrf.mxu0
      %2759 = vdwg.mxu0
      %2760 = vmatpush.bf16.msra.mxu0 0
      %2761 = vmatpush.bf16.msra.mxu0 0
      %2762 = vmatpush.bf16.msra.mxu0 0
      %2763 = vmatpush.bf16.msra.mxu0 0
      %2764 = vmatpush.bf16.msra.mxu0 0
      %2765 = vmatpush.bf16.msra.mxu0 0
      %2766 = vmatpush.bf16.msra.mxu0 0
      %2767 = vmatpush.bf16.msra.mxu0 %v2717
      %2768 = vmatmul.bf16.gmra.mxu0 %v2708
      %v2769 = vpop.f32.mrf.mxu0
      %v2770 = vadd.f32 0.0, %v2769
      %v2771 = vpop.f32.mrf.mxu0
      %2772 = vdwg.mxu0
      %2773 = vmatpush.bf16.msra.mxu0 0
      %2774 = vmatpush.bf16.msra.mxu0 0
      %2775 = vmatpush.bf16.msra.mxu0 0
      %2776 = vmatpush.bf16.msra.mxu0 0
      %2777 = vmatpush.bf16.msra.mxu0 0
      %2778 = vmatpush.bf16.msra.mxu0 0
      %2779 = vmatpush.bf16.msra.mxu0 0
      %2780 = vmatpush.bf16.msra.mxu0 %v2720
      %2781 = vmatmul.bf16.gmra.mxu0 %v2708
      %v2782 = vpop.f32.mrf.mxu0
      %v2783 = vadd.f32 0.0, %v2782
      %v2784 = vpop.f32.mrf.mxu0
      %2785 = vdwg.mxu0
      %2786 = vmatpush.bf16.msra.mxu0 0
      %2787 = vmatpush.bf16.msra.mxu0 0
      %2788 = vmatpush.bf16.msra.mxu0 0
      %2789 = vmatpush.bf16.msra.mxu0 0
      %2790 = vmatpush.bf16.msra.mxu0 0
      %2791 = vmatpush.bf16.msra.mxu0 0
      %2792 = vmatpush.bf16.msra.mxu0 0
      %2793 = vmatpush.bf16.msra.mxu0 %v2723
      %2794 = vmatmul.bf16.gmra.mxu0 %v2708
      %v2795 = vpop.f32.mrf.mxu0
      %v2796 = vadd.f32 0.0, %v2795
      %v2797 = vpop.f32.mrf.mxu0
      %2798 = vdwg.mxu0
      %2799 = vmatpush.bf16.msra.mxu0 0
      %2800 = vmatpush.bf16.msra.mxu0 0
      %2801 = vmatpush.bf16.msra.mxu0 0
      %2802 = vmatpush.bf16.msra.mxu0 0
      %2803 = vmatpush.bf16.msra.mxu0 0
      %2804 = vmatpush.bf16.msra.mxu0 0
      %2805 = vmatpush.bf16.msra.mxu0 0
      %2806 = vmatpush.bf16.msra.mxu0 %v2726
      %2807 = vmatmul.bf16.gmra.mxu0 %v2708
      %v2808 = vpop.f32.mrf.mxu0
      %v2809 = vadd.f32 0.0, %v2808
      %v2810 = vpop.f32.mrf.mxu0
      %2811 = vdwg.mxu0
      %2812 = vmatpush.bf16.msra.mxu0 0
      %2813 = vmatpush.bf16.msra.mxu0 0
      %2814 = vmatpush.bf16.msra.mxu0 0
      %2815 = vmatpush.bf16.msra.mxu0 0
      %2816 = vmatpush.bf16.msra.mxu0 0
      %2817 = vmatpush.bf16.msra.mxu0 0
      %2818 = vmatpush.bf16.msra.mxu0 0
      %2819 = vmatpush.bf16.msra.mxu0 %v2729
      %2820 = vmatmul.bf16.gmra.mxu0 %v2708
      %v2821 = vpop.f32.mrf.mxu0
      %v2822 = vadd.f32 0.0, %v2821
      %v2823 = vpop.f32.mrf.mxu0
      %2824 = vdwg.mxu0
      %2825 = vmatpush.bf16.msra.mxu0 0
      %2826 = vmatpush.bf16.msra.mxu0 0
      %2827 = vmatpush.bf16.msra.mxu0 0
      %2828 = vmatpush.bf16.msra.mxu0 0
      %2829 = vmatpush.bf16.msra.mxu0 0
      %2830 = vmatpush.bf16.msra.mxu0 0
      %2831 = vmatpush.bf16.msra.mxu0 0
      %2832 = vmatpush.bf16.msra.mxu0 %v2732
      %2833 = vmatmul.bf16.gmra.mxu0 %v2708
      %v2834 = vpop.f32.mrf.mxu0
      %v2835 = vadd.f32 0.0, %v2834
      %v2836 = vpop.f32.mrf.mxu0
      %2837 = vdwg.mxu0
      %v2838 = vadd.f32 %v2670, %v2744
      %v2839 = vadd.f32 %v2671, %v2757
      %v2840 = vadd.f32 %v2672, %v2770
      %v2841 = vadd.f32 %v2673, %v2783
      %v2842 = vadd.f32 %v2674, %v2796
      %v2843 = vadd.f32 %v2675, %v2809
      %v2844 = vadd.f32 %v2676, %v2822
      %v2845 = vadd.f32 %v2677, %v2835
      %s2846 = scalar_lea.vmem %s0, 64
      %v2847 = vld [vmem:[%s2846] sm:$0x7]
      %2848 = vrot.lane.b32.xlu0 %v194, 31
      %v2849 = vpop.permute.xlu0 %2848
      %2850 = vrot.lane.b32.xlu0 %v195, 31
      %v2851 = vpop.permute.xlu0 %2850
      %2852 = vrot.lane.b32.xlu0 %v196, 31
      %v2853 = vpop.permute.xlu0 %2852
      %2854 = vrot.lane.b32.xlu0 %v197, 31
      %v2855 = vpop.permute.xlu0 %2854
      %2856 = vrot.lane.b32.xlu0 %v198, 31
      %v2857 = vpop.permute.xlu0 %2856
      %2858 = vrot.lane.b32.xlu0 %v199, 31
      %v2859 = vpop.permute.xlu0 %2858
      %2860 = vrot.lane.b32.xlu0 %v200, 31
      %v2861 = vpop.permute.xlu0 %2860
      %2862 = vrot.lane.b32.xlu0 %v201, 31
      %v2863 = vpop.permute.xlu0 %2862
      %2864 = vrot.lane.b32.xlu0 %v202, 31
      %v2865 = vpop.permute.xlu0 %2864
      %vm2866 = vcmask 252928
      %v2867 = vsel %vm2866, %v2849, %v2851
      %v2868 = vsel %vm2866, %v2851, %v2853
      %v2869 = vsel %vm2866, %v2853, %v2855
      %v2870 = vsel %vm2866, %v2855, %v2857
      %v2871 = vsel %vm2866, %v2857, %v2859
      %v2872 = vsel %vm2866, %v2859, %v2861
      %v2873 = vsel %vm2866, %v2861, %v2863
      %v2874 = vsel %vm2866, %v2863, %v2865
      %v2876 = vsel %vm230, %v2847, 0
      %v2879 = vsel %vm234, %v2867, 0
      %v2882 = vsel %vm234, %v2868, 0
      %v2885 = vsel %vm234, %v2869, 0
      %v2888 = vsel %vm234, %v2870, 0
      %v2891 = vsel %vm234, %v2871, 0
      %v2894 = vsel %vm234, %v2872, 0
      %v2897 = vsel %vm234, %v2873, 0
      %v2900 = vsel %vm234, %v2874, 0
      %2902 = vmatpush.bf16.msra.mxu0 0
      %2903 = vmatpush.bf16.msra.mxu0 0
      %2904 = vmatpush.bf16.msra.mxu0 0
      %2905 = vmatpush.bf16.msra.mxu0 0
      %2906 = vmatpush.bf16.msra.mxu0 0
      %2907 = vmatpush.bf16.msra.mxu0 0
      %2908 = vmatpush.bf16.msra.mxu0 0
      %2909 = vmatpush.bf16.msra.mxu0 %v2879
      %2910 = vmatmul.bf16.gmra.mxu0 %v2876
      %v2911 = vpop.f32.mrf.mxu0
      %v2912 = vadd.f32 0.0, %v2911
      %v2913 = vpop.f32.mrf.mxu0
      %2914 = vdwg.mxu0
      %2915 = vmatpush.bf16.msra.mxu0 0
      %2916 = vmatpush.bf16.msra.mxu0 0
      %2917 = vmatpush.bf16.msra.mxu0 0
      %2918 = vmatpush.bf16.msra.mxu0 0
      %2919 = vmatpush.bf16.msra.mxu0 0
      %2920 = vmatpush.bf16.msra.mxu0 0
      %2921 = vmatpush.bf16.msra.mxu0 0
      %2922 = vmatpush.bf16.msra.mxu0 %v2882
      %2923 = vmatmul.bf16.gmra.mxu0 %v2876
      %v2924 = vpop.f32.mrf.mxu0
      %v2925 = vadd.f32 0.0, %v2924
      %v2926 = vpop.f32.mrf.mxu0
      %2927 = vdwg.mxu0
      %2928 = vmatpush.bf16.msra.mxu0 0
      %2929 = vmatpush.bf16.msra.mxu0 0
      %2930 = vmatpush.bf16.msra.mxu0 0
      %2931 = vmatpush.bf16.msra.mxu0 0
      %2932 = vmatpush.bf16.msra.mxu0 0
      %2933 = vmatpush.bf16.msra.mxu0 0
      %2934 = vmatpush.bf16.msra.mxu0 0
      %2935 = vmatpush.bf16.msra.mxu0 %v2885
      %2936 = vmatmul.bf16.gmra.mxu0 %v2876
      %v2937 = vpop.f32.mrf.mxu0
      %v2938 = vadd.f32 0.0, %v2937
      %v2939 = vpop.f32.mrf.mxu0
      %2940 = vdwg.mxu0
      %2941 = vmatpush.bf16.msra.mxu0 0
      %2942 = vmatpush.bf16.msra.mxu0 0
      %2943 = vmatpush.bf16.msra.mxu0 0
      %2944 = vmatpush.bf16.msra.mxu0 0
      %2945 = vmatpush.bf16.msra.mxu0 0
      %2946 = vmatpush.bf16.msra.mxu0 0
      %2947 = vmatpush.bf16.msra.mxu0 0
      %2948 = vmatpush.bf16.msra.mxu0 %v2888
      %2949 = vmatmul.bf16.gmra.mxu0 %v2876
      %v2950 = vpop.f32.mrf.mxu0
      %v2951 = vadd.f32 0.0, %v2950
      %v2952 = vpop.f32.mrf.mxu0
      %2953 = vdwg.mxu0
      %2954 = vmatpush.bf16.msra.mxu0 0
      %2955 = vmatpush.bf16.msra.mxu0 0
      %2956 = vmatpush.bf16.msra.mxu0 0
      %2957 = vmatpush.bf16.msra.mxu0 0
      %2958 = vmatpush.bf16.msra.mxu0 0
      %2959 = vmatpush.bf16.msra.mxu0 0
      %2960 = vmatpush.bf16.msra.mxu0 0
      %2961 = vmatpush.bf16.msra.mxu0 %v2891
      %2962 = vmatmul.bf16.gmra.mxu0 %v2876
      %v2963 = vpop.f32.mrf.mxu0
      %v2964 = vadd.f32 0.0, %v2963
      %v2965 = vpop.f32.mrf.mxu0
      %2966 = vdwg.mxu0
      %2967 = vmatpush.bf16.msra.mxu0 0
      %2968 = vmatpush.bf16.msra.mxu0 0
      %2969 = vmatpush.bf16.msra.mxu0 0
      %2970 = vmatpush.bf16.msra.mxu0 0
      %2971 = vmatpush.bf16.msra.mxu0 0
      %2972 = vmatpush.bf16.msra.mxu0 0
      %2973 = vmatpush.bf16.msra.mxu0 0
      %2974 = vmatpush.bf16.msra.mxu0 %v2894
      %2975 = vmatmul.bf16.gmra.mxu0 %v2876
      %v2976 = vpop.f32.mrf.mxu0
      %v2977 = vadd.f32 0.0, %v2976
      %v2978 = vpop.f32.mrf.mxu0
      %2979 = vdwg.mxu0
      %2980 = vmatpush.bf16.msra.mxu0 0
      %2981 = vmatpush.bf16.msra.mxu0 0
      %2982 = vmatpush.bf16.msra.mxu0 0
      %2983 = vmatpush.bf16.msra.mxu0 0
      %2984 = vmatpush.bf16.msra.mxu0 0
      %2985 = vmatpush.bf16.msra.mxu0 0
      %2986 = vmatpush.bf16.msra.mxu0 0
      %2987 = vmatpush.bf16.msra.mxu0 %v2897
      %2988 = vmatmul.bf16.gmra.mxu0 %v2876
      %v2989 = vpop.f32.mrf.mxu0
      %v2990 = vadd.f32 0.0, %v2989
      %v2991 = vpop.f32.mrf.mxu0
      %2992 = vdwg.mxu0
      %2993 = vmatpush.bf16.msra.mxu0 0
      %2994 = vmatpush.bf16.msra.mxu0 0
      %2995 = vmatpush.bf16.msra.mxu0 0
      %2996 = vmatpush.bf16.msra.mxu0 0
      %2997 = vmatpush.bf16.msra.mxu0 0
      %2998 = vmatpush.bf16.msra.mxu0 0
      %2999 = vmatpush.bf16.msra.mxu0 0
      %3000 = vmatpush.bf16.msra.mxu0 %v2900
      %3001 = vmatmul.bf16.gmra.mxu0 %v2876
      %v3002 = vpop.f32.mrf.mxu0
      %v3003 = vadd.f32 0.0, %v3002
      %v3004 = vpop.f32.mrf.mxu0
      %3005 = vdwg.mxu0
      %v3006 = vadd.f32 %v2838, %v2912
      %v3007 = vadd.f32 %v2839, %v2925
      %v3008 = vadd.f32 %v2840, %v2938
      %v3009 = vadd.f32 %v2841, %v2951
      %v3010 = vadd.f32 %v2842, %v2964
      %v3011 = vadd.f32 %v2843, %v2977
      %v3012 = vadd.f32 %v2844, %v2990
      %v3013 = vadd.f32 %v2845, %v3003
      %s3014 = scalar_lea.vmem %s0, 68
      %v3015 = vld [vmem:[%s3014] sm:$0x7]
      %3016 = vrot.lane.b32.xlu0 %v194, 30
      %v3017 = vpop.permute.xlu0 %3016
      %3018 = vrot.lane.b32.xlu0 %v195, 30
      %v3019 = vpop.permute.xlu0 %3018
      %3020 = vrot.lane.b32.xlu0 %v196, 30
      %v3021 = vpop.permute.xlu0 %3020
      %3022 = vrot.lane.b32.xlu0 %v197, 30
      %v3023 = vpop.permute.xlu0 %3022
      %3024 = vrot.lane.b32.xlu0 %v198, 30
      %v3025 = vpop.permute.xlu0 %3024
      %3026 = vrot.lane.b32.xlu0 %v199, 30
      %v3027 = vpop.permute.xlu0 %3026
      %3028 = vrot.lane.b32.xlu0 %v200, 30
      %v3029 = vpop.permute.xlu0 %3028
      %3030 = vrot.lane.b32.xlu0 %v201, 30
      %v3031 = vpop.permute.xlu0 %3030
      %3032 = vrot.lane.b32.xlu0 %v202, 30
      %v3033 = vpop.permute.xlu0 %3032
      %vm3034 = vcmask 244736
      %v3035 = vsel %vm3034, %v3017, %v3019
      %v3036 = vsel %vm3034, %v3019, %v3021
      %v3037 = vsel %vm3034, %v3021, %v3023
      %v3038 = vsel %vm3034, %v3023, %v3025
      %v3039 = vsel %vm3034, %v3025, %v3027
      %v3040 = vsel %vm3034, %v3027, %v3029
      %v3041 = vsel %vm3034, %v3029, %v3031
      %v3042 = vsel %vm3034, %v3031, %v3033
      %v3044 = vsel %vm230, %v3015, 0
      %v3047 = vsel %vm234, %v3035, 0
      %v3050 = vsel %vm234, %v3036, 0
      %v3053 = vsel %vm234, %v3037, 0
      %v3056 = vsel %vm234, %v3038, 0
      %v3059 = vsel %vm234, %v3039, 0
      %v3062 = vsel %vm234, %v3040, 0
      %v3065 = vsel %vm234, %v3041, 0
      %v3068 = vsel %vm234, %v3042, 0
      %3070 = vmatpush.bf16.msra.mxu0 0
      %3071 = vmatpush.bf16.msra.mxu0 0
      %3072 = vmatpush.bf16.msra.mxu0 0
      %3073 = vmatpush.bf16.msra.mxu0 0
      %3074 = vmatpush.bf16.msra.mxu0 0
      %3075 = vmatpush.bf16.msra.mxu0 0
      %3076 = vmatpush.bf16.msra.mxu0 0
      %3077 = vmatpush.bf16.msra.mxu0 %v3047
      %3078 = vmatmul.bf16.gmra.mxu0 %v3044
      %v3079 = vpop.f32.mrf.mxu0
      %v3080 = vadd.f32 0.0, %v3079
      %v3081 = vpop.f32.mrf.mxu0
      %3082 = vdwg.mxu0
      %3083 = vmatpush.bf16.msra.mxu0 0
      %3084 = vmatpush.bf16.msra.mxu0 0
      %3085 = vmatpush.bf16.msra.mxu0 0
      %3086 = vmatpush.bf16.msra.mxu0 0
      %3087 = vmatpush.bf16.msra.mxu0 0
      %3088 = vmatpush.bf16.msra.mxu0 0
      %3089 = vmatpush.bf16.msra.mxu0 0
      %3090 = vmatpush.bf16.msra.mxu0 %v3050
      %3091 = vmatmul.bf16.gmra.mxu0 %v3044
      %v3092 = vpop.f32.mrf.mxu0
      %v3093 = vadd.f32 0.0, %v3092
      %v3094 = vpop.f32.mrf.mxu0
      %3095 = vdwg.mxu0
      %3096 = vmatpush.bf16.msra.mxu0 0
      %3097 = vmatpush.bf16.msra.mxu0 0
      %3098 = vmatpush.bf16.msra.mxu0 0
      %3099 = vmatpush.bf16.msra.mxu0 0
      %3100 = vmatpush.bf16.msra.mxu0 0
      %3101 = vmatpush.bf16.msra.mxu0 0
      %3102 = vmatpush.bf16.msra.mxu0 0
      %3103 = vmatpush.bf16.msra.mxu0 %v3053
      %3104 = vmatmul.bf16.gmra.mxu0 %v3044
      %v3105 = vpop.f32.mrf.mxu0
      %v3106 = vadd.f32 0.0, %v3105
      %v3107 = vpop.f32.mrf.mxu0
      %3108 = vdwg.mxu0
      %3109 = vmatpush.bf16.msra.mxu0 0
      %3110 = vmatpush.bf16.msra.mxu0 0
      %3111 = vmatpush.bf16.msra.mxu0 0
      %3112 = vmatpush.bf16.msra.mxu0 0
      %3113 = vmatpush.bf16.msra.mxu0 0
      %3114 = vmatpush.bf16.msra.mxu0 0
      %3115 = vmatpush.bf16.msra.mxu0 0
      %3116 = vmatpush.bf16.msra.mxu0 %v3056
      %3117 = vmatmul.bf16.gmra.mxu0 %v3044
      %v3118 = vpop.f32.mrf.mxu0
      %v3119 = vadd.f32 0.0, %v3118
      %v3120 = vpop.f32.mrf.mxu0
      %3121 = vdwg.mxu0
      %3122 = vmatpush.bf16.msra.mxu0 0
      %3123 = vmatpush.bf16.msra.mxu0 0
      %3124 = vmatpush.bf16.msra.mxu0 0
      %3125 = vmatpush.bf16.msra.mxu0 0
      %3126 = vmatpush.bf16.msra.mxu0 0
      %3127 = vmatpush.bf16.msra.mxu0 0
      %3128 = vmatpush.bf16.msra.mxu0 0
      %3129 = vmatpush.bf16.msra.mxu0 %v3059
      %3130 = vmatmul.bf16.gmra.mxu0 %v3044
      %v3131 = vpop.f32.mrf.mxu0
      %v3132 = vadd.f32 0.0, %v3131
      %v3133 = vpop.f32.mrf.mxu0
      %3134 = vdwg.mxu0
      %3135 = vmatpush.bf16.msra.mxu0 0
      %3136 = vmatpush.bf16.msra.mxu0 0
      %3137 = vmatpush.bf16.msra.mxu0 0
      %3138 = vmatpush.bf16.msra.mxu0 0
      %3139 = vmatpush.bf16.msra.mxu0 0
      %3140 = vmatpush.bf16.msra.mxu0 0
      %3141 = vmatpush.bf16.msra.mxu0 0
      %3142 = vmatpush.bf16.msra.mxu0 %v3062
      %3143 = vmatmul.bf16.gmra.mxu0 %v3044
      %v3144 = vpop.f32.mrf.mxu0
      %v3145 = vadd.f32 0.0, %v3144
      %v3146 = vpop.f32.mrf.mxu0
      %3147 = vdwg.mxu0
      %3148 = vmatpush.bf16.msra.mxu0 0
      %3149 = vmatpush.bf16.msra.mxu0 0
      %3150 = vmatpush.bf16.msra.mxu0 0
      %3151 = vmatpush.bf16.msra.mxu0 0
      %3152 = vmatpush.bf16.msra.mxu0 0
      %3153 = vmatpush.bf16.msra.mxu0 0
      %3154 = vmatpush.bf16.msra.mxu0 0
      %3155 = vmatpush.bf16.msra.mxu0 %v3065
      %3156 = vmatmul.bf16.gmra.mxu0 %v3044
      %v3157 = vpop.f32.mrf.mxu0
      %v3158 = vadd.f32 0.0, %v3157
      %v3159 = vpop.f32.mrf.mxu0
      %3160 = vdwg.mxu0
      %3161 = vmatpush.bf16.msra.mxu0 0
      %3162 = vmatpush.bf16.msra.mxu0 0
      %3163 = vmatpush.bf16.msra.mxu0 0
      %3164 = vmatpush.bf16.msra.mxu0 0
      %3165 = vmatpush.bf16.msra.mxu0 0
      %3166 = vmatpush.bf16.msra.mxu0 0
      %3167 = vmatpush.bf16.msra.mxu0 0
      %3168 = vmatpush.bf16.msra.mxu0 %v3068
      %3169 = vmatmul.bf16.gmra.mxu0 %v3044
      %v3170 = vpop.f32.mrf.mxu0
      %v3171 = vadd.f32 0.0, %v3170
      %v3172 = vpop.f32.mrf.mxu0
      %3173 = vdwg.mxu0
      %v3174 = vadd.f32 %v3006, %v3080
      %v3175 = vadd.f32 %v3007, %v3093
      %v3176 = vadd.f32 %v3008, %v3106
      %v3177 = vadd.f32 %v3009, %v3119
      %v3178 = vadd.f32 %v3010, %v3132
      %v3179 = vadd.f32 %v3011, %v3145
      %v3180 = vadd.f32 %v3012, %v3158
      %v3181 = vadd.f32 %v3013, %v3171
      %s3182 = scalar_lea.vmem %s0, 72
      %v3183 = vld [vmem:[%s3182] sm:$0x7]
      %3184 = vrot.lane.b32.xlu0 %v194, 29
      %v3185 = vpop.permute.xlu0 %3184
      %3186 = vrot.lane.b32.xlu0 %v195, 29
      %v3187 = vpop.permute.xlu0 %3186
      %3188 = vrot.lane.b32.xlu0 %v196, 29
      %v3189 = vpop.permute.xlu0 %3188
      %3190 = vrot.lane.b32.xlu0 %v197, 29
      %v3191 = vpop.permute.xlu0 %3190
      %3192 = vrot.lane.b32.xlu0 %v198, 29
      %v3193 = vpop.permute.xlu0 %3192
      %3194 = vrot.lane.b32.xlu0 %v199, 29
      %v3195 = vpop.permute.xlu0 %3194
      %3196 = vrot.lane.b32.xlu0 %v200, 29
      %v3197 = vpop.permute.xlu0 %3196
      %3198 = vrot.lane.b32.xlu0 %v201, 29
      %v3199 = vpop.permute.xlu0 %3198
      %3200 = vrot.lane.b32.xlu0 %v202, 29
      %v3201 = vpop.permute.xlu0 %3200
      %vm3202 = vcmask 236544
      %v3203 = vsel %vm3202, %v3185, %v3187
      %v3204 = vsel %vm3202, %v3187, %v3189
      %v3205 = vsel %vm3202, %v3189, %v3191
      %v3206 = vsel %vm3202, %v3191, %v3193
      %v3207 = vsel %vm3202, %v3193, %v3195
      %v3208 = vsel %vm3202, %v3195, %v3197
      %v3209 = vsel %vm3202, %v3197, %v3199
      %v3210 = vsel %vm3202, %v3199, %v3201
      %v3212 = vsel %vm230, %v3183, 0
      %v3215 = vsel %vm234, %v3203, 0
      %v3218 = vsel %vm234, %v3204, 0
      %v3221 = vsel %vm234, %v3205, 0
      %v3224 = vsel %vm234, %v3206, 0
      %v3227 = vsel %vm234, %v3207, 0
      %v3230 = vsel %vm234, %v3208, 0
      %v3233 = vsel %vm234, %v3209, 0
      %v3236 = vsel %vm234, %v3210, 0
      %3238 = vmatpush.bf16.msra.mxu0 0
      %3239 = vmatpush.bf16.msra.mxu0 0
      %3240 = vmatpush.bf16.msra.mxu0 0
      %3241 = vmatpush.bf16.msra.mxu0 0
      %3242 = vmatpush.bf16.msra.mxu0 0
      %3243 = vmatpush.bf16.msra.mxu0 0
      %3244 = vmatpush.bf16.msra.mxu0 0
      %3245 = vmatpush.bf16.msra.mxu0 %v3215
      %3246 = vmatmul.bf16.gmra.mxu0 %v3212
      %v3247 = vpop.f32.mrf.mxu0
      %v3248 = vadd.f32 0.0, %v3247
      %v3249 = vpop.f32.mrf.mxu0
      %3250 = vdwg.mxu0
      %3251 = vmatpush.bf16.msra.mxu0 0
      %3252 = vmatpush.bf16.msra.mxu0 0
      %3253 = vmatpush.bf16.msra.mxu0 0
      %3254 = vmatpush.bf16.msra.mxu0 0
      %3255 = vmatpush.bf16.msra.mxu0 0
      %3256 = vmatpush.bf16.msra.mxu0 0
      %3257 = vmatpush.bf16.msra.mxu0 0
      %3258 = vmatpush.bf16.msra.mxu0 %v3218
      %3259 = vmatmul.bf16.gmra.mxu0 %v3212
      %v3260 = vpop.f32.mrf.mxu0
      %v3261 = vadd.f32 0.0, %v3260
      %v3262 = vpop.f32.mrf.mxu0
      %3263 = vdwg.mxu0
      %3264 = vmatpush.bf16.msra.mxu0 0
      %3265 = vmatpush.bf16.msra.mxu0 0
      %3266 = vmatpush.bf16.msra.mxu0 0
      %3267 = vmatpush.bf16.msra.mxu0 0
      %3268 = vmatpush.bf16.msra.mxu0 0
      %3269 = vmatpush.bf16.msra.mxu0 0
      %3270 = vmatpush.bf16.msra.mxu0 0
      %3271 = vmatpush.bf16.msra.mxu0 %v3221
      %3272 = vmatmul.bf16.gmra.mxu0 %v3212
      %v3273 = vpop.f32.mrf.mxu0
      %v3274 = vadd.f32 0.0, %v3273
      %v3275 = vpop.f32.mrf.mxu0
      %3276 = vdwg.mxu0
      %3277 = vmatpush.bf16.msra.mxu0 0
      %3278 = vmatpush.bf16.msra.mxu0 0
      %3279 = vmatpush.bf16.msra.mxu0 0
      %3280 = vmatpush.bf16.msra.mxu0 0
      %3281 = vmatpush.bf16.msra.mxu0 0
      %3282 = vmatpush.bf16.msra.mxu0 0
      %3283 = vmatpush.bf16.msra.mxu0 0
      %3284 = vmatpush.bf16.msra.mxu0 %v3224
      %3285 = vmatmul.bf16.gmra.mxu0 %v3212
      %v3286 = vpop.f32.mrf.mxu0
      %v3287 = vadd.f32 0.0, %v3286
      %v3288 = vpop.f32.mrf.mxu0
      %3289 = vdwg.mxu0
      %3290 = vmatpush.bf16.msra.mxu0 0
      %3291 = vmatpush.bf16.msra.mxu0 0
      %3292 = vmatpush.bf16.msra.mxu0 0
      %3293 = vmatpush.bf16.msra.mxu0 0
      %3294 = vmatpush.bf16.msra.mxu0 0
      %3295 = vmatpush.bf16.msra.mxu0 0
      %3296 = vmatpush.bf16.msra.mxu0 0
      %3297 = vmatpush.bf16.msra.mxu0 %v3227
      %3298 = vmatmul.bf16.gmra.mxu0 %v3212
      %v3299 = vpop.f32.mrf.mxu0
      %v3300 = vadd.f32 0.0, %v3299
      %v3301 = vpop.f32.mrf.mxu0
      %3302 = vdwg.mxu0
      %3303 = vmatpush.bf16.msra.mxu0 0
      %3304 = vmatpush.bf16.msra.mxu0 0
      %3305 = vmatpush.bf16.msra.mxu0 0
      %3306 = vmatpush.bf16.msra.mxu0 0
      %3307 = vmatpush.bf16.msra.mxu0 0
      %3308 = vmatpush.bf16.msra.mxu0 0
      %3309 = vmatpush.bf16.msra.mxu0 0
      %3310 = vmatpush.bf16.msra.mxu0 %v3230
      %3311 = vmatmul.bf16.gmra.mxu0 %v3212
      %v3312 = vpop.f32.mrf.mxu0
      %v3313 = vadd.f32 0.0, %v3312
      %v3314 = vpop.f32.mrf.mxu0
      %3315 = vdwg.mxu0
      %3316 = vmatpush.bf16.msra.mxu0 0
      %3317 = vmatpush.bf16.msra.mxu0 0
      %3318 = vmatpush.bf16.msra.mxu0 0
      %3319 = vmatpush.bf16.msra.mxu0 0
      %3320 = vmatpush.bf16.msra.mxu0 0
      %3321 = vmatpush.bf16.msra.mxu0 0
      %3322 = vmatpush.bf16.msra.mxu0 0
      %3323 = vmatpush.bf16.msra.mxu0 %v3233
      %3324 = vmatmul.bf16.gmra.mxu0 %v3212
      %v3325 = vpop.f32.mrf.mxu0
      %v3326 = vadd.f32 0.0, %v3325
      %v3327 = vpop.f32.mrf.mxu0
      %3328 = vdwg.mxu0
      %3329 = vmatpush.bf16.msra.mxu0 0
      %3330 = vmatpush.bf16.msra.mxu0 0
      %3331 = vmatpush.bf16.msra.mxu0 0
      %3332 = vmatpush.bf16.msra.mxu0 0
      %3333 = vmatpush.bf16.msra.mxu0 0
      %3334 = vmatpush.bf16.msra.mxu0 0
      %3335 = vmatpush.bf16.msra.mxu0 0
      %3336 = vmatpush.bf16.msra.mxu0 %v3236
      %3337 = vmatmul.bf16.gmra.mxu0 %v3212
      %v3338 = vpop.f32.mrf.mxu0
      %v3339 = vadd.f32 0.0, %v3338
      %v3340 = vpop.f32.mrf.mxu0
      %3341 = vdwg.mxu0
      %v3342 = vadd.f32 %v3174, %v3248
      %v3343 = vadd.f32 %v3175, %v3261
      %v3344 = vadd.f32 %v3176, %v3274
      %v3345 = vadd.f32 %v3177, %v3287
      %v3346 = vadd.f32 %v3178, %v3300
      %v3347 = vadd.f32 %v3179, %v3313
      %v3348 = vadd.f32 %v3180, %v3326
      %v3349 = vadd.f32 %v3181, %v3339
      %s3350 = scalar_lea.vmem %s0, 76
      %v3351 = vld [vmem:[%s3350] sm:$0x7]
      %3352 = vrot.lane.b32.xlu0 %v194, 28
      %v3353 = vpop.permute.xlu0 %3352
      %3354 = vrot.lane.b32.xlu0 %v195, 28
      %v3355 = vpop.permute.xlu0 %3354
      %3356 = vrot.lane.b32.xlu0 %v196, 28
      %v3357 = vpop.permute.xlu0 %3356
      %3358 = vrot.lane.b32.xlu0 %v197, 28
      %v3359 = vpop.permute.xlu0 %3358
      %3360 = vrot.lane.b32.xlu0 %v198, 28
      %v3361 = vpop.permute.xlu0 %3360
      %3362 = vrot.lane.b32.xlu0 %v199, 28
      %v3363 = vpop.permute.xlu0 %3362
      %3364 = vrot.lane.b32.xlu0 %v200, 28
      %v3365 = vpop.permute.xlu0 %3364
      %3366 = vrot.lane.b32.xlu0 %v201, 28
      %v3367 = vpop.permute.xlu0 %3366
      %3368 = vrot.lane.b32.xlu0 %v202, 28
      %v3369 = vpop.permute.xlu0 %3368
      %vm3370 = vcmask 228352
      %v3371 = vsel %vm3370, %v3353, %v3355
      %v3372 = vsel %vm3370, %v3355, %v3357
      %v3373 = vsel %vm3370, %v3357, %v3359
      %v3374 = vsel %vm3370, %v3359, %v3361
      %v3375 = vsel %vm3370, %v3361, %v3363
      %v3376 = vsel %vm3370, %v3363, %v3365
      %v3377 = vsel %vm3370, %v3365, %v3367
      %v3378 = vsel %vm3370, %v3367, %v3369
      %v3380 = vsel %vm230, %v3351, 0
      %v3383 = vsel %vm234, %v3371, 0
      %v3386 = vsel %vm234, %v3372, 0
      %v3389 = vsel %vm234, %v3373, 0
      %v3392 = vsel %vm234, %v3374, 0
      %v3395 = vsel %vm234, %v3375, 0
      %v3398 = vsel %vm234, %v3376, 0
      %v3401 = vsel %vm234, %v3377, 0
      %v3404 = vsel %vm234, %v3378, 0
      %3406 = vmatpush.bf16.msra.mxu0 0
      %3407 = vmatpush.bf16.msra.mxu0 0
      %3408 = vmatpush.bf16.msra.mxu0 0
      %3409 = vmatpush.bf16.msra.mxu0 0
      %3410 = vmatpush.bf16.msra.mxu0 0
      %3411 = vmatpush.bf16.msra.mxu0 0
      %3412 = vmatpush.bf16.msra.mxu0 0
      %3413 = vmatpush.bf16.msra.mxu0 %v3383
      %3414 = vmatmul.bf16.gmra.mxu0 %v3380
      %v3415 = vpop.f32.mrf.mxu0
      %v3416 = vadd.f32 0.0, %v3415
      %v3417 = vpop.f32.mrf.mxu0
      %3418 = vdwg.mxu0
      %3419 = vmatpush.bf16.msra.mxu0 0
      %3420 = vmatpush.bf16.msra.mxu0 0
      %3421 = vmatpush.bf16.msra.mxu0 0
      %3422 = vmatpush.bf16.msra.mxu0 0
      %3423 = vmatpush.bf16.msra.mxu0 0
      %3424 = vmatpush.bf16.msra.mxu0 0
      %3425 = vmatpush.bf16.msra.mxu0 0
      %3426 = vmatpush.bf16.msra.mxu0 %v3386
      %3427 = vmatmul.bf16.gmra.mxu0 %v3380
      %v3428 = vpop.f32.mrf.mxu0
      %v3429 = vadd.f32 0.0, %v3428
      %v3430 = vpop.f32.mrf.mxu0
      %3431 = vdwg.mxu0
      %3432 = vmatpush.bf16.msra.mxu0 0
      %3433 = vmatpush.bf16.msra.mxu0 0
      %3434 = vmatpush.bf16.msra.mxu0 0
      %3435 = vmatpush.bf16.msra.mxu0 0
      %3436 = vmatpush.bf16.msra.mxu0 0
      %3437 = vmatpush.bf16.msra.mxu0 0
      %3438 = vmatpush.bf16.msra.mxu0 0
      %3439 = vmatpush.bf16.msra.mxu0 %v3389
      %3440 = vmatmul.bf16.gmra.mxu0 %v3380
      %v3441 = vpop.f32.mrf.mxu0
      %v3442 = vadd.f32 0.0, %v3441
      %v3443 = vpop.f32.mrf.mxu0
      %3444 = vdwg.mxu0
      %3445 = vmatpush.bf16.msra.mxu0 0
      %3446 = vmatpush.bf16.msra.mxu0 0
      %3447 = vmatpush.bf16.msra.mxu0 0
      %3448 = vmatpush.bf16.msra.mxu0 0
      %3449 = vmatpush.bf16.msra.mxu0 0
      %3450 = vmatpush.bf16.msra.mxu0 0
      %3451 = vmatpush.bf16.msra.mxu0 0
      %3452 = vmatpush.bf16.msra.mxu0 %v3392
      %3453 = vmatmul.bf16.gmra.mxu0 %v3380
      %v3454 = vpop.f32.mrf.mxu0
      %v3455 = vadd.f32 0.0, %v3454
      %v3456 = vpop.f32.mrf.mxu0
      %3457 = vdwg.mxu0
      %3458 = vmatpush.bf16.msra.mxu0 0
      %3459 = vmatpush.bf16.msra.mxu0 0
      %3460 = vmatpush.bf16.msra.mxu0 0
      %3461 = vmatpush.bf16.msra.mxu0 0
      %3462 = vmatpush.bf16.msra.mxu0 0
      %3463 = vmatpush.bf16.msra.mxu0 0
      %3464 = vmatpush.bf16.msra.mxu0 0
      %3465 = vmatpush.bf16.msra.mxu0 %v3395
      %3466 = vmatmul.bf16.gmra.mxu0 %v3380
      %v3467 = vpop.f32.mrf.mxu0
      %v3468 = vadd.f32 0.0, %v3467
      %v3469 = vpop.f32.mrf.mxu0
      %3470 = vdwg.mxu0
      %3471 = vmatpush.bf16.msra.mxu0 0
      %3472 = vmatpush.bf16.msra.mxu0 0
      %3473 = vmatpush.bf16.msra.mxu0 0
      %3474 = vmatpush.bf16.msra.mxu0 0
      %3475 = vmatpush.bf16.msra.mxu0 0
      %3476 = vmatpush.bf16.msra.mxu0 0
      %3477 = vmatpush.bf16.msra.mxu0 0
      %3478 = vmatpush.bf16.msra.mxu0 %v3398
      %3479 = vmatmul.bf16.gmra.mxu0 %v3380
      %v3480 = vpop.f32.mrf.mxu0
      %v3481 = vadd.f32 0.0, %v3480
      %v3482 = vpop.f32.mrf.mxu0
      %3483 = vdwg.mxu0
      %3484 = vmatpush.bf16.msra.mxu0 0
      %3485 = vmatpush.bf16.msra.mxu0 0
      %3486 = vmatpush.bf16.msra.mxu0 0
      %3487 = vmatpush.bf16.msra.mxu0 0
      %3488 = vmatpush.bf16.msra.mxu0 0
      %3489 = vmatpush.bf16.msra.mxu0 0
      %3490 = vmatpush.bf16.msra.mxu0 0
      %3491 = vmatpush.bf16.msra.mxu0 %v3401
      %3492 = vmatmul.bf16.gmra.mxu0 %v3380
      %v3493 = vpop.f32.mrf.mxu0
      %v3494 = vadd.f32 0.0, %v3493
      %v3495 = vpop.f32.mrf.mxu0
      %3496 = vdwg.mxu0
      %3497 = vmatpush.bf16.msra.mxu0 0
      %3498 = vmatpush.bf16.msra.mxu0 0
      %3499 = vmatpush.bf16.msra.mxu0 0
      %3500 = vmatpush.bf16.msra.mxu0 0
      %3501 = vmatpush.bf16.msra.mxu0 0
      %3502 = vmatpush.bf16.msra.mxu0 0
      %3503 = vmatpush.bf16.msra.mxu0 0
      %3504 = vmatpush.bf16.msra.mxu0 %v3404
      %3505 = vmatmul.bf16.gmra.mxu0 %v3380
      %v3506 = vpop.f32.mrf.mxu0
      %v3507 = vadd.f32 0.0, %v3506
      %v3508 = vpop.f32.mrf.mxu0
      %3509 = vdwg.mxu0
      %v3510 = vadd.f32 %v3342, %v3416
      %v3511 = vadd.f32 %v3343, %v3429
      %v3512 = vadd.f32 %v3344, %v3442
      %v3513 = vadd.f32 %v3345, %v3455
      %v3514 = vadd.f32 %v3346, %v3468
      %v3515 = vadd.f32 %v3347, %v3481
      %v3516 = vadd.f32 %v3348, %v3494
      %v3517 = vadd.f32 %v3349, %v3507
      %s3518 = scalar_lea.vmem %s0, 80
      %v3519 = vld [vmem:[%s3518] sm:$0x7]
      %v3521 = vsel %vm230, %v3519, 0
      %v3524 = vsel %vm234, %v202, 0
      %3526 = vmatpush.bf16.msra.mxu0 0
      %3527 = vmatpush.bf16.msra.mxu0 0
      %3528 = vmatpush.bf16.msra.mxu0 0
      %3529 = vmatpush.bf16.msra.mxu0 0
      %3530 = vmatpush.bf16.msra.mxu0 0
      %3531 = vmatpush.bf16.msra.mxu0 0
      %3532 = vmatpush.bf16.msra.mxu0 0
      %3533 = vmatpush.bf16.msra.mxu0 %v370
      %3534 = vmatmul.bf16.gmra.mxu0 %v3521
      %v3535 = vpop.f32.mrf.mxu0
      %v3536 = vadd.f32 0.0, %v3535
      %v3537 = vpop.f32.mrf.mxu0
      %3538 = vdwg.mxu0
      %3539 = vmatpush.bf16.msra.mxu0 0
      %3540 = vmatpush.bf16.msra.mxu0 0
      %3541 = vmatpush.bf16.msra.mxu0 0
      %3542 = vmatpush.bf16.msra.mxu0 0
      %3543 = vmatpush.bf16.msra.mxu0 0
      %3544 = vmatpush.bf16.msra.mxu0 0
      %3545 = vmatpush.bf16.msra.mxu0 0
      %3546 = vmatpush.bf16.msra.mxu0 %v373
      %3547 = vmatmul.bf16.gmra.mxu0 %v3521
      %v3548 = vpop.f32.mrf.mxu0
      %v3549 = vadd.f32 0.0, %v3548
      %v3550 = vpop.f32.mrf.mxu0
      %3551 = vdwg.mxu0
      %3552 = vmatpush.bf16.msra.mxu0 0
      %3553 = vmatpush.bf16.msra.mxu0 0
      %3554 = vmatpush.bf16.msra.mxu0 0
      %3555 = vmatpush.bf16.msra.mxu0 0
      %3556 = vmatpush.bf16.msra.mxu0 0
      %3557 = vmatpush.bf16.msra.mxu0 0
      %3558 = vmatpush.bf16.msra.mxu0 0
      %3559 = vmatpush.bf16.msra.mxu0 %v376
      %3560 = vmatmul.bf16.gmra.mxu0 %v3521
      %v3561 = vpop.f32.mrf.mxu0
      %v3562 = vadd.f32 0.0, %v3561
      %v3563 = vpop.f32.mrf.mxu0
      %3564 = vdwg.mxu0
      %3565 = vmatpush.bf16.msra.mxu0 0
      %3566 = vmatpush.bf16.msra.mxu0 0
      %3567 = vmatpush.bf16.msra.mxu0 0
      %3568 = vmatpush.bf16.msra.mxu0 0
      %3569 = vmatpush.bf16.msra.mxu0 0
      %3570 = vmatpush.bf16.msra.mxu0 0
      %3571 = vmatpush.bf16.msra.mxu0 0
      %3572 = vmatpush.bf16.msra.mxu0 %v379
      %3573 = vmatmul.bf16.gmra.mxu0 %v3521
      %v3574 = vpop.f32.mrf.mxu0
      %v3575 = vadd.f32 0.0, %v3574
      %v3576 = vpop.f32.mrf.mxu0
      %3577 = vdwg.mxu0
      %3578 = vmatpush.bf16.msra.mxu0 0
      %3579 = vmatpush.bf16.msra.mxu0 0
      %3580 = vmatpush.bf16.msra.mxu0 0
      %3581 = vmatpush.bf16.msra.mxu0 0
      %3582 = vmatpush.bf16.msra.mxu0 0
      %3583 = vmatpush.bf16.msra.mxu0 0
      %3584 = vmatpush.bf16.msra.mxu0 0
      %3585 = vmatpush.bf16.msra.mxu0 %v382
      %3586 = vmatmul.bf16.gmra.mxu0 %v3521
      %v3587 = vpop.f32.mrf.mxu0
      %v3588 = vadd.f32 0.0, %v3587
      %v3589 = vpop.f32.mrf.mxu0
      %3590 = vdwg.mxu0
      %3591 = vmatpush.bf16.msra.mxu0 0
      %3592 = vmatpush.bf16.msra.mxu0 0
      %3593 = vmatpush.bf16.msra.mxu0 0
      %3594 = vmatpush.bf16.msra.mxu0 0
      %3595 = vmatpush.bf16.msra.mxu0 0
      %3596 = vmatpush.bf16.msra.mxu0 0
      %3597 = vmatpush.bf16.msra.mxu0 0
      %3598 = vmatpush.bf16.msra.mxu0 %v385
      %3599 = vmatmul.bf16.gmra.mxu0 %v3521
      %v3600 = vpop.f32.mrf.mxu0
      %v3601 = vadd.f32 0.0, %v3600
      %v3602 = vpop.f32.mrf.mxu0
      %3603 = vdwg.mxu0
      %3604 = vmatpush.bf16.msra.mxu0 0
      %3605 = vmatpush.bf16.msra.mxu0 0
      %3606 = vmatpush.bf16.msra.mxu0 0
      %3607 = vmatpush.bf16.msra.mxu0 0
      %3608 = vmatpush.bf16.msra.mxu0 0
      %3609 = vmatpush.bf16.msra.mxu0 0
      %3610 = vmatpush.bf16.msra.mxu0 0
      %3611 = vmatpush.bf16.msra.mxu0 %v388
      %3612 = vmatmul.bf16.gmra.mxu0 %v3521
      %v3613 = vpop.f32.mrf.mxu0
      %v3614 = vadd.f32 0.0, %v3613
      %v3615 = vpop.f32.mrf.mxu0
      %3616 = vdwg.mxu0
      %3617 = vmatpush.bf16.msra.mxu0 0
      %3618 = vmatpush.bf16.msra.mxu0 0
      %3619 = vmatpush.bf16.msra.mxu0 0
      %3620 = vmatpush.bf16.msra.mxu0 0
      %3621 = vmatpush.bf16.msra.mxu0 0
      %3622 = vmatpush.bf16.msra.mxu0 0
      %3623 = vmatpush.bf16.msra.mxu0 0
      %3624 = vmatpush.bf16.msra.mxu0 %v3524
      %3625 = vmatmul.bf16.gmra.mxu0 %v3521
      %v3626 = vpop.f32.mrf.mxu0
      %v3627 = vadd.f32 0.0, %v3626
      %v3628 = vpop.f32.mrf.mxu0
      %3629 = vdwg.mxu0
      %v3630 = vadd.f32 %v3510, %v3536
      %v3631 = vadd.f32 %v3511, %v3549
      %v3632 = vadd.f32 %v3512, %v3562
      %v3633 = vadd.f32 %v3513, %v3575
      %v3634 = vadd.f32 %v3514, %v3588
      %v3635 = vadd.f32 %v3515, %v3601
      %v3636 = vadd.f32 %v3516, %v3614
      %v3637 = vadd.f32 %v3517, %v3627
      %s3638 = scalar_lea.vmem %s0, 84
      %v3639 = vld [vmem:[%s3638] sm:$0x7]
      %v3640 = vunpack.c.h.b16 %v176
      %v3641 = vpack.c.b16 %v3640, %v3640
      %3642 = vrot.lane.b32.xlu0 %v3641, 127
      %v3643 = vpop.permute.xlu0 %3642
      %v3644 = vsel %vm221, %v220, %v3643
      %v3646 = vsel %vm230, %v3639, 0
      %v3649 = vsel %vm234, %v3644, 0
      %3651 = vmatpush.bf16.msra.mxu0 0
      %3652 = vmatpush.bf16.msra.mxu0 0
      %3653 = vmatpush.bf16.msra.mxu0 0
      %3654 = vmatpush.bf16.msra.mxu0 0
      %3655 = vmatpush.bf16.msra.mxu0 0
      %3656 = vmatpush.bf16.msra.mxu0 0
      %3657 = vmatpush.bf16.msra.mxu0 0
      %3658 = vmatpush.bf16.msra.mxu0 %v239
      %3659 = vmatmul.bf16.gmra.mxu0 %v3646
      %v3660 = vpop.f32.mrf.mxu0
      %v3661 = vadd.f32 0.0, %v3660
      %v3662 = vpop.f32.mrf.mxu0
      %3663 = vdwg.mxu0
      %3664 = vmatpush.bf16.msra.mxu0 0
      %3665 = vmatpush.bf16.msra.mxu0 0
      %3666 = vmatpush.bf16.msra.mxu0 0
      %3667 = vmatpush.bf16.msra.mxu0 0
      %3668 = vmatpush.bf16.msra.mxu0 0
      %3669 = vmatpush.bf16.msra.mxu0 0
      %3670 = vmatpush.bf16.msra.mxu0 0
      %3671 = vmatpush.bf16.msra.mxu0 %v242
      %3672 = vmatmul.bf16.gmra.mxu0 %v3646
      %v3673 = vpop.f32.mrf.mxu0
      %v3674 = vadd.f32 0.0, %v3673
      %v3675 = vpop.f32.mrf.mxu0
      %3676 = vdwg.mxu0
      %3677 = vmatpush.bf16.msra.mxu0 0
      %3678 = vmatpush.bf16.msra.mxu0 0
      %3679 = vmatpush.bf16.msra.mxu0 0
      %3680 = vmatpush.bf16.msra.mxu0 0
      %3681 = vmatpush.bf16.msra.mxu0 0
      %3682 = vmatpush.bf16.msra.mxu0 0
      %3683 = vmatpush.bf16.msra.mxu0 0
      %3684 = vmatpush.bf16.msra.mxu0 %v245
      %3685 = vmatmul.bf16.gmra.mxu0 %v3646
      %v3686 = vpop.f32.mrf.mxu0
      %v3687 = vadd.f32 0.0, %v3686
      %v3688 = vpop.f32.mrf.mxu0
      %3689 = vdwg.mxu0
      %3690 = vmatpush.bf16.msra.mxu0 0
      %3691 = vmatpush.bf16.msra.mxu0 0
      %3692 = vmatpush.bf16.msra.mxu0 0
      %3693 = vmatpush.bf16.msra.mxu0 0
      %3694 = vmatpush.bf16.msra.mxu0 0
      %3695 = vmatpush.bf16.msra.mxu0 0
      %3696 = vmatpush.bf16.msra.mxu0 0
      %3697 = vmatpush.bf16.msra.mxu0 %v248
      %3698 = vmatmul.bf16.gmra.mxu0 %v3646
      %v3699 = vpop.f32.mrf.mxu0
      %v3700 = vadd.f32 0.0, %v3699
      %v3701 = vpop.f32.mrf.mxu0
      %3702 = vdwg.mxu0
      %3703 = vmatpush.bf16.msra.mxu0 0
      %3704 = vmatpush.bf16.msra.mxu0 0
      %3705 = vmatpush.bf16.msra.mxu0 0
      %3706 = vmatpush.bf16.msra.mxu0 0
      %3707 = vmatpush.bf16.msra.mxu0 0
      %3708 = vmatpush.bf16.msra.mxu0 0
      %3709 = vmatpush.bf16.msra.mxu0 0
      %3710 = vmatpush.bf16.msra.mxu0 %v251
      %3711 = vmatmul.bf16.gmra.mxu0 %v3646
      %v3712 = vpop.f32.mrf.mxu0
      %v3713 = vadd.f32 0.0, %v3712
      %v3714 = vpop.f32.mrf.mxu0
      %3715 = vdwg.mxu0
      %3716 = vmatpush.bf16.msra.mxu0 0
      %3717 = vmatpush.bf16.msra.mxu0 0
      %3718 = vmatpush.bf16.msra.mxu0 0
      %3719 = vmatpush.bf16.msra.mxu0 0
      %3720 = vmatpush.bf16.msra.mxu0 0
      %3721 = vmatpush.bf16.msra.mxu0 0
      %3722 = vmatpush.bf16.msra.mxu0 0
      %3723 = vmatpush.bf16.msra.mxu0 %v254
      %3724 = vmatmul.bf16.gmra.mxu0 %v3646
      %v3725 = vpop.f32.mrf.mxu0
      %v3726 = vadd.f32 0.0, %v3725
      %v3727 = vpop.f32.mrf.mxu0
      %3728 = vdwg.mxu0
      %3729 = vmatpush.bf16.msra.mxu0 0
      %3730 = vmatpush.bf16.msra.mxu0 0
      %3731 = vmatpush.bf16.msra.mxu0 0
      %3732 = vmatpush.bf16.msra.mxu0 0
      %3733 = vmatpush.bf16.msra.mxu0 0
      %3734 = vmatpush.bf16.msra.mxu0 0
      %3735 = vmatpush.bf16.msra.mxu0 0
      %3736 = vmatpush.bf16.msra.mxu0 %v257
      %3737 = vmatmul.bf16.gmra.mxu0 %v3646
      %v3738 = vpop.f32.mrf.mxu0
      %v3739 = vadd.f32 0.0, %v3738
      %v3740 = vpop.f32.mrf.mxu0
      %3741 = vdwg.mxu0
      %3742 = vmatpush.bf16.msra.mxu0 0
      %3743 = vmatpush.bf16.msra.mxu0 0
      %3744 = vmatpush.bf16.msra.mxu0 0
      %3745 = vmatpush.bf16.msra.mxu0 0
      %3746 = vmatpush.bf16.msra.mxu0 0
      %3747 = vmatpush.bf16.msra.mxu0 0
      %3748 = vmatpush.bf16.msra.mxu0 0
      %3749 = vmatpush.bf16.msra.mxu0 %v3649
      %3750 = vmatmul.bf16.gmra.mxu0 %v3646
      %v3751 = vpop.f32.mrf.mxu0
      %v3752 = vadd.f32 0.0, %v3751
      %v3753 = vpop.f32.mrf.mxu0
      %3754 = vdwg.mxu0
      %v3755 = vadd.f32 %v3630, %v3661
      %v3756 = vadd.f32 %v3631, %v3674
      %v3757 = vadd.f32 %v3632, %v3687
      %v3758 = vadd.f32 %v3633, %v3700
      %v3759 = vadd.f32 %v3634, %v3713
      %v3760 = vadd.f32 %v3635, %v3726
      %v3761 = vadd.f32 %v3636, %v3739
      %v3762 = vadd.f32 %v3637, %v3752
      %s3763 = scalar_lea.vmem %s0, 88
      %v3764 = vld [vmem:[%s3763] sm:$0x7]
      %3765 = vrot.lane.b32.xlu0 %v3641, 126
      %v3766 = vpop.permute.xlu0 %3765
      %v3767 = vsel %vm514, %v513, %v3766
      %v3769 = vsel %vm230, %v3764, 0
      %v3772 = vsel %vm234, %v3767, 0
      %3774 = vmatpush.bf16.msra.mxu0 0
      %3775 = vmatpush.bf16.msra.mxu0 0
      %3776 = vmatpush.bf16.msra.mxu0 0
      %3777 = vmatpush.bf16.msra.mxu0 0
      %3778 = vmatpush.bf16.msra.mxu0 0
      %3779 = vmatpush.bf16.msra.mxu0 0
      %3780 = vmatpush.bf16.msra.mxu0 0
      %3781 = vmatpush.bf16.msra.mxu0 %v530
      %3782 = vmatmul.bf16.gmra.mxu0 %v3769
      %v3783 = vpop.f32.mrf.mxu0
      %v3784 = vadd.f32 0.0, %v3783
      %v3785 = vpop.f32.mrf.mxu0
      %3786 = vdwg.mxu0
      %3787 = vmatpush.bf16.msra.mxu0 0
      %3788 = vmatpush.bf16.msra.mxu0 0
      %3789 = vmatpush.bf16.msra.mxu0 0
      %3790 = vmatpush.bf16.msra.mxu0 0
      %3791 = vmatpush.bf16.msra.mxu0 0
      %3792 = vmatpush.bf16.msra.mxu0 0
      %3793 = vmatpush.bf16.msra.mxu0 0
      %3794 = vmatpush.bf16.msra.mxu0 %v533
      %3795 = vmatmul.bf16.gmra.mxu0 %v3769
      %v3796 = vpop.f32.mrf.mxu0
      %v3797 = vadd.f32 0.0, %v3796
      %v3798 = vpop.f32.mrf.mxu0
      %3799 = vdwg.mxu0
      %3800 = vmatpush.bf16.msra.mxu0 0
      %3801 = vmatpush.bf16.msra.mxu0 0
      %3802 = vmatpush.bf16.msra.mxu0 0
      %3803 = vmatpush.bf16.msra.mxu0 0
      %3804 = vmatpush.bf16.msra.mxu0 0
      %3805 = vmatpush.bf16.msra.mxu0 0
      %3806 = vmatpush.bf16.msra.mxu0 0
      %3807 = vmatpush.bf16.msra.mxu0 %v536
      %3808 = vmatmul.bf16.gmra.mxu0 %v3769
      %v3809 = vpop.f32.mrf.mxu0
      %v3810 = vadd.f32 0.0, %v3809
      %v3811 = vpop.f32.mrf.mxu0
      %3812 = vdwg.mxu0
      %3813 = vmatpush.bf16.msra.mxu0 0
      %3814 = vmatpush.bf16.msra.mxu0 0
      %3815 = vmatpush.bf16.msra.mxu0 0
      %3816 = vmatpush.bf16.msra.mxu0 0
      %3817 = vmatpush.bf16.msra.mxu0 0
      %3818 = vmatpush.bf16.msra.mxu0 0
      %3819 = vmatpush.bf16.msra.mxu0 0
      %3820 = vmatpush.bf16.msra.mxu0 %v539
      %3821 = vmatmul.bf16.gmra.mxu0 %v3769
      %v3822 = vpop.f32.mrf.mxu0
      %v3823 = vadd.f32 0.0, %v3822
      %v3824 = vpop.f32.mrf.mxu0
      %3825 = vdwg.mxu0
      %3826 = vmatpush.bf16.msra.mxu0 0
      %3827 = vmatpush.bf16.msra.mxu0 0
      %3828 = vmatpush.bf16.msra.mxu0 0
      %3829 = vmatpush.bf16.msra.mxu0 0
      %3830 = vmatpush.bf16.msra.mxu0 0
      %3831 = vmatpush.bf16.msra.mxu0 0
      %3832 = vmatpush.bf16.msra.mxu0 0
      %3833 = vmatpush.bf16.msra.mxu0 %v542
      %3834 = vmatmul.bf16.gmra.mxu0 %v3769
      %v3835 = vpop.f32.mrf.mxu0
      %v3836 = vadd.f32 0.0, %v3835
      %v3837 = vpop.f32.mrf.mxu0
      %3838 = vdwg.mxu0
      %3839 = vmatpush.bf16.msra.mxu0 0
      %3840 = vmatpush.bf16.msra.mxu0 0
      %3841 = vmatpush.bf16.msra.mxu0 0
      %3842 = vmatpush.bf16.msra.mxu0 0
      %3843 = vmatpush.bf16.msra.mxu0 0
      %3844 = vmatpush.bf16.msra.mxu0 0
      %3845 = vmatpush.bf16.msra.mxu0 0
      %3846 = vmatpush.bf16.msra.mxu0 %v545
      %3847 = vmatmul.bf16.gmra.mxu0 %v3769
      %v3848 = vpop.f32.mrf.mxu0
      %v3849 = vadd.f32 0.0, %v3848
      %v3850 = vpop.f32.mrf.mxu0
      %3851 = vdwg.mxu0
      %3852 = vmatpush.bf16.msra.mxu0 0
      %3853 = vmatpush.bf16.msra.mxu0 0
      %3854 = vmatpush.bf16.msra.mxu0 0
      %3855 = vmatpush.bf16.msra.mxu0 0
      %3856 = vmatpush.bf16.msra.mxu0 0
      %3857 = vmatpush.bf16.msra.mxu0 0
      %3858 = vmatpush.bf16.msra.mxu0 0
      %3859 = vmatpush.bf16.msra.mxu0 %v548
      %3860 = vmatmul.bf16.gmra.mxu0 %v3769
      %v3861 = vpop.f32.mrf.mxu0
      %v3862 = vadd.f32 0.0, %v3861
      %v3863 = vpop.f32.mrf.mxu0
      %3864 = vdwg.mxu0
      %3865 = vmatpush.bf16.msra.mxu0 0
      %3866 = vmatpush.bf16.msra.mxu0 0
      %3867 = vmatpush.bf16.msra.mxu0 0
      %3868 = vmatpush.bf16.msra.mxu0 0
      %3869 = vmatpush.bf16.msra.mxu0 0
      %3870 = vmatpush.bf16.msra.mxu0 0
      %3871 = vmatpush.bf16.msra.mxu0 0
      %3872 = vmatpush.bf16.msra.mxu0 %v3772
      %3873 = vmatmul.bf16.gmra.mxu0 %v3769
      %v3874 = vpop.f32.mrf.mxu0
      %v3875 = vadd.f32 0.0, %v3874
      %v3876 = vpop.f32.mrf.mxu0
      %3877 = vdwg.mxu0
      %v3878 = vadd.f32 %v3755, %v3784
      %v3879 = vadd.f32 %v3756, %v3797
      %v3880 = vadd.f32 %v3757, %v3810
      %v3881 = vadd.f32 %v3758, %v3823
      %v3882 = vadd.f32 %v3759, %v3836
      %v3883 = vadd.f32 %v3760, %v3849
      %v3884 = vadd.f32 %v3761, %v3862
      %v3885 = vadd.f32 %v3762, %v3875
      %s3886 = scalar_lea.vmem %s0, 92
      %v3887 = vld [vmem:[%s3886] sm:$0x7]
      %3888 = vrot.lane.b32.xlu0 %v3641, 125
      %v3889 = vpop.permute.xlu0 %3888
      %v3890 = vsel %vm682, %v681, %v3889
      %v3892 = vsel %vm230, %v3887, 0
      %v3895 = vsel %vm234, %v3890, 0
      %3897 = vmatpush.bf16.msra.mxu0 0
      %3898 = vmatpush.bf16.msra.mxu0 0
      %3899 = vmatpush.bf16.msra.mxu0 0
      %3900 = vmatpush.bf16.msra.mxu0 0
      %3901 = vmatpush.bf16.msra.mxu0 0
      %3902 = vmatpush.bf16.msra.mxu0 0
      %3903 = vmatpush.bf16.msra.mxu0 0
      %3904 = vmatpush.bf16.msra.mxu0 %v698
      %3905 = vmatmul.bf16.gmra.mxu0 %v3892
      %v3906 = vpop.f32.mrf.mxu0
      %v3907 = vadd.f32 0.0, %v3906
      %v3908 = vpop.f32.mrf.mxu0
      %3909 = vdwg.mxu0
      %3910 = vmatpush.bf16.msra.mxu0 0
      %3911 = vmatpush.bf16.msra.mxu0 0
      %3912 = vmatpush.bf16.msra.mxu0 0
      %3913 = vmatpush.bf16.msra.mxu0 0
      %3914 = vmatpush.bf16.msra.mxu0 0
      %3915 = vmatpush.bf16.msra.mxu0 0
      %3916 = vmatpush.bf16.msra.mxu0 0
      %3917 = vmatpush.bf16.msra.mxu0 %v701
      %3918 = vmatmul.bf16.gmra.mxu0 %v3892
      %v3919 = vpop.f32.mrf.mxu0
      %v3920 = vadd.f32 0.0, %v3919
      %v3921 = vpop.f32.mrf.mxu0
      %3922 = vdwg.mxu0
      %3923 = vmatpush.bf16.msra.mxu0 0
      %3924 = vmatpush.bf16.msra.mxu0 0
      %3925 = vmatpush.bf16.msra.mxu0 0
      %3926 = vmatpush.bf16.msra.mxu0 0
      %3927 = vmatpush.bf16.msra.mxu0 0
      %3928 = vmatpush.bf16.msra.mxu0 0
      %3929 = vmatpush.bf16.msra.mxu0 0
      %3930 = vmatpush.bf16.msra.mxu0 %v704
      %3931 = vmatmul.bf16.gmra.mxu0 %v3892
      %v3932 = vpop.f32.mrf.mxu0
      %v3933 = vadd.f32 0.0, %v3932
      %v3934 = vpop.f32.mrf.mxu0
      %3935 = vdwg.mxu0
      %3936 = vmatpush.bf16.msra.mxu0 0
      %3937 = vmatpush.bf16.msra.mxu0 0
      %3938 = vmatpush.bf16.msra.mxu0 0
      %3939 = vmatpush.bf16.msra.mxu0 0
      %3940 = vmatpush.bf16.msra.mxu0 0
      %3941 = vmatpush.bf16.msra.mxu0 0
      %3942 = vmatpush.bf16.msra.mxu0 0
      %3943 = vmatpush.bf16.msra.mxu0 %v707
      %3944 = vmatmul.bf16.gmra.mxu0 %v3892
      %v3945 = vpop.f32.mrf.mxu0
      %v3946 = vadd.f32 0.0, %v3945
      %v3947 = vpop.f32.mrf.mxu0
      %3948 = vdwg.mxu0
      %3949 = vmatpush.bf16.msra.mxu0 0
      %3950 = vmatpush.bf16.msra.mxu0 0
      %3951 = vmatpush.bf16.msra.mxu0 0
      %3952 = vmatpush.bf16.msra.mxu0 0
      %3953 = vmatpush.bf16.msra.mxu0 0
      %3954 = vmatpush.bf16.msra.mxu0 0
      %3955 = vmatpush.bf16.msra.mxu0 0
      %3956 = vmatpush.bf16.msra.mxu0 %v710
      %3957 = vmatmul.bf16.gmra.mxu0 %v3892
      %v3958 = vpop.f32.mrf.mxu0
      %v3959 = vadd.f32 0.0, %v3958
      %v3960 = vpop.f32.mrf.mxu0
      %3961 = vdwg.mxu0
      %3962 = vmatpush.bf16.msra.mxu0 0
      %3963 = vmatpush.bf16.msra.mxu0 0
      %3964 = vmatpush.bf16.msra.mxu0 0
      %3965 = vmatpush.bf16.msra.mxu0 0
      %3966 = vmatpush.bf16.msra.mxu0 0
      %3967 = vmatpush.bf16.msra.mxu0 0
      %3968 = vmatpush.bf16.msra.mxu0 0
      %3969 = vmatpush.bf16.msra.mxu0 %v713
      %3970 = vmatmul.bf16.gmra.mxu0 %v3892
      %v3971 = vpop.f32.mrf.mxu0
      %v3972 = vadd.f32 0.0, %v3971
      %v3973 = vpop.f32.mrf.mxu0
      %3974 = vdwg.mxu0
      %3975 = vmatpush.bf16.msra.mxu0 0
      %3976 = vmatpush.bf16.msra.mxu0 0
      %3977 = vmatpush.bf16.msra.mxu0 0
      %3978 = vmatpush.bf16.msra.mxu0 0
      %3979 = vmatpush.bf16.msra.mxu0 0
      %3980 = vmatpush.bf16.msra.mxu0 0
      %3981 = vmatpush.bf16.msra.mxu0 0
      %3982 = vmatpush.bf16.msra.mxu0 %v716
      %3983 = vmatmul.bf16.gmra.mxu0 %v3892
      %v3984 = vpop.f32.mrf.mxu0
      %v3985 = vadd.f32 0.0, %v3984
      %v3986 = vpop.f32.mrf.mxu0
      %3987 = vdwg.mxu0
      %3988 = vmatpush.bf16.msra.mxu0 0
      %3989 = vmatpush.bf16.msra.mxu0 0
      %3990 = vmatpush.bf16.msra.mxu0 0
      %3991 = vmatpush.bf16.msra.mxu0 0
      %3992 = vmatpush.bf16.msra.mxu0 0
      %3993 = vmatpush.bf16.msra.mxu0 0
      %3994 = vmatpush.bf16.msra.mxu0 0
      %3995 = vmatpush.bf16.msra.mxu0 %v3895
      %3996 = vmatmul.bf16.gmra.mxu0 %v3892
      %v3997 = vpop.f32.mrf.mxu0
      %v3998 = vadd.f32 0.0, %v3997
      %v3999 = vpop.f32.mrf.mxu0
      %4000 = vdwg.mxu0
      %v4001 = vadd.f32 %v3878, %v3907
      %v4002 = vadd.f32 %v3879, %v3920
      %v4003 = vadd.f32 %v3880, %v3933
      %v4004 = vadd.f32 %v3881, %v3946
      %v4005 = vadd.f32 %v3882, %v3959
      %v4006 = vadd.f32 %v3883, %v3972
      %v4007 = vadd.f32 %v3884, %v3985
      %v4008 = vadd.f32 %v3885, %v3998
      %s4009 = scalar_lea.vmem %s0, 96
      %v4010 = vld [vmem:[%s4009] sm:$0x7]
      %4011 = vrot.lane.b32.xlu0 %v3641, 124
      %v4012 = vpop.permute.xlu0 %4011
      %v4013 = vsel %vm850, %v849, %v4012
      %v4015 = vsel %vm230, %v4010, 0
      %v4018 = vsel %vm234, %v4013, 0
      %4020 = vmatpush.bf16.msra.mxu0 0
      %4021 = vmatpush.bf16.msra.mxu0 0
      %4022 = vmatpush.bf16.msra.mxu0 0
      %4023 = vmatpush.bf16.msra.mxu0 0
      %4024 = vmatpush.bf16.msra.mxu0 0
      %4025 = vmatpush.bf16.msra.mxu0 0
      %4026 = vmatpush.bf16.msra.mxu0 0
      %4027 = vmatpush.bf16.msra.mxu0 %v866
      %4028 = vmatmul.bf16.gmra.mxu0 %v4015
      %v4029 = vpop.f32.mrf.mxu0
      %v4030 = vadd.f32 0.0, %v4029
      %v4031 = vpop.f32.mrf.mxu0
      %4032 = vdwg.mxu0
      %4033 = vmatpush.bf16.msra.mxu0 0
      %4034 = vmatpush.bf16.msra.mxu0 0
      %4035 = vmatpush.bf16.msra.mxu0 0
      %4036 = vmatpush.bf16.msra.mxu0 0
      %4037 = vmatpush.bf16.msra.mxu0 0
      %4038 = vmatpush.bf16.msra.mxu0 0
      %4039 = vmatpush.bf16.msra.mxu0 0
      %4040 = vmatpush.bf16.msra.mxu0 %v869
      %4041 = vmatmul.bf16.gmra.mxu0 %v4015
      %v4042 = vpop.f32.mrf.mxu0
      %v4043 = vadd.f32 0.0, %v4042
      %v4044 = vpop.f32.mrf.mxu0
      %4045 = vdwg.mxu0
      %4046 = vmatpush.bf16.msra.mxu0 0
      %4047 = vmatpush.bf16.msra.mxu0 0
      %4048 = vmatpush.bf16.msra.mxu0 0
      %4049 = vmatpush.bf16.msra.mxu0 0
      %4050 = vmatpush.bf16.msra.mxu0 0
      %4051 = vmatpush.bf16.msra.mxu0 0
      %4052 = vmatpush.bf16.msra.mxu0 0
      %4053 = vmatpush.bf16.msra.mxu0 %v872
      %4054 = vmatmul.bf16.gmra.mxu0 %v4015
      %v4055 = vpop.f32.mrf.mxu0
      %v4056 = vadd.f32 0.0, %v4055
      %v4057 = vpop.f32.mrf.mxu0
      %4058 = vdwg.mxu0
      %4059 = vmatpush.bf16.msra.mxu0 0
      %4060 = vmatpush.bf16.msra.mxu0 0
      %4061 = vmatpush.bf16.msra.mxu0 0
      %4062 = vmatpush.bf16.msra.mxu0 0
      %4063 = vmatpush.bf16.msra.mxu0 0
      %4064 = vmatpush.bf16.msra.mxu0 0
      %4065 = vmatpush.bf16.msra.mxu0 0
      %4066 = vmatpush.bf16.msra.mxu0 %v875
      %4067 = vmatmul.bf16.gmra.mxu0 %v4015
      %v4068 = vpop.f32.mrf.mxu0
      %v4069 = vadd.f32 0.0, %v4068
      %v4070 = vpop.f32.mrf.mxu0
      %4071 = vdwg.mxu0
      %4072 = vmatpush.bf16.msra.mxu0 0
      %4073 = vmatpush.bf16.msra.mxu0 0
      %4074 = vmatpush.bf16.msra.mxu0 0
      %4075 = vmatpush.bf16.msra.mxu0 0
      %4076 = vmatpush.bf16.msra.mxu0 0
      %4077 = vmatpush.bf16.msra.mxu0 0
      %4078 = vmatpush.bf16.msra.mxu0 0
      %4079 = vmatpush.bf16.msra.mxu0 %v878
      %4080 = vmatmul.bf16.gmra.mxu0 %v4015
      %v4081 = vpop.f32.mrf.mxu0
      %v4082 = vadd.f32 0.0, %v4081
      %v4083 = vpop.f32.mrf.mxu0
      %4084 = vdwg.mxu0
      %4085 = vmatpush.bf16.msra.mxu0 0
      %4086 = vmatpush.bf16.msra.mxu0 0
      %4087 = vmatpush.bf16.msra.mxu0 0
      %4088 = vmatpush.bf16.msra.mxu0 0
      %4089 = vmatpush.bf16.msra.mxu0 0
      %4090 = vmatpush.bf16.msra.mxu0 0
      %4091 = vmatpush.bf16.msra.mxu0 0
      %4092 = vmatpush.bf16.msra.mxu0 %v881
      %4093 = vmatmul.bf16.gmra.mxu0 %v4015
      %v4094 = vpop.f32.mrf.mxu0
      %v4095 = vadd.f32 0.0, %v4094
      %v4096 = vpop.f32.mrf.mxu0
      %4097 = vdwg.mxu0
      %4098 = vmatpush.bf16.msra.mxu0 0
      %4099 = vmatpush.bf16.msra.mxu0 0
      %4100 = vmatpush.bf16.msra.mxu0 0
      %4101 = vmatpush.bf16.msra.mxu0 0
      %4102 = vmatpush.bf16.msra.mxu0 0
      %4103 = vmatpush.bf16.msra.mxu0 0
      %4104 = vmatpush.bf16.msra.mxu0 0
      %4105 = vmatpush.bf16.msra.mxu0 %v884
      %4106 = vmatmul.bf16.gmra.mxu0 %v4015
      %v4107 = vpop.f32.mrf.mxu0
      %v4108 = vadd.f32 0.0, %v4107
      %v4109 = vpop.f32.mrf.mxu0
      %4110 = vdwg.mxu0
      %4111 = vmatpush.bf16.msra.mxu0 0
      %4112 = vmatpush.bf16.msra.mxu0 0
      %4113 = vmatpush.bf16.msra.mxu0 0
      %4114 = vmatpush.bf16.msra.mxu0 0
      %4115 = vmatpush.bf16.msra.mxu0 0
      %4116 = vmatpush.bf16.msra.mxu0 0
      %4117 = vmatpush.bf16.msra.mxu0 0
      %4118 = vmatpush.bf16.msra.mxu0 %v4018
      %4119 = vmatmul.bf16.gmra.mxu0 %v4015
      %v4120 = vpop.f32.mrf.mxu0
      %v4121 = vadd.f32 0.0, %v4120
      %v4122 = vpop.f32.mrf.mxu0
      %4123 = vdwg.mxu0
      %v4124 = vadd.f32 %v4001, %v4030
      %v4125 = vadd.f32 %v4002, %v4043
      %v4126 = vadd.f32 %v4003, %v4056
      %v4127 = vadd.f32 %v4004, %v4069
      %v4128 = vadd.f32 %v4005, %v4082
      %v4129 = vadd.f32 %v4006, %v4095
      %v4130 = vadd.f32 %v4007, %v4108
      %v4131 = vadd.f32 %v4008, %v4121
      %v4132 = vld [vmem:[%s1] sm:$0x3f]
      %4134 = vset.pattern.permute.xlu0 0
      %4135 = vperm.xlu0 %4134, %v4132
      %v4136 = vpop.permute.xlu0 %4135
      %v4138 = vadd.f32 %v4124, %v4136
      %v4139 = vadd.f32 %v4125, %v4136
      %v4140 = vadd.f32 %v4126, %v4136
      %v4141 = vadd.f32 %v4127, %v4136
      %v4142 = vadd.f32 %v4128, %v4136
      %v4143 = vadd.f32 %v4129, %v4136
      %v4144 = vadd.f32 %v4130, %v4136
      %v4145 = vadd.f32 %v4131, %v4136
      %v4146 = vmax.f32 %v4138, 0.0
      %v4147 = vmax.f32 %v4139, 0.0
      %v4148 = vmax.f32 %v4140, 0.0
      %v4149 = vmax.f32 %v4141, 0.0
      %v4150 = vmax.f32 %v4142, 0.0
      %v4151 = vmax.f32 %v4143, 0.0
      %v4152 = vmax.f32 %v4144, 0.0
      %v4153 = vmax.f32 %v4145, 0.0
      %v4154 = vpack.c.bf16 %v4147, %v4146
      %v4155 = vpack.c.bf16 %v4149, %v4148
      %v4156 = vpack.c.bf16 %v4151, %v4150
      %v4157 = vpack.c.bf16 %v4153, %v4152
      %4158 = vst [vmem:[%s170] sm:$0x77] %v4154
      %4159 = vst [vmem:[%s170 + $0x8] sm:$0x77] %v4155
      %4160 = vst [vmem:[%s170 + $0x10] sm:$0x77] %v4156
      %4161 = vst [vmem:[%s170 + $0x18] sm:$0x77] %v4157
      %p4162 = scmp.lt.s32.totalorder %s14, 1
      %s4163 = scalar_select %p4162, %s14, 1
      %s4164 = smul.addr %s4163, 8
      %s4165 = smul.addr %s4164, 4
      %s4166 = scalar_lea.vmem %s3, %s4165
      // Predicated region
      $region33: #{forward.3} parent=31 // pred_check
        %p4167 = pneg %p100
      $region34: #{forward.3} parent=31 // pred_check_branch
        %4169 = sbr.rel (%p4167) target = $region36
      $region35: #{forward.3} parent=31 // pred_region
        _
      $region36: #{forward.3} parent=31 // pred_fallthru
        _
    $region32: #{forward.3} parent=5 // pred_fallthru
      _
    %p4170 = scmp.le.s32.totalorder 2, %s9
    // Predicated region
    $region37: #{forward.3} parent=5 // pred_check
      %p4171 = pneg %p4170
    $region38: #{forward.3} parent=5 // pred_check_branch
      %4173 = sbr.rel (%p4171) target = $region40
    $region39: #{forward.3} parent=5 // pred_region
      %s4174 = ssub.s32 %s9, 2
      // Predicated region
      $region41: #{forward.3} parent=39 // pred_check
        %p4175 = pneg %p106
      $region42: #{forward.3} parent=39 // pred_check_branch
        %4177 = sbr.rel (%p4175) target = $region44
      $region43: #{forward.3} parent=39 // pred_region
        %p4178 = scmp.lt.s32.totalorder %s15, 1
        %s4179 = scalar_select %p4178, %s15, 1
        %s4180 = smul.addr %s4179, 8
        %s4181 = smul.addr %s4180, 4
        %s4182 = scalar_lea.vmem %s3, %s4181
      $region44: #{forward.3} parent=39 // pred_fallthru
        _
    $region40: #{forward.3} parent=5 // pred_fallthru
      _
  $region6: #{forward.3} parent=0 // loop_footer
    %s13 = sadd.s32 1, %s9
  $region7: #{forward.3} parent=0 // loop_footer_branch
    %8 = sbr.rel target = $region3
  $region8: #{forward.3} parent=0 // loop_exit
    _

// kernel: forward.5
$region0: #{forward.5}
  #allocation0 [shape = 'u32[]', space=smem, size = 0x4, offset = 0x4, fixed_abs, tag = 'smem constant byte address 0x4 - core index']
  #allocation1 [shape = 'u32[72,128]{1,0:T(1,128)}', space=vmem, size = 0x9000, scoped, tag = 'internal scratch']
  %s0 = inlined_call_operand.vmem [shape: bf16[120,400], index: 0, kind: input, shape index: {}]
  %s1 = inlined_call_operand.vmem [shape: f32[120,1], index: 1, kind: input, shape index: {}]
  %s2 = inlined_call_operand.vmem [shape: bf16[84,120], index: 2, kind: input, shape index: {}]
  %s3 = inlined_call_operand.vmem [shape: f32[84,1], index: 3, kind: input, shape index: {}]
  %s4 = inlined_call_operand.vmem [shape: bf16[10,84], index: 4, kind: input, shape index: {}]
  %s5 = inlined_call_operand.vmem [shape: f32[10,1], index: 5, kind: input, shape index: {}]
  %s6 = inlined_call_operand.vmem [shape: bf16[400,128], index: 6, kind: input, shape index: {}]
  %s7 = inlined_call_operand.vmem [shape: f32[10,128], index: 7, kind: output, shape index: {}]
  %s8 = sld [smem:[#allocation0]]
  $region38: #{forward.5} parent=0
    _
  %s10 = ssub.s32 1, %s8
  %s11 = scalar_select 0, %s10, %s8
  // Predicated region
  $region2: #{forward.5} parent=0 // pred_check
    _
  $region3: #{forward.5} parent=0 // pred_check_branch
    %13 = sbr.rel (0) target = $region5
  $region4: #{forward.5} parent=0 // pred_region
    _
  $region5: #{forward.5} parent=0 // pred_fallthru
    _
  // Predicated region
  $region6: #{forward.5} parent=0 // pred_check
    _
  $region7: #{forward.5} parent=0 // pred_check_branch
    %15 = sbr.rel (0) target = $region9
  $region8: #{forward.5} parent=0 // pred_region
    _
  $region9: #{forward.5} parent=0 // pred_fallthru
    _
  // Predicated region
  $region10: #{forward.5} parent=0 // pred_check
    _
  $region11: #{forward.5} parent=0 // pred_check_branch
    %17 = sbr.rel (0) target = $region13
  $region12: #{forward.5} parent=0 // pred_region
    _
  $region13: #{forward.5} parent=0 // pred_fallthru
    _
  // Predicated region
  $region14: #{forward.5} parent=0 // pred_check
    _
  $region15: #{forward.5} parent=0 // pred_check_branch
    %19 = sbr.rel (0) target = $region17
  $region16: #{forward.5} parent=0 // pred_region
    _
  $region17: #{forward.5} parent=0 // pred_fallthru
    _
  // Predicated region
  $region18: #{forward.5} parent=0 // pred_check
    _
  $region19: #{forward.5} parent=0 // pred_check_branch
    %21 = sbr.rel (0) target = $region21
  $region20: #{forward.5} parent=0 // pred_region
    _
  $region21: #{forward.5} parent=0 // pred_fallthru
    _
  // Predicated region
  $region22: #{forward.5} parent=0 // pred_check
    _
  $region23: #{forward.5} parent=0 // pred_check_branch
    %23 = sbr.rel (0) target = $region25
  $region24: #{forward.5} parent=0 // pred_region
    _
  $region25: #{forward.5} parent=0 // pred_fallthru
    _
  // Predicated region
  $region26: #{forward.5} parent=0 // pred_check
    _
  $region27: #{forward.5} parent=0 // pred_check_branch
    %25 = sbr.rel (0) target = $region29
  $region28: #{forward.5} parent=0 // pred_region
    _
  $region29: #{forward.5} parent=0 // pred_fallthru
    _
  %v27 = vld [vmem:[%s0] sm:$0xff]
  %v28 = vld [vmem:[%s0 + $0x8] sm:$0xff]
  %v29 = vld [vmem:[%s0 + $0x10] sm:$0xff]
  %v30 = vld [vmem:[%s0 + $0x18] sm:$0xff]
  %v31 = vld [vmem:[%s0 + $0x20] sm:$0xff]
  %v32 = vld [vmem:[%s0 + $0x28] sm:$0xff]
  %v33 = vld [vmem:[%s0 + $0x30] sm:$0xff]
  %v34 = vld [vmem:[%s0 + $0x38] sm:$0xff]
  %v35 = vld [vmem:[%s0 + $0x40] sm:$0xff]
  %v36 = vld [vmem:[%s0 + $0x48] sm:$0xff]
  %v37 = vld [vmem:[%s0 + $0x50] sm:$0xff]
  %v38 = vld [vmem:[%s0 + $0x58] sm:$0xff]
  %v39 = vld [vmem:[%s0 + $0x60] sm:$0xff]
  %v40 = vld [vmem:[%s0 + $0x68] sm:$0xff]
  %v41 = vld [vmem:[%s0 + $0x70] sm:$0xff]
  %v42 = vld [vmem:[%s0 + $0x78] sm:$0xff]
  %v43 = vld [vmem:[%s0 + $0x80] sm:$0xff]
  %v44 = vld [vmem:[%s0 + $0x88] sm:$0xff]
  %v45 = vld [vmem:[%s0 + $0x90] sm:$0xff]
  %v46 = vld [vmem:[%s0 + $0x98] sm:$0xff]
  %v47 = vld [vmem:[%s0 + $0xa0] sm:$0xff]
  %v48 = vld [vmem:[%s0 + $0xa8] sm:$0xff]
  %v49 = vld [vmem:[%s0 + $0xb0] sm:$0xff]
  %v50 = vld [vmem:[%s0 + $0xb8] sm:$0xff]
  %v51 = vld [vmem:[%s0 + $0xc0] sm:$0xff]
  %v52 = vld [vmem:[%s0 + $0xc8] sm:$0xff]
  %v53 = vld [vmem:[%s0 + $0xd0] sm:$0xff]
  %v54 = vld [vmem:[%s0 + $0xd8] sm:$0xff]
  %v55 = vld [vmem:[%s0 + $0xe0] sm:$0xff]
  %v56 = vld [vmem:[%s0 + $0xe8] sm:$0xff]
  %v57 = vld [vmem:[%s6] sm:$0xf]
  %v58 = vld [vmem:[%s6 + $0x4] sm:$0xf]
  %v59 = vld [vmem:[%s6 + $0x8] sm:$0xf]
  %v60 = vld [vmem:[%s6 + $0xc] sm:$0xf]
  %v61 = vld [vmem:[%s6 + $0x10] sm:$0xf]
  %v62 = vld [vmem:[%s6 + $0x14] sm:$0xf]
  %v63 = vld [vmem:[%s6 + $0x18] sm:$0xf]
  %v64 = vld [vmem:[%s6 + $0x1c] sm:$0xf]
  %v65 = vld [vmem:[%s6 + $0x20] sm:$0xf]
  %v66 = vld [vmem:[%s6 + $0x24] sm:$0xf]
  %v67 = vld [vmem:[%s6 + $0x28] sm:$0xf]
  %v68 = vld [vmem:[%s6 + $0x2c] sm:$0xf]
  %v69 = vld [vmem:[%s6 + $0x30] sm:$0xf]
  %v70 = vld [vmem:[%s6 + $0x34] sm:$0xf]
  %v71 = vld [vmem:[%s6 + $0x38] sm:$0xf]
  %v72 = vld [vmem:[%s6 + $0x3c] sm:$0xf]
  %v73 = vld [vmem:[%s6 + $0x40] sm:$0xf]
  %v74 = vld [vmem:[%s6 + $0x44] sm:$0xf]
  %v75 = vld [vmem:[%s6 + $0x48] sm:$0xf]
  %v76 = vld [vmem:[%s6 + $0x4c] sm:$0xf]
  %v77 = vld [vmem:[%s6 + $0x50] sm:$0xf]
  %v78 = vld [vmem:[%s6 + $0x54] sm:$0xf]
  %v79 = vld [vmem:[%s6 + $0x58] sm:$0xf]
  %v80 = vld [vmem:[%s6 + $0x5c] sm:$0xf]
  %v81 = vld [vmem:[%s6 + $0x60] sm:$0xf]
  %v82 = vld [vmem:[%s6 + $0x64] sm:$0xf]
  %v83 = vld [vmem:[%s6 + $0x68] sm:$0xf]
  %v84 = vld [vmem:[%s6 + $0x6c] sm:$0xf]
  %v85 = vld [vmem:[%s6 + $0x70] sm:$0xf]
  %v86 = vld [vmem:[%s6 + $0x74] sm:$0xf]
  %v87 = vld [vmem:[%s6 + $0x78] sm:$0xf]
  %v88 = vld [vmem:[%s6 + $0x7c] sm:$0xf]
  %v89 = vld [vmem:[%s6 + $0x80] sm:$0xf]
  %v90 = vld [vmem:[%s6 + $0x84] sm:$0xf]
  %v91 = vld [vmem:[%s6 + $0x88] sm:$0xf]
  %v92 = vld [vmem:[%s6 + $0x8c] sm:$0xf]
  %v93 = vld [vmem:[%s6 + $0x90] sm:$0xf]
  %v94 = vld [vmem:[%s6 + $0x94] sm:$0xf]
  %v95 = vld [vmem:[%s6 + $0x98] sm:$0xf]
  %v96 = vld [vmem:[%s6 + $0x9c] sm:$0xf]
  %v97 = vld [vmem:[%s6 + $0xa0] sm:$0xf]
  %v98 = vld [vmem:[%s6 + $0xa4] sm:$0xf]
  %v99 = vld [vmem:[%s6 + $0xa8] sm:$0xf]
  %v100 = vld [vmem:[%s6 + $0xac] sm:$0xf]
  %v101 = vld [vmem:[%s6 + $0xb0] sm:$0xf]
  %v102 = vld [vmem:[%s6 + $0xb4] sm:$0xf]
  %v103 = vld [vmem:[%s6 + $0xb8] sm:$0xf]
  %v104 = vld [vmem:[%s6 + $0xbc] sm:$0xf]
  %v105 = vld [vmem:[%s6 + $0xc0] sm:$0xf]
  %v106 = vld [vmem:[%s6 + $0xc4] sm:$0xf]
  %v107 = vld [vmem:[%s1] sm:$0xff]
  %v108 = vld [vmem:[%s1 + $0x8] sm:$0xff]
  %v109 = vld [vmem:[%s1 + $0x10] sm:$0xff]
  %v110 = vld [vmem:[%s1 + $0x18] sm:$0xff]
  %v111 = vld [vmem:[%s1 + $0x20] sm:$0xff]
  %v112 = vld [vmem:[%s1 + $0x28] sm:$0xff]
  %v113 = vld [vmem:[%s1 + $0x30] sm:$0xff]
  %v114 = vld [vmem:[%s1 + $0x38] sm:$0xff]
  %v115 = vld [vmem:[%s1 + $0x40] sm:$0xff]
  %v116 = vld [vmem:[%s1 + $0x48] sm:$0xff]
  %v117 = vld [vmem:[%s1 + $0x50] sm:$0xff]
  %v118 = vld [vmem:[%s1 + $0x58] sm:$0xff]
  %v119 = vld [vmem:[%s1 + $0x60] sm:$0xff]
  %v120 = vld [vmem:[%s1 + $0x68] sm:$0xff]
  %v121 = vld [vmem:[%s1 + $0x70] sm:$0xff]
  %123 = vset.pattern.permute.xlu0 0
  %124 = vperm.xlu0 %123, %v107
  %v125 = vpop.permute.xlu0 %124
  %128 = vset.pattern.permute.xlu0 0
  %129 = vperm.xlu0 %128, %v108
  %v130 = vpop.permute.xlu0 %129
  %133 = vset.pattern.permute.xlu0 0
  %134 = vperm.xlu0 %133, %v109
  %v135 = vpop.permute.xlu0 %134
  %138 = vset.pattern.permute.xlu0 0
  %139 = vperm.xlu0 %138, %v110
  %v140 = vpop.permute.xlu0 %139
  %143 = vset.pattern.permute.xlu0 0
  %144 = vperm.xlu0 %143, %v111
  %v145 = vpop.permute.xlu0 %144
  %148 = vset.pattern.permute.xlu0 0
  %149 = vperm.xlu0 %148, %v112
  %v150 = vpop.permute.xlu0 %149
  %153 = vset.pattern.permute.xlu0 0
  %154 = vperm.xlu0 %153, %v113
  %v155 = vpop.permute.xlu0 %154
  %158 = vset.pattern.permute.xlu0 0
  %159 = vperm.xlu0 %158, %v114
  %v160 = vpop.permute.xlu0 %159
  %163 = vset.pattern.permute.xlu0 0
  %164 = vperm.xlu0 %163, %v115
  %v165 = vpop.permute.xlu0 %164
  %168 = vset.pattern.permute.xlu0 0
  %169 = vperm.xlu0 %168, %v116
  %v170 = vpop.permute.xlu0 %169
  %173 = vset.pattern.permute.xlu0 0
  %174 = vperm.xlu0 %173, %v117
  %v175 = vpop.permute.xlu0 %174
  %178 = vset.pattern.permute.xlu0 0
  %179 = vperm.xlu0 %178, %v118
  %v180 = vpop.permute.xlu0 %179
  %183 = vset.pattern.permute.xlu0 0
  %184 = vperm.xlu0 %183, %v119
  %v185 = vpop.permute.xlu0 %184
  %188 = vset.pattern.permute.xlu0 0
  %189 = vperm.xlu0 %188, %v120
  %v190 = vpop.permute.xlu0 %189
  %193 = vset.pattern.permute.xlu0 0
  %194 = vperm.xlu0 %193, %v121
  %v195 = vpop.permute.xlu0 %194
  %v227 = vunpack.c.l.b16 %v27
  %v228 = vunpack.c.h.b16 %v27
  %v229 = vunpack.c.l.b16 %v28
  %v230 = vunpack.c.h.b16 %v28
  %v231 = vunpack.c.l.b16 %v29
  %v232 = vunpack.c.h.b16 %v29
  %v233 = vunpack.c.l.b16 %v30
  %v234 = vunpack.c.h.b16 %v30
  %v235 = vunpack.c.l.b16 %v31
  %v236 = vunpack.c.h.b16 %v31
  %v237 = vunpack.c.l.b16 %v32
  %v238 = vunpack.c.h.b16 %v32
  %v239 = vunpack.c.l.b16 %v33
  %v240 = vunpack.c.h.b16 %v33
  %v241 = vunpack.c.l.b16 %v34
  %v242 = vunpack.c.h.b16 %v34
  %v243 = vunpack.c.l.b16 %v35
  %v244 = vunpack.c.h.b16 %v35
  %v245 = vunpack.c.l.b16 %v36
  %v246 = vunpack.c.h.b16 %v36
  %v247 = vunpack.c.l.b16 %v37
  %v248 = vunpack.c.h.b16 %v37
  %v249 = vunpack.c.l.b16 %v38
  %v250 = vunpack.c.h.b16 %v38
  %v251 = vunpack.c.l.b16 %v39
  %v252 = vunpack.c.h.b16 %v39
  %v253 = vunpack.c.l.b16 %v40
  %v254 = vunpack.c.h.b16 %v40
  %v255 = vunpack.c.l.b16 %v41
  %v256 = vunpack.c.h.b16 %v41
  %v257 = vunpack.c.l.b16 %v42
  %v258 = vunpack.c.h.b16 %v42
  %v259 = vunpack.c.l.b16 %v43
  %v260 = vunpack.c.h.b16 %v43
  %v261 = vunpack.c.l.b16 %v44
  %v262 = vunpack.c.h.b16 %v44
  %v263 = vunpack.c.l.b16 %v45
  %v264 = vunpack.c.h.b16 %v45
  %v265 = vunpack.c.l.b16 %v46
  %v266 = vunpack.c.h.b16 %v46
  %v267 = vunpack.c.l.b16 %v47
  %v268 = vunpack.c.h.b16 %v47
  %v269 = vunpack.c.l.b16 %v48
  %v270 = vunpack.c.h.b16 %v48
  %v271 = vunpack.c.l.b16 %v49
  %v272 = vunpack.c.h.b16 %v49
  %v273 = vunpack.c.l.b16 %v50
  %v274 = vunpack.c.h.b16 %v50
  %v275 = vunpack.c.l.b16 %v51
  %v276 = vunpack.c.h.b16 %v51
  %v277 = vunpack.c.l.b16 %v52
  %v278 = vunpack.c.h.b16 %v52
  %v279 = vunpack.c.l.b16 %v53
  %v280 = vunpack.c.h.b16 %v53
  %v281 = vunpack.c.l.b16 %v54
  %v282 = vunpack.c.h.b16 %v54
  %v283 = vunpack.c.l.b16 %v55
  %v284 = vunpack.c.h.b16 %v55
  %v285 = vunpack.c.l.b16 %v56
  %v286 = vunpack.c.h.b16 %v56
  %v287 = vpack.c.b16 %v231, %v227
  %v288 = vpack.c.b16 %v232, %v228
  %v289 = vpack.c.b16 %v233, %v229
  %v290 = vpack.c.b16 %v234, %v230
  %v291 = vpack.c.b16 %v239, %v235
  %v292 = vpack.c.b16 %v240, %v236
  %v293 = vpack.c.b16 %v241, %v237
  %v294 = vpack.c.b16 %v242, %v238
  %v295 = vpack.c.b16 %v247, %v243
  %v296 = vpack.c.b16 %v248, %v244
  %v297 = vpack.c.b16 %v249, %v245
  %v298 = vpack.c.b16 %v250, %v246
  %v299 = vpack.c.b16 %v255, %v251
  %v300 = vpack.c.b16 %v256, %v252
  %v301 = vpack.c.b16 %v257, %v253
  %v302 = vpack.c.b16 %v258, %v254
  %v303 = vpack.c.b16 %v263, %v259
  %v304 = vpack.c.b16 %v264, %v260
  %v305 = vpack.c.b16 %v265, %v261
  %v306 = vpack.c.b16 %v266, %v262
  %v307 = vpack.c.b16 %v271, %v267
  %v308 = vpack.c.b16 %v272, %v268
  %v309 = vpack.c.b16 %v273, %v269
  %v310 = vpack.c.b16 %v274, %v270
  %v311 = vpack.c.b16 %v279, %v275
  %v312 = vpack.c.b16 %v280, %v276
  %v313 = vpack.c.b16 %v281, %v277
  %v314 = vpack.c.b16 %v282, %v278
  %v315 = vpack.c.b16 %v283, %v283
  %v316 = vpack.c.b16 %v284, %v284
  %v317 = vpack.c.b16 %v285, %v285
  %v318 = vpack.c.b16 %v286, %v286
  %v393 = vunpack.c.l.b16 %v57
  %v394 = vunpack.c.l.b16 %v58
  %v395 = vunpack.c.l.b16 %v59
  %v396 = vunpack.c.l.b16 %v60
  %v397 = vunpack.c.l.b16 %v61
  %v398 = vunpack.c.l.b16 %v62
  %v399 = vunpack.c.l.b16 %v63
  %v400 = vunpack.c.l.b16 %v64
  %v401 = vunpack.c.l.b16 %v65
  %v402 = vunpack.c.l.b16 %v66
  %v403 = vunpack.c.l.b16 %v67
  %v404 = vunpack.c.l.b16 %v68
  %v405 = vunpack.c.l.b16 %v69
  %v406 = vunpack.c.l.b16 %v70
  %v407 = vunpack.c.l.b16 %v71
  %v408 = vunpack.c.l.b16 %v72
  %v409 = vunpack.c.l.b16 %v73
  %v410 = vunpack.c.l.b16 %v74
  %v411 = vunpack.c.l.b16 %v75
  %v412 = vunpack.c.l.b16 %v76
  %v413 = vunpack.c.l.b16 %v77
  %v414 = vunpack.c.l.b16 %v78
  %v415 = vunpack.c.l.b16 %v79
  %v416 = vunpack.c.l.b16 %v80
  %v417 = vunpack.c.l.b16 %v81
  %v418 = vunpack.c.l.b16 %v82
  %v419 = vunpack.c.l.b16 %v83
  %v420 = vunpack.c.l.b16 %v84
  %v421 = vunpack.c.l.b16 %v85
  %v422 = vunpack.c.l.b16 %v86
  %v423 = vunpack.c.l.b16 %v87
  %v424 = vunpack.c.l.b16 %v88
  %v425 = vunpack.c.l.b16 %v89
  %v426 = vunpack.c.l.b16 %v90
  %v427 = vunpack.c.l.b16 %v91
  %v428 = vunpack.c.l.b16 %v92
  %v429 = vunpack.c.l.b16 %v93
  %v430 = vunpack.c.l.b16 %v94
  %v431 = vunpack.c.l.b16 %v95
  %v432 = vunpack.c.l.b16 %v96
  %v433 = vunpack.c.l.b16 %v97
  %v434 = vunpack.c.l.b16 %v98
  %v435 = vunpack.c.l.b16 %v99
  %v436 = vunpack.c.l.b16 %v100
  %v437 = vunpack.c.l.b16 %v101
  %v438 = vunpack.c.l.b16 %v102
  %v439 = vunpack.c.l.b16 %v103
  %v440 = vunpack.c.l.b16 %v104
  %v441 = vunpack.c.l.b16 %v105
  %v442 = vunpack.c.l.b16 %v106
  %v443 = vpack.c.b16 %v394, %v393
  %v444 = vpack.c.b16 %v396, %v395
  %v445 = vpack.c.b16 %v398, %v397
  %v446 = vpack.c.b16 %v400, %v399
  %v447 = vpack.c.b16 %v402, %v401
  %v448 = vpack.c.b16 %v404, %v403
  %v449 = vpack.c.b16 %v406, %v405
  %v450 = vpack.c.b16 %v408, %v407
  %v451 = vpack.c.b16 %v410, %v409
  %v452 = vpack.c.b16 %v412, %v411
  %v453 = vpack.c.b16 %v414, %v413
  %v454 = vpack.c.b16 %v416, %v415
  %v455 = vpack.c.b16 %v418, %v417
  %v456 = vpack.c.b16 %v420, %v419
  %v457 = vpack.c.b16 %v422, %v421
  %v458 = vpack.c.b16 %v424, %v423
  %v459 = vpack.c.b16 %v426, %v425
  %v460 = vpack.c.b16 %v428, %v427
  %v461 = vpack.c.b16 %v430, %v429
  %v462 = vpack.c.b16 %v432, %v431
  %v463 = vpack.c.b16 %v434, %v433
  %v464 = vpack.c.b16 %v436, %v435
  %v465 = vpack.c.b16 %v438, %v437
  %v466 = vpack.c.b16 %v440, %v439
  %v467 = vpack.c.b16 %v442, %v441
  %vm493 = vcmask 130048
  %v495 = vsel %vm493, %v290, 0
  %v498 = vsel %vm493, %v294, 0
  %v501 = vsel %vm493, %v298, 0
  %v504 = vsel %vm493, %v302, 0
  %v507 = vsel %vm493, %v306, 0
  %v510 = vsel %vm493, %v310, 0
  %v513 = vsel %vm493, %v314, 0
  %v516 = vsel %vm493, %v318, 0
  %518 = vmatpush.bf16.msra.mxu0 %v450
  %519 = vmatpush.bf16.msra.mxu0 %v449
  %520 = vmatpush.bf16.msra.mxu0 %v448
  %521 = vmatpush.bf16.msra.mxu0 %v447
  %522 = vmatpush.bf16.msra.mxu0 %v446
  %523 = vmatpush.bf16.msra.mxu0 %v445
  %524 = vmatpush.bf16.msra.mxu0 %v444
  %525 = vmatpush.bf16.msra.mxu0 %v443
  %526 = vmatmul.bf16.gmra.mxu0 %v287
  %v527 = vpop.f32.mrf.mxu0
  %v528 = vadd.f32 %v125, %v527
  %v529 = vpop.f32.mrf.mxu0
  %v530 = vadd.f32 %v130, %v529
  %531 = vmatmul.bf16.gmra.mxu0 %v291
  %v532 = vpop.f32.mrf.mxu0
  %v533 = vadd.f32 %v135, %v532
  %v534 = vpop.f32.mrf.mxu0
  %v535 = vadd.f32 %v140, %v534
  %536 = vmatmul.bf16.gmra.mxu0 %v295
  %v537 = vpop.f32.mrf.mxu0
  %v538 = vadd.f32 %v145, %v537
  %v539 = vpop.f32.mrf.mxu0
  %v540 = vadd.f32 %v150, %v539
  %541 = vmatmul.bf16.gmra.mxu0 %v299
  %v542 = vpop.f32.mrf.mxu0
  %v543 = vadd.f32 %v155, %v542
  %v544 = vpop.f32.mrf.mxu0
  %v545 = vadd.f32 %v160, %v544
  %546 = vmatmul.bf16.gmra.mxu0 %v303
  %v547 = vpop.f32.mrf.mxu0
  %v548 = vadd.f32 %v165, %v547
  %v549 = vpop.f32.mrf.mxu0
  %v550 = vadd.f32 %v170, %v549
  %551 = vmatmul.bf16.gmra.mxu0 %v307
  %v552 = vpop.f32.mrf.mxu0
  %v553 = vadd.f32 %v175, %v552
  %v554 = vpop.f32.mrf.mxu0
  %v555 = vadd.f32 %v180, %v554
  %556 = vmatmul.bf16.gmra.mxu0 %v311
  %v557 = vpop.f32.mrf.mxu0
  %v558 = vadd.f32 %v185, %v557
  %v559 = vpop.f32.mrf.mxu0
  %v560 = vadd.f32 %v190, %v559
  %561 = vmatmul.bf16.gmra.mxu0 %v315
  %v562 = vpop.f32.mrf.mxu0
  %v563 = vadd.f32 %v195, %v562
  %v564 = vpop.f32.mrf.mxu0
  %565 = vdwg.mxu0
  %566 = vmatpush.bf16.msra.mxu0 %v458
  %567 = vmatpush.bf16.msra.mxu0 %v457
  %568 = vmatpush.bf16.msra.mxu0 %v456
  %569 = vmatpush.bf16.msra.mxu0 %v455
  %570 = vmatpush.bf16.msra.mxu0 %v454
  %571 = vmatpush.bf16.msra.mxu0 %v453
  %572 = vmatpush.bf16.msra.mxu0 %v452
  %573 = vmatpush.bf16.msra.mxu0 %v451
  %574 = vmatmul.bf16.gmra.mxu0 %v288
  %v575 = vpop.f32.mrf.mxu0
  %v576 = vadd.f32 %v528, %v575
  %v577 = vpop.f32.mrf.mxu0
  %v578 = vadd.f32 %v530, %v577
  %579 = vmatmul.bf16.gmra.mxu0 %v292
  %v580 = vpop.f32.mrf.mxu0
  %v581 = vadd.f32 %v533, %v580
  %v582 = vpop.f32.mrf.mxu0
  %v583 = vadd.f32 %v535, %v582
  %584 = vmatmul.bf16.gmra.mxu0 %v296
  %v585 = vpop.f32.mrf.mxu0
  %v586 = vadd.f32 %v538, %v585
  %v587 = vpop.f32.mrf.mxu0
  %v588 = vadd.f32 %v540, %v587
  %589 = vmatmul.bf16.gmra.mxu0 %v300
  %v590 = vpop.f32.mrf.mxu0
  %v591 = vadd.f32 %v543, %v590
  %v592 = vpop.f32.mrf.mxu0
  %v593 = vadd.f32 %v545, %v592
  %594 = vmatmul.bf16.gmra.mxu0 %v304
  %v595 = vpop.f32.mrf.mxu0
  %v596 = vadd.f32 %v548, %v595
  %v597 = vpop.f32.mrf.mxu0
  %v598 = vadd.f32 %v550, %v597
  %599 = vmatmul.bf16.gmra.mxu0 %v308
  %v600 = vpop.f32.mrf.mxu0
  %v601 = vadd.f32 %v553, %v600
  %v602 = vpop.f32.mrf.mxu0
  %v603 = vadd.f32 %v555, %v602
  %604 = vmatmul.bf16.gmra.mxu0 %v312
  %v605 = vpop.f32.mrf.mxu0
  %v606 = vadd.f32 %v558, %v605
  %v607 = vpop.f32.mrf.mxu0
  %v608 = vadd.f32 %v560, %v607
  %609 = vmatmul.bf16.gmra.mxu0 %v316
  %v610 = vpop.f32.mrf.mxu0
  %v611 = vadd.f32 %v563, %v610
  %v612 = vpop.f32.mrf.mxu0
  %613 = vdwg.mxu0
  %614 = vmatpush.bf16.msra.mxu0 %v466
  %615 = vmatpush.bf16.msra.mxu0 %v465
  %616 = vmatpush.bf16.msra.mxu0 %v464
  %617 = vmatpush.bf16.msra.mxu0 %v463
  %618 = vmatpush.bf16.msra.mxu0 %v462
  %619 = vmatpush.bf16.msra.mxu0 %v461
  %620 = vmatpush.bf16.msra.mxu0 %v460
  %621 = vmatpush.bf16.msra.mxu0 %v459
  %622 = vmatmul.bf16.gmra.mxu0 %v289
  %v623 = vpop.f32.mrf.mxu0
  %v624 = vadd.f32 %v576, %v623
  %v625 = vpop.f32.mrf.mxu0
  %v626 = vadd.f32 %v578, %v625
  %627 = vmatmul.bf16.gmra.mxu0 %v293
  %v628 = vpop.f32.mrf.mxu0
  %v629 = vadd.f32 %v581, %v628
  %v630 = vpop.f32.mrf.mxu0
  %v631 = vadd.f32 %v583, %v630
  %632 = vmatmul.bf16.gmra.mxu0 %v297
  %v633 = vpop.f32.mrf.mxu0
  %v634 = vadd.f32 %v586, %v633
  %v635 = vpop.f32.mrf.mxu0
  %v636 = vadd.f32 %v588, %v635
  %637 = vmatmul.bf16.gmra.mxu0 %v301
  %v638 = vpop.f32.mrf.mxu0
  %v639 = vadd.f32 %v591, %v638
  %v640 = vpop.f32.mrf.mxu0
  %v641 = vadd.f32 %v593, %v640
  %642 = vmatmul.bf16.gmra.mxu0 %v305
  %v643 = vpop.f32.mrf.mxu0
  %v644 = vadd.f32 %v596, %v643
  %v645 = vpop.f32.mrf.mxu0
  %v646 = vadd.f32 %v598, %v645
  %647 = vmatmul.bf16.gmra.mxu0 %v309
  %v648 = vpop.f32.mrf.mxu0
  %v649 = vadd.f32 %v601, %v648
  %v650 = vpop.f32.mrf.mxu0
  %v651 = vadd.f32 %v603, %v650
  %652 = vmatmul.bf16.gmra.mxu0 %v313
  %v653 = vpop.f32.mrf.mxu0
  %v654 = vadd.f32 %v606, %v653
  %v655 = vpop.f32.mrf.mxu0
  %v656 = vadd.f32 %v608, %v655
  %657 = vmatmul.bf16.gmra.mxu0 %v317
  %v658 = vpop.f32.mrf.mxu0
  %v659 = vadd.f32 %v611, %v658
  %v660 = vpop.f32.mrf.mxu0
  %661 = vdwg.mxu0
  %662 = vmatpush.bf16.msra.mxu0 0
  %663 = vmatpush.bf16.msra.mxu0 0
  %664 = vmatpush.bf16.msra.mxu0 0
  %665 = vmatpush.bf16.msra.mxu0 0
  %666 = vmatpush.bf16.msra.mxu0 0
  %667 = vmatpush.bf16.msra.mxu0 0
  %668 = vmatpush.bf16.msra.mxu0 0
  %669 = vmatpush.bf16.msra.mxu0 %v467
  %670 = vmatmul.bf16.gmra.mxu0 %v495
  %v671 = vpop.f32.mrf.mxu0
  %v672 = vadd.f32 %v624, %v671
  %v673 = vpop.f32.mrf.mxu0
  %v674 = vadd.f32 %v626, %v673
  %675 = vmatmul.bf16.gmra.mxu0 %v498
  %v676 = vpop.f32.mrf.mxu0
  %v677 = vadd.f32 %v629, %v676
  %v678 = vpop.f32.mrf.mxu0
  %v679 = vadd.f32 %v631, %v678
  %680 = vmatmul.bf16.gmra.mxu0 %v501
  %v681 = vpop.f32.mrf.mxu0
  %v682 = vadd.f32 %v634, %v681
  %v683 = vpop.f32.mrf.mxu0
  %v684 = vadd.f32 %v636, %v683
  %685 = vmatmul.bf16.gmra.mxu0 %v504
  %v686 = vpop.f32.mrf.mxu0
  %v687 = vadd.f32 %v639, %v686
  %v688 = vpop.f32.mrf.mxu0
  %v689 = vadd.f32 %v641, %v688
  %690 = vmatmul.bf16.gmra.mxu0 %v507
  %v691 = vpop.f32.mrf.mxu0
  %v692 = vadd.f32 %v644, %v691
  %v693 = vpop.f32.mrf.mxu0
  %v694 = vadd.f32 %v646, %v693
  %695 = vmatmul.bf16.gmra.mxu0 %v510
  %v696 = vpop.f32.mrf.mxu0
  %v697 = vadd.f32 %v649, %v696
  %v698 = vpop.f32.mrf.mxu0
  %v699 = vadd.f32 %v651, %v698
  %700 = vmatmul.bf16.gmra.mxu0 %v513
  %v701 = vpop.f32.mrf.mxu0
  %v702 = vadd.f32 %v654, %v701
  %v703 = vpop.f32.mrf.mxu0
  %v704 = vadd.f32 %v656, %v703
  %705 = vmatmul.bf16.gmra.mxu0 %v516
  %v706 = vpop.f32.mrf.mxu0
  %v707 = vadd.f32 %v659, %v706
  %v708 = vpop.f32.mrf.mxu0
  %709 = vdwg.mxu0
  %v710 = vmax.f32 %v672, 0.0
  %v711 = vmax.f32 %v674, 0.0
  %v712 = vmax.f32 %v677, 0.0
  %v713 = vmax.f32 %v679, 0.0
  %v714 = vmax.f32 %v682, 0.0
  %v715 = vmax.f32 %v684, 0.0
  %v716 = vmax.f32 %v687, 0.0
  %v717 = vmax.f32 %v689, 0.0
  %v718 = vmax.f32 %v692, 0.0
  %v719 = vmax.f32 %v694, 0.0
  %v720 = vmax.f32 %v697, 0.0
  %v721 = vmax.f32 %v699, 0.0
  %v722 = vmax.f32 %v702, 0.0
  %v723 = vmax.f32 %v704, 0.0
  %v724 = vmax.f32 %v707, 0.0
  %v725 = vpack.c.bf16 %v711, %v710
  %v726 = vpack.c.bf16 %v713, %v712
  %v727 = vpack.c.bf16 %v715, %v714
  %v728 = vpack.c.bf16 %v717, %v716
  %v729 = vpack.c.bf16 %v719, %v718
  %v730 = vpack.c.bf16 %v721, %v720
  %v731 = vpack.c.bf16 %v723, %v722
  %v732 = vpack.c.bf16 %v724, %v724
  %v733 = vld [vmem:[%s2] sm:$0xf]
  %v734 = vld [vmem:[%s2 + $0x4] sm:$0xf]
  %v735 = vld [vmem:[%s2 + $0x8] sm:$0xf]
  %v736 = vld [vmem:[%s2 + $0xc] sm:$0xf]
  %v737 = vld [vmem:[%s2 + $0x10] sm:$0xf]
  %v738 = vld [vmem:[%s2 + $0x14] sm:$0xf]
  %v739 = vld [vmem:[%s2 + $0x18] sm:$0xf]
  %v740 = vld [vmem:[%s2 + $0x1c] sm:$0xf]
  %v741 = vld [vmem:[%s2 + $0x20] sm:$0xf]
  %v742 = vld [vmem:[%s2 + $0x24] sm:$0xf]
  %v743 = vld [vmem:[%s2 + $0x28] sm:$0x3]
  %v744 = vld [vmem:[%s3] sm:$0xff]
  %v745 = vld [vmem:[%s3 + $0x8] sm:$0xff]
  %v746 = vld [vmem:[%s3 + $0x10] sm:$0xff]
  %v747 = vld [vmem:[%s3 + $0x18] sm:$0xff]
  %v748 = vld [vmem:[%s3 + $0x20] sm:$0xff]
  %v749 = vld [vmem:[%s3 + $0x28] sm:$0xff]
  %v750 = vld [vmem:[%s3 + $0x30] sm:$0xff]
  %v751 = vld [vmem:[%s3 + $0x38] sm:$0xff]
  %v752 = vld [vmem:[%s3 + $0x40] sm:$0xff]
  %v753 = vld [vmem:[%s3 + $0x48] sm:$0xff]
  %v754 = vld [vmem:[%s3 + $0x50] sm:$0xf]
  %756 = vset.pattern.permute.xlu0 0
  %757 = vperm.xlu0 %756, %v744
  %v758 = vpop.permute.xlu0 %757
  %761 = vset.pattern.permute.xlu0 0
  %762 = vperm.xlu0 %761, %v745
  %v763 = vpop.permute.xlu0 %762
  %766 = vset.pattern.permute.xlu0 0
  %767 = vperm.xlu0 %766, %v746
  %v768 = vpop.permute.xlu0 %767
  %771 = vset.pattern.permute.xlu0 0
  %772 = vperm.xlu0 %771, %v747
  %v773 = vpop.permute.xlu0 %772
  %776 = vset.pattern.permute.xlu0 0
  %777 = vperm.xlu0 %776, %v748
  %v778 = vpop.permute.xlu0 %777
  %781 = vset.pattern.permute.xlu0 0
  %782 = vperm.xlu0 %781, %v749
  %v783 = vpop.permute.xlu0 %782
  %786 = vset.pattern.permute.xlu0 0
  %787 = vperm.xlu0 %786, %v750
  %v788 = vpop.permute.xlu0 %787
  %791 = vset.pattern.permute.xlu0 0
  %792 = vperm.xlu0 %791, %v751
  %v793 = vpop.permute.xlu0 %792
  %796 = vset.pattern.permute.xlu0 0
  %797 = vperm.xlu0 %796, %v752
  %v798 = vpop.permute.xlu0 %797
  %801 = vset.pattern.permute.xlu0 0
  %802 = vperm.xlu0 %801, %v753
  %v803 = vpop.permute.xlu0 %802
  %806 = vset.pattern.permute.xlu0 0
  %807 = vperm.xlu0 %806, %v754
  %v808 = vpop.permute.xlu0 %807
  %v821 = vunpack.c.l.b16 %v733
  %v822 = vunpack.c.l.b16 %v734
  %v823 = vunpack.c.l.b16 %v735
  %v824 = vunpack.c.l.b16 %v736
  %v825 = vunpack.c.l.b16 %v737
  %v826 = vunpack.c.l.b16 %v738
  %v827 = vunpack.c.l.b16 %v739
  %v828 = vunpack.c.l.b16 %v740
  %v829 = vunpack.c.l.b16 %v741
  %v830 = vunpack.c.l.b16 %v742
  %v831 = vunpack.c.l.b16 %v743
  %v832 = vpack.c.b16 %v822, %v821
  %v833 = vpack.c.b16 %v824, %v823
  %v834 = vpack.c.b16 %v826, %v825
  %v835 = vpack.c.b16 %v828, %v827
  %v836 = vpack.c.b16 %v830, %v829
  %v837 = vpack.c.b16 %v831, %v831
  %vm838 = vcmask 982016
  %v840 = vsel %vm838, %v832, 0
  %v843 = vsel %vm838, %v833, 0
  %v846 = vsel %vm838, %v834, 0
  %v849 = vsel %vm838, %v835, 0
  %v852 = vsel %vm838, %v836, 0
  %v855 = vsel %vm838, %v837, 0
  %vm857 = vcmask 1043456
  %v859 = vsel %vm857, %v732, 0
  %861 = vmatpush.bf16.msra.mxu0 %v859
  %862 = vmatpush.bf16.msra.mxu0 %v731
  %863 = vmatpush.bf16.msra.mxu0 %v730
  %864 = vmatpush.bf16.msra.mxu0 %v729
  %865 = vmatpush.bf16.msra.mxu0 %v728
  %866 = vmatpush.bf16.msra.mxu0 %v727
  %867 = vmatpush.bf16.msra.mxu0 %v726
  %868 = vmatpush.bf16.msra.mxu0 %v725
  %869 = vmatmul.bf16.gmra.mxu0 %v840
  %v870 = vpop.f32.mrf.mxu0
  %v871 = vadd.f32 %v758, %v870
  %v872 = vpop.f32.mrf.mxu0
  %v873 = vadd.f32 %v763, %v872
  %874 = vmatmul.bf16.gmra.mxu0 %v843
  %v875 = vpop.f32.mrf.mxu0
  %v876 = vadd.f32 %v768, %v875
  %v877 = vpop.f32.mrf.mxu0
  %v878 = vadd.f32 %v773, %v877
  %879 = vmatmul.bf16.gmra.mxu0 %v846
  %v880 = vpop.f32.mrf.mxu0
  %v881 = vadd.f32 %v778, %v880
  %v882 = vpop.f32.mrf.mxu0
  %v883 = vadd.f32 %v783, %v882
  %884 = vmatmul.bf16.gmra.mxu0 %v849
  %v885 = vpop.f32.mrf.mxu0
  %v886 = vadd.f32 %v788, %v885
  %v887 = vpop.f32.mrf.mxu0
  %v888 = vadd.f32 %v793, %v887
  %889 = vmatmul.bf16.gmra.mxu0 %v852
  %v890 = vpop.f32.mrf.mxu0
  %v891 = vadd.f32 %v798, %v890
  %v892 = vpop.f32.mrf.mxu0
  %v893 = vadd.f32 %v803, %v892
  %894 = vmatmul.bf16.gmra.mxu0 %v855
  %v895 = vpop.f32.mrf.mxu0
  %v896 = vadd.f32 %v808, %v895
  %v897 = vpop.f32.mrf.mxu0
  %898 = vdwg.mxu0
  %v899 = vmax.f32 %v871, 0.0
  %v900 = vmax.f32 %v873, 0.0
  %v901 = vmax.f32 %v876, 0.0
  %v902 = vmax.f32 %v878, 0.0
  %v903 = vmax.f32 %v881, 0.0
  %v904 = vmax.f32 %v883, 0.0
  %v905 = vmax.f32 %v886, 0.0
  %v906 = vmax.f32 %v888, 0.0
  %v907 = vmax.f32 %v891, 0.0
  %v908 = vmax.f32 %v893, 0.0
  %v909 = vmax.f32 %v896, 0.0
  %v910 = vpack.c.bf16 %v900, %v899
  %v911 = vpack.c.bf16 %v902, %v901
  %v912 = vpack.c.bf16 %v904, %v903
  %v913 = vpack.c.bf16 %v906, %v905
  %v914 = vpack.c.bf16 %v908, %v907
  %v915 = vpack.c.bf16 %v909, %v909
  %v916 = vld [vmem:[%s4] sm:$0xf]
  %v917 = vld [vmem:[%s4 + $0x4] sm:$0x1]
  %v918 = vld [vmem:[%s5] sm:$0xff]
  %v919 = vld [vmem:[%s5 + $0x8] sm:$0x3]
  %921 = vset.pattern.permute.xlu0 0
  %922 = vperm.xlu0 %921, %v918
  %v923 = vpop.permute.xlu0 %922
  %926 = vset.pattern.permute.xlu0 0
  %927 = vperm.xlu0 %926, %v919
  %v928 = vpop.permute.xlu0 %927
  %v932 = vunpack.c.l.b16 %v916
  %v933 = vunpack.c.l.b16 %v917
  %v934 = vpack.c.b16 %v933, %v932
  %vm935 = vcmask 687104
  %v937 = vsel %vm935, %v934, 0
  %vm939 = vcmask 1041408
  %v941 = vsel %vm939, %v915, 0
  %943 = vmatpush.bf16.msra.mxu0 0
  %944 = vmatpush.bf16.msra.mxu0 0
  %945 = vmatpush.bf16.msra.mxu0 %v941
  %946 = vmatpush.bf16.msra.mxu0 %v914
  %947 = vmatpush.bf16.msra.mxu0 %v913
  %948 = vmatpush.bf16.msra.mxu0 %v912
  %949 = vmatpush.bf16.msra.mxu0 %v911
  %950 = vmatpush.bf16.msra.mxu0 %v910
  %951 = vmatmul.bf16.gmra.mxu0 %v937
  %v952 = vpop.f32.mrf.mxu0
  %v953 = vadd.f32 %v923, %v952
  %v954 = vpop.f32.mrf.mxu0
  %v955 = vadd.f32 %v928, %v954
  %956 = vdwg.mxu0
  %957 = vst [vmem:[%s7] sm:$0xff] %v953
  %958 = vst [vmem:[%s7 + $0x8] sm:$0x3] %v955
  // Predicated region
  $region30: #{forward.5} parent=0 // pred_check
    _
  $region31: #{forward.5} parent=0 // pred_check_branch
    %960 = sbr.rel (0) target = $region33
  $region32: #{forward.5} parent=0 // pred_region
    _
  $region33: #{forward.5} parent=0 // pred_fallthru
    _
  // Predicated region
  $region34: #{forward.5} parent=0 // pred_check
    _
  $region35: #{forward.5} parent=0 // pred_check_branch
    %962 = sbr.rel (0) target = $region37
  $region36: #{forward.5} parent=0 // pred_region
    _
  $region37: #{forward.5} parent=0 // pred_fallthru
    _

</llo_original>
